<compile_context>
chip_gen: v5e
topology: v5e:2x2
jax: 0.10.0
libtpu: 0.0.40
codegen_flags: <defaults>
</compile_context>

<pallas_src>
import jax
import jax.numpy as jnp
from jax.experimental import pallas as pl
from jax.experimental.pallas import tpu as pltpu

# ---------------- configuration (small, deterministic) ----------------
CHANNELS = 1
IMG_SIZE = 16
IN_DIM = CHANNELS * IMG_SIZE * IMG_SIZE      # 256 (lane-aligned)
HIDDEN = (1024, 512, 256)
OUT_PAD = 128                                # padded final width (real out dim = 1)
BATCH = 256                                  # example batch
MAX_TB = 256                                 # per-step row tile for large batches
LRELU_SLOPE = 0.2


def _leaky_relu(x):
    return jnp.where(x > 0, x, LRELU_SLOPE * x)


def discriminator_kernel(x_ref,
                         w1_ref, b1_ref,
                         w2_ref, b2_ref,
                         w3_ref, b3_ref,
                         w4_ref, b4_ref,
                         out_ref):
    """Fused 4-layer MLP discriminator for one batch tile.

    x arrives in bf16 (fed straight to the MXU); weights are bf16 and
    VMEM-resident across grid steps; matmuls accumulate in f32 on the MXU;
    bias add / LeakyReLU / sigmoid run in f32 (v5e-friendly).
    """
    h = x_ref[...]  # (TB, IN_DIM) bf16

    # layer 1: input is already bf16, no cast needed
    y = jnp.dot(h, w1_ref[...], preferred_element_type=jnp.float32) + b1_ref[...]
    h = _leaky_relu(y)

    def lin_lrelu(h, w_ref, b_ref):
        y = jnp.dot(h.astype(jnp.bfloat16), w_ref[...],
                    preferred_element_type=jnp.float32) + b_ref[...]
        return _leaky_relu(y)

    h = lin_lrelu(h, w2_ref, b2_ref)
    h = lin_lrelu(h, w3_ref, b3_ref)

    y = jnp.dot(h.astype(jnp.bfloat16), w4_ref[...],
                preferred_element_type=jnp.float32) + b4_ref[...]
    out_ref[...] = jax.nn.sigmoid(y)          # (TB, OUT_PAD); only column 0 is real


def discriminator_forward(img, params):
    """img: (B, C, H, W) -> validity: (B, 1) float32."""
    B = img.shape[0]
    # bf16 input: halves input HBM traffic; first matmul consumes bf16 anyway.
    x = img.reshape(B, -1).astype(jnp.bfloat16)
    assert x.shape[1] == IN_DIM

    # Adaptive batch tile: fold small batches into one grid step (best for the
    # single-TensorCore v5e/v6e); keep 256-row tiles for large batches so the
    # "parallel" grid axis can feed both v7x TensorCores.
    if B <= MAX_TB:
        tb = max(8, ((B + 7) // 8) * 8)       # single tile, sublane-aligned
    else:
        tb = MAX_TB

    n_tiles = pl.cdiv(B, tb)
    b_pad = n_tiles * tb
    if b_pad != B:
        x = jnp.pad(x, ((0, b_pad - B), (0, 0)))

    # Constant block index: weights/biases stay VMEM-resident, DMA'd once.
    weight_specs = [pl.BlockSpec(p.shape, lambda i: (0, 0)) for p in params]

    out = pl.pallas_call(
        discriminator_kernel,
        out_shape=jax.ShapeDtypeStruct((b_pad, OUT_PAD), jnp.float32),
        grid_spec=pltpu.PrefetchScalarGridSpec(
            num_scalar_prefetch=0,
            grid=(n_tiles,),
            in_specs=[pl.BlockSpec((tb, IN_DIM), lambda i: (i, 0))] + weight_specs,
            out_specs=pl.BlockSpec((tb, OUT_PAD), lambda i: (i, 0)),
        ),
        compiler_params=pltpu.CompilerParams(
            dimension_semantics=("parallel",),   # batch tiles independent (megacore)
            vmem_limit_bytes=16 << 20,
        ),
    )(x, *params)

    return out[:B, :1]


def init_params(key):
    """Deterministic init mimicking nn.Linear default U(-1/sqrt(fan_in), +).

    Weights are stored in bf16 (matmul operands), biases in f32.
    Final layer (256 -> 1) is zero-padded to 128 output columns for lane-dense stores.
    """
    dims = [(IN_DIM, HIDDEN[0]), (HIDDEN[0], HIDDEN[1]),
            (HIDDEN[1], HIDDEN[2]), (HIDDEN[2], 1)]
    keys = jax.random.split(key, 2 * len(dims))
    ws, bs = [], []
    for i, (fin, fout) in enumerate(dims):
        bound = 1.0 / (fin ** 0.5)
        w = jax.random.uniform(keys[2 * i], (fin, fout), jnp.float32, -bound, bound)
        b = jax.random.uniform(keys[2 * i + 1], (1, fout), jnp.float32, -bound, bound)
        ws.append(w)
        bs.append(b)
    # pad final layer (fin=256, fout=1) -> (256, OUT_PAD); extra columns are zero.
    w4 = jnp.pad(ws[3], ((0, 0), (0, OUT_PAD - 1)))
    b4 = jnp.pad(bs[3], ((0, 0), (0, OUT_PAD - 1)))
    w1, w2, w3 = ws[0], ws[1], ws[2]
    b1, b2, b3 = bs[0], bs[1], bs[2]
    to_bf16 = lambda w: w.astype(jnp.bfloat16)
    return (to_bf16(w1), b1,
            to_bf16(w2), b2,
            to_bf16(w3), b3,
            to_bf16(w4), b4)


def reference_forward(img, params):
    """Pure-JAX reference with identical numerics (bf16 inputs/weights, f32 accum)."""
    w1, b1, w2, b2, w3, b3, w4, b4 = params
    h = img.reshape(img.shape[0], -1).astype(jnp.bfloat16)

    def lin(h, w, b):
        return jnp.dot(h.astype(jnp.bfloat16), w,
                       preferred_element_type=jnp.float32) + b

    h = _leaky_relu(lin(h, w1, b1))
    h = _leaky_relu(lin(h, w2, b2))
    h = _leaky_relu(lin(h, w3, b3))
    y = jax.nn.sigmoid(lin(h, w4, b4))
    return y[:, :1]


if __name__ == "__main__":
    key = jax.random.PRNGKey(0)
    k_img, k_p = jax.random.split(key)
    img = jax.random.normal(k_img, (BATCH, CHANNELS, IMG_SIZE, IMG_SIZE), jnp.float32)
    params = init_params(k_p)

    val = discriminator_forward(img, params)
    val = jax.block_until_ready(val)

    assert val.shape == (BATCH, 1)
    assert bool(jnp.all(jnp.isfinite(val)))
    assert bool(jnp.all((val >= 0.0) & (val <= 1.0)))   # sigmoid range

    ref = jax.block_until_ready(reference_forward(img, params))
    assert bool(jnp.allclose(val, ref, atol=1e-2, rtol=1e-2))

    print("KERNEL_OK")
</pallas_src>

<mosaic_0001>
module attributes {stable_mosaic.version = 11 : i64} {
  func.func @discriminator_kernel(%arg0: i32, %arg1: memref<256x256xbf16, #tpu.memory_space<vmem>>, %arg2: memref<256x1024xbf16, #tpu.memory_space<vmem>>, %arg3: memref<1x1024xf32, #tpu.memory_space<vmem>>, %arg4: memref<1024x512xbf16, #tpu.memory_space<vmem>>, %arg5: memref<1x512xf32, #tpu.memory_space<vmem>>, %arg6: memref<512x256xbf16, #tpu.memory_space<vmem>>, %arg7: memref<1x256xf32, #tpu.memory_space<vmem>>, %arg8: memref<256x128xbf16, #tpu.memory_space<vmem>>, %arg9: memref<1x128xf32, #tpu.memory_space<vmem>>, %arg10: memref<256x128xf32, #tpu.memory_space<vmem>>) attributes {dimension_semantics = [#tpu.dimension_semantics<parallel>], iteration_bounds = array<i64: 1>, scalar_prefetch = 0 : i64, scratch_operands = 0 : i64, tpu.core_type = #tpu.core_type<tc>, window_params = [{transform_indices = @transform_0, window_bounds = array<i64: 256, 256>}, {pipeline_mode = #tpu.pipeline_mode<synchronous>, transform_indices = @transform_1, window_bounds = array<i64: 256, 1024>}, {pipeline_mode = #tpu.pipeline_mode<synchronous>, transform_indices = @transform_2, window_bounds = array<i64: 1, 1024>}, {pipeline_mode = #tpu.pipeline_mode<synchronous>, transform_indices = @transform_3, window_bounds = array<i64: 1024, 512>}, {pipeline_mode = #tpu.pipeline_mode<synchronous>, transform_indices = @transform_4, window_bounds = array<i64: 1, 512>}, {pipeline_mode = #tpu.pipeline_mode<synchronous>, transform_indices = @transform_5, window_bounds = array<i64: 512, 256>}, {pipeline_mode = #tpu.pipeline_mode<synchronous>, transform_indices = @transform_6, window_bounds = array<i64: 1, 256>}, {pipeline_mode = #tpu.pipeline_mode<synchronous>, transform_indices = @transform_7, window_bounds = array<i64: 256, 128>}, {pipeline_mode = #tpu.pipeline_mode<synchronous>, transform_indices = @transform_8, window_bounds = array<i64: 1, 128>}, {transform_indices = @transform_9, window_bounds = array<i64: 256, 128>}]} {
    %c0 = arith.constant 0 : index
    %c0_0 = arith.constant 0 : index
    %0 = vector.load %arg1[%c0, %c0_0] : memref<256x256xbf16, #tpu.memory_space<vmem>>, vector<256x256xbf16>
    %c0_1 = arith.constant 0 : index
    %c0_2 = arith.constant 0 : index
    %1 = vector.load %arg2[%c0_1, %c0_2] : memref<256x1024xbf16, #tpu.memory_space<vmem>>, vector<256x1024xbf16>
    %cst = arith.constant dense<0.000000e+00> : vector<256x1024xf32>
    %2 = tpu.matmul %0, %1, %cst {dimension_numbers = #tpu.dot_dimension_numbers<[1], [0], [0], [1], [0, 0, 1, 1], [], []>} : vector<256x256xbf16>, vector<256x1024xbf16>, vector<256x1024xf32> -> vector<256x1024xf32>
    %c0_3 = arith.constant 0 : index
    %c0_4 = arith.constant 0 : index
    %3 = vector.load %arg3[%c0_3, %c0_4] : memref<1x1024xf32, #tpu.memory_space<vmem>>, vector<1x1024xf32>
    %4 = vector.broadcast %3 : vector<1x1024xf32> to vector<256x1024xf32>
    %5 = arith.addf %2, %4 : vector<256x1024xf32>
    %cst_5 = arith.constant 0.000000e+00 : f32
    %6 = vector.broadcast %cst_5 : f32 to vector<256x1024xf32>
    %7 = arith.cmpf ogt, %5, %6 : vector<256x1024xf32>
    %cst_6 = arith.constant 2.000000e-01 : f32
    %8 = vector.broadcast %cst_6 : f32 to vector<256x1024xf32>
    %9 = arith.mulf %8, %5 : vector<256x1024xf32>
    %10 = arith.select %7, %5, %9 : vector<256x1024xi1>, vector<256x1024xf32>
    %11 = arith.truncf %10 : vector<256x1024xf32> to vector<256x1024xbf16>
    %c0_7 = arith.constant 0 : index
    %c0_8 = arith.constant 0 : index
    %12 = vector.load %arg4[%c0_7, %c0_8] : memref<1024x512xbf16, #tpu.memory_space<vmem>>, vector<1024x512xbf16>
    %cst_9 = arith.constant dense<0.000000e+00> : vector<256x512xf32>
    %13 = tpu.matmul %11, %12, %cst_9 {dimension_numbers = #tpu.dot_dimension_numbers<[1], [0], [0], [1], [0, 0, 1, 1], [], []>} : vector<256x1024xbf16>, vector<1024x512xbf16>, vector<256x512xf32> -> vector<256x512xf32>
    %c0_10 = arith.constant 0 : index
    %c0_11 = arith.constant 0 : index
    %14 = vector.load %arg5[%c0_10, %c0_11] : memref<1x512xf32, #tpu.memory_space<vmem>>, vector<1x512xf32>
    %15 = vector.broadcast %14 : vector<1x512xf32> to vector<256x512xf32>
    %16 = arith.addf %13, %15 : vector<256x512xf32>
    %cst_12 = arith.constant 0.000000e+00 : f32
    %17 = vector.broadcast %cst_12 : f32 to vector<256x512xf32>
    %18 = arith.cmpf ogt, %16, %17 : vector<256x512xf32>
    %cst_13 = arith.constant 2.000000e-01 : f32
    %19 = vector.broadcast %cst_13 : f32 to vector<256x512xf32>
    %20 = arith.mulf %19, %16 : vector<256x512xf32>
    %21 = arith.select %18, %16, %20 : vector<256x512xi1>, vector<256x512xf32>
    %22 = arith.truncf %21 : vector<256x512xf32> to vector<256x512xbf16>
    %c0_14 = arith.constant 0 : index
    %c0_15 = arith.constant 0 : index
    %23 = vector.load %arg6[%c0_14, %c0_15] : memref<512x256xbf16, #tpu.memory_space<vmem>>, vector<512x256xbf16>
    %cst_16 = arith.constant dense<0.000000e+00> : vector<256x256xf32>
    %24 = tpu.matmul %22, %23, %cst_16 {dimension_numbers = #tpu.dot_dimension_numbers<[1], [0], [0], [1], [0, 0, 1, 1], [], []>} : vector<256x512xbf16>, vector<512x256xbf16>, vector<256x256xf32> -> vector<256x256xf32>
    %c0_17 = arith.constant 0 : index
    %c0_18 = arith.constant 0 : index
    %25 = vector.load %arg7[%c0_17, %c0_18] : memref<1x256xf32, #tpu.memory_space<vmem>>, vector<1x256xf32>
    %26 = vector.broadcast %25 : vector<1x256xf32> to vector<256x256xf32>
    %27 = arith.addf %24, %26 : vector<256x256xf32>
    %cst_19 = arith.constant 0.000000e+00 : f32
    %28 = vector.broadcast %cst_19 : f32 to vector<256x256xf32>
    %29 = arith.cmpf ogt, %27, %28 : vector<256x256xf32>
    %cst_20 = arith.constant 2.000000e-01 : f32
    %30 = vector.broadcast %cst_20 : f32 to vector<256x256xf32>
    %31 = arith.mulf %30, %27 : vector<256x256xf32>
    %32 = arith.select %29, %27, %31 : vector<256x256xi1>, vector<256x256xf32>
    %33 = arith.truncf %32 : vector<256x256xf32> to vector<256x256xbf16>
    %c0_21 = arith.constant 0 : index
    %c0_22 = arith.constant 0 : index
    %34 = vector.load %arg8[%c0_21, %c0_22] : memref<256x128xbf16, #tpu.memory_space<vmem>>, vector<256x128xbf16>
    %cst_23 = arith.constant dense<0.000000e+00> : vector<256x128xf32>
    %35 = tpu.matmul %33, %34, %cst_23 {dimension_numbers = #tpu.dot_dimension_numbers<[1], [0], [0], [1], [0, 0, 1, 1], [], []>} : vector<256x256xbf16>, vector<256x128xbf16>, vector<256x128xf32> -> vector<256x128xf32>
    %c0_24 = arith.constant 0 : index
    %c0_25 = arith.constant 0 : index
    %36 = vector.load %arg9[%c0_24, %c0_25] : memref<1x128xf32, #tpu.memory_space<vmem>>, vector<1x128xf32>
    %37 = vector.broadcast %36 : vector<1x128xf32> to vector<256x128xf32>
    %38 = arith.addf %35, %37 : vector<256x128xf32>
    %39 = arith.negf %38 : vector<256x128xf32>
    %40 = math.exp %39 : vector<256x128xf32>
    %cst_26 = arith.constant 1.000000e+00 : f32
    %41 = vector.broadcast %cst_26 : f32 to vector<256x128xf32>
    %42 = arith.addf %41, %40 : vector<256x128xf32>
    %43 = arith.divf %41, %42 : vector<256x128xf32>
    %c0_27 = arith.constant 0 : index
    %c0_28 = arith.constant 0 : index
    %44 = vector.load %arg10[%c0_27, %c0_28] : memref<256x128xf32, #tpu.memory_space<vmem>>, vector<256x128xf32>
    tpu.vector_store %arg10[%c0_27, %c0_28], %43 {strides = array<i32>} : memref<256x128xf32, #tpu.memory_space<vmem>>, vector<256x128xf32>,
    return
  }
  func.func @transform_0(%arg0: i32) -> (i32, i32) {
    %c0_i32 = arith.constant 0 : i32
    %c0_i32_0 = arith.constant 0 : i32
    return %arg0, %c0_i32 : i32, i32
  }
  func.func @transform_1(%arg0: i32) -> (i32, i32) {
    %c0_i32 = arith.constant 0 : i32
    %c0_i32_0 = arith.constant 0 : i32
    %c0_i32_1 = arith.constant 0 : i32
    return %c0_i32, %c0_i32_0 : i32, i32
  }
  func.func @transform_2(%arg0: i32) -> (i32, i32) {
    %c0_i32 = arith.constant 0 : i32
    %c0_i32_0 = arith.constant 0 : i32
    %c0_i32_1 = arith.constant 0 : i32
    return %c0_i32, %c0_i32_0 : i32, i32
  }
  func.func @transform_3(%arg0: i32) -> (i32, i32) {
    %c0_i32 = arith.constant 0 : i32
    %c0_i32_0 = arith.constant 0 : i32
    %c0_i32_1 = arith.constant 0 : i32
    return %c0_i32, %c0_i32_0 : i32, i32
  }
  func.func @transform_4(%arg0: i32) -> (i32, i32) {
    %c0_i32 = arith.constant 0 : i32
    %c0_i32_0 = arith.constant 0 : i32
    %c0_i32_1 = arith.constant 0 : i32
    return %c0_i32, %c0_i32_0 : i32, i32
  }
  func.func @transform_5(%arg0: i32) -> (i32, i32) {
    %c0_i32 = arith.constant 0 : i32
    %c0_i32_0 = arith.constant 0 : i32
    %c0_i32_1 = arith.constant 0 : i32
    return %c0_i32, %c0_i32_0 : i32, i32
  }
  func.func @transform_6(%arg0: i32) -> (i32, i32) {
    %c0_i32 = arith.constant 0 : i32
    %c0_i32_0 = arith.constant 0 : i32
    %c0_i32_1 = arith.constant 0 : i32
    return %c0_i32, %c0_i32_0 : i32, i32
  }
  func.func @transform_7(%arg0: i32) -> (i32, i32) {
    %c0_i32 = arith.constant 0 : i32
    %c0_i32_0 = arith.constant 0 : i32
    %c0_i32_1 = arith.constant 0 : i32
    return %c0_i32, %c0_i32_0 : i32, i32
  }
  func.func @transform_8(%arg0: i32) -> (i32, i32) {
    %c0_i32 = arith.constant 0 : i32
    %c0_i32_0 = arith.constant 0 : i32
    %c0_i32_1 = arith.constant 0 : i32
    return %c0_i32, %c0_i32_0 : i32, i32
  }
  func.func @transform_9(%arg0: i32) -> (i32, i32) {
    %c0_i32 = arith.constant 0 : i32
    %c0_i32_0 = arith.constant 0 : i32
    return %arg0, %c0_i32 : i32, i32
  }
}

</mosaic_0001>

<llo_original>
// kernel: tpu_custom_call.1
$region0: #{tpu_custom_call.1}
  #allocation0 [shape = 'u32[]', space=smem, size = 0x4, offset = 0x4, fixed_abs, tag = 'smem constant byte address 0x4 - core index']
  #allocation1 [shape = 'u32[72,128]{1,0:T(1,128)}', space=vmem, size = 0x9000, scoped, tag = 'internal scratch']
  %s0 = inlined_call_operand.hbm [shape: bf16[256,256], index: 0, kind: input, shape index: {}]
  %s1 = inlined_call_operand.hbm [shape: bf16[256,1024], index: 1, kind: input, shape index: {}]
  %s2 = inlined_call_operand.hbm [shape: f32[1,1024], index: 2, kind: input, shape index: {}]
  %s3 = inlined_call_operand.hbm [shape: bf16[1024,512], index: 3, kind: input, shape index: {}]
  %s4 = inlined_call_operand.hbm [shape: f32[1,512], index: 4, kind: input, shape index: {}]
  %s5 = inlined_call_operand.hbm [shape: bf16[512,256], index: 5, kind: input, shape index: {}]
  %s6 = inlined_call_operand.vmem [shape: f32[1,256], index: 6, kind: input, shape index: {}]
  %s7 = inlined_call_operand.hbm [shape: bf16[256,128], index: 7, kind: input, shape index: {}]
  %s8 = inlined_call_operand.vmem [shape: f32[1,128], index: 8, kind: input, shape index: {}]
  %s9 = inlined_call_operand.hbm [shape: f32[256,128], index: 9, kind: output, shape index: {}]
  %s10 = sld [smem:[#allocation0]]
  $region74: #{tpu_custom_call.1} parent=0
    _
  %s12 = ssub.s32 1, %s10
  %s13 = scalar_select 0, %s12, %s10
  $region1: #{tpu_custom_call.1} parent=0
    #allocation2 [shape = 'u8[131072]{0}', space=vmem, size = 0x20000, scoped, tag = 'input window, operand 0, single buffered']
    #allocation3 [shape = 's32[1]{0}', space=sflag, size = 0x4, scoped, tag = 'scoped memory for tpu_custom_call.1']
    #allocation4 [shape = 's32[1]{0}', space=sflag, size = 0x4, scoped, tag = 'scoped memory for tpu_custom_call.1']
    #allocation5 [shape = 'u8[524288]{0}', space=vmem, size = 0x80000, scoped, tag = 'input window, operand 1, single buffered']
    #allocation6 [shape = 's32[1]{0}', space=sflag, size = 0x4, scoped, tag = 'scoped memory for tpu_custom_call.1']
    #allocation7 [shape = 'u8[4096]{0}', space=vmem, size = 0x1000, scoped, tag = 'input window, operand 2, single buffered']
    #allocation8 [shape = 'u8[1048576]{0}', space=vmem, size = 0x100000, scoped, tag = 'input window, operand 3, single buffered']
    #allocation9 [shape = 's32[1]{0}', space=sflag, size = 0x4, scoped, tag = 'scoped memory for tpu_custom_call.1']
    #allocation10 [shape = 'u8[2048]{0}', space=vmem, size = 0x800, scoped, tag = 'input window, operand 4, single buffered']
    #allocation11 [shape = 'u8[262144]{0}', space=vmem, size = 0x40000, scoped, tag = 'input window, operand 5, single buffered']
    #allocation12 [shape = 's32[1]{0}', space=sflag, size = 0x4, scoped, tag = 'scoped memory for tpu_custom_call.1']
    #allocation13 [shape = 'u8[65536]{0}', space=vmem, size = 0x10000, scoped, tag = 'input window, operand 7, single buffered']
    #allocation14 [shape = 'u8[131072]{0}', space=vmem, size = 0x20000, scoped, tag = 'output window, operand 0, single buffered']
    %14 = vsyncpa [#allocation3], 0
    %15 = vsyncpa [#allocation6], 0
    %16 = vsyncpa [#allocation9], 0
    %17 = vsyncpa [#allocation12], 0
    %18 = vsyncpa [#allocation4], 0
    // Predicated region
    $region2: #{tpu_custom_call.1} parent=1 // pred_check
      _
    $region3: #{tpu_custom_call.1} parent=1 // pred_check_branch
      %20 = sbr.rel (0) target = $region5
    $region4: #{tpu_custom_call.1} parent=1 // pred_region
      %22 = vsyncadd [#allocation3], 0
      %s23 = sshll.u32 %s0, 4
      %s24 = int_to_ptr.hbm [resolvable:$true] %s23
      %s25 = sshll.u32 [#allocation2], 4
      %s26 = int_to_ptr.vmem [resolvable:$true] %s25
      %31 = dma.hbm_to_vmem [thread:$0]  %s24, 4096, %s26, [#allocation3], 128, 128, 8
    $region5: #{tpu_custom_call.1} parent=1 // pred_fallthru
      _
    // Predicated region
    $region6: #{tpu_custom_call.1} parent=1 // pred_check
      _
    $region7: #{tpu_custom_call.1} parent=1 // pred_check_branch
      %33 = sbr.rel (0) target = $region9
    $region8: #{tpu_custom_call.1} parent=1 // pred_region
      %35 = vsyncadd [#allocation6], 0
      %s36 = sshll.u32 %s1, 4
      %s37 = int_to_ptr.hbm [resolvable:$true] %s36
      %s38 = sshll.u32 [#allocation5], 4
      %s39 = int_to_ptr.vmem [resolvable:$true] %s38
      %44 = dma.hbm_to_vmem [thread:$0]  %s37, 16384, %s39, [#allocation6], 512, 512, 32
    $region9: #{tpu_custom_call.1} parent=1 // pred_fallthru
      _
    // Predicated region
    $region10: #{tpu_custom_call.1} parent=1 // pred_check
      _
    $region11: #{tpu_custom_call.1} parent=1 // pred_check_branch
      %46 = sbr.rel (0) target = $region13
    $region12: #{tpu_custom_call.1} parent=1 // pred_region
      %48 = vsyncadd [#allocation6], 0
      %s50 = sshll.u32 %s2, 4
      %s51 = int_to_ptr.hbm [resolvable:$true] %s50
      %s52 = sshll.u32 [#allocation7], 4
      %s53 = int_to_ptr.vmem [resolvable:$true] %s52
      %55 = dma.hbm_to_vmem [thread:$0]  %s51, 128, %s53, [#allocation6]
    $region13: #{tpu_custom_call.1} parent=1 // pred_fallthru
      _
    // Predicated region
    $region14: #{tpu_custom_call.1} parent=1 // pred_check
      _
    $region15: #{tpu_custom_call.1} parent=1 // pred_check_branch
      %57 = sbr.rel (0) target = $region17
    $region16: #{tpu_custom_call.1} parent=1 // pred_region
      %59 = vsyncadd [#allocation9], 0
      %s60 = sshll.u32 %s3, 4
      %s61 = int_to_ptr.hbm [resolvable:$true] %s60
      %s62 = sshll.u32 [#allocation8], 4
      %s63 = int_to_ptr.vmem [resolvable:$true] %s62
      %68 = dma.hbm_to_vmem [thread:$0]  %s61, 32768, %s63, [#allocation9], 256, 256, 16
    $region17: #{tpu_custom_call.1} parent=1 // pred_fallthru
      _
    // Predicated region
    $region18: #{tpu_custom_call.1} parent=1 // pred_check
      _
    $region19: #{tpu_custom_call.1} parent=1 // pred_check_branch
      %70 = sbr.rel (0) target = $region21
    $region20: #{tpu_custom_call.1} parent=1 // pred_region
      %72 = vsyncadd [#allocation9], 0
      %s74 = sshll.u32 %s4, 4
      %s75 = int_to_ptr.hbm [resolvable:$true] %s74
      %s76 = sshll.u32 [#allocation10], 4
      %s77 = int_to_ptr.vmem [resolvable:$true] %s76
      %79 = dma.hbm_to_vmem [thread:$0]  %s75, 64, %s77, [#allocation9]
    $region21: #{tpu_custom_call.1} parent=1 // pred_fallthru
      _
    // Predicated region
    $region22: #{tpu_custom_call.1} parent=1 // pred_check
      _
    $region23: #{tpu_custom_call.1} parent=1 // pred_check_branch
      %81 = sbr.rel (0) target = $region25
    $region24: #{tpu_custom_call.1} parent=1 // pred_region
      %83 = vsyncadd [#allocation12], 0
      %s84 = sshll.u32 %s5, 4
      %s85 = int_to_ptr.hbm [resolvable:$true] %s84
      %s86 = sshll.u32 [#allocation11], 4
      %s87 = int_to_ptr.vmem [resolvable:$true] %s86
      %92 = dma.hbm_to_vmem [thread:$0]  %s85, 8192, %s87, [#allocation12], 128, 128, 8
    $region25: #{tpu_custom_call.1} parent=1 // pred_fallthru
      _
    // Predicated region
    $region26: #{tpu_custom_call.1} parent=1 // pred_check
      _
    $region27: #{tpu_custom_call.1} parent=1 // pred_check_branch
      %94 = sbr.rel (0) target = $region29
    $region28: #{tpu_custom_call.1} parent=1 // pred_region
      _
    $region29: #{tpu_custom_call.1} parent=1 // pred_fallthru
      _
    // Predicated region
    $region30: #{tpu_custom_call.1} parent=1 // pred_check
      _
    $region31: #{tpu_custom_call.1} parent=1 // pred_check_branch
      %96 = sbr.rel (0) target = $region33
    $region32: #{tpu_custom_call.1} parent=1 // pred_region
      %98 = vsyncadd [#allocation12], 0
      %s99 = sshll.u32 %s7, 4
      %s100 = int_to_ptr.hbm [resolvable:$true] %s99
      %s101 = sshll.u32 [#allocation13], 4
      %s102 = int_to_ptr.vmem [resolvable:$true] %s101
      %107 = dma.hbm_to_vmem [thread:$0]  %s100, 2048, %s102, [#allocation12], 64, 64, 4
    $region33: #{tpu_custom_call.1} parent=1 // pred_fallthru
      _
    // Predicated region
    $region34: #{tpu_custom_call.1} parent=1 // pred_check
      _
    $region35: #{tpu_custom_call.1} parent=1 // pred_check_branch
      %109 = sbr.rel (0) target = $region37
    $region36: #{tpu_custom_call.1} parent=1 // pred_region
      _
    $region37: #{tpu_custom_call.1} parent=1 // pred_fallthru
      _
    // Predicated region
    $region38: #{tpu_custom_call.1} parent=1 // pred_check
      _
    $region39: #{tpu_custom_call.1} parent=1 // pred_check_branch
      %111 = sbr.rel (0) target = $region41
    $region40: #{tpu_custom_call.1} parent=1 // pred_region
      %113 = dma.done [#allocation3], 4096
    $region41: #{tpu_custom_call.1} parent=1 // pred_fallthru
      _
    // Predicated region
    $region42: #{tpu_custom_call.1} parent=1 // pred_check
      _
    $region43: #{tpu_custom_call.1} parent=1 // pred_check_branch
      %115 = sbr.rel (0) target = $region45
    $region44: #{tpu_custom_call.1} parent=1 // pred_region
      %117 = dma.done [#allocation6], 16384
    $region45: #{tpu_custom_call.1} parent=1 // pred_fallthru
      _
    // Predicated region
    $region46: #{tpu_custom_call.1} parent=1 // pred_check
      _
    $region47: #{tpu_custom_call.1} parent=1 // pred_check_branch
      %119 = sbr.rel (0) target = $region49
    $region48: #{tpu_custom_call.1} parent=1 // pred_region
      %121 = dma.done [#allocation6], 128
    $region49: #{tpu_custom_call.1} parent=1 // pred_fallthru
      _
    // Predicated region
    $region50: #{tpu_custom_call.1} parent=1 // pred_check
      _
    $region51: #{tpu_custom_call.1} parent=1 // pred_check_branch
      %123 = sbr.rel (0) target = $region53
    $region52: #{tpu_custom_call.1} parent=1 // pred_region
      %125 = dma.done [#allocation9], 32768
    $region53: #{tpu_custom_call.1} parent=1 // pred_fallthru
      _
    // Predicated region
    $region54: #{tpu_custom_call.1} parent=1 // pred_check
      _
    $region55: #{tpu_custom_call.1} parent=1 // pred_check_branch
      %127 = sbr.rel (0) target = $region57
    $region56: #{tpu_custom_call.1} parent=1 // pred_region
      %129 = dma.done [#allocation9], 64
    $region57: #{tpu_custom_call.1} parent=1 // pred_fallthru
      _
    // Predicated region
    $region58: #{tpu_custom_call.1} parent=1 // pred_check
      _
    $region59: #{tpu_custom_call.1} parent=1 // pred_check_branch
      %131 = sbr.rel (0) target = $region61
    $region60: #{tpu_custom_call.1} parent=1 // pred_region
      %133 = dma.done [#allocation12], 8192
    $region61: #{tpu_custom_call.1} parent=1 // pred_fallthru
      _
    // Predicated region
    $region62: #{tpu_custom_call.1} parent=1 // pred_check
      _
    $region63: #{tpu_custom_call.1} parent=1 // pred_check_branch
      %135 = sbr.rel (0) target = $region65
    $region64: #{tpu_custom_call.1} parent=1 // pred_region
      %137 = dma.done [#allocation12], 2048
    $region65: #{tpu_custom_call.1} parent=1 // pred_fallthru
      _
    %v138 = vld [vmem:[#allocation2] sm:$0xff]
    %v139 = vld [vmem:[#allocation2 + $0x8] sm:$0xff]
    %v140 = vld [vmem:[#allocation2 + $0x10] sm:$0xff]
    %v141 = vld [vmem:[#allocation2 + $0x18] sm:$0xff]
    %v142 = vld [vmem:[#allocation2 + $0x20] sm:$0xff]
    %v143 = vld [vmem:[#allocation2 + $0x28] sm:$0xff]
    %v144 = vld [vmem:[#allocation2 + $0x30] sm:$0xff]
    %v145 = vld [vmem:[#allocation2 + $0x38] sm:$0xff]
    %v146 = vld [vmem:[#allocation2 + $0x40] sm:$0xff]
    %v147 = vld [vmem:[#allocation2 + $0x48] sm:$0xff]
    %v148 = vld [vmem:[#allocation2 + $0x50] sm:$0xff]
    %v149 = vld [vmem:[#allocation2 + $0x58] sm:$0xff]
    %v150 = vld [vmem:[#allocation2 + $0x60] sm:$0xff]
    %v151 = vld [vmem:[#allocation2 + $0x68] sm:$0xff]
    %v152 = vld [vmem:[#allocation2 + $0x70] sm:$0xff]
    %v153 = vld [vmem:[#allocation2 + $0x78] sm:$0xff]
    %v154 = vld [vmem:[#allocation2 + $0x80] sm:$0xff]
    %v155 = vld [vmem:[#allocation2 + $0x88] sm:$0xff]
    %v156 = vld [vmem:[#allocation2 + $0x90] sm:$0xff]
    %v157 = vld [vmem:[#allocation2 + $0x98] sm:$0xff]
    %v158 = vld [vmem:[#allocation2 + $0xa0] sm:$0xff]
    %v159 = vld [vmem:[#allocation2 + $0xa8] sm:$0xff]
    %v160 = vld [vmem:[#allocation2 + $0xb0] sm:$0xff]
    %v161 = vld [vmem:[#allocation2 + $0xb8] sm:$0xff]
    %v162 = vld [vmem:[#allocation2 + $0xc0] sm:$0xff]
    %v163 = vld [vmem:[#allocation2 + $0xc8] sm:$0xff]
    %v164 = vld [vmem:[#allocation2 + $0xd0] sm:$0xff]
    %v165 = vld [vmem:[#allocation2 + $0xd8] sm:$0xff]
    %v166 = vld [vmem:[#allocation2 + $0xe0] sm:$0xff]
    %v167 = vld [vmem:[#allocation2 + $0xe8] sm:$0xff]
    %v168 = vld [vmem:[#allocation2 + $0xf0] sm:$0xff]
    %v169 = vld [vmem:[#allocation2 + $0xf8] sm:$0xff]
    %v170 = vld [vmem:[#allocation5] sm:$0xff]
    %v171 = vld [vmem:[#allocation5 + $0x8] sm:$0xff]
    %v172 = vld [vmem:[#allocation5 + $0x10] sm:$0xff]
    %v173 = vld [vmem:[#allocation5 + $0x18] sm:$0xff]
    %v174 = vld [vmem:[#allocation5 + $0x20] sm:$0xff]
    %v175 = vld [vmem:[#allocation5 + $0x28] sm:$0xff]
    %v176 = vld [vmem:[#allocation5 + $0x30] sm:$0xff]
    %v177 = vld [vmem:[#allocation5 + $0x38] sm:$0xff]
    %v178 = vld [vmem:[#allocation5 + $0x40] sm:$0xff]
    %v179 = vld [vmem:[#allocation5 + $0x48] sm:$0xff]
    %v180 = vld [vmem:[#allocation5 + $0x50] sm:$0xff]
    %v181 = vld [vmem:[#allocation5 + $0x58] sm:$0xff]
    %v182 = vld [vmem:[#allocation5 + $0x60] sm:$0xff]
    %v183 = vld [vmem:[#allocation5 + $0x68] sm:$0xff]
    %v184 = vld [vmem:[#allocation5 + $0x70] sm:$0xff]
    %v185 = vld [vmem:[#allocation5 + $0x78] sm:$0xff]
    %v186 = vld [vmem:[#allocation5 + $0x80] sm:$0xff]
    %v187 = vld [vmem:[#allocation5 + $0x88] sm:$0xff]
    %v188 = vld [vmem:[#allocation5 + $0x90] sm:$0xff]
    %v189 = vld [vmem:[#allocation5 + $0x98] sm:$0xff]
    %v190 = vld [vmem:[#allocation5 + $0xa0] sm:$0xff]
    %v191 = vld [vmem:[#allocation5 + $0xa8] sm:$0xff]
    %v192 = vld [vmem:[#allocation5 + $0xb0] sm:$0xff]
    %v193 = vld [vmem:[#allocation5 + $0xb8] sm:$0xff]
    %v194 = vld [vmem:[#allocation5 + $0xc0] sm:$0xff]
    %v195 = vld [vmem:[#allocation5 + $0xc8] sm:$0xff]
    %v196 = vld [vmem:[#allocation5 + $0xd0] sm:$0xff]
    %v197 = vld [vmem:[#allocation5 + $0xd8] sm:$0xff]
    %v198 = vld [vmem:[#allocation5 + $0xe0] sm:$0xff]
    %v199 = vld [vmem:[#allocation5 + $0xe8] sm:$0xff]
    %v200 = vld [vmem:[#allocation5 + $0xf0] sm:$0xff]
    %v201 = vld [vmem:[#allocation5 + $0xf8] sm:$0xff]
    %v202 = vld [vmem:[#allocation5 + $0x100] sm:$0xff]
    %v203 = vld [vmem:[#allocation5 + $0x108] sm:$0xff]
    %v204 = vld [vmem:[#allocation5 + $0x110] sm:$0xff]
    %v205 = vld [vmem:[#allocation5 + $0x118] sm:$0xff]
    %v206 = vld [vmem:[#allocation5 + $0x120] sm:$0xff]
    %v207 = vld [vmem:[#allocation5 + $0x128] sm:$0xff]
    %v208 = vld [vmem:[#allocation5 + $0x130] sm:$0xff]
    %v209 = vld [vmem:[#allocation5 + $0x138] sm:$0xff]
    %v210 = vld [vmem:[#allocation5 + $0x140] sm:$0xff]
    %v211 = vld [vmem:[#allocation5 + $0x148] sm:$0xff]
    %v212 = vld [vmem:[#allocation5 + $0x150] sm:$0xff]
    %v213 = vld [vmem:[#allocation5 + $0x158] sm:$0xff]
    %v214 = vld [vmem:[#allocation5 + $0x160] sm:$0xff]
    %v215 = vld [vmem:[#allocation5 + $0x168] sm:$0xff]
    %v216 = vld [vmem:[#allocation5 + $0x170] sm:$0xff]
    %v217 = vld [vmem:[#allocation5 + $0x178] sm:$0xff]
    %v218 = vld [vmem:[#allocation5 + $0x180] sm:$0xff]
    %v219 = vld [vmem:[#allocation5 + $0x188] sm:$0xff]
    %v220 = vld [vmem:[#allocation5 + $0x190] sm:$0xff]
    %v221 = vld [vmem:[#allocation5 + $0x198] sm:$0xff]
    %v222 = vld [vmem:[#allocation5 + $0x1a0] sm:$0xff]
    %v223 = vld [vmem:[#allocation5 + $0x1a8] sm:$0xff]
    %v224 = vld [vmem:[#allocation5 + $0x1b0] sm:$0xff]
    %v225 = vld [vmem:[#allocation5 + $0x1b8] sm:$0xff]
    %v226 = vld [vmem:[#allocation5 + $0x1c0] sm:$0xff]
    %v227 = vld [vmem:[#allocation5 + $0x1c8] sm:$0xff]
    %v228 = vld [vmem:[#allocation5 + $0x1d0] sm:$0xff]
    %v229 = vld [vmem:[#allocation5 + $0x1d8] sm:$0xff]
    %v230 = vld [vmem:[#allocation5 + $0x1e0] sm:$0xff]
    %v231 = vld [vmem:[#allocation5 + $0x1e8] sm:$0xff]
    %v232 = vld [vmem:[#allocation5 + $0x1f0] sm:$0xff]
    %v233 = vld [vmem:[#allocation5 + $0x1f8] sm:$0xff]
    %v234 = vld [vmem:[#allocation5 + $0x200] sm:$0xff]
    %v235 = vld [vmem:[#allocation5 + $0x208] sm:$0xff]
    %v236 = vld [vmem:[#allocation5 + $0x210] sm:$0xff]
    %v237 = vld [vmem:[#allocation5 + $0x218] sm:$0xff]
    %v238 = vld [vmem:[#allocation5 + $0x220] sm:$0xff]
    %v239 = vld [vmem:[#allocation5 + $0x228] sm:$0xff]
    %v240 = vld [vmem:[#allocation5 + $0x230] sm:$0xff]
    %v241 = vld [vmem:[#allocation5 + $0x238] sm:$0xff]
    %v242 = vld [vmem:[#allocation5 + $0x240] sm:$0xff]
    %v243 = vld [vmem:[#allocation5 + $0x248] sm:$0xff]
    %v244 = vld [vmem:[#allocation5 + $0x250] sm:$0xff]
    %v245 = vld [vmem:[#allocation5 + $0x258] sm:$0xff]
    %v246 = vld [vmem:[#allocation5 + $0x260] sm:$0xff]
    %v247 = vld [vmem:[#allocation5 + $0x268] sm:$0xff]
    %v248 = vld [vmem:[#allocation5 + $0x270] sm:$0xff]
    %v249 = vld [vmem:[#allocation5 + $0x278] sm:$0xff]
    %v250 = vld [vmem:[#allocation5 + $0x280] sm:$0xff]
    %v251 = vld [vmem:[#allocation5 + $0x288] sm:$0xff]
    %v252 = vld [vmem:[#allocation5 + $0x290] sm:$0xff]
    %v253 = vld [vmem:[#allocation5 + $0x298] sm:$0xff]
    %v254 = vld [vmem:[#allocation5 + $0x2a0] sm:$0xff]
    %v255 = vld [vmem:[#allocation5 + $0x2a8] sm:$0xff]
    %v256 = vld [vmem:[#allocation5 + $0x2b0] sm:$0xff]
    %v257 = vld [vmem:[#allocation5 + $0x2b8] sm:$0xff]
    %v258 = vld [vmem:[#allocation5 + $0x2c0] sm:$0xff]
    %v259 = vld [vmem:[#allocation5 + $0x2c8] sm:$0xff]
    %v260 = vld [vmem:[#allocation5 + $0x2d0] sm:$0xff]
    %v261 = vld [vmem:[#allocation5 + $0x2d8] sm:$0xff]
    %v262 = vld [vmem:[#allocation5 + $0x2e0] sm:$0xff]
    %v263 = vld [vmem:[#allocation5 + $0x2e8] sm:$0xff]
    %v264 = vld [vmem:[#allocation5 + $0x2f0] sm:$0xff]
    %v265 = vld [vmem:[#allocation5 + $0x2f8] sm:$0xff]
    %v266 = vld [vmem:[#allocation5 + $0x300] sm:$0xff]
    %v267 = vld [vmem:[#allocation5 + $0x308] sm:$0xff]
    %v268 = vld [vmem:[#allocation5 + $0x310] sm:$0xff]
    %v269 = vld [vmem:[#allocation5 + $0x318] sm:$0xff]
    %v270 = vld [vmem:[#allocation5 + $0x320] sm:$0xff]
    %v271 = vld [vmem:[#allocation5 + $0x328] sm:$0xff]
    %v272 = vld [vmem:[#allocation5 + $0x330] sm:$0xff]
    %v273 = vld [vmem:[#allocation5 + $0x338] sm:$0xff]
    %v274 = vld [vmem:[#allocation5 + $0x340] sm:$0xff]
    %v275 = vld [vmem:[#allocation5 + $0x348] sm:$0xff]
    %v276 = vld [vmem:[#allocation5 + $0x350] sm:$0xff]
    %v277 = vld [vmem:[#allocation5 + $0x358] sm:$0xff]
    %v278 = vld [vmem:[#allocation5 + $0x360] sm:$0xff]
    %v279 = vld [vmem:[#allocation5 + $0x368] sm:$0xff]
    %v280 = vld [vmem:[#allocation5 + $0x370] sm:$0xff]
    %v281 = vld [vmem:[#allocation5 + $0x378] sm:$0xff]
    %v282 = vld [vmem:[#allocation5 + $0x380] sm:$0xff]
    %v283 = vld [vmem:[#allocation5 + $0x388] sm:$0xff]
    %v284 = vld [vmem:[#allocation5 + $0x390] sm:$0xff]
    %v285 = vld [vmem:[#allocation5 + $0x398] sm:$0xff]
    %v286 = vld [vmem:[#allocation5 + $0x3a0] sm:$0xff]
    %v287 = vld [vmem:[#allocation5 + $0x3a8] sm:$0xff]
    %v288 = vld [vmem:[#allocation5 + $0x3b0] sm:$0xff]
    %v289 = vld [vmem:[#allocation5 + $0x3b8] sm:$0xff]
    %v290 = vld [vmem:[#allocation5 + $0x3c0] sm:$0xff]
    %v291 = vld [vmem:[#allocation5 + $0x3c8] sm:$0xff]
    %v292 = vld [vmem:[#allocation5 + $0x3d0] sm:$0xff]
    %v293 = vld [vmem:[#allocation5 + $0x3d8] sm:$0xff]
    %v294 = vld [vmem:[#allocation5 + $0x3e0] sm:$0xff]
    %v295 = vld [vmem:[#allocation5 + $0x3e8] sm:$0xff]
    %v296 = vld [vmem:[#allocation5 + $0x3f0] sm:$0xff]
    %v297 = vld [vmem:[#allocation5 + $0x3f8] sm:$0xff]
    %v298 = vld [vmem:[#allocation7] sm:$0xff]
    %v300 = vperm.slane %v298, 0
    %v301 = vperm.slane %v298, 1
    %v302 = vperm.slane %v298, 2
    %v303 = vperm.slane %v298, 3
    %v304 = vperm.slane %v298, 4
    %v305 = vperm.slane %v298, 5
    %v306 = vperm.slane %v298, 6
    %v307 = vperm.slane %v298, 7
    %v348 = vunpack.c.l.b16 %v138
    %v349 = vunpack.c.h.b16 %v138
    %v350 = vunpack.c.l.b16 %v139
    %v351 = vunpack.c.h.b16 %v139
    %v352 = vunpack.c.l.b16 %v140
    %v353 = vunpack.c.h.b16 %v140
    %v354 = vunpack.c.l.b16 %v141
    %v355 = vunpack.c.h.b16 %v141
    %v356 = vunpack.c.l.b16 %v142
    %v357 = vunpack.c.h.b16 %v142
    %v358 = vunpack.c.l.b16 %v143
    %v359 = vunpack.c.h.b16 %v143
    %v360 = vunpack.c.l.b16 %v144
    %v361 = vunpack.c.h.b16 %v144
    %v362 = vunpack.c.l.b16 %v145
    %v363 = vunpack.c.h.b16 %v145
    %v364 = vunpack.c.l.b16 %v146
    %v365 = vunpack.c.h.b16 %v146
    %v366 = vunpack.c.l.b16 %v147
    %v367 = vunpack.c.h.b16 %v147
    %v368 = vunpack.c.l.b16 %v148
    %v369 = vunpack.c.h.b16 %v148
    %v370 = vunpack.c.l.b16 %v149
    %v371 = vunpack.c.h.b16 %v149
    %v372 = vunpack.c.l.b16 %v150
    %v373 = vunpack.c.h.b16 %v150
    %v374 = vunpack.c.l.b16 %v151
    %v375 = vunpack.c.h.b16 %v151
    %v376 = vunpack.c.l.b16 %v152
    %v377 = vunpack.c.h.b16 %v152
    %v378 = vunpack.c.l.b16 %v153
    %v379 = vunpack.c.h.b16 %v153
    %v380 = vunpack.c.l.b16 %v154
    %v381 = vunpack.c.h.b16 %v154
    %v382 = vunpack.c.l.b16 %v155
    %v383 = vunpack.c.h.b16 %v155
    %v384 = vunpack.c.l.b16 %v156
    %v385 = vunpack.c.h.b16 %v156
    %v386 = vunpack.c.l.b16 %v157
    %v387 = vunpack.c.h.b16 %v157
    %v388 = vunpack.c.l.b16 %v158
    %v389 = vunpack.c.h.b16 %v158
    %v390 = vunpack.c.l.b16 %v159
    %v391 = vunpack.c.h.b16 %v159
    %v392 = vunpack.c.l.b16 %v160
    %v393 = vunpack.c.h.b16 %v160
    %v394 = vunpack.c.l.b16 %v161
    %v395 = vunpack.c.h.b16 %v161
    %v396 = vunpack.c.l.b16 %v162
    %v397 = vunpack.c.h.b16 %v162
    %v398 = vunpack.c.l.b16 %v163
    %v399 = vunpack.c.h.b16 %v163
    %v400 = vunpack.c.l.b16 %v164
    %v401 = vunpack.c.h.b16 %v164
    %v402 = vunpack.c.l.b16 %v165
    %v403 = vunpack.c.h.b16 %v165
    %v404 = vunpack.c.l.b16 %v166
    %v405 = vunpack.c.h.b16 %v166
    %v406 = vunpack.c.l.b16 %v167
    %v407 = vunpack.c.h.b16 %v167
    %v408 = vunpack.c.l.b16 %v168
    %v409 = vunpack.c.h.b16 %v168
    %v410 = vunpack.c.l.b16 %v169
    %v411 = vunpack.c.h.b16 %v169
    %v412 = vpack.c.b16 %v350, %v348
    %v413 = vpack.c.b16 %v351, %v349
    %v414 = vpack.c.b16 %v354, %v352
    %v415 = vpack.c.b16 %v355, %v353
    %v416 = vpack.c.b16 %v358, %v356
    %v417 = vpack.c.b16 %v359, %v357
    %v418 = vpack.c.b16 %v362, %v360
    %v419 = vpack.c.b16 %v363, %v361
    %v420 = vpack.c.b16 %v366, %v364
    %v421 = vpack.c.b16 %v367, %v365
    %v422 = vpack.c.b16 %v370, %v368
    %v423 = vpack.c.b16 %v371, %v369
    %v424 = vpack.c.b16 %v374, %v372
    %v425 = vpack.c.b16 %v375, %v373
    %v426 = vpack.c.b16 %v378, %v376
    %v427 = vpack.c.b16 %v379, %v377
    %v428 = vpack.c.b16 %v382, %v380
    %v429 = vpack.c.b16 %v383, %v381
    %v430 = vpack.c.b16 %v386, %v384
    %v431 = vpack.c.b16 %v387, %v385
    %v432 = vpack.c.b16 %v390, %v388
    %v433 = vpack.c.b16 %v391, %v389
    %v434 = vpack.c.b16 %v394, %v392
    %v435 = vpack.c.b16 %v395, %v393
    %v436 = vpack.c.b16 %v398, %v396
    %v437 = vpack.c.b16 %v399, %v397
    %v438 = vpack.c.b16 %v402, %v400
    %v439 = vpack.c.b16 %v403, %v401
    %v440 = vpack.c.b16 %v406, %v404
    %v441 = vpack.c.b16 %v407, %v405
    %v442 = vpack.c.b16 %v410, %v408
    %v443 = vpack.c.b16 %v411, %v409
    %v604 = vunpack.c.l.b16 %v170
    %v605 = vunpack.c.h.b16 %v170
    %v606 = vunpack.c.l.b16 %v171
    %v607 = vunpack.c.h.b16 %v171
    %v608 = vunpack.c.l.b16 %v172
    %v609 = vunpack.c.h.b16 %v172
    %v610 = vunpack.c.l.b16 %v173
    %v611 = vunpack.c.h.b16 %v173
    %v612 = vunpack.c.l.b16 %v174
    %v613 = vunpack.c.h.b16 %v174
    %v614 = vunpack.c.l.b16 %v175
    %v615 = vunpack.c.h.b16 %v175
    %v616 = vunpack.c.l.b16 %v176
    %v617 = vunpack.c.h.b16 %v176
    %v618 = vunpack.c.l.b16 %v177
    %v619 = vunpack.c.h.b16 %v177
    %v620 = vunpack.c.l.b16 %v178
    %v621 = vunpack.c.h.b16 %v178
    %v622 = vunpack.c.l.b16 %v179
    %v623 = vunpack.c.h.b16 %v179
    %v624 = vunpack.c.l.b16 %v180
    %v625 = vunpack.c.h.b16 %v180
    %v626 = vunpack.c.l.b16 %v181
    %v627 = vunpack.c.h.b16 %v181
    %v628 = vunpack.c.l.b16 %v182
    %v629 = vunpack.c.h.b16 %v182
    %v630 = vunpack.c.l.b16 %v183
    %v631 = vunpack.c.h.b16 %v183
    %v632 = vunpack.c.l.b16 %v184
    %v633 = vunpack.c.h.b16 %v184
    %v634 = vunpack.c.l.b16 %v185
    %v635 = vunpack.c.h.b16 %v185
    %v636 = vunpack.c.l.b16 %v186
    %v637 = vunpack.c.h.b16 %v186
    %v638 = vunpack.c.l.b16 %v187
    %v639 = vunpack.c.h.b16 %v187
    %v640 = vunpack.c.l.b16 %v188
    %v641 = vunpack.c.h.b16 %v188
    %v642 = vunpack.c.l.b16 %v189
    %v643 = vunpack.c.h.b16 %v189
    %v644 = vunpack.c.l.b16 %v190
    %v645 = vunpack.c.h.b16 %v190
    %v646 = vunpack.c.l.b16 %v191
    %v647 = vunpack.c.h.b16 %v191
    %v648 = vunpack.c.l.b16 %v192
    %v649 = vunpack.c.h.b16 %v192
    %v650 = vunpack.c.l.b16 %v193
    %v651 = vunpack.c.h.b16 %v193
    %v652 = vunpack.c.l.b16 %v194
    %v653 = vunpack.c.h.b16 %v194
    %v654 = vunpack.c.l.b16 %v195
    %v655 = vunpack.c.h.b16 %v195
    %v656 = vunpack.c.l.b16 %v196
    %v657 = vunpack.c.h.b16 %v196
    %v658 = vunpack.c.l.b16 %v197
    %v659 = vunpack.c.h.b16 %v197
    %v660 = vunpack.c.l.b16 %v198
    %v661 = vunpack.c.h.b16 %v198
    %v662 = vunpack.c.l.b16 %v199
    %v663 = vunpack.c.h.b16 %v199
    %v664 = vunpack.c.l.b16 %v200
    %v665 = vunpack.c.h.b16 %v200
    %v666 = vunpack.c.l.b16 %v201
    %v667 = vunpack.c.h.b16 %v201
    %v668 = vunpack.c.l.b16 %v202
    %v669 = vunpack.c.h.b16 %v202
    %v670 = vunpack.c.l.b16 %v203
    %v671 = vunpack.c.h.b16 %v203
    %v672 = vunpack.c.l.b16 %v204
    %v673 = vunpack.c.h.b16 %v204
    %v674 = vunpack.c.l.b16 %v205
    %v675 = vunpack.c.h.b16 %v205
    %v676 = vunpack.c.l.b16 %v206
    %v677 = vunpack.c.h.b16 %v206
    %v678 = vunpack.c.l.b16 %v207
    %v679 = vunpack.c.h.b16 %v207
    %v680 = vunpack.c.l.b16 %v208
    %v681 = vunpack.c.h.b16 %v208
    %v682 = vunpack.c.l.b16 %v209
    %v683 = vunpack.c.h.b16 %v209
    %v684 = vunpack.c.l.b16 %v210
    %v685 = vunpack.c.h.b16 %v210
    %v686 = vunpack.c.l.b16 %v211
    %v687 = vunpack.c.h.b16 %v211
    %v688 = vunpack.c.l.b16 %v212
    %v689 = vunpack.c.h.b16 %v212
    %v690 = vunpack.c.l.b16 %v213
    %v691 = vunpack.c.h.b16 %v213
    %v692 = vunpack.c.l.b16 %v214
    %v693 = vunpack.c.h.b16 %v214
    %v694 = vunpack.c.l.b16 %v215
    %v695 = vunpack.c.h.b16 %v215
    %v696 = vunpack.c.l.b16 %v216
    %v697 = vunpack.c.h.b16 %v216
    %v698 = vunpack.c.l.b16 %v217
    %v699 = vunpack.c.h.b16 %v217
    %v700 = vunpack.c.l.b16 %v218
    %v701 = vunpack.c.h.b16 %v218
    %v702 = vunpack.c.l.b16 %v219
    %v703 = vunpack.c.h.b16 %v219
    %v704 = vunpack.c.l.b16 %v220
    %v705 = vunpack.c.h.b16 %v220
    %v706 = vunpack.c.l.b16 %v221
    %v707 = vunpack.c.h.b16 %v221
    %v708 = vunpack.c.l.b16 %v222
    %v709 = vunpack.c.h.b16 %v222
    %v710 = vunpack.c.l.b16 %v223
    %v711 = vunpack.c.h.b16 %v223
    %v712 = vunpack.c.l.b16 %v224
    %v713 = vunpack.c.h.b16 %v224
    %v714 = vunpack.c.l.b16 %v225
    %v715 = vunpack.c.h.b16 %v225
    %v716 = vunpack.c.l.b16 %v226
    %v717 = vunpack.c.h.b16 %v226
    %v718 = vunpack.c.l.b16 %v227
    %v719 = vunpack.c.h.b16 %v227
    %v720 = vunpack.c.l.b16 %v228
    %v721 = vunpack.c.h.b16 %v228
    %v722 = vunpack.c.l.b16 %v229
    %v723 = vunpack.c.h.b16 %v229
    %v724 = vunpack.c.l.b16 %v230
    %v725 = vunpack.c.h.b16 %v230
    %v726 = vunpack.c.l.b16 %v231
    %v727 = vunpack.c.h.b16 %v231
    %v728 = vunpack.c.l.b16 %v232
    %v729 = vunpack.c.h.b16 %v232
    %v730 = vunpack.c.l.b16 %v233
    %v731 = vunpack.c.h.b16 %v233
    %v732 = vunpack.c.l.b16 %v234
    %v733 = vunpack.c.h.b16 %v234
    %v734 = vunpack.c.l.b16 %v235
    %v735 = vunpack.c.h.b16 %v235
    %v736 = vunpack.c.l.b16 %v236
    %v737 = vunpack.c.h.b16 %v236
    %v738 = vunpack.c.l.b16 %v237
    %v739 = vunpack.c.h.b16 %v237
    %v740 = vunpack.c.l.b16 %v238
    %v741 = vunpack.c.h.b16 %v238
    %v742 = vunpack.c.l.b16 %v239
    %v743 = vunpack.c.h.b16 %v239
    %v744 = vunpack.c.l.b16 %v240
    %v745 = vunpack.c.h.b16 %v240
    %v746 = vunpack.c.l.b16 %v241
    %v747 = vunpack.c.h.b16 %v241
    %v748 = vunpack.c.l.b16 %v242
    %v749 = vunpack.c.h.b16 %v242
    %v750 = vunpack.c.l.b16 %v243
    %v751 = vunpack.c.h.b16 %v243
    %v752 = vunpack.c.l.b16 %v244
    %v753 = vunpack.c.h.b16 %v244
    %v754 = vunpack.c.l.b16 %v245
    %v755 = vunpack.c.h.b16 %v245
    %v756 = vunpack.c.l.b16 %v246
    %v757 = vunpack.c.h.b16 %v246
    %v758 = vunpack.c.l.b16 %v247
    %v759 = vunpack.c.h.b16 %v247
    %v760 = vunpack.c.l.b16 %v248
    %v761 = vunpack.c.h.b16 %v248
    %v762 = vunpack.c.l.b16 %v249
    %v763 = vunpack.c.h.b16 %v249
    %v764 = vunpack.c.l.b16 %v250
    %v765 = vunpack.c.h.b16 %v250
    %v766 = vunpack.c.l.b16 %v251
    %v767 = vunpack.c.h.b16 %v251
    %v768 = vunpack.c.l.b16 %v252
    %v769 = vunpack.c.h.b16 %v252
    %v770 = vunpack.c.l.b16 %v253
    %v771 = vunpack.c.h.b16 %v253
    %v772 = vunpack.c.l.b16 %v254
    %v773 = vunpack.c.h.b16 %v254
    %v774 = vunpack.c.l.b16 %v255
    %v775 = vunpack.c.h.b16 %v255
    %v776 = vunpack.c.l.b16 %v256
    %v777 = vunpack.c.h.b16 %v256
    %v778 = vunpack.c.l.b16 %v257
    %v779 = vunpack.c.h.b16 %v257
    %v780 = vunpack.c.l.b16 %v258
    %v781 = vunpack.c.h.b16 %v258
    %v782 = vunpack.c.l.b16 %v259
    %v783 = vunpack.c.h.b16 %v259
    %v784 = vunpack.c.l.b16 %v260
    %v785 = vunpack.c.h.b16 %v260
    %v786 = vunpack.c.l.b16 %v261
    %v787 = vunpack.c.h.b16 %v261
    %v788 = vunpack.c.l.b16 %v262
    %v789 = vunpack.c.h.b16 %v262
    %v790 = vunpack.c.l.b16 %v263
    %v791 = vunpack.c.h.b16 %v263
    %v792 = vunpack.c.l.b16 %v264
    %v793 = vunpack.c.h.b16 %v264
    %v794 = vunpack.c.l.b16 %v265
    %v795 = vunpack.c.h.b16 %v265
    %v796 = vunpack.c.l.b16 %v266
    %v797 = vunpack.c.h.b16 %v266
    %v798 = vunpack.c.l.b16 %v267
    %v799 = vunpack.c.h.b16 %v267
    %v800 = vunpack.c.l.b16 %v268
    %v801 = vunpack.c.h.b16 %v268
    %v802 = vunpack.c.l.b16 %v269
    %v803 = vunpack.c.h.b16 %v269
    %v804 = vunpack.c.l.b16 %v270
    %v805 = vunpack.c.h.b16 %v270
    %v806 = vunpack.c.l.b16 %v271
    %v807 = vunpack.c.h.b16 %v271
    %v808 = vunpack.c.l.b16 %v272
    %v809 = vunpack.c.h.b16 %v272
    %v810 = vunpack.c.l.b16 %v273
    %v811 = vunpack.c.h.b16 %v273
    %v812 = vunpack.c.l.b16 %v274
    %v813 = vunpack.c.h.b16 %v274
    %v814 = vunpack.c.l.b16 %v275
    %v815 = vunpack.c.h.b16 %v275
    %v816 = vunpack.c.l.b16 %v276
    %v817 = vunpack.c.h.b16 %v276
    %v818 = vunpack.c.l.b16 %v277
    %v819 = vunpack.c.h.b16 %v277
    %v820 = vunpack.c.l.b16 %v278
    %v821 = vunpack.c.h.b16 %v278
    %v822 = vunpack.c.l.b16 %v279
    %v823 = vunpack.c.h.b16 %v279
    %v824 = vunpack.c.l.b16 %v280
    %v825 = vunpack.c.h.b16 %v280
    %v826 = vunpack.c.l.b16 %v281
    %v827 = vunpack.c.h.b16 %v281
    %v828 = vunpack.c.l.b16 %v282
    %v829 = vunpack.c.h.b16 %v282
    %v830 = vunpack.c.l.b16 %v283
    %v831 = vunpack.c.h.b16 %v283
    %v832 = vunpack.c.l.b16 %v284
    %v833 = vunpack.c.h.b16 %v284
    %v834 = vunpack.c.l.b16 %v285
    %v835 = vunpack.c.h.b16 %v285
    %v836 = vunpack.c.l.b16 %v286
    %v837 = vunpack.c.h.b16 %v286
    %v838 = vunpack.c.l.b16 %v287
    %v839 = vunpack.c.h.b16 %v287
    %v840 = vunpack.c.l.b16 %v288
    %v841 = vunpack.c.h.b16 %v288
    %v842 = vunpack.c.l.b16 %v289
    %v843 = vunpack.c.h.b16 %v289
    %v844 = vunpack.c.l.b16 %v290
    %v845 = vunpack.c.h.b16 %v290
    %v846 = vunpack.c.l.b16 %v291
    %v847 = vunpack.c.h.b16 %v291
    %v848 = vunpack.c.l.b16 %v292
    %v849 = vunpack.c.h.b16 %v292
    %v850 = vunpack.c.l.b16 %v293
    %v851 = vunpack.c.h.b16 %v293
    %v852 = vunpack.c.l.b16 %v294
    %v853 = vunpack.c.h.b16 %v294
    %v854 = vunpack.c.l.b16 %v295
    %v855 = vunpack.c.h.b16 %v295
    %v856 = vunpack.c.l.b16 %v296
    %v857 = vunpack.c.h.b16 %v296
    %v858 = vunpack.c.l.b16 %v297
    %v859 = vunpack.c.h.b16 %v297
    %v860 = vpack.c.b16 %v612, %v604
    %v861 = vpack.c.b16 %v613, %v605
    %v862 = vpack.c.b16 %v614, %v606
    %v863 = vpack.c.b16 %v615, %v607
    %v864 = vpack.c.b16 %v616, %v608
    %v865 = vpack.c.b16 %v617, %v609
    %v866 = vpack.c.b16 %v618, %v610
    %v867 = vpack.c.b16 %v619, %v611
    %v868 = vpack.c.b16 %v628, %v620
    %v869 = vpack.c.b16 %v629, %v621
    %v870 = vpack.c.b16 %v630, %v622
    %v871 = vpack.c.b16 %v631, %v623
    %v872 = vpack.c.b16 %v632, %v624
    %v873 = vpack.c.b16 %v633, %v625
    %v874 = vpack.c.b16 %v634, %v626
    %v875 = vpack.c.b16 %v635, %v627
    %v876 = vpack.c.b16 %v644, %v636
    %v877 = vpack.c.b16 %v645, %v637
    %v878 = vpack.c.b16 %v646, %v638
    %v879 = vpack.c.b16 %v647, %v639
    %v880 = vpack.c.b16 %v648, %v640
    %v881 = vpack.c.b16 %v649, %v641
    %v882 = vpack.c.b16 %v650, %v642
    %v883 = vpack.c.b16 %v651, %v643
    %v884 = vpack.c.b16 %v660, %v652
    %v885 = vpack.c.b16 %v661, %v653
    %v886 = vpack.c.b16 %v662, %v654
    %v887 = vpack.c.b16 %v663, %v655
    %v888 = vpack.c.b16 %v664, %v656
    %v889 = vpack.c.b16 %v665, %v657
    %v890 = vpack.c.b16 %v666, %v658
    %v891 = vpack.c.b16 %v667, %v659
    %v892 = vpack.c.b16 %v676, %v668
    %v893 = vpack.c.b16 %v677, %v669
    %v894 = vpack.c.b16 %v678, %v670
    %v895 = vpack.c.b16 %v679, %v671
    %v896 = vpack.c.b16 %v680, %v672
    %v897 = vpack.c.b16 %v681, %v673
    %v898 = vpack.c.b16 %v682, %v674
    %v899 = vpack.c.b16 %v683, %v675
    %v900 = vpack.c.b16 %v692, %v684
    %v901 = vpack.c.b16 %v693, %v685
    %v902 = vpack.c.b16 %v694, %v686
    %v903 = vpack.c.b16 %v695, %v687
    %v904 = vpack.c.b16 %v696, %v688
    %v905 = vpack.c.b16 %v697, %v689
    %v906 = vpack.c.b16 %v698, %v690
    %v907 = vpack.c.b16 %v699, %v691
    %v908 = vpack.c.b16 %v708, %v700
    %v909 = vpack.c.b16 %v709, %v701
    %v910 = vpack.c.b16 %v710, %v702
    %v911 = vpack.c.b16 %v711, %v703
    %v912 = vpack.c.b16 %v712, %v704
    %v913 = vpack.c.b16 %v713, %v705
    %v914 = vpack.c.b16 %v714, %v706
    %v915 = vpack.c.b16 %v715, %v707
    %v916 = vpack.c.b16 %v724, %v716
    %v917 = vpack.c.b16 %v725, %v717
    %v918 = vpack.c.b16 %v726, %v718
    %v919 = vpack.c.b16 %v727, %v719
    %v920 = vpack.c.b16 %v728, %v720
    %v921 = vpack.c.b16 %v729, %v721
    %v922 = vpack.c.b16 %v730, %v722
    %v923 = vpack.c.b16 %v731, %v723
    %v924 = vpack.c.b16 %v740, %v732
    %v925 = vpack.c.b16 %v741, %v733
    %v926 = vpack.c.b16 %v742, %v734
    %v927 = vpack.c.b16 %v743, %v735
    %v928 = vpack.c.b16 %v744, %v736
    %v929 = vpack.c.b16 %v745, %v737
    %v930 = vpack.c.b16 %v746, %v738
    %v931 = vpack.c.b16 %v747, %v739
    %v932 = vpack.c.b16 %v756, %v748
    %v933 = vpack.c.b16 %v757, %v749
    %v934 = vpack.c.b16 %v758, %v750
    %v935 = vpack.c.b16 %v759, %v751
    %v936 = vpack.c.b16 %v760, %v752
    %v937 = vpack.c.b16 %v761, %v753
    %v938 = vpack.c.b16 %v762, %v754
    %v939 = vpack.c.b16 %v763, %v755
    %v940 = vpack.c.b16 %v772, %v764
    %v941 = vpack.c.b16 %v773, %v765
    %v942 = vpack.c.b16 %v774, %v766
    %v943 = vpack.c.b16 %v775, %v767
    %v944 = vpack.c.b16 %v776, %v768
    %v945 = vpack.c.b16 %v777, %v769
    %v946 = vpack.c.b16 %v778, %v770
    %v947 = vpack.c.b16 %v779, %v771
    %v948 = vpack.c.b16 %v788, %v780
    %v949 = vpack.c.b16 %v789, %v781
    %v950 = vpack.c.b16 %v790, %v782
    %v951 = vpack.c.b16 %v791, %v783
    %v952 = vpack.c.b16 %v792, %v784
    %v953 = vpack.c.b16 %v793, %v785
    %v954 = vpack.c.b16 %v794, %v786
    %v955 = vpack.c.b16 %v795, %v787
    %v956 = vpack.c.b16 %v804, %v796
    %v957 = vpack.c.b16 %v805, %v797
    %v958 = vpack.c.b16 %v806, %v798
    %v959 = vpack.c.b16 %v807, %v799
    %v960 = vpack.c.b16 %v808, %v800
    %v961 = vpack.c.b16 %v809, %v801
    %v962 = vpack.c.b16 %v810, %v802
    %v963 = vpack.c.b16 %v811, %v803
    %v964 = vpack.c.b16 %v820, %v812
    %v965 = vpack.c.b16 %v821, %v813
    %v966 = vpack.c.b16 %v822, %v814
    %v967 = vpack.c.b16 %v823, %v815
    %v968 = vpack.c.b16 %v824, %v816
    %v969 = vpack.c.b16 %v825, %v817
    %v970 = vpack.c.b16 %v826, %v818
    %v971 = vpack.c.b16 %v827, %v819
    %v972 = vpack.c.b16 %v836, %v828
    %v973 = vpack.c.b16 %v837, %v829
    %v974 = vpack.c.b16 %v838, %v830
    %v975 = vpack.c.b16 %v839, %v831
    %v976 = vpack.c.b16 %v840, %v832
    %v977 = vpack.c.b16 %v841, %v833
    %v978 = vpack.c.b16 %v842, %v834
    %v979 = vpack.c.b16 %v843, %v835
    %v980 = vpack.c.b16 %v852, %v844
    %v981 = vpack.c.b16 %v853, %v845
    %v982 = vpack.c.b16 %v854, %v846
    %v983 = vpack.c.b16 %v855, %v847
    %v984 = vpack.c.b16 %v856, %v848
    %v985 = vpack.c.b16 %v857, %v849
    %v986 = vpack.c.b16 %v858, %v850
    %v987 = vpack.c.b16 %v859, %v851
    %1116 = vmatpush.bf16.msra.mxu0 %v916
    %1117 = vmatpush.bf16.msra.mxu0 %v908
    %1118 = vmatpush.bf16.msra.mxu0 %v900
    %1119 = vmatpush.bf16.msra.mxu0 %v892
    %1120 = vmatpush.bf16.msra.mxu0 %v884
    %1121 = vmatpush.bf16.msra.mxu0 %v876
    %1122 = vmatpush.bf16.msra.mxu0 %v868
    %1123 = vmatpush.bf16.msra.mxu0 %v860
    %1124 = vmatmul.bf16.gmra.mxu0 %v412
    %v1125 = vpop.f32.mrf.mxu0
    %v1126 = vadd.f32 %v300, %v1125
    %v1127 = vpop.f32.mrf.mxu0
    %v1128 = vadd.f32 %v300, %v1127
    %1129 = vmatmul.bf16.gmra.mxu0 %v414
    %v1130 = vpop.f32.mrf.mxu0
    %v1131 = vadd.f32 %v300, %v1130
    %v1132 = vpop.f32.mrf.mxu0
    %v1133 = vadd.f32 %v300, %v1132
    %1134 = vmatmul.bf16.gmra.mxu0 %v416
    %v1135 = vpop.f32.mrf.mxu0
    %v1136 = vadd.f32 %v300, %v1135
    %v1137 = vpop.f32.mrf.mxu0
    %v1138 = vadd.f32 %v300, %v1137
    %1139 = vmatmul.bf16.gmra.mxu0 %v418
    %v1140 = vpop.f32.mrf.mxu0
    %v1141 = vadd.f32 %v300, %v1140
    %v1142 = vpop.f32.mrf.mxu0
    %v1143 = vadd.f32 %v300, %v1142
    %1144 = vmatmul.bf16.gmra.mxu0 %v420
    %v1145 = vpop.f32.mrf.mxu0
    %v1146 = vadd.f32 %v300, %v1145
    %v1147 = vpop.f32.mrf.mxu0
    %v1148 = vadd.f32 %v300, %v1147
    %1149 = vmatmul.bf16.gmra.mxu0 %v422
    %v1150 = vpop.f32.mrf.mxu0
    %v1151 = vadd.f32 %v300, %v1150
    %v1152 = vpop.f32.mrf.mxu0
    %v1153 = vadd.f32 %v300, %v1152
    %1154 = vmatmul.bf16.gmra.mxu0 %v424
    %v1155 = vpop.f32.mrf.mxu0
    %v1156 = vadd.f32 %v300, %v1155
    %v1157 = vpop.f32.mrf.mxu0
    %v1158 = vadd.f32 %v300, %v1157
    %1159 = vmatmul.bf16.gmra.mxu0 %v426
    %v1160 = vpop.f32.mrf.mxu0
    %v1161 = vadd.f32 %v300, %v1160
    %v1162 = vpop.f32.mrf.mxu0
    %v1163 = vadd.f32 %v300, %v1162
    %1164 = vmatmul.bf16.gmra.mxu0 %v428
    %v1165 = vpop.f32.mrf.mxu0
    %v1166 = vadd.f32 %v300, %v1165
    %v1167 = vpop.f32.mrf.mxu0
    %v1168 = vadd.f32 %v300, %v1167
    %1169 = vmatmul.bf16.gmra.mxu0 %v430
    %v1170 = vpop.f32.mrf.mxu0
    %v1171 = vadd.f32 %v300, %v1170
    %v1172 = vpop.f32.mrf.mxu0
    %v1173 = vadd.f32 %v300, %v1172
    %1174 = vmatmul.bf16.gmra.mxu0 %v432
    %v1175 = vpop.f32.mrf.mxu0
    %v1176 = vadd.f32 %v300, %v1175
    %v1177 = vpop.f32.mrf.mxu0
    %v1178 = vadd.f32 %v300, %v1177
    %1179 = vmatmul.bf16.gmra.mxu0 %v434
    %v1180 = vpop.f32.mrf.mxu0
    %v1181 = vadd.f32 %v300, %v1180
    %v1182 = vpop.f32.mrf.mxu0
    %v1183 = vadd.f32 %v300, %v1182
    %1184 = vmatmul.bf16.gmra.mxu0 %v436
    %v1185 = vpop.f32.mrf.mxu0
    %v1186 = vadd.f32 %v300, %v1185
    %v1187 = vpop.f32.mrf.mxu0
    %v1188 = vadd.f32 %v300, %v1187
    %1189 = vmatmul.bf16.gmra.mxu0 %v438
    %v1190 = vpop.f32.mrf.mxu0
    %v1191 = vadd.f32 %v300, %v1190
    %v1192 = vpop.f32.mrf.mxu0
    %v1193 = vadd.f32 %v300, %v1192
    %1194 = vmatmul.bf16.gmra.mxu0 %v440
    %v1195 = vpop.f32.mrf.mxu0
    %v1196 = vadd.f32 %v300, %v1195
    %v1197 = vpop.f32.mrf.mxu0
    %v1198 = vadd.f32 %v300, %v1197
    %1199 = vmatmul.bf16.gmra.mxu0 %v442
    %v1200 = vpop.f32.mrf.mxu0
    %v1201 = vadd.f32 %v300, %v1200
    %v1202 = vpop.f32.mrf.mxu0
    %v1203 = vadd.f32 %v300, %v1202
    %1204 = vdwg.mxu0
    %1205 = vmatpush.bf16.msra.mxu0 %v980
    %1206 = vmatpush.bf16.msra.mxu0 %v972
    %1207 = vmatpush.bf16.msra.mxu0 %v964
    %1208 = vmatpush.bf16.msra.mxu0 %v956
    %1209 = vmatpush.bf16.msra.mxu0 %v948
    %1210 = vmatpush.bf16.msra.mxu0 %v940
    %1211 = vmatpush.bf16.msra.mxu0 %v932
    %1212 = vmatpush.bf16.msra.mxu0 %v924
    %1213 = vmatmul.bf16.gmra.mxu0 %v413
    %v1214 = vpop.f32.mrf.mxu0
    %v1215 = vadd.f32 %v1126, %v1214
    %v1216 = vpop.f32.mrf.mxu0
    %v1217 = vadd.f32 %v1128, %v1216
    %1218 = vmatmul.bf16.gmra.mxu0 %v415
    %v1219 = vpop.f32.mrf.mxu0
    %v1220 = vadd.f32 %v1131, %v1219
    %v1221 = vpop.f32.mrf.mxu0
    %v1222 = vadd.f32 %v1133, %v1221
    %1223 = vmatmul.bf16.gmra.mxu0 %v417
    %v1224 = vpop.f32.mrf.mxu0
    %v1225 = vadd.f32 %v1136, %v1224
    %v1226 = vpop.f32.mrf.mxu0
    %v1227 = vadd.f32 %v1138, %v1226
    %1228 = vmatmul.bf16.gmra.mxu0 %v419
    %v1229 = vpop.f32.mrf.mxu0
    %v1230 = vadd.f32 %v1141, %v1229
    %v1231 = vpop.f32.mrf.mxu0
    %v1232 = vadd.f32 %v1143, %v1231
    %1233 = vmatmul.bf16.gmra.mxu0 %v421
    %v1234 = vpop.f32.mrf.mxu0
    %v1235 = vadd.f32 %v1146, %v1234
    %v1236 = vpop.f32.mrf.mxu0
    %v1237 = vadd.f32 %v1148, %v1236
    %1238 = vmatmul.bf16.gmra.mxu0 %v423
    %v1239 = vpop.f32.mrf.mxu0
    %v1240 = vadd.f32 %v1151, %v1239
    %v1241 = vpop.f32.mrf.mxu0
    %v1242 = vadd.f32 %v1153, %v1241
    %1243 = vmatmul.bf16.gmra.mxu0 %v425
    %v1244 = vpop.f32.mrf.mxu0
    %v1245 = vadd.f32 %v1156, %v1244
    %v1246 = vpop.f32.mrf.mxu0
    %v1247 = vadd.f32 %v1158, %v1246
    %1248 = vmatmul.bf16.gmra.mxu0 %v427
    %v1249 = vpop.f32.mrf.mxu0
    %v1250 = vadd.f32 %v1161, %v1249
    %v1251 = vpop.f32.mrf.mxu0
    %v1252 = vadd.f32 %v1163, %v1251
    %1253 = vmatmul.bf16.gmra.mxu0 %v429
    %v1254 = vpop.f32.mrf.mxu0
    %v1255 = vadd.f32 %v1166, %v1254
    %v1256 = vpop.f32.mrf.mxu0
    %v1257 = vadd.f32 %v1168, %v1256
    %1258 = vmatmul.bf16.gmra.mxu0 %v431
    %v1259 = vpop.f32.mrf.mxu0
    %v1260 = vadd.f32 %v1171, %v1259
    %v1261 = vpop.f32.mrf.mxu0
    %v1262 = vadd.f32 %v1173, %v1261
    %1263 = vmatmul.bf16.gmra.mxu0 %v433
    %v1264 = vpop.f32.mrf.mxu0
    %v1265 = vadd.f32 %v1176, %v1264
    %v1266 = vpop.f32.mrf.mxu0
    %v1267 = vadd.f32 %v1178, %v1266
    %1268 = vmatmul.bf16.gmra.mxu0 %v435
    %v1269 = vpop.f32.mrf.mxu0
    %v1270 = vadd.f32 %v1181, %v1269
    %v1271 = vpop.f32.mrf.mxu0
    %v1272 = vadd.f32 %v1183, %v1271
    %1273 = vmatmul.bf16.gmra.mxu0 %v437
    %v1274 = vpop.f32.mrf.mxu0
    %v1275 = vadd.f32 %v1186, %v1274
    %v1276 = vpop.f32.mrf.mxu0
    %v1277 = vadd.f32 %v1188, %v1276
    %1278 = vmatmul.bf16.gmra.mxu0 %v439
    %v1279 = vpop.f32.mrf.mxu0
    %v1280 = vadd.f32 %v1191, %v1279
    %v1281 = vpop.f32.mrf.mxu0
    %v1282 = vadd.f32 %v1193, %v1281
    %1283 = vmatmul.bf16.gmra.mxu0 %v441
    %v1284 = vpop.f32.mrf.mxu0
    %v1285 = vadd.f32 %v1196, %v1284
    %v1286 = vpop.f32.mrf.mxu0
    %v1287 = vadd.f32 %v1198, %v1286
    %1288 = vmatmul.bf16.gmra.mxu0 %v443
    %v1289 = vpop.f32.mrf.mxu0
    %v1290 = vadd.f32 %v1201, %v1289
    %v1291 = vpop.f32.mrf.mxu0
    %v1292 = vadd.f32 %v1203, %v1291
    %1293 = vdwg.mxu0
    %1294 = vmatpush.bf16.msra.mxu0 %v917
    %1295 = vmatpush.bf16.msra.mxu0 %v909
    %1296 = vmatpush.bf16.msra.mxu0 %v901
    %1297 = vmatpush.bf16.msra.mxu0 %v893
    %1298 = vmatpush.bf16.msra.mxu0 %v885
    %1299 = vmatpush.bf16.msra.mxu0 %v877
    %1300 = vmatpush.bf16.msra.mxu0 %v869
    %1301 = vmatpush.bf16.msra.mxu0 %v861
    %1302 = vmatmul.bf16.gmra.mxu0 %v412
    %v1303 = vpop.f32.mrf.mxu0
    %v1304 = vadd.f32 %v301, %v1303
    %v1305 = vpop.f32.mrf.mxu0
    %v1306 = vadd.f32 %v301, %v1305
    %1307 = vmatmul.bf16.gmra.mxu0 %v414
    %v1308 = vpop.f32.mrf.mxu0
    %v1309 = vadd.f32 %v301, %v1308
    %v1310 = vpop.f32.mrf.mxu0
    %v1311 = vadd.f32 %v301, %v1310
    %1312 = vmatmul.bf16.gmra.mxu0 %v416
    %v1313 = vpop.f32.mrf.mxu0
    %v1314 = vadd.f32 %v301, %v1313
    %v1315 = vpop.f32.mrf.mxu0
    %v1316 = vadd.f32 %v301, %v1315
    %1317 = vmatmul.bf16.gmra.mxu0 %v418
    %v1318 = vpop.f32.mrf.mxu0
    %v1319 = vadd.f32 %v301, %v1318
    %v1320 = vpop.f32.mrf.mxu0
    %v1321 = vadd.f32 %v301, %v1320
    %1322 = vmatmul.bf16.gmra.mxu0 %v420
    %v1323 = vpop.f32.mrf.mxu0
    %v1324 = vadd.f32 %v301, %v1323
    %v1325 = vpop.f32.mrf.mxu0
    %v1326 = vadd.f32 %v301, %v1325
    %1327 = vmatmul.bf16.gmra.mxu0 %v422
    %v1328 = vpop.f32.mrf.mxu0
    %v1329 = vadd.f32 %v301, %v1328
    %v1330 = vpop.f32.mrf.mxu0
    %v1331 = vadd.f32 %v301, %v1330
    %1332 = vmatmul.bf16.gmra.mxu0 %v424
    %v1333 = vpop.f32.mrf.mxu0
    %v1334 = vadd.f32 %v301, %v1333
    %v1335 = vpop.f32.mrf.mxu0
    %v1336 = vadd.f32 %v301, %v1335
    %1337 = vmatmul.bf16.gmra.mxu0 %v426
    %v1338 = vpop.f32.mrf.mxu0
    %v1339 = vadd.f32 %v301, %v1338
    %v1340 = vpop.f32.mrf.mxu0
    %v1341 = vadd.f32 %v301, %v1340
    %1342 = vmatmul.bf16.gmra.mxu0 %v428
    %v1343 = vpop.f32.mrf.mxu0
    %v1344 = vadd.f32 %v301, %v1343
    %v1345 = vpop.f32.mrf.mxu0
    %v1346 = vadd.f32 %v301, %v1345
    %1347 = vmatmul.bf16.gmra.mxu0 %v430
    %v1348 = vpop.f32.mrf.mxu0
    %v1349 = vadd.f32 %v301, %v1348
    %v1350 = vpop.f32.mrf.mxu0
    %v1351 = vadd.f32 %v301, %v1350
    %1352 = vmatmul.bf16.gmra.mxu0 %v432
    %v1353 = vpop.f32.mrf.mxu0
    %v1354 = vadd.f32 %v301, %v1353
    %v1355 = vpop.f32.mrf.mxu0
    %v1356 = vadd.f32 %v301, %v1355
    %1357 = vmatmul.bf16.gmra.mxu0 %v434
    %v1358 = vpop.f32.mrf.mxu0
    %v1359 = vadd.f32 %v301, %v1358
    %v1360 = vpop.f32.mrf.mxu0
    %v1361 = vadd.f32 %v301, %v1360
    %1362 = vmatmul.bf16.gmra.mxu0 %v436
    %v1363 = vpop.f32.mrf.mxu0
    %v1364 = vadd.f32 %v301, %v1363
    %v1365 = vpop.f32.mrf.mxu0
    %v1366 = vadd.f32 %v301, %v1365
    %1367 = vmatmul.bf16.gmra.mxu0 %v438
    %v1368 = vpop.f32.mrf.mxu0
    %v1369 = vadd.f32 %v301, %v1368
    %v1370 = vpop.f32.mrf.mxu0
    %v1371 = vadd.f32 %v301, %v1370
    %1372 = vmatmul.bf16.gmra.mxu0 %v440
    %v1373 = vpop.f32.mrf.mxu0
    %v1374 = vadd.f32 %v301, %v1373
    %v1375 = vpop.f32.mrf.mxu0
    %v1376 = vadd.f32 %v301, %v1375
    %1377 = vmatmul.bf16.gmra.mxu0 %v442
    %v1378 = vpop.f32.mrf.mxu0
    %v1379 = vadd.f32 %v301, %v1378
    %v1380 = vpop.f32.mrf.mxu0
    %v1381 = vadd.f32 %v301, %v1380
    %1382 = vdwg.mxu0
    %1383 = vmatpush.bf16.msra.mxu0 %v981
    %1384 = vmatpush.bf16.msra.mxu0 %v973
    %1385 = vmatpush.bf16.msra.mxu0 %v965
    %1386 = vmatpush.bf16.msra.mxu0 %v957
    %1387 = vmatpush.bf16.msra.mxu0 %v949
    %1388 = vmatpush.bf16.msra.mxu0 %v941
    %1389 = vmatpush.bf16.msra.mxu0 %v933
    %1390 = vmatpush.bf16.msra.mxu0 %v925
    %1391 = vmatmul.bf16.gmra.mxu0 %v413
    %v1392 = vpop.f32.mrf.mxu0
    %v1393 = vadd.f32 %v1304, %v1392
    %v1394 = vpop.f32.mrf.mxu0
    %v1395 = vadd.f32 %v1306, %v1394
    %1396 = vmatmul.bf16.gmra.mxu0 %v415
    %v1397 = vpop.f32.mrf.mxu0
    %v1398 = vadd.f32 %v1309, %v1397
    %v1399 = vpop.f32.mrf.mxu0
    %v1400 = vadd.f32 %v1311, %v1399
    %1401 = vmatmul.bf16.gmra.mxu0 %v417
    %v1402 = vpop.f32.mrf.mxu0
    %v1403 = vadd.f32 %v1314, %v1402
    %v1404 = vpop.f32.mrf.mxu0
    %v1405 = vadd.f32 %v1316, %v1404
    %1406 = vmatmul.bf16.gmra.mxu0 %v419
    %v1407 = vpop.f32.mrf.mxu0
    %v1408 = vadd.f32 %v1319, %v1407
    %v1409 = vpop.f32.mrf.mxu0
    %v1410 = vadd.f32 %v1321, %v1409
    %1411 = vmatmul.bf16.gmra.mxu0 %v421
    %v1412 = vpop.f32.mrf.mxu0
    %v1413 = vadd.f32 %v1324, %v1412
    %v1414 = vpop.f32.mrf.mxu0
    %v1415 = vadd.f32 %v1326, %v1414
    %1416 = vmatmul.bf16.gmra.mxu0 %v423
    %v1417 = vpop.f32.mrf.mxu0
    %v1418 = vadd.f32 %v1329, %v1417
    %v1419 = vpop.f32.mrf.mxu0
    %v1420 = vadd.f32 %v1331, %v1419
    %1421 = vmatmul.bf16.gmra.mxu0 %v425
    %v1422 = vpop.f32.mrf.mxu0
    %v1423 = vadd.f32 %v1334, %v1422
    %v1424 = vpop.f32.mrf.mxu0
    %v1425 = vadd.f32 %v1336, %v1424
    %1426 = vmatmul.bf16.gmra.mxu0 %v427
    %v1427 = vpop.f32.mrf.mxu0
    %v1428 = vadd.f32 %v1339, %v1427
    %v1429 = vpop.f32.mrf.mxu0
    %v1430 = vadd.f32 %v1341, %v1429
    %1431 = vmatmul.bf16.gmra.mxu0 %v429
    %v1432 = vpop.f32.mrf.mxu0
    %v1433 = vadd.f32 %v1344, %v1432
    %v1434 = vpop.f32.mrf.mxu0
    %v1435 = vadd.f32 %v1346, %v1434
    %1436 = vmatmul.bf16.gmra.mxu0 %v431
    %v1437 = vpop.f32.mrf.mxu0
    %v1438 = vadd.f32 %v1349, %v1437
    %v1439 = vpop.f32.mrf.mxu0
    %v1440 = vadd.f32 %v1351, %v1439
    %1441 = vmatmul.bf16.gmra.mxu0 %v433
    %v1442 = vpop.f32.mrf.mxu0
    %v1443 = vadd.f32 %v1354, %v1442
    %v1444 = vpop.f32.mrf.mxu0
    %v1445 = vadd.f32 %v1356, %v1444
    %1446 = vmatmul.bf16.gmra.mxu0 %v435
    %v1447 = vpop.f32.mrf.mxu0
    %v1448 = vadd.f32 %v1359, %v1447
    %v1449 = vpop.f32.mrf.mxu0
    %v1450 = vadd.f32 %v1361, %v1449
    %1451 = vmatmul.bf16.gmra.mxu0 %v437
    %v1452 = vpop.f32.mrf.mxu0
    %v1453 = vadd.f32 %v1364, %v1452
    %v1454 = vpop.f32.mrf.mxu0
    %v1455 = vadd.f32 %v1366, %v1454
    %1456 = vmatmul.bf16.gmra.mxu0 %v439
    %v1457 = vpop.f32.mrf.mxu0
    %v1458 = vadd.f32 %v1369, %v1457
    %v1459 = vpop.f32.mrf.mxu0
    %v1460 = vadd.f32 %v1371, %v1459
    %1461 = vmatmul.bf16.gmra.mxu0 %v441
    %v1462 = vpop.f32.mrf.mxu0
    %v1463 = vadd.f32 %v1374, %v1462
    %v1464 = vpop.f32.mrf.mxu0
    %v1465 = vadd.f32 %v1376, %v1464
    %1466 = vmatmul.bf16.gmra.mxu0 %v443
    %v1467 = vpop.f32.mrf.mxu0
    %v1468 = vadd.f32 %v1379, %v1467
    %v1469 = vpop.f32.mrf.mxu0
    %v1470 = vadd.f32 %v1381, %v1469
    %1471 = vdwg.mxu0
    %1472 = vmatpush.bf16.msra.mxu0 %v918
    %1473 = vmatpush.bf16.msra.mxu0 %v910
    %1474 = vmatpush.bf16.msra.mxu0 %v902
    %1475 = vmatpush.bf16.msra.mxu0 %v894
    %1476 = vmatpush.bf16.msra.mxu0 %v886
    %1477 = vmatpush.bf16.msra.mxu0 %v878
    %1478 = vmatpush.bf16.msra.mxu0 %v870
    %1479 = vmatpush.bf16.msra.mxu0 %v862
    %1480 = vmatmul.bf16.gmra.mxu0 %v412
    %v1481 = vpop.f32.mrf.mxu0
    %v1482 = vadd.f32 %v302, %v1481
    %v1483 = vpop.f32.mrf.mxu0
    %v1484 = vadd.f32 %v302, %v1483
    %1485 = vmatmul.bf16.gmra.mxu0 %v414
    %v1486 = vpop.f32.mrf.mxu0
    %v1487 = vadd.f32 %v302, %v1486
    %v1488 = vpop.f32.mrf.mxu0
    %v1489 = vadd.f32 %v302, %v1488
    %1490 = vmatmul.bf16.gmra.mxu0 %v416
    %v1491 = vpop.f32.mrf.mxu0
    %v1492 = vadd.f32 %v302, %v1491
    %v1493 = vpop.f32.mrf.mxu0
    %v1494 = vadd.f32 %v302, %v1493
    %1495 = vmatmul.bf16.gmra.mxu0 %v418
    %v1496 = vpop.f32.mrf.mxu0
    %v1497 = vadd.f32 %v302, %v1496
    %v1498 = vpop.f32.mrf.mxu0
    %v1499 = vadd.f32 %v302, %v1498
    %1500 = vmatmul.bf16.gmra.mxu0 %v420
    %v1501 = vpop.f32.mrf.mxu0
    %v1502 = vadd.f32 %v302, %v1501
    %v1503 = vpop.f32.mrf.mxu0
    %v1504 = vadd.f32 %v302, %v1503
    %1505 = vmatmul.bf16.gmra.mxu0 %v422
    %v1506 = vpop.f32.mrf.mxu0
    %v1507 = vadd.f32 %v302, %v1506
    %v1508 = vpop.f32.mrf.mxu0
    %v1509 = vadd.f32 %v302, %v1508
    %1510 = vmatmul.bf16.gmra.mxu0 %v424
    %v1511 = vpop.f32.mrf.mxu0
    %v1512 = vadd.f32 %v302, %v1511
    %v1513 = vpop.f32.mrf.mxu0
    %v1514 = vadd.f32 %v302, %v1513
    %1515 = vmatmul.bf16.gmra.mxu0 %v426
    %v1516 = vpop.f32.mrf.mxu0
    %v1517 = vadd.f32 %v302, %v1516
    %v1518 = vpop.f32.mrf.mxu0
    %v1519 = vadd.f32 %v302, %v1518
    %1520 = vmatmul.bf16.gmra.mxu0 %v428
    %v1521 = vpop.f32.mrf.mxu0
    %v1522 = vadd.f32 %v302, %v1521
    %v1523 = vpop.f32.mrf.mxu0
    %v1524 = vadd.f32 %v302, %v1523
    %1525 = vmatmul.bf16.gmra.mxu0 %v430
    %v1526 = vpop.f32.mrf.mxu0
    %v1527 = vadd.f32 %v302, %v1526
    %v1528 = vpop.f32.mrf.mxu0
    %v1529 = vadd.f32 %v302, %v1528
    %1530 = vmatmul.bf16.gmra.mxu0 %v432
    %v1531 = vpop.f32.mrf.mxu0
    %v1532 = vadd.f32 %v302, %v1531
    %v1533 = vpop.f32.mrf.mxu0
    %v1534 = vadd.f32 %v302, %v1533
    %1535 = vmatmul.bf16.gmra.mxu0 %v434
    %v1536 = vpop.f32.mrf.mxu0
    %v1537 = vadd.f32 %v302, %v1536
    %v1538 = vpop.f32.mrf.mxu0
    %v1539 = vadd.f32 %v302, %v1538
    %1540 = vmatmul.bf16.gmra.mxu0 %v436
    %v1541 = vpop.f32.mrf.mxu0
    %v1542 = vadd.f32 %v302, %v1541
    %v1543 = vpop.f32.mrf.mxu0
    %v1544 = vadd.f32 %v302, %v1543
    %1545 = vmatmul.bf16.gmra.mxu0 %v438
    %v1546 = vpop.f32.mrf.mxu0
    %v1547 = vadd.f32 %v302, %v1546
    %v1548 = vpop.f32.mrf.mxu0
    %v1549 = vadd.f32 %v302, %v1548
    %1550 = vmatmul.bf16.gmra.mxu0 %v440
    %v1551 = vpop.f32.mrf.mxu0
    %v1552 = vadd.f32 %v302, %v1551
    %v1553 = vpop.f32.mrf.mxu0
    %v1554 = vadd.f32 %v302, %v1553
    %1555 = vmatmul.bf16.gmra.mxu0 %v442
    %v1556 = vpop.f32.mrf.mxu0
    %v1557 = vadd.f32 %v302, %v1556
    %v1558 = vpop.f32.mrf.mxu0
    %v1559 = vadd.f32 %v302, %v1558
    %1560 = vdwg.mxu0
    %1561 = vmatpush.bf16.msra.mxu0 %v982
    %1562 = vmatpush.bf16.msra.mxu0 %v974
    %1563 = vmatpush.bf16.msra.mxu0 %v966
    %1564 = vmatpush.bf16.msra.mxu0 %v958
    %1565 = vmatpush.bf16.msra.mxu0 %v950
    %1566 = vmatpush.bf16.msra.mxu0 %v942
    %1567 = vmatpush.bf16.msra.mxu0 %v934
    %1568 = vmatpush.bf16.msra.mxu0 %v926
    %1569 = vmatmul.bf16.gmra.mxu0 %v413
    %v1570 = vpop.f32.mrf.mxu0
    %v1571 = vadd.f32 %v1482, %v1570
    %v1572 = vpop.f32.mrf.mxu0
    %v1573 = vadd.f32 %v1484, %v1572
    %1574 = vmatmul.bf16.gmra.mxu0 %v415
    %v1575 = vpop.f32.mrf.mxu0
    %v1576 = vadd.f32 %v1487, %v1575
    %v1577 = vpop.f32.mrf.mxu0
    %v1578 = vadd.f32 %v1489, %v1577
    %1579 = vmatmul.bf16.gmra.mxu0 %v417
    %v1580 = vpop.f32.mrf.mxu0
    %v1581 = vadd.f32 %v1492, %v1580
    %v1582 = vpop.f32.mrf.mxu0
    %v1583 = vadd.f32 %v1494, %v1582
    %1584 = vmatmul.bf16.gmra.mxu0 %v419
    %v1585 = vpop.f32.mrf.mxu0
    %v1586 = vadd.f32 %v1497, %v1585
    %v1587 = vpop.f32.mrf.mxu0
    %v1588 = vadd.f32 %v1499, %v1587
    %1589 = vmatmul.bf16.gmra.mxu0 %v421
    %v1590 = vpop.f32.mrf.mxu0
    %v1591 = vadd.f32 %v1502, %v1590
    %v1592 = vpop.f32.mrf.mxu0
    %v1593 = vadd.f32 %v1504, %v1592
    %1594 = vmatmul.bf16.gmra.mxu0 %v423
    %v1595 = vpop.f32.mrf.mxu0
    %v1596 = vadd.f32 %v1507, %v1595
    %v1597 = vpop.f32.mrf.mxu0
    %v1598 = vadd.f32 %v1509, %v1597
    %1599 = vmatmul.bf16.gmra.mxu0 %v425
    %v1600 = vpop.f32.mrf.mxu0
    %v1601 = vadd.f32 %v1512, %v1600
    %v1602 = vpop.f32.mrf.mxu0
    %v1603 = vadd.f32 %v1514, %v1602
    %1604 = vmatmul.bf16.gmra.mxu0 %v427
    %v1605 = vpop.f32.mrf.mxu0
    %v1606 = vadd.f32 %v1517, %v1605
    %v1607 = vpop.f32.mrf.mxu0
    %v1608 = vadd.f32 %v1519, %v1607
    %1609 = vmatmul.bf16.gmra.mxu0 %v429
    %v1610 = vpop.f32.mrf.mxu0
    %v1611 = vadd.f32 %v1522, %v1610
    %v1612 = vpop.f32.mrf.mxu0
    %v1613 = vadd.f32 %v1524, %v1612
    %1614 = vmatmul.bf16.gmra.mxu0 %v431
    %v1615 = vpop.f32.mrf.mxu0
    %v1616 = vadd.f32 %v1527, %v1615
    %v1617 = vpop.f32.mrf.mxu0
    %v1618 = vadd.f32 %v1529, %v1617
    %1619 = vmatmul.bf16.gmra.mxu0 %v433
    %v1620 = vpop.f32.mrf.mxu0
    %v1621 = vadd.f32 %v1532, %v1620
    %v1622 = vpop.f32.mrf.mxu0
    %v1623 = vadd.f32 %v1534, %v1622
    %1624 = vmatmul.bf16.gmra.mxu0 %v435
    %v1625 = vpop.f32.mrf.mxu0
    %v1626 = vadd.f32 %v1537, %v1625
    %v1627 = vpop.f32.mrf.mxu0
    %v1628 = vadd.f32 %v1539, %v1627
    %1629 = vmatmul.bf16.gmra.mxu0 %v437
    %v1630 = vpop.f32.mrf.mxu0
    %v1631 = vadd.f32 %v1542, %v1630
    %v1632 = vpop.f32.mrf.mxu0
    %v1633 = vadd.f32 %v1544, %v1632
    %1634 = vmatmul.bf16.gmra.mxu0 %v439
    %v1635 = vpop.f32.mrf.mxu0
    %v1636 = vadd.f32 %v1547, %v1635
    %v1637 = vpop.f32.mrf.mxu0
    %v1638 = vadd.f32 %v1549, %v1637
    %1639 = vmatmul.bf16.gmra.mxu0 %v441
    %v1640 = vpop.f32.mrf.mxu0
    %v1641 = vadd.f32 %v1552, %v1640
    %v1642 = vpop.f32.mrf.mxu0
    %v1643 = vadd.f32 %v1554, %v1642
    %1644 = vmatmul.bf16.gmra.mxu0 %v443
    %v1645 = vpop.f32.mrf.mxu0
    %v1646 = vadd.f32 %v1557, %v1645
    %v1647 = vpop.f32.mrf.mxu0
    %v1648 = vadd.f32 %v1559, %v1647
    %1649 = vdwg.mxu0
    %1650 = vmatpush.bf16.msra.mxu0 %v919
    %1651 = vmatpush.bf16.msra.mxu0 %v911
    %1652 = vmatpush.bf16.msra.mxu0 %v903
    %1653 = vmatpush.bf16.msra.mxu0 %v895
    %1654 = vmatpush.bf16.msra.mxu0 %v887
    %1655 = vmatpush.bf16.msra.mxu0 %v879
    %1656 = vmatpush.bf16.msra.mxu0 %v871
    %1657 = vmatpush.bf16.msra.mxu0 %v863
    %1658 = vmatmul.bf16.gmra.mxu0 %v412
    %v1659 = vpop.f32.mrf.mxu0
    %v1660 = vadd.f32 %v303, %v1659
    %v1661 = vpop.f32.mrf.mxu0
    %v1662 = vadd.f32 %v303, %v1661
    %1663 = vmatmul.bf16.gmra.mxu0 %v414
    %v1664 = vpop.f32.mrf.mxu0
    %v1665 = vadd.f32 %v303, %v1664
    %v1666 = vpop.f32.mrf.mxu0
    %v1667 = vadd.f32 %v303, %v1666
    %1668 = vmatmul.bf16.gmra.mxu0 %v416
    %v1669 = vpop.f32.mrf.mxu0
    %v1670 = vadd.f32 %v303, %v1669
    %v1671 = vpop.f32.mrf.mxu0
    %v1672 = vadd.f32 %v303, %v1671
    %1673 = vmatmul.bf16.gmra.mxu0 %v418
    %v1674 = vpop.f32.mrf.mxu0
    %v1675 = vadd.f32 %v303, %v1674
    %v1676 = vpop.f32.mrf.mxu0
    %v1677 = vadd.f32 %v303, %v1676
    %1678 = vmatmul.bf16.gmra.mxu0 %v420
    %v1679 = vpop.f32.mrf.mxu0
    %v1680 = vadd.f32 %v303, %v1679
    %v1681 = vpop.f32.mrf.mxu0
    %v1682 = vadd.f32 %v303, %v1681
    %1683 = vmatmul.bf16.gmra.mxu0 %v422
    %v1684 = vpop.f32.mrf.mxu0
    %v1685 = vadd.f32 %v303, %v1684
    %v1686 = vpop.f32.mrf.mxu0
    %v1687 = vadd.f32 %v303, %v1686
    %1688 = vmatmul.bf16.gmra.mxu0 %v424
    %v1689 = vpop.f32.mrf.mxu0
    %v1690 = vadd.f32 %v303, %v1689
    %v1691 = vpop.f32.mrf.mxu0
    %v1692 = vadd.f32 %v303, %v1691
    %1693 = vmatmul.bf16.gmra.mxu0 %v426
    %v1694 = vpop.f32.mrf.mxu0
    %v1695 = vadd.f32 %v303, %v1694
    %v1696 = vpop.f32.mrf.mxu0
    %v1697 = vadd.f32 %v303, %v1696
    %1698 = vmatmul.bf16.gmra.mxu0 %v428
    %v1699 = vpop.f32.mrf.mxu0
    %v1700 = vadd.f32 %v303, %v1699
    %v1701 = vpop.f32.mrf.mxu0
    %v1702 = vadd.f32 %v303, %v1701
    %1703 = vmatmul.bf16.gmra.mxu0 %v430
    %v1704 = vpop.f32.mrf.mxu0
    %v1705 = vadd.f32 %v303, %v1704
    %v1706 = vpop.f32.mrf.mxu0
    %v1707 = vadd.f32 %v303, %v1706
    %1708 = vmatmul.bf16.gmra.mxu0 %v432
    %v1709 = vpop.f32.mrf.mxu0
    %v1710 = vadd.f32 %v303, %v1709
    %v1711 = vpop.f32.mrf.mxu0
    %v1712 = vadd.f32 %v303, %v1711
    %1713 = vmatmul.bf16.gmra.mxu0 %v434
    %v1714 = vpop.f32.mrf.mxu0
    %v1715 = vadd.f32 %v303, %v1714
    %v1716 = vpop.f32.mrf.mxu0
    %v1717 = vadd.f32 %v303, %v1716
    %1718 = vmatmul.bf16.gmra.mxu0 %v436
    %v1719 = vpop.f32.mrf.mxu0
    %v1720 = vadd.f32 %v303, %v1719
    %v1721 = vpop.f32.mrf.mxu0
    %v1722 = vadd.f32 %v303, %v1721
    %1723 = vmatmul.bf16.gmra.mxu0 %v438
    %v1724 = vpop.f32.mrf.mxu0
    %v1725 = vadd.f32 %v303, %v1724
    %v1726 = vpop.f32.mrf.mxu0
    %v1727 = vadd.f32 %v303, %v1726
    %1728 = vmatmul.bf16.gmra.mxu0 %v440
    %v1729 = vpop.f32.mrf.mxu0
    %v1730 = vadd.f32 %v303, %v1729
    %v1731 = vpop.f32.mrf.mxu0
    %v1732 = vadd.f32 %v303, %v1731
    %1733 = vmatmul.bf16.gmra.mxu0 %v442
    %v1734 = vpop.f32.mrf.mxu0
    %v1735 = vadd.f32 %v303, %v1734
    %v1736 = vpop.f32.mrf.mxu0
    %v1737 = vadd.f32 %v303, %v1736
    %1738 = vdwg.mxu0
    %1739 = vmatpush.bf16.msra.mxu0 %v983
    %1740 = vmatpush.bf16.msra.mxu0 %v975
    %1741 = vmatpush.bf16.msra.mxu0 %v967
    %1742 = vmatpush.bf16.msra.mxu0 %v959
    %1743 = vmatpush.bf16.msra.mxu0 %v951
    %1744 = vmatpush.bf16.msra.mxu0 %v943
    %1745 = vmatpush.bf16.msra.mxu0 %v935
    %1746 = vmatpush.bf16.msra.mxu0 %v927
    %1747 = vmatmul.bf16.gmra.mxu0 %v413
    %v1748 = vpop.f32.mrf.mxu0
    %v1749 = vadd.f32 %v1660, %v1748
    %v1750 = vpop.f32.mrf.mxu0
    %v1751 = vadd.f32 %v1662, %v1750
    %1752 = vmatmul.bf16.gmra.mxu0 %v415
    %v1753 = vpop.f32.mrf.mxu0
    %v1754 = vadd.f32 %v1665, %v1753
    %v1755 = vpop.f32.mrf.mxu0
    %v1756 = vadd.f32 %v1667, %v1755
    %1757 = vmatmul.bf16.gmra.mxu0 %v417
    %v1758 = vpop.f32.mrf.mxu0
    %v1759 = vadd.f32 %v1670, %v1758
    %v1760 = vpop.f32.mrf.mxu0
    %v1761 = vadd.f32 %v1672, %v1760
    %1762 = vmatmul.bf16.gmra.mxu0 %v419
    %v1763 = vpop.f32.mrf.mxu0
    %v1764 = vadd.f32 %v1675, %v1763
    %v1765 = vpop.f32.mrf.mxu0
    %v1766 = vadd.f32 %v1677, %v1765
    %1767 = vmatmul.bf16.gmra.mxu0 %v421
    %v1768 = vpop.f32.mrf.mxu0
    %v1769 = vadd.f32 %v1680, %v1768
    %v1770 = vpop.f32.mrf.mxu0
    %v1771 = vadd.f32 %v1682, %v1770
    %1772 = vmatmul.bf16.gmra.mxu0 %v423
    %v1773 = vpop.f32.mrf.mxu0
    %v1774 = vadd.f32 %v1685, %v1773
    %v1775 = vpop.f32.mrf.mxu0
    %v1776 = vadd.f32 %v1687, %v1775
    %1777 = vmatmul.bf16.gmra.mxu0 %v425
    %v1778 = vpop.f32.mrf.mxu0
    %v1779 = vadd.f32 %v1690, %v1778
    %v1780 = vpop.f32.mrf.mxu0
    %v1781 = vadd.f32 %v1692, %v1780
    %1782 = vmatmul.bf16.gmra.mxu0 %v427
    %v1783 = vpop.f32.mrf.mxu0
    %v1784 = vadd.f32 %v1695, %v1783
    %v1785 = vpop.f32.mrf.mxu0
    %v1786 = vadd.f32 %v1697, %v1785
    %1787 = vmatmul.bf16.gmra.mxu0 %v429
    %v1788 = vpop.f32.mrf.mxu0
    %v1789 = vadd.f32 %v1700, %v1788
    %v1790 = vpop.f32.mrf.mxu0
    %v1791 = vadd.f32 %v1702, %v1790
    %1792 = vmatmul.bf16.gmra.mxu0 %v431
    %v1793 = vpop.f32.mrf.mxu0
    %v1794 = vadd.f32 %v1705, %v1793
    %v1795 = vpop.f32.mrf.mxu0
    %v1796 = vadd.f32 %v1707, %v1795
    %1797 = vmatmul.bf16.gmra.mxu0 %v433
    %v1798 = vpop.f32.mrf.mxu0
    %v1799 = vadd.f32 %v1710, %v1798
    %v1800 = vpop.f32.mrf.mxu0
    %v1801 = vadd.f32 %v1712, %v1800
    %1802 = vmatmul.bf16.gmra.mxu0 %v435
    %v1803 = vpop.f32.mrf.mxu0
    %v1804 = vadd.f32 %v1715, %v1803
    %v1805 = vpop.f32.mrf.mxu0
    %v1806 = vadd.f32 %v1717, %v1805
    %1807 = vmatmul.bf16.gmra.mxu0 %v437
    %v1808 = vpop.f32.mrf.mxu0
    %v1809 = vadd.f32 %v1720, %v1808
    %v1810 = vpop.f32.mrf.mxu0
    %v1811 = vadd.f32 %v1722, %v1810
    %1812 = vmatmul.bf16.gmra.mxu0 %v439
    %v1813 = vpop.f32.mrf.mxu0
    %v1814 = vadd.f32 %v1725, %v1813
    %v1815 = vpop.f32.mrf.mxu0
    %v1816 = vadd.f32 %v1727, %v1815
    %1817 = vmatmul.bf16.gmra.mxu0 %v441
    %v1818 = vpop.f32.mrf.mxu0
    %v1819 = vadd.f32 %v1730, %v1818
    %v1820 = vpop.f32.mrf.mxu0
    %v1821 = vadd.f32 %v1732, %v1820
    %1822 = vmatmul.bf16.gmra.mxu0 %v443
    %v1823 = vpop.f32.mrf.mxu0
    %v1824 = vadd.f32 %v1735, %v1823
    %v1825 = vpop.f32.mrf.mxu0
    %v1826 = vadd.f32 %v1737, %v1825
    %1827 = vdwg.mxu0
    %1828 = vmatpush.bf16.msra.mxu0 %v920
    %1829 = vmatpush.bf16.msra.mxu0 %v912
    %1830 = vmatpush.bf16.msra.mxu0 %v904
    %1831 = vmatpush.bf16.msra.mxu0 %v896
    %1832 = vmatpush.bf16.msra.mxu0 %v888
    %1833 = vmatpush.bf16.msra.mxu0 %v880
    %1834 = vmatpush.bf16.msra.mxu0 %v872
    %1835 = vmatpush.bf16.msra.mxu0 %v864
    %1836 = vmatmul.bf16.gmra.mxu0 %v412
    %v1837 = vpop.f32.mrf.mxu0
    %v1838 = vadd.f32 %v304, %v1837
    %v1839 = vpop.f32.mrf.mxu0
    %v1840 = vadd.f32 %v304, %v1839
    %1841 = vmatmul.bf16.gmra.mxu0 %v414
    %v1842 = vpop.f32.mrf.mxu0
    %v1843 = vadd.f32 %v304, %v1842
    %v1844 = vpop.f32.mrf.mxu0
    %v1845 = vadd.f32 %v304, %v1844
    %1846 = vmatmul.bf16.gmra.mxu0 %v416
    %v1847 = vpop.f32.mrf.mxu0
    %v1848 = vadd.f32 %v304, %v1847
    %v1849 = vpop.f32.mrf.mxu0
    %v1850 = vadd.f32 %v304, %v1849
    %1851 = vmatmul.bf16.gmra.mxu0 %v418
    %v1852 = vpop.f32.mrf.mxu0
    %v1853 = vadd.f32 %v304, %v1852
    %v1854 = vpop.f32.mrf.mxu0
    %v1855 = vadd.f32 %v304, %v1854
    %1856 = vmatmul.bf16.gmra.mxu0 %v420
    %v1857 = vpop.f32.mrf.mxu0
    %v1858 = vadd.f32 %v304, %v1857
    %v1859 = vpop.f32.mrf.mxu0
    %v1860 = vadd.f32 %v304, %v1859
    %1861 = vmatmul.bf16.gmra.mxu0 %v422
    %v1862 = vpop.f32.mrf.mxu0
    %v1863 = vadd.f32 %v304, %v1862
    %v1864 = vpop.f32.mrf.mxu0
    %v1865 = vadd.f32 %v304, %v1864
    %1866 = vmatmul.bf16.gmra.mxu0 %v424
    %v1867 = vpop.f32.mrf.mxu0
    %v1868 = vadd.f32 %v304, %v1867
    %v1869 = vpop.f32.mrf.mxu0
    %v1870 = vadd.f32 %v304, %v1869
    %1871 = vmatmul.bf16.gmra.mxu0 %v426
    %v1872 = vpop.f32.mrf.mxu0
    %v1873 = vadd.f32 %v304, %v1872
    %v1874 = vpop.f32.mrf.mxu0
    %v1875 = vadd.f32 %v304, %v1874
    %1876 = vmatmul.bf16.gmra.mxu0 %v428
    %v1877 = vpop.f32.mrf.mxu0
    %v1878 = vadd.f32 %v304, %v1877
    %v1879 = vpop.f32.mrf.mxu0
    %v1880 = vadd.f32 %v304, %v1879
    %1881 = vmatmul.bf16.gmra.mxu0 %v430
    %v1882 = vpop.f32.mrf.mxu0
    %v1883 = vadd.f32 %v304, %v1882
    %v1884 = vpop.f32.mrf.mxu0
    %v1885 = vadd.f32 %v304, %v1884
    %1886 = vmatmul.bf16.gmra.mxu0 %v432
    %v1887 = vpop.f32.mrf.mxu0
    %v1888 = vadd.f32 %v304, %v1887
    %v1889 = vpop.f32.mrf.mxu0
    %v1890 = vadd.f32 %v304, %v1889
    %1891 = vmatmul.bf16.gmra.mxu0 %v434
    %v1892 = vpop.f32.mrf.mxu0
    %v1893 = vadd.f32 %v304, %v1892
    %v1894 = vpop.f32.mrf.mxu0
    %v1895 = vadd.f32 %v304, %v1894
    %1896 = vmatmul.bf16.gmra.mxu0 %v436
    %v1897 = vpop.f32.mrf.mxu0
    %v1898 = vadd.f32 %v304, %v1897
    %v1899 = vpop.f32.mrf.mxu0
    %v1900 = vadd.f32 %v304, %v1899
    %1901 = vmatmul.bf16.gmra.mxu0 %v438
    %v1902 = vpop.f32.mrf.mxu0
    %v1903 = vadd.f32 %v304, %v1902
    %v1904 = vpop.f32.mrf.mxu0
    %v1905 = vadd.f32 %v304, %v1904
    %1906 = vmatmul.bf16.gmra.mxu0 %v440
    %v1907 = vpop.f32.mrf.mxu0
    %v1908 = vadd.f32 %v304, %v1907
    %v1909 = vpop.f32.mrf.mxu0
    %v1910 = vadd.f32 %v304, %v1909
    %1911 = vmatmul.bf16.gmra.mxu0 %v442
    %v1912 = vpop.f32.mrf.mxu0
    %v1913 = vadd.f32 %v304, %v1912
    %v1914 = vpop.f32.mrf.mxu0
    %v1915 = vadd.f32 %v304, %v1914
    %1916 = vdwg.mxu0
    %1917 = vmatpush.bf16.msra.mxu0 %v984
    %1918 = vmatpush.bf16.msra.mxu0 %v976
    %1919 = vmatpush.bf16.msra.mxu0 %v968
    %1920 = vmatpush.bf16.msra.mxu0 %v960
    %1921 = vmatpush.bf16.msra.mxu0 %v952
    %1922 = vmatpush.bf16.msra.mxu0 %v944
    %1923 = vmatpush.bf16.msra.mxu0 %v936
    %1924 = vmatpush.bf16.msra.mxu0 %v928
    %1925 = vmatmul.bf16.gmra.mxu0 %v413
    %v1926 = vpop.f32.mrf.mxu0
    %v1927 = vadd.f32 %v1838, %v1926
    %v1928 = vpop.f32.mrf.mxu0
    %v1929 = vadd.f32 %v1840, %v1928
    %1930 = vmatmul.bf16.gmra.mxu0 %v415
    %v1931 = vpop.f32.mrf.mxu0
    %v1932 = vadd.f32 %v1843, %v1931
    %v1933 = vpop.f32.mrf.mxu0
    %v1934 = vadd.f32 %v1845, %v1933
    %1935 = vmatmul.bf16.gmra.mxu0 %v417
    %v1936 = vpop.f32.mrf.mxu0
    %v1937 = vadd.f32 %v1848, %v1936
    %v1938 = vpop.f32.mrf.mxu0
    %v1939 = vadd.f32 %v1850, %v1938
    %1940 = vmatmul.bf16.gmra.mxu0 %v419
    %v1941 = vpop.f32.mrf.mxu0
    %v1942 = vadd.f32 %v1853, %v1941
    %v1943 = vpop.f32.mrf.mxu0
    %v1944 = vadd.f32 %v1855, %v1943
    %1945 = vmatmul.bf16.gmra.mxu0 %v421
    %v1946 = vpop.f32.mrf.mxu0
    %v1947 = vadd.f32 %v1858, %v1946
    %v1948 = vpop.f32.mrf.mxu0
    %v1949 = vadd.f32 %v1860, %v1948
    %1950 = vmatmul.bf16.gmra.mxu0 %v423
    %v1951 = vpop.f32.mrf.mxu0
    %v1952 = vadd.f32 %v1863, %v1951
    %v1953 = vpop.f32.mrf.mxu0
    %v1954 = vadd.f32 %v1865, %v1953
    %1955 = vmatmul.bf16.gmra.mxu0 %v425
    %v1956 = vpop.f32.mrf.mxu0
    %v1957 = vadd.f32 %v1868, %v1956
    %v1958 = vpop.f32.mrf.mxu0
    %v1959 = vadd.f32 %v1870, %v1958
    %1960 = vmatmul.bf16.gmra.mxu0 %v427
    %v1961 = vpop.f32.mrf.mxu0
    %v1962 = vadd.f32 %v1873, %v1961
    %v1963 = vpop.f32.mrf.mxu0
    %v1964 = vadd.f32 %v1875, %v1963
    %1965 = vmatmul.bf16.gmra.mxu0 %v429
    %v1966 = vpop.f32.mrf.mxu0
    %v1967 = vadd.f32 %v1878, %v1966
    %v1968 = vpop.f32.mrf.mxu0
    %v1969 = vadd.f32 %v1880, %v1968
    %1970 = vmatmul.bf16.gmra.mxu0 %v431
    %v1971 = vpop.f32.mrf.mxu0
    %v1972 = vadd.f32 %v1883, %v1971
    %v1973 = vpop.f32.mrf.mxu0
    %v1974 = vadd.f32 %v1885, %v1973
    %1975 = vmatmul.bf16.gmra.mxu0 %v433
    %v1976 = vpop.f32.mrf.mxu0
    %v1977 = vadd.f32 %v1888, %v1976
    %v1978 = vpop.f32.mrf.mxu0
    %v1979 = vadd.f32 %v1890, %v1978
    %1980 = vmatmul.bf16.gmra.mxu0 %v435
    %v1981 = vpop.f32.mrf.mxu0
    %v1982 = vadd.f32 %v1893, %v1981
    %v1983 = vpop.f32.mrf.mxu0
    %v1984 = vadd.f32 %v1895, %v1983
    %1985 = vmatmul.bf16.gmra.mxu0 %v437
    %v1986 = vpop.f32.mrf.mxu0
    %v1987 = vadd.f32 %v1898, %v1986
    %v1988 = vpop.f32.mrf.mxu0
    %v1989 = vadd.f32 %v1900, %v1988
    %1990 = vmatmul.bf16.gmra.mxu0 %v439
    %v1991 = vpop.f32.mrf.mxu0
    %v1992 = vadd.f32 %v1903, %v1991
    %v1993 = vpop.f32.mrf.mxu0
    %v1994 = vadd.f32 %v1905, %v1993
    %1995 = vmatmul.bf16.gmra.mxu0 %v441
    %v1996 = vpop.f32.mrf.mxu0
    %v1997 = vadd.f32 %v1908, %v1996
    %v1998 = vpop.f32.mrf.mxu0
    %v1999 = vadd.f32 %v1910, %v1998
    %2000 = vmatmul.bf16.gmra.mxu0 %v443
    %v2001 = vpop.f32.mrf.mxu0
    %v2002 = vadd.f32 %v1913, %v2001
    %v2003 = vpop.f32.mrf.mxu0
    %v2004 = vadd.f32 %v1915, %v2003
    %2005 = vdwg.mxu0
    %2006 = vmatpush.bf16.msra.mxu0 %v921
    %2007 = vmatpush.bf16.msra.mxu0 %v913
    %2008 = vmatpush.bf16.msra.mxu0 %v905
    %2009 = vmatpush.bf16.msra.mxu0 %v897
    %2010 = vmatpush.bf16.msra.mxu0 %v889
    %2011 = vmatpush.bf16.msra.mxu0 %v881
    %2012 = vmatpush.bf16.msra.mxu0 %v873
    %2013 = vmatpush.bf16.msra.mxu0 %v865
    %2014 = vmatmul.bf16.gmra.mxu0 %v412
    %v2015 = vpop.f32.mrf.mxu0
    %v2016 = vadd.f32 %v305, %v2015
    %v2017 = vpop.f32.mrf.mxu0
    %v2018 = vadd.f32 %v305, %v2017
    %2019 = vmatmul.bf16.gmra.mxu0 %v414
    %v2020 = vpop.f32.mrf.mxu0
    %v2021 = vadd.f32 %v305, %v2020
    %v2022 = vpop.f32.mrf.mxu0
    %v2023 = vadd.f32 %v305, %v2022
    %2024 = vmatmul.bf16.gmra.mxu0 %v416
    %v2025 = vpop.f32.mrf.mxu0
    %v2026 = vadd.f32 %v305, %v2025
    %v2027 = vpop.f32.mrf.mxu0
    %v2028 = vadd.f32 %v305, %v2027
    %2029 = vmatmul.bf16.gmra.mxu0 %v418
    %v2030 = vpop.f32.mrf.mxu0
    %v2031 = vadd.f32 %v305, %v2030
    %v2032 = vpop.f32.mrf.mxu0
    %v2033 = vadd.f32 %v305, %v2032
    %2034 = vmatmul.bf16.gmra.mxu0 %v420
    %v2035 = vpop.f32.mrf.mxu0
    %v2036 = vadd.f32 %v305, %v2035
    %v2037 = vpop.f32.mrf.mxu0
    %v2038 = vadd.f32 %v305, %v2037
    %2039 = vmatmul.bf16.gmra.mxu0 %v422
    %v2040 = vpop.f32.mrf.mxu0
    %v2041 = vadd.f32 %v305, %v2040
    %v2042 = vpop.f32.mrf.mxu0
    %v2043 = vadd.f32 %v305, %v2042
    %2044 = vmatmul.bf16.gmra.mxu0 %v424
    %v2045 = vpop.f32.mrf.mxu0
    %v2046 = vadd.f32 %v305, %v2045
    %v2047 = vpop.f32.mrf.mxu0
    %v2048 = vadd.f32 %v305, %v2047
    %2049 = vmatmul.bf16.gmra.mxu0 %v426
    %v2050 = vpop.f32.mrf.mxu0
    %v2051 = vadd.f32 %v305, %v2050
    %v2052 = vpop.f32.mrf.mxu0
    %v2053 = vadd.f32 %v305, %v2052
    %2054 = vmatmul.bf16.gmra.mxu0 %v428
    %v2055 = vpop.f32.mrf.mxu0
    %v2056 = vadd.f32 %v305, %v2055
    %v2057 = vpop.f32.mrf.mxu0
    %v2058 = vadd.f32 %v305, %v2057
    %2059 = vmatmul.bf16.gmra.mxu0 %v430
    %v2060 = vpop.f32.mrf.mxu0
    %v2061 = vadd.f32 %v305, %v2060
    %v2062 = vpop.f32.mrf.mxu0
    %v2063 = vadd.f32 %v305, %v2062
    %2064 = vmatmul.bf16.gmra.mxu0 %v432
    %v2065 = vpop.f32.mrf.mxu0
    %v2066 = vadd.f32 %v305, %v2065
    %v2067 = vpop.f32.mrf.mxu0
    %v2068 = vadd.f32 %v305, %v2067
    %2069 = vmatmul.bf16.gmra.mxu0 %v434
    %v2070 = vpop.f32.mrf.mxu0
    %v2071 = vadd.f32 %v305, %v2070
    %v2072 = vpop.f32.mrf.mxu0
    %v2073 = vadd.f32 %v305, %v2072
    %2074 = vmatmul.bf16.gmra.mxu0 %v436
    %v2075 = vpop.f32.mrf.mxu0
    %v2076 = vadd.f32 %v305, %v2075
    %v2077 = vpop.f32.mrf.mxu0
    %v2078 = vadd.f32 %v305, %v2077
    %2079 = vmatmul.bf16.gmra.mxu0 %v438
    %v2080 = vpop.f32.mrf.mxu0
    %v2081 = vadd.f32 %v305, %v2080
    %v2082 = vpop.f32.mrf.mxu0
    %v2083 = vadd.f32 %v305, %v2082
    %2084 = vmatmul.bf16.gmra.mxu0 %v440
    %v2085 = vpop.f32.mrf.mxu0
    %v2086 = vadd.f32 %v305, %v2085
    %v2087 = vpop.f32.mrf.mxu0
    %v2088 = vadd.f32 %v305, %v2087
    %2089 = vmatmul.bf16.gmra.mxu0 %v442
    %v2090 = vpop.f32.mrf.mxu0
    %v2091 = vadd.f32 %v305, %v2090
    %v2092 = vpop.f32.mrf.mxu0
    %v2093 = vadd.f32 %v305, %v2092
    %2094 = vdwg.mxu0
    %2095 = vmatpush.bf16.msra.mxu0 %v985
    %2096 = vmatpush.bf16.msra.mxu0 %v977
    %2097 = vmatpush.bf16.msra.mxu0 %v969
    %2098 = vmatpush.bf16.msra.mxu0 %v961
    %2099 = vmatpush.bf16.msra.mxu0 %v953
    %2100 = vmatpush.bf16.msra.mxu0 %v945
    %2101 = vmatpush.bf16.msra.mxu0 %v937
    %2102 = vmatpush.bf16.msra.mxu0 %v929
    %2103 = vmatmul.bf16.gmra.mxu0 %v413
    %v2104 = vpop.f32.mrf.mxu0
    %v2105 = vadd.f32 %v2016, %v2104
    %v2106 = vpop.f32.mrf.mxu0
    %v2107 = vadd.f32 %v2018, %v2106
    %2108 = vmatmul.bf16.gmra.mxu0 %v415
    %v2109 = vpop.f32.mrf.mxu0
    %v2110 = vadd.f32 %v2021, %v2109
    %v2111 = vpop.f32.mrf.mxu0
    %v2112 = vadd.f32 %v2023, %v2111
    %2113 = vmatmul.bf16.gmra.mxu0 %v417
    %v2114 = vpop.f32.mrf.mxu0
    %v2115 = vadd.f32 %v2026, %v2114
    %v2116 = vpop.f32.mrf.mxu0
    %v2117 = vadd.f32 %v2028, %v2116
    %2118 = vmatmul.bf16.gmra.mxu0 %v419
    %v2119 = vpop.f32.mrf.mxu0
    %v2120 = vadd.f32 %v2031, %v2119
    %v2121 = vpop.f32.mrf.mxu0
    %v2122 = vadd.f32 %v2033, %v2121
    %2123 = vmatmul.bf16.gmra.mxu0 %v421
    %v2124 = vpop.f32.mrf.mxu0
    %v2125 = vadd.f32 %v2036, %v2124
    %v2126 = vpop.f32.mrf.mxu0
    %v2127 = vadd.f32 %v2038, %v2126
    %2128 = vmatmul.bf16.gmra.mxu0 %v423
    %v2129 = vpop.f32.mrf.mxu0
    %v2130 = vadd.f32 %v2041, %v2129
    %v2131 = vpop.f32.mrf.mxu0
    %v2132 = vadd.f32 %v2043, %v2131
    %2133 = vmatmul.bf16.gmra.mxu0 %v425
    %v2134 = vpop.f32.mrf.mxu0
    %v2135 = vadd.f32 %v2046, %v2134
    %v2136 = vpop.f32.mrf.mxu0
    %v2137 = vadd.f32 %v2048, %v2136
    %2138 = vmatmul.bf16.gmra.mxu0 %v427
    %v2139 = vpop.f32.mrf.mxu0
    %v2140 = vadd.f32 %v2051, %v2139
    %v2141 = vpop.f32.mrf.mxu0
    %v2142 = vadd.f32 %v2053, %v2141
    %2143 = vmatmul.bf16.gmra.mxu0 %v429
    %v2144 = vpop.f32.mrf.mxu0
    %v2145 = vadd.f32 %v2056, %v2144
    %v2146 = vpop.f32.mrf.mxu0
    %v2147 = vadd.f32 %v2058, %v2146
    %2148 = vmatmul.bf16.gmra.mxu0 %v431
    %v2149 = vpop.f32.mrf.mxu0
    %v2150 = vadd.f32 %v2061, %v2149
    %v2151 = vpop.f32.mrf.mxu0
    %v2152 = vadd.f32 %v2063, %v2151
    %2153 = vmatmul.bf16.gmra.mxu0 %v433
    %v2154 = vpop.f32.mrf.mxu0
    %v2155 = vadd.f32 %v2066, %v2154
    %v2156 = vpop.f32.mrf.mxu0
    %v2157 = vadd.f32 %v2068, %v2156
    %2158 = vmatmul.bf16.gmra.mxu0 %v435
    %v2159 = vpop.f32.mrf.mxu0
    %v2160 = vadd.f32 %v2071, %v2159
    %v2161 = vpop.f32.mrf.mxu0
    %v2162 = vadd.f32 %v2073, %v2161
    %2163 = vmatmul.bf16.gmra.mxu0 %v437
    %v2164 = vpop.f32.mrf.mxu0
    %v2165 = vadd.f32 %v2076, %v2164
    %v2166 = vpop.f32.mrf.mxu0
    %v2167 = vadd.f32 %v2078, %v2166
    %2168 = vmatmul.bf16.gmra.mxu0 %v439
    %v2169 = vpop.f32.mrf.mxu0
    %v2170 = vadd.f32 %v2081, %v2169
    %v2171 = vpop.f32.mrf.mxu0
    %v2172 = vadd.f32 %v2083, %v2171
    %2173 = vmatmul.bf16.gmra.mxu0 %v441
    %v2174 = vpop.f32.mrf.mxu0
    %v2175 = vadd.f32 %v2086, %v2174
    %v2176 = vpop.f32.mrf.mxu0
    %v2177 = vadd.f32 %v2088, %v2176
    %2178 = vmatmul.bf16.gmra.mxu0 %v443
    %v2179 = vpop.f32.mrf.mxu0
    %v2180 = vadd.f32 %v2091, %v2179
    %v2181 = vpop.f32.mrf.mxu0
    %v2182 = vadd.f32 %v2093, %v2181
    %2183 = vdwg.mxu0
    %2184 = vmatpush.bf16.msra.mxu0 %v922
    %2185 = vmatpush.bf16.msra.mxu0 %v914
    %2186 = vmatpush.bf16.msra.mxu0 %v906
    %2187 = vmatpush.bf16.msra.mxu0 %v898
    %2188 = vmatpush.bf16.msra.mxu0 %v890
    %2189 = vmatpush.bf16.msra.mxu0 %v882
    %2190 = vmatpush.bf16.msra.mxu0 %v874
    %2191 = vmatpush.bf16.msra.mxu0 %v866
    %2192 = vmatmul.bf16.gmra.mxu0 %v412
    %v2193 = vpop.f32.mrf.mxu0
    %v2194 = vadd.f32 %v306, %v2193
    %v2195 = vpop.f32.mrf.mxu0
    %v2196 = vadd.f32 %v306, %v2195
    %2197 = vmatmul.bf16.gmra.mxu0 %v414
    %v2198 = vpop.f32.mrf.mxu0
    %v2199 = vadd.f32 %v306, %v2198
    %v2200 = vpop.f32.mrf.mxu0
    %v2201 = vadd.f32 %v306, %v2200
    %2202 = vmatmul.bf16.gmra.mxu0 %v416
    %v2203 = vpop.f32.mrf.mxu0
    %v2204 = vadd.f32 %v306, %v2203
    %v2205 = vpop.f32.mrf.mxu0
    %v2206 = vadd.f32 %v306, %v2205
    %2207 = vmatmul.bf16.gmra.mxu0 %v418
    %v2208 = vpop.f32.mrf.mxu0
    %v2209 = vadd.f32 %v306, %v2208
    %v2210 = vpop.f32.mrf.mxu0
    %v2211 = vadd.f32 %v306, %v2210
    %2212 = vmatmul.bf16.gmra.mxu0 %v420
    %v2213 = vpop.f32.mrf.mxu0
    %v2214 = vadd.f32 %v306, %v2213
    %v2215 = vpop.f32.mrf.mxu0
    %v2216 = vadd.f32 %v306, %v2215
    %2217 = vmatmul.bf16.gmra.mxu0 %v422
    %v2218 = vpop.f32.mrf.mxu0
    %v2219 = vadd.f32 %v306, %v2218
    %v2220 = vpop.f32.mrf.mxu0
    %v2221 = vadd.f32 %v306, %v2220
    %2222 = vmatmul.bf16.gmra.mxu0 %v424
    %v2223 = vpop.f32.mrf.mxu0
    %v2224 = vadd.f32 %v306, %v2223
    %v2225 = vpop.f32.mrf.mxu0
    %v2226 = vadd.f32 %v306, %v2225
    %2227 = vmatmul.bf16.gmra.mxu0 %v426
    %v2228 = vpop.f32.mrf.mxu0
    %v2229 = vadd.f32 %v306, %v2228
    %v2230 = vpop.f32.mrf.mxu0
    %v2231 = vadd.f32 %v306, %v2230
    %2232 = vmatmul.bf16.gmra.mxu0 %v428
    %v2233 = vpop.f32.mrf.mxu0
    %v2234 = vadd.f32 %v306, %v2233
    %v2235 = vpop.f32.mrf.mxu0
    %v2236 = vadd.f32 %v306, %v2235
    %2237 = vmatmul.bf16.gmra.mxu0 %v430
    %v2238 = vpop.f32.mrf.mxu0
    %v2239 = vadd.f32 %v306, %v2238
    %v2240 = vpop.f32.mrf.mxu0
    %v2241 = vadd.f32 %v306, %v2240
    %2242 = vmatmul.bf16.gmra.mxu0 %v432
    %v2243 = vpop.f32.mrf.mxu0
    %v2244 = vadd.f32 %v306, %v2243
    %v2245 = vpop.f32.mrf.mxu0
    %v2246 = vadd.f32 %v306, %v2245
    %2247 = vmatmul.bf16.gmra.mxu0 %v434
    %v2248 = vpop.f32.mrf.mxu0
    %v2249 = vadd.f32 %v306, %v2248
    %v2250 = vpop.f32.mrf.mxu0
    %v2251 = vadd.f32 %v306, %v2250
    %2252 = vmatmul.bf16.gmra.mxu0 %v436
    %v2253 = vpop.f32.mrf.mxu0
    %v2254 = vadd.f32 %v306, %v2253
    %v2255 = vpop.f32.mrf.mxu0
    %v2256 = vadd.f32 %v306, %v2255
    %2257 = vmatmul.bf16.gmra.mxu0 %v438
    %v2258 = vpop.f32.mrf.mxu0
    %v2259 = vadd.f32 %v306, %v2258
    %v2260 = vpop.f32.mrf.mxu0
    %v2261 = vadd.f32 %v306, %v2260
    %2262 = vmatmul.bf16.gmra.mxu0 %v440
    %v2263 = vpop.f32.mrf.mxu0
    %v2264 = vadd.f32 %v306, %v2263
    %v2265 = vpop.f32.mrf.mxu0
    %v2266 = vadd.f32 %v306, %v2265
    %2267 = vmatmul.bf16.gmra.mxu0 %v442
    %v2268 = vpop.f32.mrf.mxu0
    %v2269 = vadd.f32 %v306, %v2268
    %v2270 = vpop.f32.mrf.mxu0
    %v2271 = vadd.f32 %v306, %v2270
    %2272 = vdwg.mxu0
    %2273 = vmatpush.bf16.msra.mxu0 %v986
    %2274 = vmatpush.bf16.msra.mxu0 %v978
    %2275 = vmatpush.bf16.msra.mxu0 %v970
    %2276 = vmatpush.bf16.msra.mxu0 %v962
    %2277 = vmatpush.bf16.msra.mxu0 %v954
    %2278 = vmatpush.bf16.msra.mxu0 %v946
    %2279 = vmatpush.bf16.msra.mxu0 %v938
    %2280 = vmatpush.bf16.msra.mxu0 %v930
    %2281 = vmatmul.bf16.gmra.mxu0 %v413
    %v2282 = vpop.f32.mrf.mxu0
    %v2283 = vadd.f32 %v2194, %v2282
    %v2284 = vpop.f32.mrf.mxu0
    %v2285 = vadd.f32 %v2196, %v2284
    %2286 = vmatmul.bf16.gmra.mxu0 %v415
    %v2287 = vpop.f32.mrf.mxu0
    %v2288 = vadd.f32 %v2199, %v2287
    %v2289 = vpop.f32.mrf.mxu0
    %v2290 = vadd.f32 %v2201, %v2289
    %2291 = vmatmul.bf16.gmra.mxu0 %v417
    %v2292 = vpop.f32.mrf.mxu0
    %v2293 = vadd.f32 %v2204, %v2292
    %v2294 = vpop.f32.mrf.mxu0
    %v2295 = vadd.f32 %v2206, %v2294
    %2296 = vmatmul.bf16.gmra.mxu0 %v419
    %v2297 = vpop.f32.mrf.mxu0
    %v2298 = vadd.f32 %v2209, %v2297
    %v2299 = vpop.f32.mrf.mxu0
    %v2300 = vadd.f32 %v2211, %v2299
    %2301 = vmatmul.bf16.gmra.mxu0 %v421
    %v2302 = vpop.f32.mrf.mxu0
    %v2303 = vadd.f32 %v2214, %v2302
    %v2304 = vpop.f32.mrf.mxu0
    %v2305 = vadd.f32 %v2216, %v2304
    %2306 = vmatmul.bf16.gmra.mxu0 %v423
    %v2307 = vpop.f32.mrf.mxu0
    %v2308 = vadd.f32 %v2219, %v2307
    %v2309 = vpop.f32.mrf.mxu0
    %v2310 = vadd.f32 %v2221, %v2309
    %2311 = vmatmul.bf16.gmra.mxu0 %v425
    %v2312 = vpop.f32.mrf.mxu0
    %v2313 = vadd.f32 %v2224, %v2312
    %v2314 = vpop.f32.mrf.mxu0
    %v2315 = vadd.f32 %v2226, %v2314
    %2316 = vmatmul.bf16.gmra.mxu0 %v427
    %v2317 = vpop.f32.mrf.mxu0
    %v2318 = vadd.f32 %v2229, %v2317
    %v2319 = vpop.f32.mrf.mxu0
    %v2320 = vadd.f32 %v2231, %v2319
    %2321 = vmatmul.bf16.gmra.mxu0 %v429
    %v2322 = vpop.f32.mrf.mxu0
    %v2323 = vadd.f32 %v2234, %v2322
    %v2324 = vpop.f32.mrf.mxu0
    %v2325 = vadd.f32 %v2236, %v2324
    %2326 = vmatmul.bf16.gmra.mxu0 %v431
    %v2327 = vpop.f32.mrf.mxu0
    %v2328 = vadd.f32 %v2239, %v2327
    %v2329 = vpop.f32.mrf.mxu0
    %v2330 = vadd.f32 %v2241, %v2329
    %2331 = vmatmul.bf16.gmra.mxu0 %v433
    %v2332 = vpop.f32.mrf.mxu0
    %v2333 = vadd.f32 %v2244, %v2332
    %v2334 = vpop.f32.mrf.mxu0
    %v2335 = vadd.f32 %v2246, %v2334
    %2336 = vmatmul.bf16.gmra.mxu0 %v435
    %v2337 = vpop.f32.mrf.mxu0
    %v2338 = vadd.f32 %v2249, %v2337
    %v2339 = vpop.f32.mrf.mxu0
    %v2340 = vadd.f32 %v2251, %v2339
    %2341 = vmatmul.bf16.gmra.mxu0 %v437
    %v2342 = vpop.f32.mrf.mxu0
    %v2343 = vadd.f32 %v2254, %v2342
    %v2344 = vpop.f32.mrf.mxu0
    %v2345 = vadd.f32 %v2256, %v2344
    %2346 = vmatmul.bf16.gmra.mxu0 %v439
    %v2347 = vpop.f32.mrf.mxu0
    %v2348 = vadd.f32 %v2259, %v2347
    %v2349 = vpop.f32.mrf.mxu0
    %v2350 = vadd.f32 %v2261, %v2349
    %2351 = vmatmul.bf16.gmra.mxu0 %v441
    %v2352 = vpop.f32.mrf.mxu0
    %v2353 = vadd.f32 %v2264, %v2352
    %v2354 = vpop.f32.mrf.mxu0
    %v2355 = vadd.f32 %v2266, %v2354
    %2356 = vmatmul.bf16.gmra.mxu0 %v443
    %v2357 = vpop.f32.mrf.mxu0
    %v2358 = vadd.f32 %v2269, %v2357
    %v2359 = vpop.f32.mrf.mxu0
    %v2360 = vadd.f32 %v2271, %v2359
    %2361 = vdwg.mxu0
    %2362 = vmatpush.bf16.msra.mxu0 %v923
    %2363 = vmatpush.bf16.msra.mxu0 %v915
    %2364 = vmatpush.bf16.msra.mxu0 %v907
    %2365 = vmatpush.bf16.msra.mxu0 %v899
    %2366 = vmatpush.bf16.msra.mxu0 %v891
    %2367 = vmatpush.bf16.msra.mxu0 %v883
    %2368 = vmatpush.bf16.msra.mxu0 %v875
    %2369 = vmatpush.bf16.msra.mxu0 %v867
    %2370 = vmatmul.bf16.gmra.mxu0 %v412
    %v2371 = vpop.f32.mrf.mxu0
    %v2372 = vadd.f32 %v307, %v2371
    %v2373 = vpop.f32.mrf.mxu0
    %v2374 = vadd.f32 %v307, %v2373
    %2375 = vmatmul.bf16.gmra.mxu0 %v414
    %v2376 = vpop.f32.mrf.mxu0
    %v2377 = vadd.f32 %v307, %v2376
    %v2378 = vpop.f32.mrf.mxu0
    %v2379 = vadd.f32 %v307, %v2378
    %2380 = vmatmul.bf16.gmra.mxu0 %v416
    %v2381 = vpop.f32.mrf.mxu0
    %v2382 = vadd.f32 %v307, %v2381
    %v2383 = vpop.f32.mrf.mxu0
    %v2384 = vadd.f32 %v307, %v2383
    %2385 = vmatmul.bf16.gmra.mxu0 %v418
    %v2386 = vpop.f32.mrf.mxu0
    %v2387 = vadd.f32 %v307, %v2386
    %v2388 = vpop.f32.mrf.mxu0
    %v2389 = vadd.f32 %v307, %v2388
    %2390 = vmatmul.bf16.gmra.mxu0 %v420
    %v2391 = vpop.f32.mrf.mxu0
    %v2392 = vadd.f32 %v307, %v2391
    %v2393 = vpop.f32.mrf.mxu0
    %v2394 = vadd.f32 %v307, %v2393
    %2395 = vmatmul.bf16.gmra.mxu0 %v422
    %v2396 = vpop.f32.mrf.mxu0
    %v2397 = vadd.f32 %v307, %v2396
    %v2398 = vpop.f32.mrf.mxu0
    %v2399 = vadd.f32 %v307, %v2398
    %2400 = vmatmul.bf16.gmra.mxu0 %v424
    %v2401 = vpop.f32.mrf.mxu0
    %v2402 = vadd.f32 %v307, %v2401
    %v2403 = vpop.f32.mrf.mxu0
    %v2404 = vadd.f32 %v307, %v2403
    %2405 = vmatmul.bf16.gmra.mxu0 %v426
    %v2406 = vpop.f32.mrf.mxu0
    %v2407 = vadd.f32 %v307, %v2406
    %v2408 = vpop.f32.mrf.mxu0
    %v2409 = vadd.f32 %v307, %v2408
    %2410 = vmatmul.bf16.gmra.mxu0 %v428
    %v2411 = vpop.f32.mrf.mxu0
    %v2412 = vadd.f32 %v307, %v2411
    %v2413 = vpop.f32.mrf.mxu0
    %v2414 = vadd.f32 %v307, %v2413
    %2415 = vmatmul.bf16.gmra.mxu0 %v430
    %v2416 = vpop.f32.mrf.mxu0
    %v2417 = vadd.f32 %v307, %v2416
    %v2418 = vpop.f32.mrf.mxu0
    %v2419 = vadd.f32 %v307, %v2418
    %2420 = vmatmul.bf16.gmra.mxu0 %v432
    %v2421 = vpop.f32.mrf.mxu0
    %v2422 = vadd.f32 %v307, %v2421
    %v2423 = vpop.f32.mrf.mxu0
    %v2424 = vadd.f32 %v307, %v2423
    %2425 = vmatmul.bf16.gmra.mxu0 %v434
    %v2426 = vpop.f32.mrf.mxu0
    %v2427 = vadd.f32 %v307, %v2426
    %v2428 = vpop.f32.mrf.mxu0
    %v2429 = vadd.f32 %v307, %v2428
    %2430 = vmatmul.bf16.gmra.mxu0 %v436
    %v2431 = vpop.f32.mrf.mxu0
    %v2432 = vadd.f32 %v307, %v2431
    %v2433 = vpop.f32.mrf.mxu0
    %v2434 = vadd.f32 %v307, %v2433
    %2435 = vmatmul.bf16.gmra.mxu0 %v438
    %v2436 = vpop.f32.mrf.mxu0
    %v2437 = vadd.f32 %v307, %v2436
    %v2438 = vpop.f32.mrf.mxu0
    %v2439 = vadd.f32 %v307, %v2438
    %2440 = vmatmul.bf16.gmra.mxu0 %v440
    %v2441 = vpop.f32.mrf.mxu0
    %v2442 = vadd.f32 %v307, %v2441
    %v2443 = vpop.f32.mrf.mxu0
    %v2444 = vadd.f32 %v307, %v2443
    %2445 = vmatmul.bf16.gmra.mxu0 %v442
    %v2446 = vpop.f32.mrf.mxu0
    %v2447 = vadd.f32 %v307, %v2446
    %v2448 = vpop.f32.mrf.mxu0
    %v2449 = vadd.f32 %v307, %v2448
    %2450 = vdwg.mxu0
    %2451 = vmatpush.bf16.msra.mxu0 %v987
    %2452 = vmatpush.bf16.msra.mxu0 %v979
    %2453 = vmatpush.bf16.msra.mxu0 %v971
    %2454 = vmatpush.bf16.msra.mxu0 %v963
    %2455 = vmatpush.bf16.msra.mxu0 %v955
    %2456 = vmatpush.bf16.msra.mxu0 %v947
    %2457 = vmatpush.bf16.msra.mxu0 %v939
    %2458 = vmatpush.bf16.msra.mxu0 %v931
    %2459 = vmatmul.bf16.gmra.mxu0 %v413
    %v2460 = vpop.f32.mrf.mxu0
    %v2461 = vadd.f32 %v2372, %v2460
    %v2462 = vpop.f32.mrf.mxu0
    %v2463 = vadd.f32 %v2374, %v2462
    %2464 = vmatmul.bf16.gmra.mxu0 %v415
    %v2465 = vpop.f32.mrf.mxu0
    %v2466 = vadd.f32 %v2377, %v2465
    %v2467 = vpop.f32.mrf.mxu0
    %v2468 = vadd.f32 %v2379, %v2467
    %2469 = vmatmul.bf16.gmra.mxu0 %v417
    %v2470 = vpop.f32.mrf.mxu0
    %v2471 = vadd.f32 %v2382, %v2470
    %v2472 = vpop.f32.mrf.mxu0
    %v2473 = vadd.f32 %v2384, %v2472
    %2474 = vmatmul.bf16.gmra.mxu0 %v419
    %v2475 = vpop.f32.mrf.mxu0
    %v2476 = vadd.f32 %v2387, %v2475
    %v2477 = vpop.f32.mrf.mxu0
    %v2478 = vadd.f32 %v2389, %v2477
    %2479 = vmatmul.bf16.gmra.mxu0 %v421
    %v2480 = vpop.f32.mrf.mxu0
    %v2481 = vadd.f32 %v2392, %v2480
    %v2482 = vpop.f32.mrf.mxu0
    %v2483 = vadd.f32 %v2394, %v2482
    %2484 = vmatmul.bf16.gmra.mxu0 %v423
    %v2485 = vpop.f32.mrf.mxu0
    %v2486 = vadd.f32 %v2397, %v2485
    %v2487 = vpop.f32.mrf.mxu0
    %v2488 = vadd.f32 %v2399, %v2487
    %2489 = vmatmul.bf16.gmra.mxu0 %v425
    %v2490 = vpop.f32.mrf.mxu0
    %v2491 = vadd.f32 %v2402, %v2490
    %v2492 = vpop.f32.mrf.mxu0
    %v2493 = vadd.f32 %v2404, %v2492
    %2494 = vmatmul.bf16.gmra.mxu0 %v427
    %v2495 = vpop.f32.mrf.mxu0
    %v2496 = vadd.f32 %v2407, %v2495
    %v2497 = vpop.f32.mrf.mxu0
    %v2498 = vadd.f32 %v2409, %v2497
    %2499 = vmatmul.bf16.gmra.mxu0 %v429
    %v2500 = vpop.f32.mrf.mxu0
    %v2501 = vadd.f32 %v2412, %v2500
    %v2502 = vpop.f32.mrf.mxu0
    %v2503 = vadd.f32 %v2414, %v2502
    %2504 = vmatmul.bf16.gmra.mxu0 %v431
    %v2505 = vpop.f32.mrf.mxu0
    %v2506 = vadd.f32 %v2417, %v2505
    %v2507 = vpop.f32.mrf.mxu0
    %v2508 = vadd.f32 %v2419, %v2507
    %2509 = vmatmul.bf16.gmra.mxu0 %v433
    %v2510 = vpop.f32.mrf.mxu0
    %v2511 = vadd.f32 %v2422, %v2510
    %v2512 = vpop.f32.mrf.mxu0
    %v2513 = vadd.f32 %v2424, %v2512
    %2514 = vmatmul.bf16.gmra.mxu0 %v435
    %v2515 = vpop.f32.mrf.mxu0
    %v2516 = vadd.f32 %v2427, %v2515
    %v2517 = vpop.f32.mrf.mxu0
    %v2518 = vadd.f32 %v2429, %v2517
    %2519 = vmatmul.bf16.gmra.mxu0 %v437
    %v2520 = vpop.f32.mrf.mxu0
    %v2521 = vadd.f32 %v2432, %v2520
    %v2522 = vpop.f32.mrf.mxu0
    %v2523 = vadd.f32 %v2434, %v2522
    %2524 = vmatmul.bf16.gmra.mxu0 %v439
    %v2525 = vpop.f32.mrf.mxu0
    %v2526 = vadd.f32 %v2437, %v2525
    %v2527 = vpop.f32.mrf.mxu0
    %v2528 = vadd.f32 %v2439, %v2527
    %2529 = vmatmul.bf16.gmra.mxu0 %v441
    %v2530 = vpop.f32.mrf.mxu0
    %v2531 = vadd.f32 %v2442, %v2530
    %v2532 = vpop.f32.mrf.mxu0
    %v2533 = vadd.f32 %v2444, %v2532
    %2534 = vmatmul.bf16.gmra.mxu0 %v443
    %v2535 = vpop.f32.mrf.mxu0
    %v2536 = vadd.f32 %v2447, %v2535
    %v2537 = vpop.f32.mrf.mxu0
    %v2538 = vadd.f32 %v2449, %v2537
    %2539 = vdwg.mxu0
    %vm2540 = vcmp.gt.f32.partialorder %v1215, 0.0
    %vm2541 = vcmp.gt.f32.partialorder %v1393, 0.0
    %vm2542 = vcmp.gt.f32.partialorder %v1571, 0.0
    %vm2543 = vcmp.gt.f32.partialorder %v1749, 0.0
    %vm2544 = vcmp.gt.f32.partialorder %v1927, 0.0
    %vm2545 = vcmp.gt.f32.partialorder %v2105, 0.0
    %vm2546 = vcmp.gt.f32.partialorder %v2283, 0.0
    %vm2547 = vcmp.gt.f32.partialorder %v2461, 0.0
    %vm2548 = vcmp.gt.f32.partialorder %v1217, 0.0
    %vm2549 = vcmp.gt.f32.partialorder %v1395, 0.0
    %vm2550 = vcmp.gt.f32.partialorder %v1573, 0.0
    %vm2551 = vcmp.gt.f32.partialorder %v1751, 0.0
    %vm2552 = vcmp.gt.f32.partialorder %v1929, 0.0
    %vm2553 = vcmp.gt.f32.partialorder %v2107, 0.0
    %vm2554 = vcmp.gt.f32.partialorder %v2285, 0.0
    %vm2555 = vcmp.gt.f32.partialorder %v2463, 0.0
    %vm2556 = vcmp.gt.f32.partialorder %v1220, 0.0
    %vm2557 = vcmp.gt.f32.partialorder %v1398, 0.0
    %vm2558 = vcmp.gt.f32.partialorder %v1576, 0.0
    %vm2559 = vcmp.gt.f32.partialorder %v1754, 0.0
    %vm2560 = vcmp.gt.f32.partialorder %v1932, 0.0
    %vm2561 = vcmp.gt.f32.partialorder %v2110, 0.0
    %vm2562 = vcmp.gt.f32.partialorder %v2288, 0.0
    %vm2563 = vcmp.gt.f32.partialorder %v2466, 0.0
    %vm2564 = vcmp.gt.f32.partialorder %v1222, 0.0
    %vm2565 = vcmp.gt.f32.partialorder %v1400, 0.0
    %vm2566 = vcmp.gt.f32.partialorder %v1578, 0.0
    %vm2567 = vcmp.gt.f32.partialorder %v1756, 0.0
    %vm2568 = vcmp.gt.f32.partialorder %v1934, 0.0
    %vm2569 = vcmp.gt.f32.partialorder %v2112, 0.0
    %vm2570 = vcmp.gt.f32.partialorder %v2290, 0.0
    %vm2571 = vcmp.gt.f32.partialorder %v2468, 0.0
    %vm2572 = vcmp.gt.f32.partialorder %v1225, 0.0
    %vm2573 = vcmp.gt.f32.partialorder %v1403, 0.0
    %vm2574 = vcmp.gt.f32.partialorder %v1581, 0.0
    %vm2575 = vcmp.gt.f32.partialorder %v1759, 0.0
    %vm2576 = vcmp.gt.f32.partialorder %v1937, 0.0
    %vm2577 = vcmp.gt.f32.partialorder %v2115, 0.0
    %vm2578 = vcmp.gt.f32.partialorder %v2293, 0.0
    %vm2579 = vcmp.gt.f32.partialorder %v2471, 0.0
    %vm2580 = vcmp.gt.f32.partialorder %v1227, 0.0
    %vm2581 = vcmp.gt.f32.partialorder %v1405, 0.0
    %vm2582 = vcmp.gt.f32.partialorder %v1583, 0.0
    %vm2583 = vcmp.gt.f32.partialorder %v1761, 0.0
    %vm2584 = vcmp.gt.f32.partialorder %v1939, 0.0
    %vm2585 = vcmp.gt.f32.partialorder %v2117, 0.0
    %vm2586 = vcmp.gt.f32.partialorder %v2295, 0.0
    %vm2587 = vcmp.gt.f32.partialorder %v2473, 0.0
    %vm2588 = vcmp.gt.f32.partialorder %v1230, 0.0
    %vm2589 = vcmp.gt.f32.partialorder %v1408, 0.0
    %vm2590 = vcmp.gt.f32.partialorder %v1586, 0.0
    %vm2591 = vcmp.gt.f32.partialorder %v1764, 0.0
    %vm2592 = vcmp.gt.f32.partialorder %v1942, 0.0
    %vm2593 = vcmp.gt.f32.partialorder %v2120, 0.0
    %vm2594 = vcmp.gt.f32.partialorder %v2298, 0.0
    %vm2595 = vcmp.gt.f32.partialorder %v2476, 0.0
    %vm2596 = vcmp.gt.f32.partialorder %v1232, 0.0
    %vm2597 = vcmp.gt.f32.partialorder %v1410, 0.0
    %vm2598 = vcmp.gt.f32.partialorder %v1588, 0.0
    %vm2599 = vcmp.gt.f32.partialorder %v1766, 0.0
    %vm2600 = vcmp.gt.f32.partialorder %v1944, 0.0
    %vm2601 = vcmp.gt.f32.partialorder %v2122, 0.0
    %vm2602 = vcmp.gt.f32.partialorder %v2300, 0.0
    %vm2603 = vcmp.gt.f32.partialorder %v2478, 0.0
    %vm2604 = vcmp.gt.f32.partialorder %v1235, 0.0
    %vm2605 = vcmp.gt.f32.partialorder %v1413, 0.0
    %vm2606 = vcmp.gt.f32.partialorder %v1591, 0.0
    %vm2607 = vcmp.gt.f32.partialorder %v1769, 0.0
    %vm2608 = vcmp.gt.f32.partialorder %v1947, 0.0
    %vm2609 = vcmp.gt.f32.partialorder %v2125, 0.0
    %vm2610 = vcmp.gt.f32.partialorder %v2303, 0.0
    %vm2611 = vcmp.gt.f32.partialorder %v2481, 0.0
    %vm2612 = vcmp.gt.f32.partialorder %v1237, 0.0
    %vm2613 = vcmp.gt.f32.partialorder %v1415, 0.0
    %vm2614 = vcmp.gt.f32.partialorder %v1593, 0.0
    %vm2615 = vcmp.gt.f32.partialorder %v1771, 0.0
    %vm2616 = vcmp.gt.f32.partialorder %v1949, 0.0
    %vm2617 = vcmp.gt.f32.partialorder %v2127, 0.0
    %vm2618 = vcmp.gt.f32.partialorder %v2305, 0.0
    %vm2619 = vcmp.gt.f32.partialorder %v2483, 0.0
    %vm2620 = vcmp.gt.f32.partialorder %v1240, 0.0
    %vm2621 = vcmp.gt.f32.partialorder %v1418, 0.0
    %vm2622 = vcmp.gt.f32.partialorder %v1596, 0.0
    %vm2623 = vcmp.gt.f32.partialorder %v1774, 0.0
    %vm2624 = vcmp.gt.f32.partialorder %v1952, 0.0
    %vm2625 = vcmp.gt.f32.partialorder %v2130, 0.0
    %vm2626 = vcmp.gt.f32.partialorder %v2308, 0.0
    %vm2627 = vcmp.gt.f32.partialorder %v2486, 0.0
    %vm2628 = vcmp.gt.f32.partialorder %v1242, 0.0
    %vm2629 = vcmp.gt.f32.partialorder %v1420, 0.0
    %vm2630 = vcmp.gt.f32.partialorder %v1598, 0.0
    %vm2631 = vcmp.gt.f32.partialorder %v1776, 0.0
    %vm2632 = vcmp.gt.f32.partialorder %v1954, 0.0
    %vm2633 = vcmp.gt.f32.partialorder %v2132, 0.0
    %vm2634 = vcmp.gt.f32.partialorder %v2310, 0.0
    %vm2635 = vcmp.gt.f32.partialorder %v2488, 0.0
    %vm2636 = vcmp.gt.f32.partialorder %v1245, 0.0
    %vm2637 = vcmp.gt.f32.partialorder %v1423, 0.0
    %vm2638 = vcmp.gt.f32.partialorder %v1601, 0.0
    %vm2639 = vcmp.gt.f32.partialorder %v1779, 0.0
    %vm2640 = vcmp.gt.f32.partialorder %v1957, 0.0
    %vm2641 = vcmp.gt.f32.partialorder %v2135, 0.0
    %vm2642 = vcmp.gt.f32.partialorder %v2313, 0.0
    %vm2643 = vcmp.gt.f32.partialorder %v2491, 0.0
    %vm2644 = vcmp.gt.f32.partialorder %v1247, 0.0
    %vm2645 = vcmp.gt.f32.partialorder %v1425, 0.0
    %vm2646 = vcmp.gt.f32.partialorder %v1603, 0.0
    %vm2647 = vcmp.gt.f32.partialorder %v1781, 0.0
    %vm2648 = vcmp.gt.f32.partialorder %v1959, 0.0
    %vm2649 = vcmp.gt.f32.partialorder %v2137, 0.0
    %vm2650 = vcmp.gt.f32.partialorder %v2315, 0.0
    %vm2651 = vcmp.gt.f32.partialorder %v2493, 0.0
    %vm2652 = vcmp.gt.f32.partialorder %v1250, 0.0
    %vm2653 = vcmp.gt.f32.partialorder %v1428, 0.0
    %vm2654 = vcmp.gt.f32.partialorder %v1606, 0.0
    %vm2655 = vcmp.gt.f32.partialorder %v1784, 0.0
    %vm2656 = vcmp.gt.f32.partialorder %v1962, 0.0
    %vm2657 = vcmp.gt.f32.partialorder %v2140, 0.0
    %vm2658 = vcmp.gt.f32.partialorder %v2318, 0.0
    %vm2659 = vcmp.gt.f32.partialorder %v2496, 0.0
    %vm2660 = vcmp.gt.f32.partialorder %v1252, 0.0
    %vm2661 = vcmp.gt.f32.partialorder %v1430, 0.0
    %vm2662 = vcmp.gt.f32.partialorder %v1608, 0.0
    %vm2663 = vcmp.gt.f32.partialorder %v1786, 0.0
    %vm2664 = vcmp.gt.f32.partialorder %v1964, 0.0
    %vm2665 = vcmp.gt.f32.partialorder %v2142, 0.0
    %vm2666 = vcmp.gt.f32.partialorder %v2320, 0.0
    %vm2667 = vcmp.gt.f32.partialorder %v2498, 0.0
    %vm2668 = vcmp.gt.f32.partialorder %v1255, 0.0
    %vm2669 = vcmp.gt.f32.partialorder %v1433, 0.0
    %vm2670 = vcmp.gt.f32.partialorder %v1611, 0.0
    %vm2671 = vcmp.gt.f32.partialorder %v1789, 0.0
    %vm2672 = vcmp.gt.f32.partialorder %v1967, 0.0
    %vm2673 = vcmp.gt.f32.partialorder %v2145, 0.0
    %vm2674 = vcmp.gt.f32.partialorder %v2323, 0.0
    %vm2675 = vcmp.gt.f32.partialorder %v2501, 0.0
    %vm2676 = vcmp.gt.f32.partialorder %v1257, 0.0
    %vm2677 = vcmp.gt.f32.partialorder %v1435, 0.0
    %vm2678 = vcmp.gt.f32.partialorder %v1613, 0.0
    %vm2679 = vcmp.gt.f32.partialorder %v1791, 0.0
    %vm2680 = vcmp.gt.f32.partialorder %v1969, 0.0
    %vm2681 = vcmp.gt.f32.partialorder %v2147, 0.0
    %vm2682 = vcmp.gt.f32.partialorder %v2325, 0.0
    %vm2683 = vcmp.gt.f32.partialorder %v2503, 0.0
    %vm2684 = vcmp.gt.f32.partialorder %v1260, 0.0
    %vm2685 = vcmp.gt.f32.partialorder %v1438, 0.0
    %vm2686 = vcmp.gt.f32.partialorder %v1616, 0.0
    %vm2687 = vcmp.gt.f32.partialorder %v1794, 0.0
    %vm2688 = vcmp.gt.f32.partialorder %v1972, 0.0
    %vm2689 = vcmp.gt.f32.partialorder %v2150, 0.0
    %vm2690 = vcmp.gt.f32.partialorder %v2328, 0.0
    %vm2691 = vcmp.gt.f32.partialorder %v2506, 0.0
    %vm2692 = vcmp.gt.f32.partialorder %v1262, 0.0
    %vm2693 = vcmp.gt.f32.partialorder %v1440, 0.0
    %vm2694 = vcmp.gt.f32.partialorder %v1618, 0.0
    %vm2695 = vcmp.gt.f32.partialorder %v1796, 0.0
    %vm2696 = vcmp.gt.f32.partialorder %v1974, 0.0
    %vm2697 = vcmp.gt.f32.partialorder %v2152, 0.0
    %vm2698 = vcmp.gt.f32.partialorder %v2330, 0.0
    %vm2699 = vcmp.gt.f32.partialorder %v2508, 0.0
    %vm2700 = vcmp.gt.f32.partialorder %v1265, 0.0
    %vm2701 = vcmp.gt.f32.partialorder %v1443, 0.0
    %vm2702 = vcmp.gt.f32.partialorder %v1621, 0.0
    %vm2703 = vcmp.gt.f32.partialorder %v1799, 0.0
    %vm2704 = vcmp.gt.f32.partialorder %v1977, 0.0
    %vm2705 = vcmp.gt.f32.partialorder %v2155, 0.0
    %vm2706 = vcmp.gt.f32.partialorder %v2333, 0.0
    %vm2707 = vcmp.gt.f32.partialorder %v2511, 0.0
    %vm2708 = vcmp.gt.f32.partialorder %v1267, 0.0
    %vm2709 = vcmp.gt.f32.partialorder %v1445, 0.0
    %vm2710 = vcmp.gt.f32.partialorder %v1623, 0.0
    %vm2711 = vcmp.gt.f32.partialorder %v1801, 0.0
    %vm2712 = vcmp.gt.f32.partialorder %v1979, 0.0
    %vm2713 = vcmp.gt.f32.partialorder %v2157, 0.0
    %vm2714 = vcmp.gt.f32.partialorder %v2335, 0.0
    %vm2715 = vcmp.gt.f32.partialorder %v2513, 0.0
    %vm2716 = vcmp.gt.f32.partialorder %v1270, 0.0
    %vm2717 = vcmp.gt.f32.partialorder %v1448, 0.0
    %vm2718 = vcmp.gt.f32.partialorder %v1626, 0.0
    %vm2719 = vcmp.gt.f32.partialorder %v1804, 0.0
    %vm2720 = vcmp.gt.f32.partialorder %v1982, 0.0
    %vm2721 = vcmp.gt.f32.partialorder %v2160, 0.0
    %vm2722 = vcmp.gt.f32.partialorder %v2338, 0.0
    %vm2723 = vcmp.gt.f32.partialorder %v2516, 0.0
    %vm2724 = vcmp.gt.f32.partialorder %v1272, 0.0
    %vm2725 = vcmp.gt.f32.partialorder %v1450, 0.0
    %vm2726 = vcmp.gt.f32.partialorder %v1628, 0.0
    %vm2727 = vcmp.gt.f32.partialorder %v1806, 0.0
    %vm2728 = vcmp.gt.f32.partialorder %v1984, 0.0
    %vm2729 = vcmp.gt.f32.partialorder %v2162, 0.0
    %vm2730 = vcmp.gt.f32.partialorder %v2340, 0.0
    %vm2731 = vcmp.gt.f32.partialorder %v2518, 0.0
    %vm2732 = vcmp.gt.f32.partialorder %v1275, 0.0
    %vm2733 = vcmp.gt.f32.partialorder %v1453, 0.0
    %vm2734 = vcmp.gt.f32.partialorder %v1631, 0.0
    %vm2735 = vcmp.gt.f32.partialorder %v1809, 0.0
    %vm2736 = vcmp.gt.f32.partialorder %v1987, 0.0
    %vm2737 = vcmp.gt.f32.partialorder %v2165, 0.0
    %vm2738 = vcmp.gt.f32.partialorder %v2343, 0.0
    %vm2739 = vcmp.gt.f32.partialorder %v2521, 0.0
    %vm2740 = vcmp.gt.f32.partialorder %v1277, 0.0
    %vm2741 = vcmp.gt.f32.partialorder %v1455, 0.0
    %vm2742 = vcmp.gt.f32.partialorder %v1633, 0.0
    %vm2743 = vcmp.gt.f32.partialorder %v1811, 0.0
    %vm2744 = vcmp.gt.f32.partialorder %v1989, 0.0
    %vm2745 = vcmp.gt.f32.partialorder %v2167, 0.0
    %vm2746 = vcmp.gt.f32.partialorder %v2345, 0.0
    %vm2747 = vcmp.gt.f32.partialorder %v2523, 0.0
    %vm2748 = vcmp.gt.f32.partialorder %v1280, 0.0
    %vm2749 = vcmp.gt.f32.partialorder %v1458, 0.0
    %vm2750 = vcmp.gt.f32.partialorder %v1636, 0.0
    %vm2751 = vcmp.gt.f32.partialorder %v1814, 0.0
    %vm2752 = vcmp.gt.f32.partialorder %v1992, 0.0
    %vm2753 = vcmp.gt.f32.partialorder %v2170, 0.0
    %vm2754 = vcmp.gt.f32.partialorder %v2348, 0.0
    %vm2755 = vcmp.gt.f32.partialorder %v2526, 0.0
    %vm2756 = vcmp.gt.f32.partialorder %v1282, 0.0
    %vm2757 = vcmp.gt.f32.partialorder %v1460, 0.0
    %vm2758 = vcmp.gt.f32.partialorder %v1638, 0.0
    %vm2759 = vcmp.gt.f32.partialorder %v1816, 0.0
    %vm2760 = vcmp.gt.f32.partialorder %v1994, 0.0
    %vm2761 = vcmp.gt.f32.partialorder %v2172, 0.0
    %vm2762 = vcmp.gt.f32.partialorder %v2350, 0.0
    %vm2763 = vcmp.gt.f32.partialorder %v2528, 0.0
    %vm2764 = vcmp.gt.f32.partialorder %v1285, 0.0
    %vm2765 = vcmp.gt.f32.partialorder %v1463, 0.0
    %vm2766 = vcmp.gt.f32.partialorder %v1641, 0.0
    %vm2767 = vcmp.gt.f32.partialorder %v1819, 0.0
    %vm2768 = vcmp.gt.f32.partialorder %v1997, 0.0
    %vm2769 = vcmp.gt.f32.partialorder %v2175, 0.0
    %vm2770 = vcmp.gt.f32.partialorder %v2353, 0.0
    %vm2771 = vcmp.gt.f32.partialorder %v2531, 0.0
    %vm2772 = vcmp.gt.f32.partialorder %v1287, 0.0
    %vm2773 = vcmp.gt.f32.partialorder %v1465, 0.0
    %vm2774 = vcmp.gt.f32.partialorder %v1643, 0.0
    %vm2775 = vcmp.gt.f32.partialorder %v1821, 0.0
    %vm2776 = vcmp.gt.f32.partialorder %v1999, 0.0
    %vm2777 = vcmp.gt.f32.partialorder %v2177, 0.0
    %vm2778 = vcmp.gt.f32.partialorder %v2355, 0.0
    %vm2779 = vcmp.gt.f32.partialorder %v2533, 0.0
    %vm2780 = vcmp.gt.f32.partialorder %v1290, 0.0
    %vm2781 = vcmp.gt.f32.partialorder %v1468, 0.0
    %vm2782 = vcmp.gt.f32.partialorder %v1646, 0.0
    %vm2783 = vcmp.gt.f32.partialorder %v1824, 0.0
    %vm2784 = vcmp.gt.f32.partialorder %v2002, 0.0
    %vm2785 = vcmp.gt.f32.partialorder %v2180, 0.0
    %vm2786 = vcmp.gt.f32.partialorder %v2358, 0.0
    %vm2787 = vcmp.gt.f32.partialorder %v2536, 0.0
    %vm2788 = vcmp.gt.f32.partialorder %v1292, 0.0
    %vm2789 = vcmp.gt.f32.partialorder %v1470, 0.0
    %vm2790 = vcmp.gt.f32.partialorder %v1648, 0.0
    %vm2791 = vcmp.gt.f32.partialorder %v1826, 0.0
    %vm2792 = vcmp.gt.f32.partialorder %v2004, 0.0
    %vm2793 = vcmp.gt.f32.partialorder %v2182, 0.0
    %vm2794 = vcmp.gt.f32.partialorder %v2360, 0.0
    %vm2795 = vcmp.gt.f32.partialorder %v2538, 0.0
    %v2796 = vmul.f32 %v1215, 0.2
    %v2797 = vmul.f32 %v1393, 0.2
    %v2798 = vmul.f32 %v1571, 0.2
    %v2799 = vmul.f32 %v1749, 0.2
    %v2800 = vmul.f32 %v1927, 0.2
    %v2801 = vmul.f32 %v2105, 0.2
    %v2802 = vmul.f32 %v2283, 0.2
    %v2803 = vmul.f32 %v2461, 0.2
    %v2804 = vmul.f32 %v1217, 0.2
    %v2805 = vmul.f32 %v1395, 0.2
    %v2806 = vmul.f32 %v1573, 0.2
    %v2807 = vmul.f32 %v1751, 0.2
    %v2808 = vmul.f32 %v1929, 0.2
    %v2809 = vmul.f32 %v2107, 0.2
    %v2810 = vmul.f32 %v2285, 0.2
    %v2811 = vmul.f32 %v2463, 0.2
    %v2812 = vmul.f32 %v1220, 0.2
    %v2813 = vmul.f32 %v1398, 0.2
    %v2814 = vmul.f32 %v1576, 0.2
    %v2815 = vmul.f32 %v1754, 0.2
    %v2816 = vmul.f32 %v1932, 0.2
    %v2817 = vmul.f32 %v2110, 0.2
    %v2818 = vmul.f32 %v2288, 0.2
    %v2819 = vmul.f32 %v2466, 0.2
    %v2820 = vmul.f32 %v1222, 0.2
    %v2821 = vmul.f32 %v1400, 0.2
    %v2822 = vmul.f32 %v1578, 0.2
    %v2823 = vmul.f32 %v1756, 0.2
    %v2824 = vmul.f32 %v1934, 0.2
    %v2825 = vmul.f32 %v2112, 0.2
    %v2826 = vmul.f32 %v2290, 0.2
    %v2827 = vmul.f32 %v2468, 0.2
    %v2828 = vmul.f32 %v1225, 0.2
    %v2829 = vmul.f32 %v1403, 0.2
    %v2830 = vmul.f32 %v1581, 0.2
    %v2831 = vmul.f32 %v1759, 0.2
    %v2832 = vmul.f32 %v1937, 0.2
    %v2833 = vmul.f32 %v2115, 0.2
    %v2834 = vmul.f32 %v2293, 0.2
    %v2835 = vmul.f32 %v2471, 0.2
    %v2836 = vmul.f32 %v1227, 0.2
    %v2837 = vmul.f32 %v1405, 0.2
    %v2838 = vmul.f32 %v1583, 0.2
    %v2839 = vmul.f32 %v1761, 0.2
    %v2840 = vmul.f32 %v1939, 0.2
    %v2841 = vmul.f32 %v2117, 0.2
    %v2842 = vmul.f32 %v2295, 0.2
    %v2843 = vmul.f32 %v2473, 0.2
    %v2844 = vmul.f32 %v1230, 0.2
    %v2845 = vmul.f32 %v1408, 0.2
    %v2846 = vmul.f32 %v1586, 0.2
    %v2847 = vmul.f32 %v1764, 0.2
    %v2848 = vmul.f32 %v1942, 0.2
    %v2849 = vmul.f32 %v2120, 0.2
    %v2850 = vmul.f32 %v2298, 0.2
    %v2851 = vmul.f32 %v2476, 0.2
    %v2852 = vmul.f32 %v1232, 0.2
    %v2853 = vmul.f32 %v1410, 0.2
    %v2854 = vmul.f32 %v1588, 0.2
    %v2855 = vmul.f32 %v1766, 0.2
    %v2856 = vmul.f32 %v1944, 0.2
    %v2857 = vmul.f32 %v2122, 0.2
    %v2858 = vmul.f32 %v2300, 0.2
    %v2859 = vmul.f32 %v2478, 0.2
    %v2860 = vmul.f32 %v1235, 0.2
    %v2861 = vmul.f32 %v1413, 0.2
    %v2862 = vmul.f32 %v1591, 0.2
    %v2863 = vmul.f32 %v1769, 0.2
    %v2864 = vmul.f32 %v1947, 0.2
    %v2865 = vmul.f32 %v2125, 0.2
    %v2866 = vmul.f32 %v2303, 0.2
    %v2867 = vmul.f32 %v2481, 0.2
    %v2868 = vmul.f32 %v1237, 0.2
    %v2869 = vmul.f32 %v1415, 0.2
    %v2870 = vmul.f32 %v1593, 0.2
    %v2871 = vmul.f32 %v1771, 0.2
    %v2872 = vmul.f32 %v1949, 0.2
    %v2873 = vmul.f32 %v2127, 0.2
    %v2874 = vmul.f32 %v2305, 0.2
    %v2875 = vmul.f32 %v2483, 0.2
    %v2876 = vmul.f32 %v1240, 0.2
    %v2877 = vmul.f32 %v1418, 0.2
    %v2878 = vmul.f32 %v1596, 0.2
    %v2879 = vmul.f32 %v1774, 0.2
    %v2880 = vmul.f32 %v1952, 0.2
    %v2881 = vmul.f32 %v2130, 0.2
    %v2882 = vmul.f32 %v2308, 0.2
    %v2883 = vmul.f32 %v2486, 0.2
    %v2884 = vmul.f32 %v1242, 0.2
    %v2885 = vmul.f32 %v1420, 0.2
    %v2886 = vmul.f32 %v1598, 0.2
    %v2887 = vmul.f32 %v1776, 0.2
    %v2888 = vmul.f32 %v1954, 0.2
    %v2889 = vmul.f32 %v2132, 0.2
    %v2890 = vmul.f32 %v2310, 0.2
    %v2891 = vmul.f32 %v2488, 0.2
    %v2892 = vmul.f32 %v1245, 0.2
    %v2893 = vmul.f32 %v1423, 0.2
    %v2894 = vmul.f32 %v1601, 0.2
    %v2895 = vmul.f32 %v1779, 0.2
    %v2896 = vmul.f32 %v1957, 0.2
    %v2897 = vmul.f32 %v2135, 0.2
    %v2898 = vmul.f32 %v2313, 0.2
    %v2899 = vmul.f32 %v2491, 0.2
    %v2900 = vmul.f32 %v1247, 0.2
    %v2901 = vmul.f32 %v1425, 0.2
    %v2902 = vmul.f32 %v1603, 0.2
    %v2903 = vmul.f32 %v1781, 0.2
    %v2904 = vmul.f32 %v1959, 0.2
    %v2905 = vmul.f32 %v2137, 0.2
    %v2906 = vmul.f32 %v2315, 0.2
    %v2907 = vmul.f32 %v2493, 0.2
    %v2908 = vmul.f32 %v1250, 0.2
    %v2909 = vmul.f32 %v1428, 0.2
    %v2910 = vmul.f32 %v1606, 0.2
    %v2911 = vmul.f32 %v1784, 0.2
    %v2912 = vmul.f32 %v1962, 0.2
    %v2913 = vmul.f32 %v2140, 0.2
    %v2914 = vmul.f32 %v2318, 0.2
    %v2915 = vmul.f32 %v2496, 0.2
    %v2916 = vmul.f32 %v1252, 0.2
    %v2917 = vmul.f32 %v1430, 0.2
    %v2918 = vmul.f32 %v1608, 0.2
    %v2919 = vmul.f32 %v1786, 0.2
    %v2920 = vmul.f32 %v1964, 0.2
    %v2921 = vmul.f32 %v2142, 0.2
    %v2922 = vmul.f32 %v2320, 0.2
    %v2923 = vmul.f32 %v2498, 0.2
    %v2924 = vmul.f32 %v1255, 0.2
    %v2925 = vmul.f32 %v1433, 0.2
    %v2926 = vmul.f32 %v1611, 0.2
    %v2927 = vmul.f32 %v1789, 0.2
    %v2928 = vmul.f32 %v1967, 0.2
    %v2929 = vmul.f32 %v2145, 0.2
    %v2930 = vmul.f32 %v2323, 0.2
    %v2931 = vmul.f32 %v2501, 0.2
    %v2932 = vmul.f32 %v1257, 0.2
    %v2933 = vmul.f32 %v1435, 0.2
    %v2934 = vmul.f32 %v1613, 0.2
    %v2935 = vmul.f32 %v1791, 0.2
    %v2936 = vmul.f32 %v1969, 0.2
    %v2937 = vmul.f32 %v2147, 0.2
    %v2938 = vmul.f32 %v2325, 0.2
    %v2939 = vmul.f32 %v2503, 0.2
    %v2940 = vmul.f32 %v1260, 0.2
    %v2941 = vmul.f32 %v1438, 0.2
    %v2942 = vmul.f32 %v1616, 0.2
    %v2943 = vmul.f32 %v1794, 0.2
    %v2944 = vmul.f32 %v1972, 0.2
    %v2945 = vmul.f32 %v2150, 0.2
    %v2946 = vmul.f32 %v2328, 0.2
    %v2947 = vmul.f32 %v2506, 0.2
    %v2948 = vmul.f32 %v1262, 0.2
    %v2949 = vmul.f32 %v1440, 0.2
    %v2950 = vmul.f32 %v1618, 0.2
    %v2951 = vmul.f32 %v1796, 0.2
    %v2952 = vmul.f32 %v1974, 0.2
    %v2953 = vmul.f32 %v2152, 0.2
    %v2954 = vmul.f32 %v2330, 0.2
    %v2955 = vmul.f32 %v2508, 0.2
    %v2956 = vmul.f32 %v1265, 0.2
    %v2957 = vmul.f32 %v1443, 0.2
    %v2958 = vmul.f32 %v1621, 0.2
    %v2959 = vmul.f32 %v1799, 0.2
    %v2960 = vmul.f32 %v1977, 0.2
    %v2961 = vmul.f32 %v2155, 0.2
    %v2962 = vmul.f32 %v2333, 0.2
    %v2963 = vmul.f32 %v2511, 0.2
    %v2964 = vmul.f32 %v1267, 0.2
    %v2965 = vmul.f32 %v1445, 0.2
    %v2966 = vmul.f32 %v1623, 0.2
    %v2967 = vmul.f32 %v1801, 0.2
    %v2968 = vmul.f32 %v1979, 0.2
    %v2969 = vmul.f32 %v2157, 0.2
    %v2970 = vmul.f32 %v2335, 0.2
    %v2971 = vmul.f32 %v2513, 0.2
    %v2972 = vmul.f32 %v1270, 0.2
    %v2973 = vmul.f32 %v1448, 0.2
    %v2974 = vmul.f32 %v1626, 0.2
    %v2975 = vmul.f32 %v1804, 0.2
    %v2976 = vmul.f32 %v1982, 0.2
    %v2977 = vmul.f32 %v2160, 0.2
    %v2978 = vmul.f32 %v2338, 0.2
    %v2979 = vmul.f32 %v2516, 0.2
    %v2980 = vmul.f32 %v1272, 0.2
    %v2981 = vmul.f32 %v1450, 0.2
    %v2982 = vmul.f32 %v1628, 0.2
    %v2983 = vmul.f32 %v1806, 0.2
    %v2984 = vmul.f32 %v1984, 0.2
    %v2985 = vmul.f32 %v2162, 0.2
    %v2986 = vmul.f32 %v2340, 0.2
    %v2987 = vmul.f32 %v2518, 0.2
    %v2988 = vmul.f32 %v1275, 0.2
    %v2989 = vmul.f32 %v1453, 0.2
    %v2990 = vmul.f32 %v1631, 0.2
    %v2991 = vmul.f32 %v1809, 0.2
    %v2992 = vmul.f32 %v1987, 0.2
    %v2993 = vmul.f32 %v2165, 0.2
    %v2994 = vmul.f32 %v2343, 0.2
    %v2995 = vmul.f32 %v2521, 0.2
    %v2996 = vmul.f32 %v1277, 0.2
    %v2997 = vmul.f32 %v1455, 0.2
    %v2998 = vmul.f32 %v1633, 0.2
    %v2999 = vmul.f32 %v1811, 0.2
    %v3000 = vmul.f32 %v1989, 0.2
    %v3001 = vmul.f32 %v2167, 0.2
    %v3002 = vmul.f32 %v2345, 0.2
    %v3003 = vmul.f32 %v2523, 0.2
    %v3004 = vmul.f32 %v1280, 0.2
    %v3005 = vmul.f32 %v1458, 0.2
    %v3006 = vmul.f32 %v1636, 0.2
    %v3007 = vmul.f32 %v1814, 0.2
    %v3008 = vmul.f32 %v1992, 0.2
    %v3009 = vmul.f32 %v2170, 0.2
    %v3010 = vmul.f32 %v2348, 0.2
    %v3011 = vmul.f32 %v2526, 0.2
    %v3012 = vmul.f32 %v1282, 0.2
    %v3013 = vmul.f32 %v1460, 0.2
    %v3014 = vmul.f32 %v1638, 0.2
    %v3015 = vmul.f32 %v1816, 0.2
    %v3016 = vmul.f32 %v1994, 0.2
    %v3017 = vmul.f32 %v2172, 0.2
    %v3018 = vmul.f32 %v2350, 0.2
    %v3019 = vmul.f32 %v2528, 0.2
    %v3020 = vmul.f32 %v1285, 0.2
    %v3021 = vmul.f32 %v1463, 0.2
    %v3022 = vmul.f32 %v1641, 0.2
    %v3023 = vmul.f32 %v1819, 0.2
    %v3024 = vmul.f32 %v1997, 0.2
    %v3025 = vmul.f32 %v2175, 0.2
    %v3026 = vmul.f32 %v2353, 0.2
    %v3027 = vmul.f32 %v2531, 0.2
    %v3028 = vmul.f32 %v1287, 0.2
    %v3029 = vmul.f32 %v1465, 0.2
    %v3030 = vmul.f32 %v1643, 0.2
    %v3031 = vmul.f32 %v1821, 0.2
    %v3032 = vmul.f32 %v1999, 0.2
    %v3033 = vmul.f32 %v2177, 0.2
    %v3034 = vmul.f32 %v2355, 0.2
    %v3035 = vmul.f32 %v2533, 0.2
    %v3036 = vmul.f32 %v1290, 0.2
    %v3037 = vmul.f32 %v1468, 0.2
    %v3038 = vmul.f32 %v1646, 0.2
    %v3039 = vmul.f32 %v1824, 0.2
    %v3040 = vmul.f32 %v2002, 0.2
    %v3041 = vmul.f32 %v2180, 0.2
    %v3042 = vmul.f32 %v2358, 0.2
    %v3043 = vmul.f32 %v2536, 0.2
    %v3044 = vmul.f32 %v1292, 0.2
    %v3045 = vmul.f32 %v1470, 0.2
    %v3046 = vmul.f32 %v1648, 0.2
    %v3047 = vmul.f32 %v1826, 0.2
    %v3048 = vmul.f32 %v2004, 0.2
    %v3049 = vmul.f32 %v2182, 0.2
    %v3050 = vmul.f32 %v2360, 0.2
    %v3051 = vmul.f32 %v2538, 0.2
    %v3052 = vsel %vm2540, %v1215, %v2796
    %v3053 = vsel %vm2541, %v1393, %v2797
    %v3054 = vsel %vm2542, %v1571, %v2798
    %v3055 = vsel %vm2543, %v1749, %v2799
    %v3056 = vsel %vm2544, %v1927, %v2800
    %v3057 = vsel %vm2545, %v2105, %v2801
    %v3058 = vsel %vm2546, %v2283, %v2802
    %v3059 = vsel %vm2547, %v2461, %v2803
    %v3060 = vsel %vm2548, %v1217, %v2804
    %v3061 = vsel %vm2549, %v1395, %v2805
    %v3062 = vsel %vm2550, %v1573, %v2806
    %v3063 = vsel %vm2551, %v1751, %v2807
    %v3064 = vsel %vm2552, %v1929, %v2808
    %v3065 = vsel %vm2553, %v2107, %v2809
    %v3066 = vsel %vm2554, %v2285, %v2810
    %v3067 = vsel %vm2555, %v2463, %v2811
    %v3068 = vsel %vm2556, %v1220, %v2812
    %v3069 = vsel %vm2557, %v1398, %v2813
    %v3070 = vsel %vm2558, %v1576, %v2814
    %v3071 = vsel %vm2559, %v1754, %v2815
    %v3072 = vsel %vm2560, %v1932, %v2816
    %v3073 = vsel %vm2561, %v2110, %v2817
    %v3074 = vsel %vm2562, %v2288, %v2818
    %v3075 = vsel %vm2563, %v2466, %v2819
    %v3076 = vsel %vm2564, %v1222, %v2820
    %v3077 = vsel %vm2565, %v1400, %v2821
    %v3078 = vsel %vm2566, %v1578, %v2822
    %v3079 = vsel %vm2567, %v1756, %v2823
    %v3080 = vsel %vm2568, %v1934, %v2824
    %v3081 = vsel %vm2569, %v2112, %v2825
    %v3082 = vsel %vm2570, %v2290, %v2826
    %v3083 = vsel %vm2571, %v2468, %v2827
    %v3084 = vsel %vm2572, %v1225, %v2828
    %v3085 = vsel %vm2573, %v1403, %v2829
    %v3086 = vsel %vm2574, %v1581, %v2830
    %v3087 = vsel %vm2575, %v1759, %v2831
    %v3088 = vsel %vm2576, %v1937, %v2832
    %v3089 = vsel %vm2577, %v2115, %v2833
    %v3090 = vsel %vm2578, %v2293, %v2834
    %v3091 = vsel %vm2579, %v2471, %v2835
    %v3092 = vsel %vm2580, %v1227, %v2836
    %v3093 = vsel %vm2581, %v1405, %v2837
    %v3094 = vsel %vm2582, %v1583, %v2838
    %v3095 = vsel %vm2583, %v1761, %v2839
    %v3096 = vsel %vm2584, %v1939, %v2840
    %v3097 = vsel %vm2585, %v2117, %v2841
    %v3098 = vsel %vm2586, %v2295, %v2842
    %v3099 = vsel %vm2587, %v2473, %v2843
    %v3100 = vsel %vm2588, %v1230, %v2844
    %v3101 = vsel %vm2589, %v1408, %v2845
    %v3102 = vsel %vm2590, %v1586, %v2846
    %v3103 = vsel %vm2591, %v1764, %v2847
    %v3104 = vsel %vm2592, %v1942, %v2848
    %v3105 = vsel %vm2593, %v2120, %v2849
    %v3106 = vsel %vm2594, %v2298, %v2850
    %v3107 = vsel %vm2595, %v2476, %v2851
    %v3108 = vsel %vm2596, %v1232, %v2852
    %v3109 = vsel %vm2597, %v1410, %v2853
    %v3110 = vsel %vm2598, %v1588, %v2854
    %v3111 = vsel %vm2599, %v1766, %v2855
    %v3112 = vsel %vm2600, %v1944, %v2856
    %v3113 = vsel %vm2601, %v2122, %v2857
    %v3114 = vsel %vm2602, %v2300, %v2858
    %v3115 = vsel %vm2603, %v2478, %v2859
    %v3116 = vsel %vm2604, %v1235, %v2860
    %v3117 = vsel %vm2605, %v1413, %v2861
    %v3118 = vsel %vm2606, %v1591, %v2862
    %v3119 = vsel %vm2607, %v1769, %v2863
    %v3120 = vsel %vm2608, %v1947, %v2864
    %v3121 = vsel %vm2609, %v2125, %v2865
    %v3122 = vsel %vm2610, %v2303, %v2866
    %v3123 = vsel %vm2611, %v2481, %v2867
    %v3124 = vsel %vm2612, %v1237, %v2868
    %v3125 = vsel %vm2613, %v1415, %v2869
    %v3126 = vsel %vm2614, %v1593, %v2870
    %v3127 = vsel %vm2615, %v1771, %v2871
    %v3128 = vsel %vm2616, %v1949, %v2872
    %v3129 = vsel %vm2617, %v2127, %v2873
    %v3130 = vsel %vm2618, %v2305, %v2874
    %v3131 = vsel %vm2619, %v2483, %v2875
    %v3132 = vsel %vm2620, %v1240, %v2876
    %v3133 = vsel %vm2621, %v1418, %v2877
    %v3134 = vsel %vm2622, %v1596, %v2878
    %v3135 = vsel %vm2623, %v1774, %v2879
    %v3136 = vsel %vm2624, %v1952, %v2880
    %v3137 = vsel %vm2625, %v2130, %v2881
    %v3138 = vsel %vm2626, %v2308, %v2882
    %v3139 = vsel %vm2627, %v2486, %v2883
    %v3140 = vsel %vm2628, %v1242, %v2884
    %v3141 = vsel %vm2629, %v1420, %v2885
    %v3142 = vsel %vm2630, %v1598, %v2886
    %v3143 = vsel %vm2631, %v1776, %v2887
    %v3144 = vsel %vm2632, %v1954, %v2888
    %v3145 = vsel %vm2633, %v2132, %v2889
    %v3146 = vsel %vm2634, %v2310, %v2890
    %v3147 = vsel %vm2635, %v2488, %v2891
    %v3148 = vsel %vm2636, %v1245, %v2892
    %v3149 = vsel %vm2637, %v1423, %v2893
    %v3150 = vsel %vm2638, %v1601, %v2894
    %v3151 = vsel %vm2639, %v1779, %v2895
    %v3152 = vsel %vm2640, %v1957, %v2896
    %v3153 = vsel %vm2641, %v2135, %v2897
    %v3154 = vsel %vm2642, %v2313, %v2898
    %v3155 = vsel %vm2643, %v2491, %v2899
    %v3156 = vsel %vm2644, %v1247, %v2900
    %v3157 = vsel %vm2645, %v1425, %v2901
    %v3158 = vsel %vm2646, %v1603, %v2902
    %v3159 = vsel %vm2647, %v1781, %v2903
    %v3160 = vsel %vm2648, %v1959, %v2904
    %v3161 = vsel %vm2649, %v2137, %v2905
    %v3162 = vsel %vm2650, %v2315, %v2906
    %v3163 = vsel %vm2651, %v2493, %v2907
    %v3164 = vsel %vm2652, %v1250, %v2908
    %v3165 = vsel %vm2653, %v1428, %v2909
    %v3166 = vsel %vm2654, %v1606, %v2910
    %v3167 = vsel %vm2655, %v1784, %v2911
    %v3168 = vsel %vm2656, %v1962, %v2912
    %v3169 = vsel %vm2657, %v2140, %v2913
    %v3170 = vsel %vm2658, %v2318, %v2914
    %v3171 = vsel %vm2659, %v2496, %v2915
    %v3172 = vsel %vm2660, %v1252, %v2916
    %v3173 = vsel %vm2661, %v1430, %v2917
    %v3174 = vsel %vm2662, %v1608, %v2918
    %v3175 = vsel %vm2663, %v1786, %v2919
    %v3176 = vsel %vm2664, %v1964, %v2920
    %v3177 = vsel %vm2665, %v2142, %v2921
    %v3178 = vsel %vm2666, %v2320, %v2922
    %v3179 = vsel %vm2667, %v2498, %v2923
    %v3180 = vsel %vm2668, %v1255, %v2924
    %v3181 = vsel %vm2669, %v1433, %v2925
    %v3182 = vsel %vm2670, %v1611, %v2926
    %v3183 = vsel %vm2671, %v1789, %v2927
    %v3184 = vsel %vm2672, %v1967, %v2928
    %v3185 = vsel %vm2673, %v2145, %v2929
    %v3186 = vsel %vm2674, %v2323, %v2930
    %v3187 = vsel %vm2675, %v2501, %v2931
    %v3188 = vsel %vm2676, %v1257, %v2932
    %v3189 = vsel %vm2677, %v1435, %v2933
    %v3190 = vsel %vm2678, %v1613, %v2934
    %v3191 = vsel %vm2679, %v1791, %v2935
    %v3192 = vsel %vm2680, %v1969, %v2936
    %v3193 = vsel %vm2681, %v2147, %v2937
    %v3194 = vsel %vm2682, %v2325, %v2938
    %v3195 = vsel %vm2683, %v2503, %v2939
    %v3196 = vsel %vm2684, %v1260, %v2940
    %v3197 = vsel %vm2685, %v1438, %v2941
    %v3198 = vsel %vm2686, %v1616, %v2942
    %v3199 = vsel %vm2687, %v1794, %v2943
    %v3200 = vsel %vm2688, %v1972, %v2944
    %v3201 = vsel %vm2689, %v2150, %v2945
    %v3202 = vsel %vm2690, %v2328, %v2946
    %v3203 = vsel %vm2691, %v2506, %v2947
    %v3204 = vsel %vm2692, %v1262, %v2948
    %v3205 = vsel %vm2693, %v1440, %v2949
    %v3206 = vsel %vm2694, %v1618, %v2950
    %v3207 = vsel %vm2695, %v1796, %v2951
    %v3208 = vsel %vm2696, %v1974, %v2952
    %v3209 = vsel %vm2697, %v2152, %v2953
    %v3210 = vsel %vm2698, %v2330, %v2954
    %v3211 = vsel %vm2699, %v2508, %v2955
    %v3212 = vsel %vm2700, %v1265, %v2956
    %v3213 = vsel %vm2701, %v1443, %v2957
    %v3214 = vsel %vm2702, %v1621, %v2958
    %v3215 = vsel %vm2703, %v1799, %v2959
    %v3216 = vsel %vm2704, %v1977, %v2960
    %v3217 = vsel %vm2705, %v2155, %v2961
    %v3218 = vsel %vm2706, %v2333, %v2962
    %v3219 = vsel %vm2707, %v2511, %v2963
    %v3220 = vsel %vm2708, %v1267, %v2964
    %v3221 = vsel %vm2709, %v1445, %v2965
    %v3222 = vsel %vm2710, %v1623, %v2966
    %v3223 = vsel %vm2711, %v1801, %v2967
    %v3224 = vsel %vm2712, %v1979, %v2968
    %v3225 = vsel %vm2713, %v2157, %v2969
    %v3226 = vsel %vm2714, %v2335, %v2970
    %v3227 = vsel %vm2715, %v2513, %v2971
    %v3228 = vsel %vm2716, %v1270, %v2972
    %v3229 = vsel %vm2717, %v1448, %v2973
    %v3230 = vsel %vm2718, %v1626, %v2974
    %v3231 = vsel %vm2719, %v1804, %v2975
    %v3232 = vsel %vm2720, %v1982, %v2976
    %v3233 = vsel %vm2721, %v2160, %v2977
    %v3234 = vsel %vm2722, %v2338, %v2978
    %v3235 = vsel %vm2723, %v2516, %v2979
    %v3236 = vsel %vm2724, %v1272, %v2980
    %v3237 = vsel %vm2725, %v1450, %v2981
    %v3238 = vsel %vm2726, %v1628, %v2982
    %v3239 = vsel %vm2727, %v1806, %v2983
    %v3240 = vsel %vm2728, %v1984, %v2984
    %v3241 = vsel %vm2729, %v2162, %v2985
    %v3242 = vsel %vm2730, %v2340, %v2986
    %v3243 = vsel %vm2731, %v2518, %v2987
    %v3244 = vsel %vm2732, %v1275, %v2988
    %v3245 = vsel %vm2733, %v1453, %v2989
    %v3246 = vsel %vm2734, %v1631, %v2990
    %v3247 = vsel %vm2735, %v1809, %v2991
    %v3248 = vsel %vm2736, %v1987, %v2992
    %v3249 = vsel %vm2737, %v2165, %v2993
    %v3250 = vsel %vm2738, %v2343, %v2994
    %v3251 = vsel %vm2739, %v2521, %v2995
    %v3252 = vsel %vm2740, %v1277, %v2996
    %v3253 = vsel %vm2741, %v1455, %v2997
    %v3254 = vsel %vm2742, %v1633, %v2998
    %v3255 = vsel %vm2743, %v1811, %v2999
    %v3256 = vsel %vm2744, %v1989, %v3000
    %v3257 = vsel %vm2745, %v2167, %v3001
    %v3258 = vsel %vm2746, %v2345, %v3002
    %v3259 = vsel %vm2747, %v2523, %v3003
    %v3260 = vsel %vm2748, %v1280, %v3004
    %v3261 = vsel %vm2749, %v1458, %v3005
    %v3262 = vsel %vm2750, %v1636, %v3006
    %v3263 = vsel %vm2751, %v1814, %v3007
    %v3264 = vsel %vm2752, %v1992, %v3008
    %v3265 = vsel %vm2753, %v2170, %v3009
    %v3266 = vsel %vm2754, %v2348, %v3010
    %v3267 = vsel %vm2755, %v2526, %v3011
    %v3268 = vsel %vm2756, %v1282, %v3012
    %v3269 = vsel %vm2757, %v1460, %v3013
    %v3270 = vsel %vm2758, %v1638, %v3014
    %v3271 = vsel %vm2759, %v1816, %v3015
    %v3272 = vsel %vm2760, %v1994, %v3016
    %v3273 = vsel %vm2761, %v2172, %v3017
    %v3274 = vsel %vm2762, %v2350, %v3018
    %v3275 = vsel %vm2763, %v2528, %v3019
    %v3276 = vsel %vm2764, %v1285, %v3020
    %v3277 = vsel %vm2765, %v1463, %v3021
    %v3278 = vsel %vm2766, %v1641, %v3022
    %v3279 = vsel %vm2767, %v1819, %v3023
    %v3280 = vsel %vm2768, %v1997, %v3024
    %v3281 = vsel %vm2769, %v2175, %v3025
    %v3282 = vsel %vm2770, %v2353, %v3026
    %v3283 = vsel %vm2771, %v2531, %v3027
    %v3284 = vsel %vm2772, %v1287, %v3028
    %v3285 = vsel %vm2773, %v1465, %v3029
    %v3286 = vsel %vm2774, %v1643, %v3030
    %v3287 = vsel %vm2775, %v1821, %v3031
    %v3288 = vsel %vm2776, %v1999, %v3032
    %v3289 = vsel %vm2777, %v2177, %v3033
    %v3290 = vsel %vm2778, %v2355, %v3034
    %v3291 = vsel %vm2779, %v2533, %v3035
    %v3292 = vsel %vm2780, %v1290, %v3036
    %v3293 = vsel %vm2781, %v1468, %v3037
    %v3294 = vsel %vm2782, %v1646, %v3038
    %v3295 = vsel %vm2783, %v1824, %v3039
    %v3296 = vsel %vm2784, %v2002, %v3040
    %v3297 = vsel %vm2785, %v2180, %v3041
    %v3298 = vsel %vm2786, %v2358, %v3042
    %v3299 = vsel %vm2787, %v2536, %v3043
    %v3300 = vsel %vm2788, %v1292, %v3044
    %v3301 = vsel %vm2789, %v1470, %v3045
    %v3302 = vsel %vm2790, %v1648, %v3046
    %v3303 = vsel %vm2791, %v1826, %v3047
    %v3304 = vsel %vm2792, %v2004, %v3048
    %v3305 = vsel %vm2793, %v2182, %v3049
    %v3306 = vsel %vm2794, %v2360, %v3050
    %v3307 = vsel %vm2795, %v2538, %v3051
    %v3308 = vpack.c.bf16 %v3060, %v3052
    %v3309 = vpack.c.bf16 %v3061, %v3053
    %v3310 = vpack.c.bf16 %v3062, %v3054
    %v3311 = vpack.c.bf16 %v3063, %v3055
    %v3312 = vpack.c.bf16 %v3064, %v3056
    %v3313 = vpack.c.bf16 %v3065, %v3057
    %v3314 = vpack.c.bf16 %v3066, %v3058
    %v3315 = vpack.c.bf16 %v3067, %v3059
    %v3316 = vpack.c.bf16 %v3076, %v3068
    %v3317 = vpack.c.bf16 %v3077, %v3069
    %v3318 = vpack.c.bf16 %v3078, %v3070
    %v3319 = vpack.c.bf16 %v3079, %v3071
    %v3320 = vpack.c.bf16 %v3080, %v3072
    %v3321 = vpack.c.bf16 %v3081, %v3073
    %v3322 = vpack.c.bf16 %v3082, %v3074
    %v3323 = vpack.c.bf16 %v3083, %v3075
    %v3324 = vpack.c.bf16 %v3092, %v3084
    %v3325 = vpack.c.bf16 %v3093, %v3085
    %v3326 = vpack.c.bf16 %v3094, %v3086
    %v3327 = vpack.c.bf16 %v3095, %v3087
    %v3328 = vpack.c.bf16 %v3096, %v3088
    %v3329 = vpack.c.bf16 %v3097, %v3089
    %v3330 = vpack.c.bf16 %v3098, %v3090
    %v3331 = vpack.c.bf16 %v3099, %v3091
    %v3332 = vpack.c.bf16 %v3108, %v3100
    %v3333 = vpack.c.bf16 %v3109, %v3101
    %v3334 = vpack.c.bf16 %v3110, %v3102
    %v3335 = vpack.c.bf16 %v3111, %v3103
    %v3336 = vpack.c.bf16 %v3112, %v3104
    %v3337 = vpack.c.bf16 %v3113, %v3105
    %v3338 = vpack.c.bf16 %v3114, %v3106
    %v3339 = vpack.c.bf16 %v3115, %v3107
    %v3340 = vpack.c.bf16 %v3124, %v3116
    %v3341 = vpack.c.bf16 %v3125, %v3117
    %v3342 = vpack.c.bf16 %v3126, %v3118
    %v3343 = vpack.c.bf16 %v3127, %v3119
    %v3344 = vpack.c.bf16 %v3128, %v3120
    %v3345 = vpack.c.bf16 %v3129, %v3121
    %v3346 = vpack.c.bf16 %v3130, %v3122
    %v3347 = vpack.c.bf16 %v3131, %v3123
    %v3348 = vpack.c.bf16 %v3140, %v3132
    %v3349 = vpack.c.bf16 %v3141, %v3133
    %v3350 = vpack.c.bf16 %v3142, %v3134
    %v3351 = vpack.c.bf16 %v3143, %v3135
    %v3352 = vpack.c.bf16 %v3144, %v3136
    %v3353 = vpack.c.bf16 %v3145, %v3137
    %v3354 = vpack.c.bf16 %v3146, %v3138
    %v3355 = vpack.c.bf16 %v3147, %v3139
    %v3356 = vpack.c.bf16 %v3156, %v3148
    %v3357 = vpack.c.bf16 %v3157, %v3149
    %v3358 = vpack.c.bf16 %v3158, %v3150
    %v3359 = vpack.c.bf16 %v3159, %v3151
    %v3360 = vpack.c.bf16 %v3160, %v3152
    %v3361 = vpack.c.bf16 %v3161, %v3153
    %v3362 = vpack.c.bf16 %v3162, %v3154
    %v3363 = vpack.c.bf16 %v3163, %v3155
    %v3364 = vpack.c.bf16 %v3172, %v3164
    %v3365 = vpack.c.bf16 %v3173, %v3165
    %v3366 = vpack.c.bf16 %v3174, %v3166
    %v3367 = vpack.c.bf16 %v3175, %v3167
    %v3368 = vpack.c.bf16 %v3176, %v3168
    %v3369 = vpack.c.bf16 %v3177, %v3169
    %v3370 = vpack.c.bf16 %v3178, %v3170
    %v3371 = vpack.c.bf16 %v3179, %v3171
    %v3372 = vpack.c.bf16 %v3188, %v3180
    %v3373 = vpack.c.bf16 %v3189, %v3181
    %v3374 = vpack.c.bf16 %v3190, %v3182
    %v3375 = vpack.c.bf16 %v3191, %v3183
    %v3376 = vpack.c.bf16 %v3192, %v3184
    %v3377 = vpack.c.bf16 %v3193, %v3185
    %v3378 = vpack.c.bf16 %v3194, %v3186
    %v3379 = vpack.c.bf16 %v3195, %v3187
    %v3380 = vpack.c.bf16 %v3204, %v3196
    %v3381 = vpack.c.bf16 %v3205, %v3197
    %v3382 = vpack.c.bf16 %v3206, %v3198
    %v3383 = vpack.c.bf16 %v3207, %v3199
    %v3384 = vpack.c.bf16 %v3208, %v3200
    %v3385 = vpack.c.bf16 %v3209, %v3201
    %v3386 = vpack.c.bf16 %v3210, %v3202
    %v3387 = vpack.c.bf16 %v3211, %v3203
    %v3388 = vpack.c.bf16 %v3220, %v3212
    %v3389 = vpack.c.bf16 %v3221, %v3213
    %v3390 = vpack.c.bf16 %v3222, %v3214
    %v3391 = vpack.c.bf16 %v3223, %v3215
    %v3392 = vpack.c.bf16 %v3224, %v3216
    %v3393 = vpack.c.bf16 %v3225, %v3217
    %v3394 = vpack.c.bf16 %v3226, %v3218
    %v3395 = vpack.c.bf16 %v3227, %v3219
    %v3396 = vpack.c.bf16 %v3236, %v3228
    %v3397 = vpack.c.bf16 %v3237, %v3229
    %v3398 = vpack.c.bf16 %v3238, %v3230
    %v3399 = vpack.c.bf16 %v3239, %v3231
    %v3400 = vpack.c.bf16 %v3240, %v3232
    %v3401 = vpack.c.bf16 %v3241, %v3233
    %v3402 = vpack.c.bf16 %v3242, %v3234
    %v3403 = vpack.c.bf16 %v3243, %v3235
    %v3404 = vpack.c.bf16 %v3252, %v3244
    %v3405 = vpack.c.bf16 %v3253, %v3245
    %v3406 = vpack.c.bf16 %v3254, %v3246
    %v3407 = vpack.c.bf16 %v3255, %v3247
    %v3408 = vpack.c.bf16 %v3256, %v3248
    %v3409 = vpack.c.bf16 %v3257, %v3249
    %v3410 = vpack.c.bf16 %v3258, %v3250
    %v3411 = vpack.c.bf16 %v3259, %v3251
    %v3412 = vpack.c.bf16 %v3268, %v3260
    %v3413 = vpack.c.bf16 %v3269, %v3261
    %v3414 = vpack.c.bf16 %v3270, %v3262
    %v3415 = vpack.c.bf16 %v3271, %v3263
    %v3416 = vpack.c.bf16 %v3272, %v3264
    %v3417 = vpack.c.bf16 %v3273, %v3265
    %v3418 = vpack.c.bf16 %v3274, %v3266
    %v3419 = vpack.c.bf16 %v3275, %v3267
    %v3420 = vpack.c.bf16 %v3284, %v3276
    %v3421 = vpack.c.bf16 %v3285, %v3277
    %v3422 = vpack.c.bf16 %v3286, %v3278
    %v3423 = vpack.c.bf16 %v3287, %v3279
    %v3424 = vpack.c.bf16 %v3288, %v3280
    %v3425 = vpack.c.bf16 %v3289, %v3281
    %v3426 = vpack.c.bf16 %v3290, %v3282
    %v3427 = vpack.c.bf16 %v3291, %v3283
    %v3428 = vpack.c.bf16 %v3300, %v3292
    %v3429 = vpack.c.bf16 %v3301, %v3293
    %v3430 = vpack.c.bf16 %v3302, %v3294
    %v3431 = vpack.c.bf16 %v3303, %v3295
    %v3432 = vpack.c.bf16 %v3304, %v3296
    %v3433 = vpack.c.bf16 %v3305, %v3297
    %v3434 = vpack.c.bf16 %v3306, %v3298
    %v3435 = vpack.c.bf16 %v3307, %v3299
    %v3436 = vld [vmem:[#allocation8] sm:$0xff]
    %v3437 = vld [vmem:[#allocation8 + $0x8] sm:$0xff]
    %v3438 = vld [vmem:[#allocation8 + $0x10] sm:$0xff]
    %v3439 = vld [vmem:[#allocation8 + $0x18] sm:$0xff]
    %v3440 = vld [vmem:[#allocation8 + $0x20] sm:$0xff]
    %v3441 = vld [vmem:[#allocation8 + $0x28] sm:$0xff]
    %v3442 = vld [vmem:[#allocation8 + $0x30] sm:$0xff]
    %v3443 = vld [vmem:[#allocation8 + $0x38] sm:$0xff]
    %v3444 = vld [vmem:[#allocation8 + $0x40] sm:$0xff]
    %v3445 = vld [vmem:[#allocation8 + $0x48] sm:$0xff]
    %v3446 = vld [vmem:[#allocation8 + $0x50] sm:$0xff]
    %v3447 = vld [vmem:[#allocation8 + $0x58] sm:$0xff]
    %v3448 = vld [vmem:[#allocation8 + $0x60] sm:$0xff]
    %v3449 = vld [vmem:[#allocation8 + $0x68] sm:$0xff]
    %v3450 = vld [vmem:[#allocation8 + $0x70] sm:$0xff]
    %v3451 = vld [vmem:[#allocation8 + $0x78] sm:$0xff]
    %v3452 = vld [vmem:[#allocation8 + $0x80] sm:$0xff]
    %v3453 = vld [vmem:[#allocation8 + $0x88] sm:$0xff]
    %v3454 = vld [vmem:[#allocation8 + $0x90] sm:$0xff]
    %v3455 = vld [vmem:[#allocation8 + $0x98] sm:$0xff]
    %v3456 = vld [vmem:[#allocation8 + $0xa0] sm:$0xff]
    %v3457 = vld [vmem:[#allocation8 + $0xa8] sm:$0xff]
    %v3458 = vld [vmem:[#allocation8 + $0xb0] sm:$0xff]
    %v3459 = vld [vmem:[#allocation8 + $0xb8] sm:$0xff]
    %v3460 = vld [vmem:[#allocation8 + $0xc0] sm:$0xff]
    %v3461 = vld [vmem:[#allocation8 + $0xc8] sm:$0xff]
    %v3462 = vld [vmem:[#allocation8 + $0xd0] sm:$0xff]
    %v3463 = vld [vmem:[#allocation8 + $0xd8] sm:$0xff]
    %v3464 = vld [vmem:[#allocation8 + $0xe0] sm:$0xff]
    %v3465 = vld [vmem:[#allocation8 + $0xe8] sm:$0xff]
    %v3466 = vld [vmem:[#allocation8 + $0xf0] sm:$0xff]
    %v3467 = vld [vmem:[#allocation8 + $0xf8] sm:$0xff]
    %v3468 = vld [vmem:[#allocation8 + $0x100] sm:$0xff]
    %v3469 = vld [vmem:[#allocation8 + $0x108] sm:$0xff]
    %v3470 = vld [vmem:[#allocation8 + $0x110] sm:$0xff]
    %v3471 = vld [vmem:[#allocation8 + $0x118] sm:$0xff]
    %v3472 = vld [vmem:[#allocation8 + $0x120] sm:$0xff]
    %v3473 = vld [vmem:[#allocation8 + $0x128] sm:$0xff]
    %v3474 = vld [vmem:[#allocation8 + $0x130] sm:$0xff]
    %v3475 = vld [vmem:[#allocation8 + $0x138] sm:$0xff]
    %v3476 = vld [vmem:[#allocation8 + $0x140] sm:$0xff]
    %v3477 = vld [vmem:[#allocation8 + $0x148] sm:$0xff]
    %v3478 = vld [vmem:[#allocation8 + $0x150] sm:$0xff]
    %v3479 = vld [vmem:[#allocation8 + $0x158] sm:$0xff]
    %v3480 = vld [vmem:[#allocation8 + $0x160] sm:$0xff]
    %v3481 = vld [vmem:[#allocation8 + $0x168] sm:$0xff]
    %v3482 = vld [vmem:[#allocation8 + $0x170] sm:$0xff]
    %v3483 = vld [vmem:[#allocation8 + $0x178] sm:$0xff]
    %v3484 = vld [vmem:[#allocation8 + $0x180] sm:$0xff]
    %v3485 = vld [vmem:[#allocation8 + $0x188] sm:$0xff]
    %v3486 = vld [vmem:[#allocation8 + $0x190] sm:$0xff]
    %v3487 = vld [vmem:[#allocation8 + $0x198] sm:$0xff]
    %v3488 = vld [vmem:[#allocation8 + $0x1a0] sm:$0xff]
    %v3489 = vld [vmem:[#allocation8 + $0x1a8] sm:$0xff]
    %v3490 = vld [vmem:[#allocation8 + $0x1b0] sm:$0xff]
    %v3491 = vld [vmem:[#allocation8 + $0x1b8] sm:$0xff]
    %v3492 = vld [vmem:[#allocation8 + $0x1c0] sm:$0xff]
    %v3493 = vld [vmem:[#allocation8 + $0x1c8] sm:$0xff]
    %v3494 = vld [vmem:[#allocation8 + $0x1d0] sm:$0xff]
    %v3495 = vld [vmem:[#allocation8 + $0x1d8] sm:$0xff]
    %v3496 = vld [vmem:[#allocation8 + $0x1e0] sm:$0xff]
    %v3497 = vld [vmem:[#allocation8 + $0x1e8] sm:$0xff]
    %v3498 = vld [vmem:[#allocation8 + $0x1f0] sm:$0xff]
    %v3499 = vld [vmem:[#allocation8 + $0x1f8] sm:$0xff]
    %v3500 = vld [vmem:[#allocation8 + $0x200] sm:$0xff]
    %v3501 = vld [vmem:[#allocation8 + $0x208] sm:$0xff]
    %v3502 = vld [vmem:[#allocation8 + $0x210] sm:$0xff]
    %v3503 = vld [vmem:[#allocation8 + $0x218] sm:$0xff]
    %v3504 = vld [vmem:[#allocation8 + $0x220] sm:$0xff]
    %v3505 = vld [vmem:[#allocation8 + $0x228] sm:$0xff]
    %v3506 = vld [vmem:[#allocation8 + $0x230] sm:$0xff]
    %v3507 = vld [vmem:[#allocation8 + $0x238] sm:$0xff]
    %v3508 = vld [vmem:[#allocation8 + $0x240] sm:$0xff]
    %v3509 = vld [vmem:[#allocation8 + $0x248] sm:$0xff]
    %v3510 = vld [vmem:[#allocation8 + $0x250] sm:$0xff]
    %v3511 = vld [vmem:[#allocation8 + $0x258] sm:$0xff]
    %v3512 = vld [vmem:[#allocation8 + $0x260] sm:$0xff]
    %v3513 = vld [vmem:[#allocation8 + $0x268] sm:$0xff]
    %v3514 = vld [vmem:[#allocation8 + $0x270] sm:$0xff]
    %v3515 = vld [vmem:[#allocation8 + $0x278] sm:$0xff]
    %v3516 = vld [vmem:[#allocation8 + $0x280] sm:$0xff]
    %v3517 = vld [vmem:[#allocation8 + $0x288] sm:$0xff]
    %v3518 = vld [vmem:[#allocation8 + $0x290] sm:$0xff]
    %v3519 = vld [vmem:[#allocation8 + $0x298] sm:$0xff]
    %v3520 = vld [vmem:[#allocation8 + $0x2a0] sm:$0xff]
    %v3521 = vld [vmem:[#allocation8 + $0x2a8] sm:$0xff]
    %v3522 = vld [vmem:[#allocation8 + $0x2b0] sm:$0xff]
    %v3523 = vld [vmem:[#allocation8 + $0x2b8] sm:$0xff]
    %v3524 = vld [vmem:[#allocation8 + $0x2c0] sm:$0xff]
    %v3525 = vld [vmem:[#allocation8 + $0x2c8] sm:$0xff]
    %v3526 = vld [vmem:[#allocation8 + $0x2d0] sm:$0xff]
    %v3527 = vld [vmem:[#allocation8 + $0x2d8] sm:$0xff]
    %v3528 = vld [vmem:[#allocation8 + $0x2e0] sm:$0xff]
    %v3529 = vld [vmem:[#allocation8 + $0x2e8] sm:$0xff]
    %v3530 = vld [vmem:[#allocation8 + $0x2f0] sm:$0xff]
    %v3531 = vld [vmem:[#allocation8 + $0x2f8] sm:$0xff]
    %v3532 = vld [vmem:[#allocation8 + $0x300] sm:$0xff]
    %v3533 = vld [vmem:[#allocation8 + $0x308] sm:$0xff]
    %v3534 = vld [vmem:[#allocation8 + $0x310] sm:$0xff]
    %v3535 = vld [vmem:[#allocation8 + $0x318] sm:$0xff]
    %v3536 = vld [vmem:[#allocation8 + $0x320] sm:$0xff]
    %v3537 = vld [vmem:[#allocation8 + $0x328] sm:$0xff]
    %v3538 = vld [vmem:[#allocation8 + $0x330] sm:$0xff]
    %v3539 = vld [vmem:[#allocation8 + $0x338] sm:$0xff]
    %v3540 = vld [vmem:[#allocation8 + $0x340] sm:$0xff]
    %v3541 = vld [vmem:[#allocation8 + $0x348] sm:$0xff]
    %v3542 = vld [vmem:[#allocation8 + $0x350] sm:$0xff]
    %v3543 = vld [vmem:[#allocation8 + $0x358] sm:$0xff]
    %v3544 = vld [vmem:[#allocation8 + $0x360] sm:$0xff]
    %v3545 = vld [vmem:[#allocation8 + $0x368] sm:$0xff]
    %v3546 = vld [vmem:[#allocation8 + $0x370] sm:$0xff]
    %v3547 = vld [vmem:[#allocation8 + $0x378] sm:$0xff]
    %v3548 = vld [vmem:[#allocation8 + $0x380] sm:$0xff]
    %v3549 = vld [vmem:[#allocation8 + $0x388] sm:$0xff]
    %v3550 = vld [vmem:[#allocation8 + $0x390] sm:$0xff]
    %v3551 = vld [vmem:[#allocation8 + $0x398] sm:$0xff]
    %v3552 = vld [vmem:[#allocation8 + $0x3a0] sm:$0xff]
    %v3553 = vld [vmem:[#allocation8 + $0x3a8] sm:$0xff]
    %v3554 = vld [vmem:[#allocation8 + $0x3b0] sm:$0xff]
    %v3555 = vld [vmem:[#allocation8 + $0x3b8] sm:$0xff]
    %v3556 = vld [vmem:[#allocation8 + $0x3c0] sm:$0xff]
    %v3557 = vld [vmem:[#allocation8 + $0x3c8] sm:$0xff]
    %v3558 = vld [vmem:[#allocation8 + $0x3d0] sm:$0xff]
    %v3559 = vld [vmem:[#allocation8 + $0x3d8] sm:$0xff]
    %v3560 = vld [vmem:[#allocation8 + $0x3e0] sm:$0xff]
    %v3561 = vld [vmem:[#allocation8 + $0x3e8] sm:$0xff]
    %v3562 = vld [vmem:[#allocation8 + $0x3f0] sm:$0xff]
    %v3563 = vld [vmem:[#allocation8 + $0x3f8] sm:$0xff]
    %v3564 = vld [vmem:[#allocation8 + $0x400] sm:$0xff]
    %v3565 = vld [vmem:[#allocation8 + $0x408] sm:$0xff]
    %v3566 = vld [vmem:[#allocation8 + $0x410] sm:$0xff]
    %v3567 = vld [vmem:[#allocation8 + $0x418] sm:$0xff]
    %v3568 = vld [vmem:[#allocation8 + $0x420] sm:$0xff]
    %v3569 = vld [vmem:[#allocation8 + $0x428] sm:$0xff]
    %v3570 = vld [vmem:[#allocation8 + $0x430] sm:$0xff]
    %v3571 = vld [vmem:[#allocation8 + $0x438] sm:$0xff]
    %v3572 = vld [vmem:[#allocation8 + $0x440] sm:$0xff]
    %v3573 = vld [vmem:[#allocation8 + $0x448] sm:$0xff]
    %v3574 = vld [vmem:[#allocation8 + $0x450] sm:$0xff]
    %v3575 = vld [vmem:[#allocation8 + $0x458] sm:$0xff]
    %v3576 = vld [vmem:[#allocation8 + $0x460] sm:$0xff]
    %v3577 = vld [vmem:[#allocation8 + $0x468] sm:$0xff]
    %v3578 = vld [vmem:[#allocation8 + $0x470] sm:$0xff]
    %v3579 = vld [vmem:[#allocation8 + $0x478] sm:$0xff]
    %v3580 = vld [vmem:[#allocation8 + $0x480] sm:$0xff]
    %v3581 = vld [vmem:[#allocation8 + $0x488] sm:$0xff]
    %v3582 = vld [vmem:[#allocation8 + $0x490] sm:$0xff]
    %v3583 = vld [vmem:[#allocation8 + $0x498] sm:$0xff]
    %v3584 = vld [vmem:[#allocation8 + $0x4a0] sm:$0xff]
    %v3585 = vld [vmem:[#allocation8 + $0x4a8] sm:$0xff]
    %v3586 = vld [vmem:[#allocation8 + $0x4b0] sm:$0xff]
    %v3587 = vld [vmem:[#allocation8 + $0x4b8] sm:$0xff]
    %v3588 = vld [vmem:[#allocation8 + $0x4c0] sm:$0xff]
    %v3589 = vld [vmem:[#allocation8 + $0x4c8] sm:$0xff]
    %v3590 = vld [vmem:[#allocation8 + $0x4d0] sm:$0xff]
    %v3591 = vld [vmem:[#allocation8 + $0x4d8] sm:$0xff]
    %v3592 = vld [vmem:[#allocation8 + $0x4e0] sm:$0xff]
    %v3593 = vld [vmem:[#allocation8 + $0x4e8] sm:$0xff]
    %v3594 = vld [vmem:[#allocation8 + $0x4f0] sm:$0xff]
    %v3595 = vld [vmem:[#allocation8 + $0x4f8] sm:$0xff]
    %v3596 = vld [vmem:[#allocation8 + $0x500] sm:$0xff]
    %v3597 = vld [vmem:[#allocation8 + $0x508] sm:$0xff]
    %v3598 = vld [vmem:[#allocation8 + $0x510] sm:$0xff]
    %v3599 = vld [vmem:[#allocation8 + $0x518] sm:$0xff]
    %v3600 = vld [vmem:[#allocation8 + $0x520] sm:$0xff]
    %v3601 = vld [vmem:[#allocation8 + $0x528] sm:$0xff]
    %v3602 = vld [vmem:[#allocation8 + $0x530] sm:$0xff]
    %v3603 = vld [vmem:[#allocation8 + $0x538] sm:$0xff]
    %v3604 = vld [vmem:[#allocation8 + $0x540] sm:$0xff]
    %v3605 = vld [vmem:[#allocation8 + $0x548] sm:$0xff]
    %v3606 = vld [vmem:[#allocation8 + $0x550] sm:$0xff]
    %v3607 = vld [vmem:[#allocation8 + $0x558] sm:$0xff]
    %v3608 = vld [vmem:[#allocation8 + $0x560] sm:$0xff]
    %v3609 = vld [vmem:[#allocation8 + $0x568] sm:$0xff]
    %v3610 = vld [vmem:[#allocation8 + $0x570] sm:$0xff]
    %v3611 = vld [vmem:[#allocation8 + $0x578] sm:$0xff]
    %v3612 = vld [vmem:[#allocation8 + $0x580] sm:$0xff]
    %v3613 = vld [vmem:[#allocation8 + $0x588] sm:$0xff]
    %v3614 = vld [vmem:[#allocation8 + $0x590] sm:$0xff]
    %v3615 = vld [vmem:[#allocation8 + $0x598] sm:$0xff]
    %v3616 = vld [vmem:[#allocation8 + $0x5a0] sm:$0xff]
    %v3617 = vld [vmem:[#allocation8 + $0x5a8] sm:$0xff]
    %v3618 = vld [vmem:[#allocation8 + $0x5b0] sm:$0xff]
    %v3619 = vld [vmem:[#allocation8 + $0x5b8] sm:$0xff]
    %v3620 = vld [vmem:[#allocation8 + $0x5c0] sm:$0xff]
    %v3621 = vld [vmem:[#allocation8 + $0x5c8] sm:$0xff]
    %v3622 = vld [vmem:[#allocation8 + $0x5d0] sm:$0xff]
    %v3623 = vld [vmem:[#allocation8 + $0x5d8] sm:$0xff]
    %v3624 = vld [vmem:[#allocation8 + $0x5e0] sm:$0xff]
    %v3625 = vld [vmem:[#allocation8 + $0x5e8] sm:$0xff]
    %v3626 = vld [vmem:[#allocation8 + $0x5f0] sm:$0xff]
    %v3627 = vld [vmem:[#allocation8 + $0x5f8] sm:$0xff]
    %v3628 = vld [vmem:[#allocation8 + $0x600] sm:$0xff]
    %v3629 = vld [vmem:[#allocation8 + $0x608] sm:$0xff]
    %v3630 = vld [vmem:[#allocation8 + $0x610] sm:$0xff]
    %v3631 = vld [vmem:[#allocation8 + $0x618] sm:$0xff]
    %v3632 = vld [vmem:[#allocation8 + $0x620] sm:$0xff]
    %v3633 = vld [vmem:[#allocation8 + $0x628] sm:$0xff]
    %v3634 = vld [vmem:[#allocation8 + $0x630] sm:$0xff]
    %v3635 = vld [vmem:[#allocation8 + $0x638] sm:$0xff]
    %v3636 = vld [vmem:[#allocation8 + $0x640] sm:$0xff]
    %v3637 = vld [vmem:[#allocation8 + $0x648] sm:$0xff]
    %v3638 = vld [vmem:[#allocation8 + $0x650] sm:$0xff]
    %v3639 = vld [vmem:[#allocation8 + $0x658] sm:$0xff]
    %v3640 = vld [vmem:[#allocation8 + $0x660] sm:$0xff]
    %v3641 = vld [vmem:[#allocation8 + $0x668] sm:$0xff]
    %v3642 = vld [vmem:[#allocation8 + $0x670] sm:$0xff]
    %v3643 = vld [vmem:[#allocation8 + $0x678] sm:$0xff]
    %v3644 = vld [vmem:[#allocation8 + $0x680] sm:$0xff]
    %v3645 = vld [vmem:[#allocation8 + $0x688] sm:$0xff]
    %v3646 = vld [vmem:[#allocation8 + $0x690] sm:$0xff]
    %v3647 = vld [vmem:[#allocation8 + $0x698] sm:$0xff]
    %v3648 = vld [vmem:[#allocation8 + $0x6a0] sm:$0xff]
    %v3649 = vld [vmem:[#allocation8 + $0x6a8] sm:$0xff]
    %v3650 = vld [vmem:[#allocation8 + $0x6b0] sm:$0xff]
    %v3651 = vld [vmem:[#allocation8 + $0x6b8] sm:$0xff]
    %v3652 = vld [vmem:[#allocation8 + $0x6c0] sm:$0xff]
    %v3653 = vld [vmem:[#allocation8 + $0x6c8] sm:$0xff]
    %v3654 = vld [vmem:[#allocation8 + $0x6d0] sm:$0xff]
    %v3655 = vld [vmem:[#allocation8 + $0x6d8] sm:$0xff]
    %v3656 = vld [vmem:[#allocation8 + $0x6e0] sm:$0xff]
    %v3657 = vld [vmem:[#allocation8 + $0x6e8] sm:$0xff]
    %v3658 = vld [vmem:[#allocation8 + $0x6f0] sm:$0xff]
    %v3659 = vld [vmem:[#allocation8 + $0x6f8] sm:$0xff]
    %v3660 = vld [vmem:[#allocation8 + $0x700] sm:$0xff]
    %v3661 = vld [vmem:[#allocation8 + $0x708] sm:$0xff]
    %v3662 = vld [vmem:[#allocation8 + $0x710] sm:$0xff]
    %v3663 = vld [vmem:[#allocation8 + $0x718] sm:$0xff]
    %v3664 = vld [vmem:[#allocation8 + $0x720] sm:$0xff]
    %v3665 = vld [vmem:[#allocation8 + $0x728] sm:$0xff]
    %v3666 = vld [vmem:[#allocation8 + $0x730] sm:$0xff]
    %v3667 = vld [vmem:[#allocation8 + $0x738] sm:$0xff]
    %v3668 = vld [vmem:[#allocation8 + $0x740] sm:$0xff]
    %v3669 = vld [vmem:[#allocation8 + $0x748] sm:$0xff]
    %v3670 = vld [vmem:[#allocation8 + $0x750] sm:$0xff]
    %v3671 = vld [vmem:[#allocation8 + $0x758] sm:$0xff]
    %v3672 = vld [vmem:[#allocation8 + $0x760] sm:$0xff]
    %v3673 = vld [vmem:[#allocation8 + $0x768] sm:$0xff]
    %v3674 = vld [vmem:[#allocation8 + $0x770] sm:$0xff]
    %v3675 = vld [vmem:[#allocation8 + $0x778] sm:$0xff]
    %v3676 = vld [vmem:[#allocation8 + $0x780] sm:$0xff]
    %v3677 = vld [vmem:[#allocation8 + $0x788] sm:$0xff]
    %v3678 = vld [vmem:[#allocation8 + $0x790] sm:$0xff]
    %v3679 = vld [vmem:[#allocation8 + $0x798] sm:$0xff]
    %v3680 = vld [vmem:[#allocation8 + $0x7a0] sm:$0xff]
    %v3681 = vld [vmem:[#allocation8 + $0x7a8] sm:$0xff]
    %v3682 = vld [vmem:[#allocation8 + $0x7b0] sm:$0xff]
    %v3683 = vld [vmem:[#allocation8 + $0x7b8] sm:$0xff]
    %v3684 = vld [vmem:[#allocation8 + $0x7c0] sm:$0xff]
    %v3685 = vld [vmem:[#allocation8 + $0x7c8] sm:$0xff]
    %v3686 = vld [vmem:[#allocation8 + $0x7d0] sm:$0xff]
    %v3687 = vld [vmem:[#allocation8 + $0x7d8] sm:$0xff]
    %v3688 = vld [vmem:[#allocation8 + $0x7e0] sm:$0xff]
    %v3689 = vld [vmem:[#allocation8 + $0x7e8] sm:$0xff]
    %v3690 = vld [vmem:[#allocation8 + $0x7f0] sm:$0xff]
    %v3691 = vld [vmem:[#allocation8 + $0x7f8] sm:$0xff]
    %v3692 = vld [vmem:[#allocation10] sm:$0xf]
    %v3694 = vperm.slane %v3692, 0
    %v3695 = vperm.slane %v3692, 1
    %v3696 = vperm.slane %v3692, 2
    %v3697 = vperm.slane %v3692, 3
    %v3958 = vunpack.c.l.b16 %v3436
    %v3959 = vunpack.c.h.b16 %v3436
    %v3960 = vunpack.c.l.b16 %v3437
    %v3961 = vunpack.c.h.b16 %v3437
    %v3962 = vunpack.c.l.b16 %v3438
    %v3963 = vunpack.c.h.b16 %v3438
    %v3964 = vunpack.c.l.b16 %v3439
    %v3965 = vunpack.c.h.b16 %v3439
    %v3966 = vunpack.c.l.b16 %v3440
    %v3967 = vunpack.c.h.b16 %v3440
    %v3968 = vunpack.c.l.b16 %v3441
    %v3969 = vunpack.c.h.b16 %v3441
    %v3970 = vunpack.c.l.b16 %v3442
    %v3971 = vunpack.c.h.b16 %v3442
    %v3972 = vunpack.c.l.b16 %v3443
    %v3973 = vunpack.c.h.b16 %v3443
    %v3974 = vunpack.c.l.b16 %v3444
    %v3975 = vunpack.c.h.b16 %v3444
    %v3976 = vunpack.c.l.b16 %v3445
    %v3977 = vunpack.c.h.b16 %v3445
    %v3978 = vunpack.c.l.b16 %v3446
    %v3979 = vunpack.c.h.b16 %v3446
    %v3980 = vunpack.c.l.b16 %v3447
    %v3981 = vunpack.c.h.b16 %v3447
    %v3982 = vunpack.c.l.b16 %v3448
    %v3983 = vunpack.c.h.b16 %v3448
    %v3984 = vunpack.c.l.b16 %v3449
    %v3985 = vunpack.c.h.b16 %v3449
    %v3986 = vunpack.c.l.b16 %v3450
    %v3987 = vunpack.c.h.b16 %v3450
    %v3988 = vunpack.c.l.b16 %v3451
    %v3989 = vunpack.c.h.b16 %v3451
    %v3990 = vunpack.c.l.b16 %v3452
    %v3991 = vunpack.c.h.b16 %v3452
    %v3992 = vunpack.c.l.b16 %v3453
    %v3993 = vunpack.c.h.b16 %v3453
    %v3994 = vunpack.c.l.b16 %v3454
    %v3995 = vunpack.c.h.b16 %v3454
    %v3996 = vunpack.c.l.b16 %v3455
    %v3997 = vunpack.c.h.b16 %v3455
    %v3998 = vunpack.c.l.b16 %v3456
    %v3999 = vunpack.c.h.b16 %v3456
    %v4000 = vunpack.c.l.b16 %v3457
    %v4001 = vunpack.c.h.b16 %v3457
    %v4002 = vunpack.c.l.b16 %v3458
    %v4003 = vunpack.c.h.b16 %v3458
    %v4004 = vunpack.c.l.b16 %v3459
    %v4005 = vunpack.c.h.b16 %v3459
    %v4006 = vunpack.c.l.b16 %v3460
    %v4007 = vunpack.c.h.b16 %v3460
    %v4008 = vunpack.c.l.b16 %v3461
    %v4009 = vunpack.c.h.b16 %v3461
    %v4010 = vunpack.c.l.b16 %v3462
    %v4011 = vunpack.c.h.b16 %v3462
    %v4012 = vunpack.c.l.b16 %v3463
    %v4013 = vunpack.c.h.b16 %v3463
    %v4014 = vunpack.c.l.b16 %v3464
    %v4015 = vunpack.c.h.b16 %v3464
    %v4016 = vunpack.c.l.b16 %v3465
    %v4017 = vunpack.c.h.b16 %v3465
    %v4018 = vunpack.c.l.b16 %v3466
    %v4019 = vunpack.c.h.b16 %v3466
    %v4020 = vunpack.c.l.b16 %v3467
    %v4021 = vunpack.c.h.b16 %v3467
    %v4022 = vunpack.c.l.b16 %v3468
    %v4023 = vunpack.c.h.b16 %v3468
    %v4024 = vunpack.c.l.b16 %v3469
    %v4025 = vunpack.c.h.b16 %v3469
    %v4026 = vunpack.c.l.b16 %v3470
    %v4027 = vunpack.c.h.b16 %v3470
    %v4028 = vunpack.c.l.b16 %v3471
    %v4029 = vunpack.c.h.b16 %v3471
    %v4030 = vunpack.c.l.b16 %v3472
    %v4031 = vunpack.c.h.b16 %v3472
    %v4032 = vunpack.c.l.b16 %v3473
    %v4033 = vunpack.c.h.b16 %v3473
    %v4034 = vunpack.c.l.b16 %v3474
    %v4035 = vunpack.c.h.b16 %v3474
    %v4036 = vunpack.c.l.b16 %v3475
    %v4037 = vunpack.c.h.b16 %v3475
    %v4038 = vunpack.c.l.b16 %v3476
    %v4039 = vunpack.c.h.b16 %v3476
    %v4040 = vunpack.c.l.b16 %v3477
    %v4041 = vunpack.c.h.b16 %v3477
    %v4042 = vunpack.c.l.b16 %v3478
    %v4043 = vunpack.c.h.b16 %v3478
    %v4044 = vunpack.c.l.b16 %v3479
    %v4045 = vunpack.c.h.b16 %v3479
    %v4046 = vunpack.c.l.b16 %v3480
    %v4047 = vunpack.c.h.b16 %v3480
    %v4048 = vunpack.c.l.b16 %v3481
    %v4049 = vunpack.c.h.b16 %v3481
    %v4050 = vunpack.c.l.b16 %v3482
    %v4051 = vunpack.c.h.b16 %v3482
    %v4052 = vunpack.c.l.b16 %v3483
    %v4053 = vunpack.c.h.b16 %v3483
    %v4054 = vunpack.c.l.b16 %v3484
    %v4055 = vunpack.c.h.b16 %v3484
    %v4056 = vunpack.c.l.b16 %v3485
    %v4057 = vunpack.c.h.b16 %v3485
    %v4058 = vunpack.c.l.b16 %v3486
    %v4059 = vunpack.c.h.b16 %v3486
    %v4060 = vunpack.c.l.b16 %v3487
    %v4061 = vunpack.c.h.b16 %v3487
    %v4062 = vunpack.c.l.b16 %v3488
    %v4063 = vunpack.c.h.b16 %v3488
    %v4064 = vunpack.c.l.b16 %v3489
    %v4065 = vunpack.c.h.b16 %v3489
    %v4066 = vunpack.c.l.b16 %v3490
    %v4067 = vunpack.c.h.b16 %v3490
    %v4068 = vunpack.c.l.b16 %v3491
    %v4069 = vunpack.c.h.b16 %v3491
    %v4070 = vunpack.c.l.b16 %v3492
    %v4071 = vunpack.c.h.b16 %v3492
    %v4072 = vunpack.c.l.b16 %v3493
    %v4073 = vunpack.c.h.b16 %v3493
    %v4074 = vunpack.c.l.b16 %v3494
    %v4075 = vunpack.c.h.b16 %v3494
    %v4076 = vunpack.c.l.b16 %v3495
    %v4077 = vunpack.c.h.b16 %v3495
    %v4078 = vunpack.c.l.b16 %v3496
    %v4079 = vunpack.c.h.b16 %v3496
    %v4080 = vunpack.c.l.b16 %v3497
    %v4081 = vunpack.c.h.b16 %v3497
    %v4082 = vunpack.c.l.b16 %v3498
    %v4083 = vunpack.c.h.b16 %v3498
    %v4084 = vunpack.c.l.b16 %v3499
    %v4085 = vunpack.c.h.b16 %v3499
    %v4086 = vunpack.c.l.b16 %v3500
    %v4087 = vunpack.c.h.b16 %v3500
    %v4088 = vunpack.c.l.b16 %v3501
    %v4089 = vunpack.c.h.b16 %v3501
    %v4090 = vunpack.c.l.b16 %v3502
    %v4091 = vunpack.c.h.b16 %v3502
    %v4092 = vunpack.c.l.b16 %v3503
    %v4093 = vunpack.c.h.b16 %v3503
    %v4094 = vunpack.c.l.b16 %v3504
    %v4095 = vunpack.c.h.b16 %v3504
    %v4096 = vunpack.c.l.b16 %v3505
    %v4097 = vunpack.c.h.b16 %v3505
    %v4098 = vunpack.c.l.b16 %v3506
    %v4099 = vunpack.c.h.b16 %v3506
    %v4100 = vunpack.c.l.b16 %v3507
    %v4101 = vunpack.c.h.b16 %v3507
    %v4102 = vunpack.c.l.b16 %v3508
    %v4103 = vunpack.c.h.b16 %v3508
    %v4104 = vunpack.c.l.b16 %v3509
    %v4105 = vunpack.c.h.b16 %v3509
    %v4106 = vunpack.c.l.b16 %v3510
    %v4107 = vunpack.c.h.b16 %v3510
    %v4108 = vunpack.c.l.b16 %v3511
    %v4109 = vunpack.c.h.b16 %v3511
    %v4110 = vunpack.c.l.b16 %v3512
    %v4111 = vunpack.c.h.b16 %v3512
    %v4112 = vunpack.c.l.b16 %v3513
    %v4113 = vunpack.c.h.b16 %v3513
    %v4114 = vunpack.c.l.b16 %v3514
    %v4115 = vunpack.c.h.b16 %v3514
    %v4116 = vunpack.c.l.b16 %v3515
    %v4117 = vunpack.c.h.b16 %v3515
    %v4118 = vunpack.c.l.b16 %v3516
    %v4119 = vunpack.c.h.b16 %v3516
    %v4120 = vunpack.c.l.b16 %v3517
    %v4121 = vunpack.c.h.b16 %v3517
    %v4122 = vunpack.c.l.b16 %v3518
    %v4123 = vunpack.c.h.b16 %v3518
    %v4124 = vunpack.c.l.b16 %v3519
    %v4125 = vunpack.c.h.b16 %v3519
    %v4126 = vunpack.c.l.b16 %v3520
    %v4127 = vunpack.c.h.b16 %v3520
    %v4128 = vunpack.c.l.b16 %v3521
    %v4129 = vunpack.c.h.b16 %v3521
    %v4130 = vunpack.c.l.b16 %v3522
    %v4131 = vunpack.c.h.b16 %v3522
    %v4132 = vunpack.c.l.b16 %v3523
    %v4133 = vunpack.c.h.b16 %v3523
    %v4134 = vunpack.c.l.b16 %v3524
    %v4135 = vunpack.c.h.b16 %v3524
    %v4136 = vunpack.c.l.b16 %v3525
    %v4137 = vunpack.c.h.b16 %v3525
    %v4138 = vunpack.c.l.b16 %v3526
    %v4139 = vunpack.c.h.b16 %v3526
    %v4140 = vunpack.c.l.b16 %v3527
    %v4141 = vunpack.c.h.b16 %v3527
    %v4142 = vunpack.c.l.b16 %v3528
    %v4143 = vunpack.c.h.b16 %v3528
    %v4144 = vunpack.c.l.b16 %v3529
    %v4145 = vunpack.c.h.b16 %v3529
    %v4146 = vunpack.c.l.b16 %v3530
    %v4147 = vunpack.c.h.b16 %v3530
    %v4148 = vunpack.c.l.b16 %v3531
    %v4149 = vunpack.c.h.b16 %v3531
    %v4150 = vunpack.c.l.b16 %v3532
    %v4151 = vunpack.c.h.b16 %v3532
    %v4152 = vunpack.c.l.b16 %v3533
    %v4153 = vunpack.c.h.b16 %v3533
    %v4154 = vunpack.c.l.b16 %v3534
    %v4155 = vunpack.c.h.b16 %v3534
    %v4156 = vunpack.c.l.b16 %v3535
    %v4157 = vunpack.c.h.b16 %v3535
    %v4158 = vunpack.c.l.b16 %v3536
    %v4159 = vunpack.c.h.b16 %v3536
    %v4160 = vunpack.c.l.b16 %v3537
    %v4161 = vunpack.c.h.b16 %v3537
    %v4162 = vunpack.c.l.b16 %v3538
    %v4163 = vunpack.c.h.b16 %v3538
    %v4164 = vunpack.c.l.b16 %v3539
    %v4165 = vunpack.c.h.b16 %v3539
    %v4166 = vunpack.c.l.b16 %v3540
    %v4167 = vunpack.c.h.b16 %v3540
    %v4168 = vunpack.c.l.b16 %v3541
    %v4169 = vunpack.c.h.b16 %v3541
    %v4170 = vunpack.c.l.b16 %v3542
    %v4171 = vunpack.c.h.b16 %v3542
    %v4172 = vunpack.c.l.b16 %v3543
    %v4173 = vunpack.c.h.b16 %v3543
    %v4174 = vunpack.c.l.b16 %v3544
    %v4175 = vunpack.c.h.b16 %v3544
    %v4176 = vunpack.c.l.b16 %v3545
    %v4177 = vunpack.c.h.b16 %v3545
    %v4178 = vunpack.c.l.b16 %v3546
    %v4179 = vunpack.c.h.b16 %v3546
    %v4180 = vunpack.c.l.b16 %v3547
    %v4181 = vunpack.c.h.b16 %v3547
    %v4182 = vunpack.c.l.b16 %v3548
    %v4183 = vunpack.c.h.b16 %v3548
    %v4184 = vunpack.c.l.b16 %v3549
    %v4185 = vunpack.c.h.b16 %v3549
    %v4186 = vunpack.c.l.b16 %v3550
    %v4187 = vunpack.c.h.b16 %v3550
    %v4188 = vunpack.c.l.b16 %v3551
    %v4189 = vunpack.c.h.b16 %v3551
    %v4190 = vunpack.c.l.b16 %v3552
    %v4191 = vunpack.c.h.b16 %v3552
    %v4192 = vunpack.c.l.b16 %v3553
    %v4193 = vunpack.c.h.b16 %v3553
    %v4194 = vunpack.c.l.b16 %v3554
    %v4195 = vunpack.c.h.b16 %v3554
    %v4196 = vunpack.c.l.b16 %v3555
    %v4197 = vunpack.c.h.b16 %v3555
    %v4198 = vunpack.c.l.b16 %v3556
    %v4199 = vunpack.c.h.b16 %v3556
    %v4200 = vunpack.c.l.b16 %v3557
    %v4201 = vunpack.c.h.b16 %v3557
    %v4202 = vunpack.c.l.b16 %v3558
    %v4203 = vunpack.c.h.b16 %v3558
    %v4204 = vunpack.c.l.b16 %v3559
    %v4205 = vunpack.c.h.b16 %v3559
    %v4206 = vunpack.c.l.b16 %v3560
    %v4207 = vunpack.c.h.b16 %v3560
    %v4208 = vunpack.c.l.b16 %v3561
    %v4209 = vunpack.c.h.b16 %v3561
    %v4210 = vunpack.c.l.b16 %v3562
    %v4211 = vunpack.c.h.b16 %v3562
    %v4212 = vunpack.c.l.b16 %v3563
    %v4213 = vunpack.c.h.b16 %v3563
    %v4214 = vunpack.c.l.b16 %v3564
    %v4215 = vunpack.c.h.b16 %v3564
    %v4216 = vunpack.c.l.b16 %v3565
    %v4217 = vunpack.c.h.b16 %v3565
    %v4218 = vunpack.c.l.b16 %v3566
    %v4219 = vunpack.c.h.b16 %v3566
    %v4220 = vunpack.c.l.b16 %v3567
    %v4221 = vunpack.c.h.b16 %v3567
    %v4222 = vunpack.c.l.b16 %v3568
    %v4223 = vunpack.c.h.b16 %v3568
    %v4224 = vunpack.c.l.b16 %v3569
    %v4225 = vunpack.c.h.b16 %v3569
    %v4226 = vunpack.c.l.b16 %v3570
    %v4227 = vunpack.c.h.b16 %v3570
    %v4228 = vunpack.c.l.b16 %v3571
    %v4229 = vunpack.c.h.b16 %v3571
    %v4230 = vunpack.c.l.b16 %v3572
    %v4231 = vunpack.c.h.b16 %v3572
    %v4232 = vunpack.c.l.b16 %v3573
    %v4233 = vunpack.c.h.b16 %v3573
    %v4234 = vunpack.c.l.b16 %v3574
    %v4235 = vunpack.c.h.b16 %v3574
    %v4236 = vunpack.c.l.b16 %v3575
    %v4237 = vunpack.c.h.b16 %v3575
    %v4238 = vunpack.c.l.b16 %v3576
    %v4239 = vunpack.c.h.b16 %v3576
    %v4240 = vunpack.c.l.b16 %v3577
    %v4241 = vunpack.c.h.b16 %v3577
    %v4242 = vunpack.c.l.b16 %v3578
    %v4243 = vunpack.c.h.b16 %v3578
    %v4244 = vunpack.c.l.b16 %v3579
    %v4245 = vunpack.c.h.b16 %v3579
    %v4246 = vunpack.c.l.b16 %v3580
    %v4247 = vunpack.c.h.b16 %v3580
    %v4248 = vunpack.c.l.b16 %v3581
    %v4249 = vunpack.c.h.b16 %v3581
    %v4250 = vunpack.c.l.b16 %v3582
    %v4251 = vunpack.c.h.b16 %v3582
    %v4252 = vunpack.c.l.b16 %v3583
    %v4253 = vunpack.c.h.b16 %v3583
    %v4254 = vunpack.c.l.b16 %v3584
    %v4255 = vunpack.c.h.b16 %v3584
    %v4256 = vunpack.c.l.b16 %v3585
    %v4257 = vunpack.c.h.b16 %v3585
    %v4258 = vunpack.c.l.b16 %v3586
    %v4259 = vunpack.c.h.b16 %v3586
    %v4260 = vunpack.c.l.b16 %v3587
    %v4261 = vunpack.c.h.b16 %v3587
    %v4262 = vunpack.c.l.b16 %v3588
    %v4263 = vunpack.c.h.b16 %v3588
    %v4264 = vunpack.c.l.b16 %v3589
    %v4265 = vunpack.c.h.b16 %v3589
    %v4266 = vunpack.c.l.b16 %v3590
    %v4267 = vunpack.c.h.b16 %v3590
    %v4268 = vunpack.c.l.b16 %v3591
    %v4269 = vunpack.c.h.b16 %v3591
    %v4270 = vunpack.c.l.b16 %v3592
    %v4271 = vunpack.c.h.b16 %v3592
    %v4272 = vunpack.c.l.b16 %v3593
    %v4273 = vunpack.c.h.b16 %v3593
    %v4274 = vunpack.c.l.b16 %v3594
    %v4275 = vunpack.c.h.b16 %v3594
    %v4276 = vunpack.c.l.b16 %v3595
    %v4277 = vunpack.c.h.b16 %v3595
    %v4278 = vunpack.c.l.b16 %v3596
    %v4279 = vunpack.c.h.b16 %v3596
    %v4280 = vunpack.c.l.b16 %v3597
    %v4281 = vunpack.c.h.b16 %v3597
    %v4282 = vunpack.c.l.b16 %v3598
    %v4283 = vunpack.c.h.b16 %v3598
    %v4284 = vunpack.c.l.b16 %v3599
    %v4285 = vunpack.c.h.b16 %v3599
    %v4286 = vunpack.c.l.b16 %v3600
    %v4287 = vunpack.c.h.b16 %v3600
    %v4288 = vunpack.c.l.b16 %v3601
    %v4289 = vunpack.c.h.b16 %v3601
    %v4290 = vunpack.c.l.b16 %v3602
    %v4291 = vunpack.c.h.b16 %v3602
    %v4292 = vunpack.c.l.b16 %v3603
    %v4293 = vunpack.c.h.b16 %v3603
    %v4294 = vunpack.c.l.b16 %v3604
    %v4295 = vunpack.c.h.b16 %v3604
    %v4296 = vunpack.c.l.b16 %v3605
    %v4297 = vunpack.c.h.b16 %v3605
    %v4298 = vunpack.c.l.b16 %v3606
    %v4299 = vunpack.c.h.b16 %v3606
    %v4300 = vunpack.c.l.b16 %v3607
    %v4301 = vunpack.c.h.b16 %v3607
    %v4302 = vunpack.c.l.b16 %v3608
    %v4303 = vunpack.c.h.b16 %v3608
    %v4304 = vunpack.c.l.b16 %v3609
    %v4305 = vunpack.c.h.b16 %v3609
    %v4306 = vunpack.c.l.b16 %v3610
    %v4307 = vunpack.c.h.b16 %v3610
    %v4308 = vunpack.c.l.b16 %v3611
    %v4309 = vunpack.c.h.b16 %v3611
    %v4310 = vunpack.c.l.b16 %v3612
    %v4311 = vunpack.c.h.b16 %v3612
    %v4312 = vunpack.c.l.b16 %v3613
    %v4313 = vunpack.c.h.b16 %v3613
    %v4314 = vunpack.c.l.b16 %v3614
    %v4315 = vunpack.c.h.b16 %v3614
    %v4316 = vunpack.c.l.b16 %v3615
    %v4317 = vunpack.c.h.b16 %v3615
    %v4318 = vunpack.c.l.b16 %v3616
    %v4319 = vunpack.c.h.b16 %v3616
    %v4320 = vunpack.c.l.b16 %v3617
    %v4321 = vunpack.c.h.b16 %v3617
    %v4322 = vunpack.c.l.b16 %v3618
    %v4323 = vunpack.c.h.b16 %v3618
    %v4324 = vunpack.c.l.b16 %v3619
    %v4325 = vunpack.c.h.b16 %v3619
    %v4326 = vunpack.c.l.b16 %v3620
    %v4327 = vunpack.c.h.b16 %v3620
    %v4328 = vunpack.c.l.b16 %v3621
    %v4329 = vunpack.c.h.b16 %v3621
    %v4330 = vunpack.c.l.b16 %v3622
    %v4331 = vunpack.c.h.b16 %v3622
    %v4332 = vunpack.c.l.b16 %v3623
    %v4333 = vunpack.c.h.b16 %v3623
    %v4334 = vunpack.c.l.b16 %v3624
    %v4335 = vunpack.c.h.b16 %v3624
    %v4336 = vunpack.c.l.b16 %v3625
    %v4337 = vunpack.c.h.b16 %v3625
    %v4338 = vunpack.c.l.b16 %v3626
    %v4339 = vunpack.c.h.b16 %v3626
    %v4340 = vunpack.c.l.b16 %v3627
    %v4341 = vunpack.c.h.b16 %v3627
    %v4342 = vunpack.c.l.b16 %v3628
    %v4343 = vunpack.c.h.b16 %v3628
    %v4344 = vunpack.c.l.b16 %v3629
    %v4345 = vunpack.c.h.b16 %v3629
    %v4346 = vunpack.c.l.b16 %v3630
    %v4347 = vunpack.c.h.b16 %v3630
    %v4348 = vunpack.c.l.b16 %v3631
    %v4349 = vunpack.c.h.b16 %v3631
    %v4350 = vunpack.c.l.b16 %v3632
    %v4351 = vunpack.c.h.b16 %v3632
    %v4352 = vunpack.c.l.b16 %v3633
    %v4353 = vunpack.c.h.b16 %v3633
    %v4354 = vunpack.c.l.b16 %v3634
    %v4355 = vunpack.c.h.b16 %v3634
    %v4356 = vunpack.c.l.b16 %v3635
    %v4357 = vunpack.c.h.b16 %v3635
    %v4358 = vunpack.c.l.b16 %v3636
    %v4359 = vunpack.c.h.b16 %v3636
    %v4360 = vunpack.c.l.b16 %v3637
    %v4361 = vunpack.c.h.b16 %v3637
    %v4362 = vunpack.c.l.b16 %v3638
    %v4363 = vunpack.c.h.b16 %v3638
    %v4364 = vunpack.c.l.b16 %v3639
    %v4365 = vunpack.c.h.b16 %v3639
    %v4366 = vunpack.c.l.b16 %v3640
    %v4367 = vunpack.c.h.b16 %v3640
    %v4368 = vunpack.c.l.b16 %v3641
    %v4369 = vunpack.c.h.b16 %v3641
    %v4370 = vunpack.c.l.b16 %v3642
    %v4371 = vunpack.c.h.b16 %v3642
    %v4372 = vunpack.c.l.b16 %v3643
    %v4373 = vunpack.c.h.b16 %v3643
    %v4374 = vunpack.c.l.b16 %v3644
    %v4375 = vunpack.c.h.b16 %v3644
    %v4376 = vunpack.c.l.b16 %v3645
    %v4377 = vunpack.c.h.b16 %v3645
    %v4378 = vunpack.c.l.b16 %v3646
    %v4379 = vunpack.c.h.b16 %v3646
    %v4380 = vunpack.c.l.b16 %v3647
    %v4381 = vunpack.c.h.b16 %v3647
    %v4382 = vunpack.c.l.b16 %v3648
    %v4383 = vunpack.c.h.b16 %v3648
    %v4384 = vunpack.c.l.b16 %v3649
    %v4385 = vunpack.c.h.b16 %v3649
    %v4386 = vunpack.c.l.b16 %v3650
    %v4387 = vunpack.c.h.b16 %v3650
    %v4388 = vunpack.c.l.b16 %v3651
    %v4389 = vunpack.c.h.b16 %v3651
    %v4390 = vunpack.c.l.b16 %v3652
    %v4391 = vunpack.c.h.b16 %v3652
    %v4392 = vunpack.c.l.b16 %v3653
    %v4393 = vunpack.c.h.b16 %v3653
    %v4394 = vunpack.c.l.b16 %v3654
    %v4395 = vunpack.c.h.b16 %v3654
    %v4396 = vunpack.c.l.b16 %v3655
    %v4397 = vunpack.c.h.b16 %v3655
    %v4398 = vunpack.c.l.b16 %v3656
    %v4399 = vunpack.c.h.b16 %v3656
    %v4400 = vunpack.c.l.b16 %v3657
    %v4401 = vunpack.c.h.b16 %v3657
    %v4402 = vunpack.c.l.b16 %v3658
    %v4403 = vunpack.c.h.b16 %v3658
    %v4404 = vunpack.c.l.b16 %v3659
    %v4405 = vunpack.c.h.b16 %v3659
    %v4406 = vunpack.c.l.b16 %v3660
    %v4407 = vunpack.c.h.b16 %v3660
    %v4408 = vunpack.c.l.b16 %v3661
    %v4409 = vunpack.c.h.b16 %v3661
    %v4410 = vunpack.c.l.b16 %v3662
    %v4411 = vunpack.c.h.b16 %v3662
    %v4412 = vunpack.c.l.b16 %v3663
    %v4413 = vunpack.c.h.b16 %v3663
    %v4414 = vunpack.c.l.b16 %v3664
    %v4415 = vunpack.c.h.b16 %v3664
    %v4416 = vunpack.c.l.b16 %v3665
    %v4417 = vunpack.c.h.b16 %v3665
    %v4418 = vunpack.c.l.b16 %v3666
    %v4419 = vunpack.c.h.b16 %v3666
    %v4420 = vunpack.c.l.b16 %v3667
    %v4421 = vunpack.c.h.b16 %v3667
    %v4422 = vunpack.c.l.b16 %v3668
    %v4423 = vunpack.c.h.b16 %v3668
    %v4424 = vunpack.c.l.b16 %v3669
    %v4425 = vunpack.c.h.b16 %v3669
    %v4426 = vunpack.c.l.b16 %v3670
    %v4427 = vunpack.c.h.b16 %v3670
    %v4428 = vunpack.c.l.b16 %v3671
    %v4429 = vunpack.c.h.b16 %v3671
    %v4430 = vunpack.c.l.b16 %v3672
    %v4431 = vunpack.c.h.b16 %v3672
    %v4432 = vunpack.c.l.b16 %v3673
    %v4433 = vunpack.c.h.b16 %v3673
    %v4434 = vunpack.c.l.b16 %v3674
    %v4435 = vunpack.c.h.b16 %v3674
    %v4436 = vunpack.c.l.b16 %v3675
    %v4437 = vunpack.c.h.b16 %v3675
    %v4438 = vunpack.c.l.b16 %v3676
    %v4439 = vunpack.c.h.b16 %v3676
    %v4440 = vunpack.c.l.b16 %v3677
    %v4441 = vunpack.c.h.b16 %v3677
    %v4442 = vunpack.c.l.b16 %v3678
    %v4443 = vunpack.c.h.b16 %v3678
    %v4444 = vunpack.c.l.b16 %v3679
    %v4445 = vunpack.c.h.b16 %v3679
    %v4446 = vunpack.c.l.b16 %v3680
    %v4447 = vunpack.c.h.b16 %v3680
    %v4448 = vunpack.c.l.b16 %v3681
    %v4449 = vunpack.c.h.b16 %v3681
    %v4450 = vunpack.c.l.b16 %v3682
    %v4451 = vunpack.c.h.b16 %v3682
    %v4452 = vunpack.c.l.b16 %v3683
    %v4453 = vunpack.c.h.b16 %v3683
    %v4454 = vunpack.c.l.b16 %v3684
    %v4455 = vunpack.c.h.b16 %v3684
    %v4456 = vunpack.c.l.b16 %v3685
    %v4457 = vunpack.c.h.b16 %v3685
    %v4458 = vunpack.c.l.b16 %v3686
    %v4459 = vunpack.c.h.b16 %v3686
    %v4460 = vunpack.c.l.b16 %v3687
    %v4461 = vunpack.c.h.b16 %v3687
    %v4462 = vunpack.c.l.b16 %v3688
    %v4463 = vunpack.c.h.b16 %v3688
    %v4464 = vunpack.c.l.b16 %v3689
    %v4465 = vunpack.c.h.b16 %v3689
    %v4466 = vunpack.c.l.b16 %v3690
    %v4467 = vunpack.c.h.b16 %v3690
    %v4468 = vunpack.c.l.b16 %v3691
    %v4469 = vunpack.c.h.b16 %v3691
    %v4470 = vpack.c.b16 %v3962, %v3958
    %v4471 = vpack.c.b16 %v3963, %v3959
    %v4472 = vpack.c.b16 %v3964, %v3960
    %v4473 = vpack.c.b16 %v3965, %v3961
    %v4474 = vpack.c.b16 %v3970, %v3966
    %v4475 = vpack.c.b16 %v3971, %v3967
    %v4476 = vpack.c.b16 %v3972, %v3968
    %v4477 = vpack.c.b16 %v3973, %v3969
    %v4478 = vpack.c.b16 %v3978, %v3974
    %v4479 = vpack.c.b16 %v3979, %v3975
    %v4480 = vpack.c.b16 %v3980, %v3976
    %v4481 = vpack.c.b16 %v3981, %v3977
    %v4482 = vpack.c.b16 %v3986, %v3982
    %v4483 = vpack.c.b16 %v3987, %v3983
    %v4484 = vpack.c.b16 %v3988, %v3984
    %v4485 = vpack.c.b16 %v3989, %v3985
    %v4486 = vpack.c.b16 %v3994, %v3990
    %v4487 = vpack.c.b16 %v3995, %v3991
    %v4488 = vpack.c.b16 %v3996, %v3992
    %v4489 = vpack.c.b16 %v3997, %v3993
    %v4490 = vpack.c.b16 %v4002, %v3998
    %v4491 = vpack.c.b16 %v4003, %v3999
    %v4492 = vpack.c.b16 %v4004, %v4000
    %v4493 = vpack.c.b16 %v4005, %v4001
    %v4494 = vpack.c.b16 %v4010, %v4006
    %v4495 = vpack.c.b16 %v4011, %v4007
    %v4496 = vpack.c.b16 %v4012, %v4008
    %v4497 = vpack.c.b16 %v4013, %v4009
    %v4498 = vpack.c.b16 %v4018, %v4014
    %v4499 = vpack.c.b16 %v4019, %v4015
    %v4500 = vpack.c.b16 %v4020, %v4016
    %v4501 = vpack.c.b16 %v4021, %v4017
    %v4502 = vpack.c.b16 %v4026, %v4022
    %v4503 = vpack.c.b16 %v4027, %v4023
    %v4504 = vpack.c.b16 %v4028, %v4024
    %v4505 = vpack.c.b16 %v4029, %v4025
    %v4506 = vpack.c.b16 %v4034, %v4030
    %v4507 = vpack.c.b16 %v4035, %v4031
    %v4508 = vpack.c.b16 %v4036, %v4032
    %v4509 = vpack.c.b16 %v4037, %v4033
    %v4510 = vpack.c.b16 %v4042, %v4038
    %v4511 = vpack.c.b16 %v4043, %v4039
    %v4512 = vpack.c.b16 %v4044, %v4040
    %v4513 = vpack.c.b16 %v4045, %v4041
    %v4514 = vpack.c.b16 %v4050, %v4046
    %v4515 = vpack.c.b16 %v4051, %v4047
    %v4516 = vpack.c.b16 %v4052, %v4048
    %v4517 = vpack.c.b16 %v4053, %v4049
    %v4518 = vpack.c.b16 %v4058, %v4054
    %v4519 = vpack.c.b16 %v4059, %v4055
    %v4520 = vpack.c.b16 %v4060, %v4056
    %v4521 = vpack.c.b16 %v4061, %v4057
    %v4522 = vpack.c.b16 %v4066, %v4062
    %v4523 = vpack.c.b16 %v4067, %v4063
    %v4524 = vpack.c.b16 %v4068, %v4064
    %v4525 = vpack.c.b16 %v4069, %v4065
    %v4526 = vpack.c.b16 %v4074, %v4070
    %v4527 = vpack.c.b16 %v4075, %v4071
    %v4528 = vpack.c.b16 %v4076, %v4072
    %v4529 = vpack.c.b16 %v4077, %v4073
    %v4530 = vpack.c.b16 %v4082, %v4078
    %v4531 = vpack.c.b16 %v4083, %v4079
    %v4532 = vpack.c.b16 %v4084, %v4080
    %v4533 = vpack.c.b16 %v4085, %v4081
    %v4534 = vpack.c.b16 %v4090, %v4086
    %v4535 = vpack.c.b16 %v4091, %v4087
    %v4536 = vpack.c.b16 %v4092, %v4088
    %v4537 = vpack.c.b16 %v4093, %v4089
    %v4538 = vpack.c.b16 %v4098, %v4094
    %v4539 = vpack.c.b16 %v4099, %v4095
    %v4540 = vpack.c.b16 %v4100, %v4096
    %v4541 = vpack.c.b16 %v4101, %v4097
    %v4542 = vpack.c.b16 %v4106, %v4102
    %v4543 = vpack.c.b16 %v4107, %v4103
    %v4544 = vpack.c.b16 %v4108, %v4104
    %v4545 = vpack.c.b16 %v4109, %v4105
    %v4546 = vpack.c.b16 %v4114, %v4110
    %v4547 = vpack.c.b16 %v4115, %v4111
    %v4548 = vpack.c.b16 %v4116, %v4112
    %v4549 = vpack.c.b16 %v4117, %v4113
    %v4550 = vpack.c.b16 %v4122, %v4118
    %v4551 = vpack.c.b16 %v4123, %v4119
    %v4552 = vpack.c.b16 %v4124, %v4120
    %v4553 = vpack.c.b16 %v4125, %v4121
    %v4554 = vpack.c.b16 %v4130, %v4126
    %v4555 = vpack.c.b16 %v4131, %v4127
    %v4556 = vpack.c.b16 %v4132, %v4128
    %v4557 = vpack.c.b16 %v4133, %v4129
    %v4558 = vpack.c.b16 %v4138, %v4134
    %v4559 = vpack.c.b16 %v4139, %v4135
    %v4560 = vpack.c.b16 %v4140, %v4136
    %v4561 = vpack.c.b16 %v4141, %v4137
    %v4562 = vpack.c.b16 %v4146, %v4142
    %v4563 = vpack.c.b16 %v4147, %v4143
    %v4564 = vpack.c.b16 %v4148, %v4144
    %v4565 = vpack.c.b16 %v4149, %v4145
    %v4566 = vpack.c.b16 %v4154, %v4150
    %v4567 = vpack.c.b16 %v4155, %v4151
    %v4568 = vpack.c.b16 %v4156, %v4152
    %v4569 = vpack.c.b16 %v4157, %v4153
    %v4570 = vpack.c.b16 %v4162, %v4158
    %v4571 = vpack.c.b16 %v4163, %v4159
    %v4572 = vpack.c.b16 %v4164, %v4160
    %v4573 = vpack.c.b16 %v4165, %v4161
    %v4574 = vpack.c.b16 %v4170, %v4166
    %v4575 = vpack.c.b16 %v4171, %v4167
    %v4576 = vpack.c.b16 %v4172, %v4168
    %v4577 = vpack.c.b16 %v4173, %v4169
    %v4578 = vpack.c.b16 %v4178, %v4174
    %v4579 = vpack.c.b16 %v4179, %v4175
    %v4580 = vpack.c.b16 %v4180, %v4176
    %v4581 = vpack.c.b16 %v4181, %v4177
    %v4582 = vpack.c.b16 %v4186, %v4182
    %v4583 = vpack.c.b16 %v4187, %v4183
    %v4584 = vpack.c.b16 %v4188, %v4184
    %v4585 = vpack.c.b16 %v4189, %v4185
    %v4586 = vpack.c.b16 %v4194, %v4190
    %v4587 = vpack.c.b16 %v4195, %v4191
    %v4588 = vpack.c.b16 %v4196, %v4192
    %v4589 = vpack.c.b16 %v4197, %v4193
    %v4590 = vpack.c.b16 %v4202, %v4198
    %v4591 = vpack.c.b16 %v4203, %v4199
    %v4592 = vpack.c.b16 %v4204, %v4200
    %v4593 = vpack.c.b16 %v4205, %v4201
    %v4594 = vpack.c.b16 %v4210, %v4206
    %v4595 = vpack.c.b16 %v4211, %v4207
    %v4596 = vpack.c.b16 %v4212, %v4208
    %v4597 = vpack.c.b16 %v4213, %v4209
    %v4598 = vpack.c.b16 %v4218, %v4214
    %v4599 = vpack.c.b16 %v4219, %v4215
    %v4600 = vpack.c.b16 %v4220, %v4216
    %v4601 = vpack.c.b16 %v4221, %v4217
    %v4602 = vpack.c.b16 %v4226, %v4222
    %v4603 = vpack.c.b16 %v4227, %v4223
    %v4604 = vpack.c.b16 %v4228, %v4224
    %v4605 = vpack.c.b16 %v4229, %v4225
    %v4606 = vpack.c.b16 %v4234, %v4230
    %v4607 = vpack.c.b16 %v4235, %v4231
    %v4608 = vpack.c.b16 %v4236, %v4232
    %v4609 = vpack.c.b16 %v4237, %v4233
    %v4610 = vpack.c.b16 %v4242, %v4238
    %v4611 = vpack.c.b16 %v4243, %v4239
    %v4612 = vpack.c.b16 %v4244, %v4240
    %v4613 = vpack.c.b16 %v4245, %v4241
    %v4614 = vpack.c.b16 %v4250, %v4246
    %v4615 = vpack.c.b16 %v4251, %v4247
    %v4616 = vpack.c.b16 %v4252, %v4248
    %v4617 = vpack.c.b16 %v4253, %v4249
    %v4618 = vpack.c.b16 %v4258, %v4254
    %v4619 = vpack.c.b16 %v4259, %v4255
    %v4620 = vpack.c.b16 %v4260, %v4256
    %v4621 = vpack.c.b16 %v4261, %v4257
    %v4622 = vpack.c.b16 %v4266, %v4262
    %v4623 = vpack.c.b16 %v4267, %v4263
    %v4624 = vpack.c.b16 %v4268, %v4264
    %v4625 = vpack.c.b16 %v4269, %v4265
    %v4626 = vpack.c.b16 %v4274, %v4270
    %v4627 = vpack.c.b16 %v4275, %v4271
    %v4628 = vpack.c.b16 %v4276, %v4272
    %v4629 = vpack.c.b16 %v4277, %v4273
    %v4630 = vpack.c.b16 %v4282, %v4278
    %v4631 = vpack.c.b16 %v4283, %v4279
    %v4632 = vpack.c.b16 %v4284, %v4280
    %v4633 = vpack.c.b16 %v4285, %v4281
    %v4634 = vpack.c.b16 %v4290, %v4286
    %v4635 = vpack.c.b16 %v4291, %v4287
    %v4636 = vpack.c.b16 %v4292, %v4288
    %v4637 = vpack.c.b16 %v4293, %v4289
    %v4638 = vpack.c.b16 %v4298, %v4294
    %v4639 = vpack.c.b16 %v4299, %v4295
    %v4640 = vpack.c.b16 %v4300, %v4296
    %v4641 = vpack.c.b16 %v4301, %v4297
    %v4642 = vpack.c.b16 %v4306, %v4302
    %v4643 = vpack.c.b16 %v4307, %v4303
    %v4644 = vpack.c.b16 %v4308, %v4304
    %v4645 = vpack.c.b16 %v4309, %v4305
    %v4646 = vpack.c.b16 %v4314, %v4310
    %v4647 = vpack.c.b16 %v4315, %v4311
    %v4648 = vpack.c.b16 %v4316, %v4312
    %v4649 = vpack.c.b16 %v4317, %v4313
    %v4650 = vpack.c.b16 %v4322, %v4318
    %v4651 = vpack.c.b16 %v4323, %v4319
    %v4652 = vpack.c.b16 %v4324, %v4320
    %v4653 = vpack.c.b16 %v4325, %v4321
    %v4654 = vpack.c.b16 %v4330, %v4326
    %v4655 = vpack.c.b16 %v4331, %v4327
    %v4656 = vpack.c.b16 %v4332, %v4328
    %v4657 = vpack.c.b16 %v4333, %v4329
    %v4658 = vpack.c.b16 %v4338, %v4334
    %v4659 = vpack.c.b16 %v4339, %v4335
    %v4660 = vpack.c.b16 %v4340, %v4336
    %v4661 = vpack.c.b16 %v4341, %v4337
    %v4662 = vpack.c.b16 %v4346, %v4342
    %v4663 = vpack.c.b16 %v4347, %v4343
    %v4664 = vpack.c.b16 %v4348, %v4344
    %v4665 = vpack.c.b16 %v4349, %v4345
    %v4666 = vpack.c.b16 %v4354, %v4350
    %v4667 = vpack.c.b16 %v4355, %v4351
    %v4668 = vpack.c.b16 %v4356, %v4352
    %v4669 = vpack.c.b16 %v4357, %v4353
    %v4670 = vpack.c.b16 %v4362, %v4358
    %v4671 = vpack.c.b16 %v4363, %v4359
    %v4672 = vpack.c.b16 %v4364, %v4360
    %v4673 = vpack.c.b16 %v4365, %v4361
    %v4674 = vpack.c.b16 %v4370, %v4366
    %v4675 = vpack.c.b16 %v4371, %v4367
    %v4676 = vpack.c.b16 %v4372, %v4368
    %v4677 = vpack.c.b16 %v4373, %v4369
    %v4678 = vpack.c.b16 %v4378, %v4374
    %v4679 = vpack.c.b16 %v4379, %v4375
    %v4680 = vpack.c.b16 %v4380, %v4376
    %v4681 = vpack.c.b16 %v4381, %v4377
    %v4682 = vpack.c.b16 %v4386, %v4382
    %v4683 = vpack.c.b16 %v4387, %v4383
    %v4684 = vpack.c.b16 %v4388, %v4384
    %v4685 = vpack.c.b16 %v4389, %v4385
    %v4686 = vpack.c.b16 %v4394, %v4390
    %v4687 = vpack.c.b16 %v4395, %v4391
    %v4688 = vpack.c.b16 %v4396, %v4392
    %v4689 = vpack.c.b16 %v4397, %v4393
    %v4690 = vpack.c.b16 %v4402, %v4398
    %v4691 = vpack.c.b16 %v4403, %v4399
    %v4692 = vpack.c.b16 %v4404, %v4400
    %v4693 = vpack.c.b16 %v4405, %v4401
    %v4694 = vpack.c.b16 %v4410, %v4406
    %v4695 = vpack.c.b16 %v4411, %v4407
    %v4696 = vpack.c.b16 %v4412, %v4408
    %v4697 = vpack.c.b16 %v4413, %v4409
    %v4698 = vpack.c.b16 %v4418, %v4414
    %v4699 = vpack.c.b16 %v4419, %v4415
    %v4700 = vpack.c.b16 %v4420, %v4416
    %v4701 = vpack.c.b16 %v4421, %v4417
    %v4702 = vpack.c.b16 %v4426, %v4422
    %v4703 = vpack.c.b16 %v4427, %v4423
    %v4704 = vpack.c.b16 %v4428, %v4424
    %v4705 = vpack.c.b16 %v4429, %v4425
    %v4706 = vpack.c.b16 %v4434, %v4430
    %v4707 = vpack.c.b16 %v4435, %v4431
    %v4708 = vpack.c.b16 %v4436, %v4432
    %v4709 = vpack.c.b16 %v4437, %v4433
    %v4710 = vpack.c.b16 %v4442, %v4438
    %v4711 = vpack.c.b16 %v4443, %v4439
    %v4712 = vpack.c.b16 %v4444, %v4440
    %v4713 = vpack.c.b16 %v4445, %v4441
    %v4714 = vpack.c.b16 %v4450, %v4446
    %v4715 = vpack.c.b16 %v4451, %v4447
    %v4716 = vpack.c.b16 %v4452, %v4448
    %v4717 = vpack.c.b16 %v4453, %v4449
    %v4718 = vpack.c.b16 %v4458, %v4454
    %v4719 = vpack.c.b16 %v4459, %v4455
    %v4720 = vpack.c.b16 %v4460, %v4456
    %v4721 = vpack.c.b16 %v4461, %v4457
    %v4722 = vpack.c.b16 %v4466, %v4462
    %v4723 = vpack.c.b16 %v4467, %v4463
    %v4724 = vpack.c.b16 %v4468, %v4464
    %v4725 = vpack.c.b16 %v4469, %v4465
    %4982 = vmatpush.bf16.msra.mxu0 %v4498
    %4983 = vmatpush.bf16.msra.mxu0 %v4494
    %4984 = vmatpush.bf16.msra.mxu0 %v4490
    %4985 = vmatpush.bf16.msra.mxu0 %v4486
    %4986 = vmatpush.bf16.msra.mxu0 %v4482
    %4987 = vmatpush.bf16.msra.mxu0 %v4478
    %4988 = vmatpush.bf16.msra.mxu0 %v4474
    %4989 = vmatpush.bf16.msra.mxu0 %v4470
    %4990 = vmatmul.bf16.gmra.mxu0 %v3308
    %v4991 = vpop.f32.mrf.mxu0
    %v4992 = vadd.f32 %v3694, %v4991
    %v4993 = vpop.f32.mrf.mxu0
    %v4994 = vadd.f32 %v3694, %v4993
    %4995 = vmatmul.bf16.gmra.mxu0 %v3316
    %v4996 = vpop.f32.mrf.mxu0
    %v4997 = vadd.f32 %v3694, %v4996
    %v4998 = vpop.f32.mrf.mxu0
    %v4999 = vadd.f32 %v3694, %v4998
    %5000 = vmatmul.bf16.gmra.mxu0 %v3324
    %v5001 = vpop.f32.mrf.mxu0
    %v5002 = vadd.f32 %v3694, %v5001
    %v5003 = vpop.f32.mrf.mxu0
    %v5004 = vadd.f32 %v3694, %v5003
    %5005 = vmatmul.bf16.gmra.mxu0 %v3332
    %v5006 = vpop.f32.mrf.mxu0
    %v5007 = vadd.f32 %v3694, %v5006
    %v5008 = vpop.f32.mrf.mxu0
    %v5009 = vadd.f32 %v3694, %v5008
    %5010 = vmatmul.bf16.gmra.mxu0 %v3340
    %v5011 = vpop.f32.mrf.mxu0
    %v5012 = vadd.f32 %v3694, %v5011
    %v5013 = vpop.f32.mrf.mxu0
    %v5014 = vadd.f32 %v3694, %v5013
    %5015 = vmatmul.bf16.gmra.mxu0 %v3348
    %v5016 = vpop.f32.mrf.mxu0
    %v5017 = vadd.f32 %v3694, %v5016
    %v5018 = vpop.f32.mrf.mxu0
    %v5019 = vadd.f32 %v3694, %v5018
    %5020 = vmatmul.bf16.gmra.mxu0 %v3356
    %v5021 = vpop.f32.mrf.mxu0
    %v5022 = vadd.f32 %v3694, %v5021
    %v5023 = vpop.f32.mrf.mxu0
    %v5024 = vadd.f32 %v3694, %v5023
    %5025 = vmatmul.bf16.gmra.mxu0 %v3364
    %v5026 = vpop.f32.mrf.mxu0
    %v5027 = vadd.f32 %v3694, %v5026
    %v5028 = vpop.f32.mrf.mxu0
    %v5029 = vadd.f32 %v3694, %v5028
    %5030 = vmatmul.bf16.gmra.mxu0 %v3372
    %v5031 = vpop.f32.mrf.mxu0
    %v5032 = vadd.f32 %v3694, %v5031
    %v5033 = vpop.f32.mrf.mxu0
    %v5034 = vadd.f32 %v3694, %v5033
    %5035 = vmatmul.bf16.gmra.mxu0 %v3380
    %v5036 = vpop.f32.mrf.mxu0
    %v5037 = vadd.f32 %v3694, %v5036
    %v5038 = vpop.f32.mrf.mxu0
    %v5039 = vadd.f32 %v3694, %v5038
    %5040 = vmatmul.bf16.gmra.mxu0 %v3388
    %v5041 = vpop.f32.mrf.mxu0
    %v5042 = vadd.f32 %v3694, %v5041
    %v5043 = vpop.f32.mrf.mxu0
    %v5044 = vadd.f32 %v3694, %v5043
    %5045 = vmatmul.bf16.gmra.mxu0 %v3396
    %v5046 = vpop.f32.mrf.mxu0
    %v5047 = vadd.f32 %v3694, %v5046
    %v5048 = vpop.f32.mrf.mxu0
    %v5049 = vadd.f32 %v3694, %v5048
    %5050 = vmatmul.bf16.gmra.mxu0 %v3404
    %v5051 = vpop.f32.mrf.mxu0
    %v5052 = vadd.f32 %v3694, %v5051
    %v5053 = vpop.f32.mrf.mxu0
    %v5054 = vadd.f32 %v3694, %v5053
    %5055 = vmatmul.bf16.gmra.mxu0 %v3412
    %v5056 = vpop.f32.mrf.mxu0
    %v5057 = vadd.f32 %v3694, %v5056
    %v5058 = vpop.f32.mrf.mxu0
    %v5059 = vadd.f32 %v3694, %v5058
    %5060 = vmatmul.bf16.gmra.mxu0 %v3420
    %v5061 = vpop.f32.mrf.mxu0
    %v5062 = vadd.f32 %v3694, %v5061
    %v5063 = vpop.f32.mrf.mxu0
    %v5064 = vadd.f32 %v3694, %v5063
    %5065 = vmatmul.bf16.gmra.mxu0 %v3428
    %v5066 = vpop.f32.mrf.mxu0
    %v5067 = vadd.f32 %v3694, %v5066
    %v5068 = vpop.f32.mrf.mxu0
    %v5069 = vadd.f32 %v3694, %v5068
    %5070 = vdwg.mxu0
    %5071 = vmatpush.bf16.msra.mxu0 %v4530
    %5072 = vmatpush.bf16.msra.mxu0 %v4526
    %5073 = vmatpush.bf16.msra.mxu0 %v4522
    %5074 = vmatpush.bf16.msra.mxu0 %v4518
    %5075 = vmatpush.bf16.msra.mxu0 %v4514
    %5076 = vmatpush.bf16.msra.mxu0 %v4510
    %5077 = vmatpush.bf16.msra.mxu0 %v4506
    %5078 = vmatpush.bf16.msra.mxu0 %v4502
    %5079 = vmatmul.bf16.gmra.mxu0 %v3309
    %v5080 = vpop.f32.mrf.mxu0
    %v5081 = vadd.f32 %v4992, %v5080
    %v5082 = vpop.f32.mrf.mxu0
    %v5083 = vadd.f32 %v4994, %v5082
    %5084 = vmatmul.bf16.gmra.mxu0 %v3317
    %v5085 = vpop.f32.mrf.mxu0
    %v5086 = vadd.f32 %v4997, %v5085
    %v5087 = vpop.f32.mrf.mxu0
    %v5088 = vadd.f32 %v4999, %v5087
    %5089 = vmatmul.bf16.gmra.mxu0 %v3325
    %v5090 = vpop.f32.mrf.mxu0
    %v5091 = vadd.f32 %v5002, %v5090
    %v5092 = vpop.f32.mrf.mxu0
    %v5093 = vadd.f32 %v5004, %v5092
    %5094 = vmatmul.bf16.gmra.mxu0 %v3333
    %v5095 = vpop.f32.mrf.mxu0
    %v5096 = vadd.f32 %v5007, %v5095
    %v5097 = vpop.f32.mrf.mxu0
    %v5098 = vadd.f32 %v5009, %v5097
    %5099 = vmatmul.bf16.gmra.mxu0 %v3341
    %v5100 = vpop.f32.mrf.mxu0
    %v5101 = vadd.f32 %v5012, %v5100
    %v5102 = vpop.f32.mrf.mxu0
    %v5103 = vadd.f32 %v5014, %v5102
    %5104 = vmatmul.bf16.gmra.mxu0 %v3349
    %v5105 = vpop.f32.mrf.mxu0
    %v5106 = vadd.f32 %v5017, %v5105
    %v5107 = vpop.f32.mrf.mxu0
    %v5108 = vadd.f32 %v5019, %v5107
    %5109 = vmatmul.bf16.gmra.mxu0 %v3357
    %v5110 = vpop.f32.mrf.mxu0
    %v5111 = vadd.f32 %v5022, %v5110
    %v5112 = vpop.f32.mrf.mxu0
    %v5113 = vadd.f32 %v5024, %v5112
    %5114 = vmatmul.bf16.gmra.mxu0 %v3365
    %v5115 = vpop.f32.mrf.mxu0
    %v5116 = vadd.f32 %v5027, %v5115
    %v5117 = vpop.f32.mrf.mxu0
    %v5118 = vadd.f32 %v5029, %v5117
    %5119 = vmatmul.bf16.gmra.mxu0 %v3373
    %v5120 = vpop.f32.mrf.mxu0
    %v5121 = vadd.f32 %v5032, %v5120
    %v5122 = vpop.f32.mrf.mxu0
    %v5123 = vadd.f32 %v5034, %v5122
    %5124 = vmatmul.bf16.gmra.mxu0 %v3381
    %v5125 = vpop.f32.mrf.mxu0
    %v5126 = vadd.f32 %v5037, %v5125
    %v5127 = vpop.f32.mrf.mxu0
    %v5128 = vadd.f32 %v5039, %v5127
    %5129 = vmatmul.bf16.gmra.mxu0 %v3389
    %v5130 = vpop.f32.mrf.mxu0
    %v5131 = vadd.f32 %v5042, %v5130
    %v5132 = vpop.f32.mrf.mxu0
    %v5133 = vadd.f32 %v5044, %v5132
    %5134 = vmatmul.bf16.gmra.mxu0 %v3397
    %v5135 = vpop.f32.mrf.mxu0
    %v5136 = vadd.f32 %v5047, %v5135
    %v5137 = vpop.f32.mrf.mxu0
    %v5138 = vadd.f32 %v5049, %v5137
    %5139 = vmatmul.bf16.gmra.mxu0 %v3405
    %v5140 = vpop.f32.mrf.mxu0
    %v5141 = vadd.f32 %v5052, %v5140
    %v5142 = vpop.f32.mrf.mxu0
    %v5143 = vadd.f32 %v5054, %v5142
    %5144 = vmatmul.bf16.gmra.mxu0 %v3413
    %v5145 = vpop.f32.mrf.mxu0
    %v5146 = vadd.f32 %v5057, %v5145
    %v5147 = vpop.f32.mrf.mxu0
    %v5148 = vadd.f32 %v5059, %v5147
    %5149 = vmatmul.bf16.gmra.mxu0 %v3421
    %v5150 = vpop.f32.mrf.mxu0
    %v5151 = vadd.f32 %v5062, %v5150
    %v5152 = vpop.f32.mrf.mxu0
    %v5153 = vadd.f32 %v5064, %v5152
    %5154 = vmatmul.bf16.gmra.mxu0 %v3429
    %v5155 = vpop.f32.mrf.mxu0
    %v5156 = vadd.f32 %v5067, %v5155
    %v5157 = vpop.f32.mrf.mxu0
    %v5158 = vadd.f32 %v5069, %v5157
    %5159 = vdwg.mxu0
    %5160 = vmatpush.bf16.msra.mxu0 %v4562
    %5161 = vmatpush.bf16.msra.mxu0 %v4558
    %5162 = vmatpush.bf16.msra.mxu0 %v4554
    %5163 = vmatpush.bf16.msra.mxu0 %v4550
    %5164 = vmatpush.bf16.msra.mxu0 %v4546
    %5165 = vmatpush.bf16.msra.mxu0 %v4542
    %5166 = vmatpush.bf16.msra.mxu0 %v4538
    %5167 = vmatpush.bf16.msra.mxu0 %v4534
    %5168 = vmatmul.bf16.gmra.mxu0 %v3310
    %v5169 = vpop.f32.mrf.mxu0
    %v5170 = vadd.f32 %v5081, %v5169
    %v5171 = vpop.f32.mrf.mxu0
    %v5172 = vadd.f32 %v5083, %v5171
    %5173 = vmatmul.bf16.gmra.mxu0 %v3318
    %v5174 = vpop.f32.mrf.mxu0
    %v5175 = vadd.f32 %v5086, %v5174
    %v5176 = vpop.f32.mrf.mxu0
    %v5177 = vadd.f32 %v5088, %v5176
    %5178 = vmatmul.bf16.gmra.mxu0 %v3326
    %v5179 = vpop.f32.mrf.mxu0
    %v5180 = vadd.f32 %v5091, %v5179
    %v5181 = vpop.f32.mrf.mxu0
    %v5182 = vadd.f32 %v5093, %v5181
    %5183 = vmatmul.bf16.gmra.mxu0 %v3334
    %v5184 = vpop.f32.mrf.mxu0
    %v5185 = vadd.f32 %v5096, %v5184
    %v5186 = vpop.f32.mrf.mxu0
    %v5187 = vadd.f32 %v5098, %v5186
    %5188 = vmatmul.bf16.gmra.mxu0 %v3342
    %v5189 = vpop.f32.mrf.mxu0
    %v5190 = vadd.f32 %v5101, %v5189
    %v5191 = vpop.f32.mrf.mxu0
    %v5192 = vadd.f32 %v5103, %v5191
    %5193 = vmatmul.bf16.gmra.mxu0 %v3350
    %v5194 = vpop.f32.mrf.mxu0
    %v5195 = vadd.f32 %v5106, %v5194
    %v5196 = vpop.f32.mrf.mxu0
    %v5197 = vadd.f32 %v5108, %v5196
    %5198 = vmatmul.bf16.gmra.mxu0 %v3358
    %v5199 = vpop.f32.mrf.mxu0
    %v5200 = vadd.f32 %v5111, %v5199
    %v5201 = vpop.f32.mrf.mxu0
    %v5202 = vadd.f32 %v5113, %v5201
    %5203 = vmatmul.bf16.gmra.mxu0 %v3366
    %v5204 = vpop.f32.mrf.mxu0
    %v5205 = vadd.f32 %v5116, %v5204
    %v5206 = vpop.f32.mrf.mxu0
    %v5207 = vadd.f32 %v5118, %v5206
    %5208 = vmatmul.bf16.gmra.mxu0 %v3374
    %v5209 = vpop.f32.mrf.mxu0
    %v5210 = vadd.f32 %v5121, %v5209
    %v5211 = vpop.f32.mrf.mxu0
    %v5212 = vadd.f32 %v5123, %v5211
    %5213 = vmatmul.bf16.gmra.mxu0 %v3382
    %v5214 = vpop.f32.mrf.mxu0
    %v5215 = vadd.f32 %v5126, %v5214
    %v5216 = vpop.f32.mrf.mxu0
    %v5217 = vadd.f32 %v5128, %v5216
    %5218 = vmatmul.bf16.gmra.mxu0 %v3390
    %v5219 = vpop.f32.mrf.mxu0
    %v5220 = vadd.f32 %v5131, %v5219
    %v5221 = vpop.f32.mrf.mxu0
    %v5222 = vadd.f32 %v5133, %v5221
    %5223 = vmatmul.bf16.gmra.mxu0 %v3398
    %v5224 = vpop.f32.mrf.mxu0
    %v5225 = vadd.f32 %v5136, %v5224
    %v5226 = vpop.f32.mrf.mxu0
    %v5227 = vadd.f32 %v5138, %v5226
    %5228 = vmatmul.bf16.gmra.mxu0 %v3406
    %v5229 = vpop.f32.mrf.mxu0
    %v5230 = vadd.f32 %v5141, %v5229
    %v5231 = vpop.f32.mrf.mxu0
    %v5232 = vadd.f32 %v5143, %v5231
    %5233 = vmatmul.bf16.gmra.mxu0 %v3414
    %v5234 = vpop.f32.mrf.mxu0
    %v5235 = vadd.f32 %v5146, %v5234
    %v5236 = vpop.f32.mrf.mxu0
    %v5237 = vadd.f32 %v5148, %v5236
    %5238 = vmatmul.bf16.gmra.mxu0 %v3422
    %v5239 = vpop.f32.mrf.mxu0
    %v5240 = vadd.f32 %v5151, %v5239
    %v5241 = vpop.f32.mrf.mxu0
    %v5242 = vadd.f32 %v5153, %v5241
    %5243 = vmatmul.bf16.gmra.mxu0 %v3430
    %v5244 = vpop.f32.mrf.mxu0
    %v5245 = vadd.f32 %v5156, %v5244
    %v5246 = vpop.f32.mrf.mxu0
    %v5247 = vadd.f32 %v5158, %v5246
    %5248 = vdwg.mxu0
    %5249 = vmatpush.bf16.msra.mxu0 %v4594
    %5250 = vmatpush.bf16.msra.mxu0 %v4590
    %5251 = vmatpush.bf16.msra.mxu0 %v4586
    %5252 = vmatpush.bf16.msra.mxu0 %v4582
    %5253 = vmatpush.bf16.msra.mxu0 %v4578
    %5254 = vmatpush.bf16.msra.mxu0 %v4574
    %5255 = vmatpush.bf16.msra.mxu0 %v4570
    %5256 = vmatpush.bf16.msra.mxu0 %v4566
    %5257 = vmatmul.bf16.gmra.mxu0 %v3311
    %v5258 = vpop.f32.mrf.mxu0
    %v5259 = vadd.f32 %v5170, %v5258
    %v5260 = vpop.f32.mrf.mxu0
    %v5261 = vadd.f32 %v5172, %v5260
    %5262 = vmatmul.bf16.gmra.mxu0 %v3319
    %v5263 = vpop.f32.mrf.mxu0
    %v5264 = vadd.f32 %v5175, %v5263
    %v5265 = vpop.f32.mrf.mxu0
    %v5266 = vadd.f32 %v5177, %v5265
    %5267 = vmatmul.bf16.gmra.mxu0 %v3327
    %v5268 = vpop.f32.mrf.mxu0
    %v5269 = vadd.f32 %v5180, %v5268
    %v5270 = vpop.f32.mrf.mxu0
    %v5271 = vadd.f32 %v5182, %v5270
    %5272 = vmatmul.bf16.gmra.mxu0 %v3335
    %v5273 = vpop.f32.mrf.mxu0
    %v5274 = vadd.f32 %v5185, %v5273
    %v5275 = vpop.f32.mrf.mxu0
    %v5276 = vadd.f32 %v5187, %v5275
    %5277 = vmatmul.bf16.gmra.mxu0 %v3343
    %v5278 = vpop.f32.mrf.mxu0
    %v5279 = vadd.f32 %v5190, %v5278
    %v5280 = vpop.f32.mrf.mxu0
    %v5281 = vadd.f32 %v5192, %v5280
    %5282 = vmatmul.bf16.gmra.mxu0 %v3351
    %v5283 = vpop.f32.mrf.mxu0
    %v5284 = vadd.f32 %v5195, %v5283
    %v5285 = vpop.f32.mrf.mxu0
    %v5286 = vadd.f32 %v5197, %v5285
    %5287 = vmatmul.bf16.gmra.mxu0 %v3359
    %v5288 = vpop.f32.mrf.mxu0
    %v5289 = vadd.f32 %v5200, %v5288
    %v5290 = vpop.f32.mrf.mxu0
    %v5291 = vadd.f32 %v5202, %v5290
    %5292 = vmatmul.bf16.gmra.mxu0 %v3367
    %v5293 = vpop.f32.mrf.mxu0
    %v5294 = vadd.f32 %v5205, %v5293
    %v5295 = vpop.f32.mrf.mxu0
    %v5296 = vadd.f32 %v5207, %v5295
    %5297 = vmatmul.bf16.gmra.mxu0 %v3375
    %v5298 = vpop.f32.mrf.mxu0
    %v5299 = vadd.f32 %v5210, %v5298
    %v5300 = vpop.f32.mrf.mxu0
    %v5301 = vadd.f32 %v5212, %v5300
    %5302 = vmatmul.bf16.gmra.mxu0 %v3383
    %v5303 = vpop.f32.mrf.mxu0
    %v5304 = vadd.f32 %v5215, %v5303
    %v5305 = vpop.f32.mrf.mxu0
    %v5306 = vadd.f32 %v5217, %v5305
    %5307 = vmatmul.bf16.gmra.mxu0 %v3391
    %v5308 = vpop.f32.mrf.mxu0
    %v5309 = vadd.f32 %v5220, %v5308
    %v5310 = vpop.f32.mrf.mxu0
    %v5311 = vadd.f32 %v5222, %v5310
    %5312 = vmatmul.bf16.gmra.mxu0 %v3399
    %v5313 = vpop.f32.mrf.mxu0
    %v5314 = vadd.f32 %v5225, %v5313
    %v5315 = vpop.f32.mrf.mxu0
    %v5316 = vadd.f32 %v5227, %v5315
    %5317 = vmatmul.bf16.gmra.mxu0 %v3407
    %v5318 = vpop.f32.mrf.mxu0
    %v5319 = vadd.f32 %v5230, %v5318
    %v5320 = vpop.f32.mrf.mxu0
    %v5321 = vadd.f32 %v5232, %v5320
    %5322 = vmatmul.bf16.gmra.mxu0 %v3415
    %v5323 = vpop.f32.mrf.mxu0
    %v5324 = vadd.f32 %v5235, %v5323
    %v5325 = vpop.f32.mrf.mxu0
    %v5326 = vadd.f32 %v5237, %v5325
    %5327 = vmatmul.bf16.gmra.mxu0 %v3423
    %v5328 = vpop.f32.mrf.mxu0
    %v5329 = vadd.f32 %v5240, %v5328
    %v5330 = vpop.f32.mrf.mxu0
    %v5331 = vadd.f32 %v5242, %v5330
    %5332 = vmatmul.bf16.gmra.mxu0 %v3431
    %v5333 = vpop.f32.mrf.mxu0
    %v5334 = vadd.f32 %v5245, %v5333
    %v5335 = vpop.f32.mrf.mxu0
    %v5336 = vadd.f32 %v5247, %v5335
    %5337 = vdwg.mxu0
    %5338 = vmatpush.bf16.msra.mxu0 %v4626
    %5339 = vmatpush.bf16.msra.mxu0 %v4622
    %5340 = vmatpush.bf16.msra.mxu0 %v4618
    %5341 = vmatpush.bf16.msra.mxu0 %v4614
    %5342 = vmatpush.bf16.msra.mxu0 %v4610
    %5343 = vmatpush.bf16.msra.mxu0 %v4606
    %5344 = vmatpush.bf16.msra.mxu0 %v4602
    %5345 = vmatpush.bf16.msra.mxu0 %v4598
    %5346 = vmatmul.bf16.gmra.mxu0 %v3312
    %v5347 = vpop.f32.mrf.mxu0
    %v5348 = vadd.f32 %v5259, %v5347
    %v5349 = vpop.f32.mrf.mxu0
    %v5350 = vadd.f32 %v5261, %v5349
    %5351 = vmatmul.bf16.gmra.mxu0 %v3320
    %v5352 = vpop.f32.mrf.mxu0
    %v5353 = vadd.f32 %v5264, %v5352
    %v5354 = vpop.f32.mrf.mxu0
    %v5355 = vadd.f32 %v5266, %v5354
    %5356 = vmatmul.bf16.gmra.mxu0 %v3328
    %v5357 = vpop.f32.mrf.mxu0
    %v5358 = vadd.f32 %v5269, %v5357
    %v5359 = vpop.f32.mrf.mxu0
    %v5360 = vadd.f32 %v5271, %v5359
    %5361 = vmatmul.bf16.gmra.mxu0 %v3336
    %v5362 = vpop.f32.mrf.mxu0
    %v5363 = vadd.f32 %v5274, %v5362
    %v5364 = vpop.f32.mrf.mxu0
    %v5365 = vadd.f32 %v5276, %v5364
    %5366 = vmatmul.bf16.gmra.mxu0 %v3344
    %v5367 = vpop.f32.mrf.mxu0
    %v5368 = vadd.f32 %v5279, %v5367
    %v5369 = vpop.f32.mrf.mxu0
    %v5370 = vadd.f32 %v5281, %v5369
    %5371 = vmatmul.bf16.gmra.mxu0 %v3352
    %v5372 = vpop.f32.mrf.mxu0
    %v5373 = vadd.f32 %v5284, %v5372
    %v5374 = vpop.f32.mrf.mxu0
    %v5375 = vadd.f32 %v5286, %v5374
    %5376 = vmatmul.bf16.gmra.mxu0 %v3360
    %v5377 = vpop.f32.mrf.mxu0
    %v5378 = vadd.f32 %v5289, %v5377
    %v5379 = vpop.f32.mrf.mxu0
    %v5380 = vadd.f32 %v5291, %v5379
    %5381 = vmatmul.bf16.gmra.mxu0 %v3368
    %v5382 = vpop.f32.mrf.mxu0
    %v5383 = vadd.f32 %v5294, %v5382
    %v5384 = vpop.f32.mrf.mxu0
    %v5385 = vadd.f32 %v5296, %v5384
    %5386 = vmatmul.bf16.gmra.mxu0 %v3376
    %v5387 = vpop.f32.mrf.mxu0
    %v5388 = vadd.f32 %v5299, %v5387
    %v5389 = vpop.f32.mrf.mxu0
    %v5390 = vadd.f32 %v5301, %v5389
    %5391 = vmatmul.bf16.gmra.mxu0 %v3384
    %v5392 = vpop.f32.mrf.mxu0
    %v5393 = vadd.f32 %v5304, %v5392
    %v5394 = vpop.f32.mrf.mxu0
    %v5395 = vadd.f32 %v5306, %v5394
    %5396 = vmatmul.bf16.gmra.mxu0 %v3392
    %v5397 = vpop.f32.mrf.mxu0
    %v5398 = vadd.f32 %v5309, %v5397
    %v5399 = vpop.f32.mrf.mxu0
    %v5400 = vadd.f32 %v5311, %v5399
    %5401 = vmatmul.bf16.gmra.mxu0 %v3400
    %v5402 = vpop.f32.mrf.mxu0
    %v5403 = vadd.f32 %v5314, %v5402
    %v5404 = vpop.f32.mrf.mxu0
    %v5405 = vadd.f32 %v5316, %v5404
    %5406 = vmatmul.bf16.gmra.mxu0 %v3408
    %v5407 = vpop.f32.mrf.mxu0
    %v5408 = vadd.f32 %v5319, %v5407
    %v5409 = vpop.f32.mrf.mxu0
    %v5410 = vadd.f32 %v5321, %v5409
    %5411 = vmatmul.bf16.gmra.mxu0 %v3416
    %v5412 = vpop.f32.mrf.mxu0
    %v5413 = vadd.f32 %v5324, %v5412
    %v5414 = vpop.f32.mrf.mxu0
    %v5415 = vadd.f32 %v5326, %v5414
    %5416 = vmatmul.bf16.gmra.mxu0 %v3424
    %v5417 = vpop.f32.mrf.mxu0
    %v5418 = vadd.f32 %v5329, %v5417
    %v5419 = vpop.f32.mrf.mxu0
    %v5420 = vadd.f32 %v5331, %v5419
    %5421 = vmatmul.bf16.gmra.mxu0 %v3432
    %v5422 = vpop.f32.mrf.mxu0
    %v5423 = vadd.f32 %v5334, %v5422
    %v5424 = vpop.f32.mrf.mxu0
    %v5425 = vadd.f32 %v5336, %v5424
    %5426 = vdwg.mxu0
    %5427 = vmatpush.bf16.msra.mxu0 %v4658
    %5428 = vmatpush.bf16.msra.mxu0 %v4654
    %5429 = vmatpush.bf16.msra.mxu0 %v4650
    %5430 = vmatpush.bf16.msra.mxu0 %v4646
    %5431 = vmatpush.bf16.msra.mxu0 %v4642
    %5432 = vmatpush.bf16.msra.mxu0 %v4638
    %5433 = vmatpush.bf16.msra.mxu0 %v4634
    %5434 = vmatpush.bf16.msra.mxu0 %v4630
    %5435 = vmatmul.bf16.gmra.mxu0 %v3313
    %v5436 = vpop.f32.mrf.mxu0
    %v5437 = vadd.f32 %v5348, %v5436
    %v5438 = vpop.f32.mrf.mxu0
    %v5439 = vadd.f32 %v5350, %v5438
    %5440 = vmatmul.bf16.gmra.mxu0 %v3321
    %v5441 = vpop.f32.mrf.mxu0
    %v5442 = vadd.f32 %v5353, %v5441
    %v5443 = vpop.f32.mrf.mxu0
    %v5444 = vadd.f32 %v5355, %v5443
    %5445 = vmatmul.bf16.gmra.mxu0 %v3329
    %v5446 = vpop.f32.mrf.mxu0
    %v5447 = vadd.f32 %v5358, %v5446
    %v5448 = vpop.f32.mrf.mxu0
    %v5449 = vadd.f32 %v5360, %v5448
    %5450 = vmatmul.bf16.gmra.mxu0 %v3337
    %v5451 = vpop.f32.mrf.mxu0
    %v5452 = vadd.f32 %v5363, %v5451
    %v5453 = vpop.f32.mrf.mxu0
    %v5454 = vadd.f32 %v5365, %v5453
    %5455 = vmatmul.bf16.gmra.mxu0 %v3345
    %v5456 = vpop.f32.mrf.mxu0
    %v5457 = vadd.f32 %v5368, %v5456
    %v5458 = vpop.f32.mrf.mxu0
    %v5459 = vadd.f32 %v5370, %v5458
    %5460 = vmatmul.bf16.gmra.mxu0 %v3353
    %v5461 = vpop.f32.mrf.mxu0
    %v5462 = vadd.f32 %v5373, %v5461
    %v5463 = vpop.f32.mrf.mxu0
    %v5464 = vadd.f32 %v5375, %v5463
    %5465 = vmatmul.bf16.gmra.mxu0 %v3361
    %v5466 = vpop.f32.mrf.mxu0
    %v5467 = vadd.f32 %v5378, %v5466
    %v5468 = vpop.f32.mrf.mxu0
    %v5469 = vadd.f32 %v5380, %v5468
    %5470 = vmatmul.bf16.gmra.mxu0 %v3369
    %v5471 = vpop.f32.mrf.mxu0
    %v5472 = vadd.f32 %v5383, %v5471
    %v5473 = vpop.f32.mrf.mxu0
    %v5474 = vadd.f32 %v5385, %v5473
    %5475 = vmatmul.bf16.gmra.mxu0 %v3377
    %v5476 = vpop.f32.mrf.mxu0
    %v5477 = vadd.f32 %v5388, %v5476
    %v5478 = vpop.f32.mrf.mxu0
    %v5479 = vadd.f32 %v5390, %v5478
    %5480 = vmatmul.bf16.gmra.mxu0 %v3385
    %v5481 = vpop.f32.mrf.mxu0
    %v5482 = vadd.f32 %v5393, %v5481
    %v5483 = vpop.f32.mrf.mxu0
    %v5484 = vadd.f32 %v5395, %v5483
    %5485 = vmatmul.bf16.gmra.mxu0 %v3393
    %v5486 = vpop.f32.mrf.mxu0
    %v5487 = vadd.f32 %v5398, %v5486
    %v5488 = vpop.f32.mrf.mxu0
    %v5489 = vadd.f32 %v5400, %v5488
    %5490 = vmatmul.bf16.gmra.mxu0 %v3401
    %v5491 = vpop.f32.mrf.mxu0
    %v5492 = vadd.f32 %v5403, %v5491
    %v5493 = vpop.f32.mrf.mxu0
    %v5494 = vadd.f32 %v5405, %v5493
    %5495 = vmatmul.bf16.gmra.mxu0 %v3409
    %v5496 = vpop.f32.mrf.mxu0
    %v5497 = vadd.f32 %v5408, %v5496
    %v5498 = vpop.f32.mrf.mxu0
    %v5499 = vadd.f32 %v5410, %v5498
    %5500 = vmatmul.bf16.gmra.mxu0 %v3417
    %v5501 = vpop.f32.mrf.mxu0
    %v5502 = vadd.f32 %v5413, %v5501
    %v5503 = vpop.f32.mrf.mxu0
    %v5504 = vadd.f32 %v5415, %v5503
    %5505 = vmatmul.bf16.gmra.mxu0 %v3425
    %v5506 = vpop.f32.mrf.mxu0
    %v5507 = vadd.f32 %v5418, %v5506
    %v5508 = vpop.f32.mrf.mxu0
    %v5509 = vadd.f32 %v5420, %v5508
    %5510 = vmatmul.bf16.gmra.mxu0 %v3433
    %v5511 = vpop.f32.mrf.mxu0
    %v5512 = vadd.f32 %v5423, %v5511
    %v5513 = vpop.f32.mrf.mxu0
    %v5514 = vadd.f32 %v5425, %v5513
    %5515 = vdwg.mxu0
    %5516 = vmatpush.bf16.msra.mxu0 %v4690
    %5517 = vmatpush.bf16.msra.mxu0 %v4686
    %5518 = vmatpush.bf16.msra.mxu0 %v4682
    %5519 = vmatpush.bf16.msra.mxu0 %v4678
    %5520 = vmatpush.bf16.msra.mxu0 %v4674
    %5521 = vmatpush.bf16.msra.mxu0 %v4670
    %5522 = vmatpush.bf16.msra.mxu0 %v4666
    %5523 = vmatpush.bf16.msra.mxu0 %v4662
    %5524 = vmatmul.bf16.gmra.mxu0 %v3314
    %v5525 = vpop.f32.mrf.mxu0
    %v5526 = vadd.f32 %v5437, %v5525
    %v5527 = vpop.f32.mrf.mxu0
    %v5528 = vadd.f32 %v5439, %v5527
    %5529 = vmatmul.bf16.gmra.mxu0 %v3322
    %v5530 = vpop.f32.mrf.mxu0
    %v5531 = vadd.f32 %v5442, %v5530
    %v5532 = vpop.f32.mrf.mxu0
    %v5533 = vadd.f32 %v5444, %v5532
    %5534 = vmatmul.bf16.gmra.mxu0 %v3330
    %v5535 = vpop.f32.mrf.mxu0
    %v5536 = vadd.f32 %v5447, %v5535
    %v5537 = vpop.f32.mrf.mxu0
    %v5538 = vadd.f32 %v5449, %v5537
    %5539 = vmatmul.bf16.gmra.mxu0 %v3338
    %v5540 = vpop.f32.mrf.mxu0
    %v5541 = vadd.f32 %v5452, %v5540
    %v5542 = vpop.f32.mrf.mxu0
    %v5543 = vadd.f32 %v5454, %v5542
    %5544 = vmatmul.bf16.gmra.mxu0 %v3346
    %v5545 = vpop.f32.mrf.mxu0
    %v5546 = vadd.f32 %v5457, %v5545
    %v5547 = vpop.f32.mrf.mxu0
    %v5548 = vadd.f32 %v5459, %v5547
    %5549 = vmatmul.bf16.gmra.mxu0 %v3354
    %v5550 = vpop.f32.mrf.mxu0
    %v5551 = vadd.f32 %v5462, %v5550
    %v5552 = vpop.f32.mrf.mxu0
    %v5553 = vadd.f32 %v5464, %v5552
    %5554 = vmatmul.bf16.gmra.mxu0 %v3362
    %v5555 = vpop.f32.mrf.mxu0
    %v5556 = vadd.f32 %v5467, %v5555
    %v5557 = vpop.f32.mrf.mxu0
    %v5558 = vadd.f32 %v5469, %v5557
    %5559 = vmatmul.bf16.gmra.mxu0 %v3370
    %v5560 = vpop.f32.mrf.mxu0
    %v5561 = vadd.f32 %v5472, %v5560
    %v5562 = vpop.f32.mrf.mxu0
    %v5563 = vadd.f32 %v5474, %v5562
    %5564 = vmatmul.bf16.gmra.mxu0 %v3378
    %v5565 = vpop.f32.mrf.mxu0
    %v5566 = vadd.f32 %v5477, %v5565
    %v5567 = vpop.f32.mrf.mxu0
    %v5568 = vadd.f32 %v5479, %v5567
    %5569 = vmatmul.bf16.gmra.mxu0 %v3386
    %v5570 = vpop.f32.mrf.mxu0
    %v5571 = vadd.f32 %v5482, %v5570
    %v5572 = vpop.f32.mrf.mxu0
    %v5573 = vadd.f32 %v5484, %v5572
    %5574 = vmatmul.bf16.gmra.mxu0 %v3394
    %v5575 = vpop.f32.mrf.mxu0
    %v5576 = vadd.f32 %v5487, %v5575
    %v5577 = vpop.f32.mrf.mxu0
    %v5578 = vadd.f32 %v5489, %v5577
    %5579 = vmatmul.bf16.gmra.mxu0 %v3402
    %v5580 = vpop.f32.mrf.mxu0
    %v5581 = vadd.f32 %v5492, %v5580
    %v5582 = vpop.f32.mrf.mxu0
    %v5583 = vadd.f32 %v5494, %v5582
    %5584 = vmatmul.bf16.gmra.mxu0 %v3410
    %v5585 = vpop.f32.mrf.mxu0
    %v5586 = vadd.f32 %v5497, %v5585
    %v5587 = vpop.f32.mrf.mxu0
    %v5588 = vadd.f32 %v5499, %v5587
    %5589 = vmatmul.bf16.gmra.mxu0 %v3418
    %v5590 = vpop.f32.mrf.mxu0
    %v5591 = vadd.f32 %v5502, %v5590
    %v5592 = vpop.f32.mrf.mxu0
    %v5593 = vadd.f32 %v5504, %v5592
    %5594 = vmatmul.bf16.gmra.mxu0 %v3426
    %v5595 = vpop.f32.mrf.mxu0
    %v5596 = vadd.f32 %v5507, %v5595
    %v5597 = vpop.f32.mrf.mxu0
    %v5598 = vadd.f32 %v5509, %v5597
    %5599 = vmatmul.bf16.gmra.mxu0 %v3434
    %v5600 = vpop.f32.mrf.mxu0
    %v5601 = vadd.f32 %v5512, %v5600
    %v5602 = vpop.f32.mrf.mxu0
    %v5603 = vadd.f32 %v5514, %v5602
    %5604 = vdwg.mxu0
    %5605 = vmatpush.bf16.msra.mxu0 %v4722
    %5606 = vmatpush.bf16.msra.mxu0 %v4718
    %5607 = vmatpush.bf16.msra.mxu0 %v4714
    %5608 = vmatpush.bf16.msra.mxu0 %v4710
    %5609 = vmatpush.bf16.msra.mxu0 %v4706
    %5610 = vmatpush.bf16.msra.mxu0 %v4702
    %5611 = vmatpush.bf16.msra.mxu0 %v4698
    %5612 = vmatpush.bf16.msra.mxu0 %v4694
    %5613 = vmatmul.bf16.gmra.mxu0 %v3315
    %v5614 = vpop.f32.mrf.mxu0
    %v5615 = vadd.f32 %v5526, %v5614
    %v5616 = vpop.f32.mrf.mxu0
    %v5617 = vadd.f32 %v5528, %v5616
    %5618 = vmatmul.bf16.gmra.mxu0 %v3323
    %v5619 = vpop.f32.mrf.mxu0
    %v5620 = vadd.f32 %v5531, %v5619
    %v5621 = vpop.f32.mrf.mxu0
    %v5622 = vadd.f32 %v5533, %v5621
    %5623 = vmatmul.bf16.gmra.mxu0 %v3331
    %v5624 = vpop.f32.mrf.mxu0
    %v5625 = vadd.f32 %v5536, %v5624
    %v5626 = vpop.f32.mrf.mxu0
    %v5627 = vadd.f32 %v5538, %v5626
    %5628 = vmatmul.bf16.gmra.mxu0 %v3339
    %v5629 = vpop.f32.mrf.mxu0
    %v5630 = vadd.f32 %v5541, %v5629
    %v5631 = vpop.f32.mrf.mxu0
    %v5632 = vadd.f32 %v5543, %v5631
    %5633 = vmatmul.bf16.gmra.mxu0 %v3347
    %v5634 = vpop.f32.mrf.mxu0
    %v5635 = vadd.f32 %v5546, %v5634
    %v5636 = vpop.f32.mrf.mxu0
    %v5637 = vadd.f32 %v5548, %v5636
    %5638 = vmatmul.bf16.gmra.mxu0 %v3355
    %v5639 = vpop.f32.mrf.mxu0
    %v5640 = vadd.f32 %v5551, %v5639
    %v5641 = vpop.f32.mrf.mxu0
    %v5642 = vadd.f32 %v5553, %v5641
    %5643 = vmatmul.bf16.gmra.mxu0 %v3363
    %v5644 = vpop.f32.mrf.mxu0
    %v5645 = vadd.f32 %v5556, %v5644
    %v5646 = vpop.f32.mrf.mxu0
    %v5647 = vadd.f32 %v5558, %v5646
    %5648 = vmatmul.bf16.gmra.mxu0 %v3371
    %v5649 = vpop.f32.mrf.mxu0
    %v5650 = vadd.f32 %v5561, %v5649
    %v5651 = vpop.f32.mrf.mxu0
    %v5652 = vadd.f32 %v5563, %v5651
    %5653 = vmatmul.bf16.gmra.mxu0 %v3379
    %v5654 = vpop.f32.mrf.mxu0
    %v5655 = vadd.f32 %v5566, %v5654
    %v5656 = vpop.f32.mrf.mxu0
    %v5657 = vadd.f32 %v5568, %v5656
    %5658 = vmatmul.bf16.gmra.mxu0 %v3387
    %v5659 = vpop.f32.mrf.mxu0
    %v5660 = vadd.f32 %v5571, %v5659
    %v5661 = vpop.f32.mrf.mxu0
    %v5662 = vadd.f32 %v5573, %v5661
    %5663 = vmatmul.bf16.gmra.mxu0 %v3395
    %v5664 = vpop.f32.mrf.mxu0
    %v5665 = vadd.f32 %v5576, %v5664
    %v5666 = vpop.f32.mrf.mxu0
    %v5667 = vadd.f32 %v5578, %v5666
    %5668 = vmatmul.bf16.gmra.mxu0 %v3403
    %v5669 = vpop.f32.mrf.mxu0
    %v5670 = vadd.f32 %v5581, %v5669
    %v5671 = vpop.f32.mrf.mxu0
    %v5672 = vadd.f32 %v5583, %v5671
    %5673 = vmatmul.bf16.gmra.mxu0 %v3411
    %v5674 = vpop.f32.mrf.mxu0
    %v5675 = vadd.f32 %v5586, %v5674
    %v5676 = vpop.f32.mrf.mxu0
    %v5677 = vadd.f32 %v5588, %v5676
    %5678 = vmatmul.bf16.gmra.mxu0 %v3419
    %v5679 = vpop.f32.mrf.mxu0
    %v5680 = vadd.f32 %v5591, %v5679
    %v5681 = vpop.f32.mrf.mxu0
    %v5682 = vadd.f32 %v5593, %v5681
    %5683 = vmatmul.bf16.gmra.mxu0 %v3427
    %v5684 = vpop.f32.mrf.mxu0
    %v5685 = vadd.f32 %v5596, %v5684
    %v5686 = vpop.f32.mrf.mxu0
    %v5687 = vadd.f32 %v5598, %v5686
    %5688 = vmatmul.bf16.gmra.mxu0 %v3435
    %v5689 = vpop.f32.mrf.mxu0
    %v5690 = vadd.f32 %v5601, %v5689
    %v5691 = vpop.f32.mrf.mxu0
    %v5692 = vadd.f32 %v5603, %v5691
    %5693 = vdwg.mxu0
    %5694 = vmatpush.bf16.msra.mxu0 %v4499
    %5695 = vmatpush.bf16.msra.mxu0 %v4495
    %5696 = vmatpush.bf16.msra.mxu0 %v4491
    %5697 = vmatpush.bf16.msra.mxu0 %v4487
    %5698 = vmatpush.bf16.msra.mxu0 %v4483
    %5699 = vmatpush.bf16.msra.mxu0 %v4479
    %5700 = vmatpush.bf16.msra.mxu0 %v4475
    %5701 = vmatpush.bf16.msra.mxu0 %v4471
    %5702 = vmatmul.bf16.gmra.mxu0 %v3308
    %v5703 = vpop.f32.mrf.mxu0
    %v5704 = vadd.f32 %v3695, %v5703
    %v5705 = vpop.f32.mrf.mxu0
    %v5706 = vadd.f32 %v3695, %v5705
    %5707 = vmatmul.bf16.gmra.mxu0 %v3316
    %v5708 = vpop.f32.mrf.mxu0
    %v5709 = vadd.f32 %v3695, %v5708
    %v5710 = vpop.f32.mrf.mxu0
    %v5711 = vadd.f32 %v3695, %v5710
    %5712 = vmatmul.bf16.gmra.mxu0 %v3324
    %v5713 = vpop.f32.mrf.mxu0
    %v5714 = vadd.f32 %v3695, %v5713
    %v5715 = vpop.f32.mrf.mxu0
    %v5716 = vadd.f32 %v3695, %v5715
    %5717 = vmatmul.bf16.gmra.mxu0 %v3332
    %v5718 = vpop.f32.mrf.mxu0
    %v5719 = vadd.f32 %v3695, %v5718
    %v5720 = vpop.f32.mrf.mxu0
    %v5721 = vadd.f32 %v3695, %v5720
    %5722 = vmatmul.bf16.gmra.mxu0 %v3340
    %v5723 = vpop.f32.mrf.mxu0
    %v5724 = vadd.f32 %v3695, %v5723
    %v5725 = vpop.f32.mrf.mxu0
    %v5726 = vadd.f32 %v3695, %v5725
    %5727 = vmatmul.bf16.gmra.mxu0 %v3348
    %v5728 = vpop.f32.mrf.mxu0
    %v5729 = vadd.f32 %v3695, %v5728
    %v5730 = vpop.f32.mrf.mxu0
    %v5731 = vadd.f32 %v3695, %v5730
    %5732 = vmatmul.bf16.gmra.mxu0 %v3356
    %v5733 = vpop.f32.mrf.mxu0
    %v5734 = vadd.f32 %v3695, %v5733
    %v5735 = vpop.f32.mrf.mxu0
    %v5736 = vadd.f32 %v3695, %v5735
    %5737 = vmatmul.bf16.gmra.mxu0 %v3364
    %v5738 = vpop.f32.mrf.mxu0
    %v5739 = vadd.f32 %v3695, %v5738
    %v5740 = vpop.f32.mrf.mxu0
    %v5741 = vadd.f32 %v3695, %v5740
    %5742 = vmatmul.bf16.gmra.mxu0 %v3372
    %v5743 = vpop.f32.mrf.mxu0
    %v5744 = vadd.f32 %v3695, %v5743
    %v5745 = vpop.f32.mrf.mxu0
    %v5746 = vadd.f32 %v3695, %v5745
    %5747 = vmatmul.bf16.gmra.mxu0 %v3380
    %v5748 = vpop.f32.mrf.mxu0
    %v5749 = vadd.f32 %v3695, %v5748
    %v5750 = vpop.f32.mrf.mxu0
    %v5751 = vadd.f32 %v3695, %v5750
    %5752 = vmatmul.bf16.gmra.mxu0 %v3388
    %v5753 = vpop.f32.mrf.mxu0
    %v5754 = vadd.f32 %v3695, %v5753
    %v5755 = vpop.f32.mrf.mxu0
    %v5756 = vadd.f32 %v3695, %v5755
    %5757 = vmatmul.bf16.gmra.mxu0 %v3396
    %v5758 = vpop.f32.mrf.mxu0
    %v5759 = vadd.f32 %v3695, %v5758
    %v5760 = vpop.f32.mrf.mxu0
    %v5761 = vadd.f32 %v3695, %v5760
    %5762 = vmatmul.bf16.gmra.mxu0 %v3404
    %v5763 = vpop.f32.mrf.mxu0
    %v5764 = vadd.f32 %v3695, %v5763
    %v5765 = vpop.f32.mrf.mxu0
    %v5766 = vadd.f32 %v3695, %v5765
    %5767 = vmatmul.bf16.gmra.mxu0 %v3412
    %v5768 = vpop.f32.mrf.mxu0
    %v5769 = vadd.f32 %v3695, %v5768
    %v5770 = vpop.f32.mrf.mxu0
    %v5771 = vadd.f32 %v3695, %v5770
    %5772 = vmatmul.bf16.gmra.mxu0 %v3420
    %v5773 = vpop.f32.mrf.mxu0
    %v5774 = vadd.f32 %v3695, %v5773
    %v5775 = vpop.f32.mrf.mxu0
    %v5776 = vadd.f32 %v3695, %v5775
    %5777 = vmatmul.bf16.gmra.mxu0 %v3428
    %v5778 = vpop.f32.mrf.mxu0
    %v5779 = vadd.f32 %v3695, %v5778
    %v5780 = vpop.f32.mrf.mxu0
    %v5781 = vadd.f32 %v3695, %v5780
    %5782 = vdwg.mxu0
    %5783 = vmatpush.bf16.msra.mxu0 %v4531
    %5784 = vmatpush.bf16.msra.mxu0 %v4527
    %5785 = vmatpush.bf16.msra.mxu0 %v4523
    %5786 = vmatpush.bf16.msra.mxu0 %v4519
    %5787 = vmatpush.bf16.msra.mxu0 %v4515
    %5788 = vmatpush.bf16.msra.mxu0 %v4511
    %5789 = vmatpush.bf16.msra.mxu0 %v4507
    %5790 = vmatpush.bf16.msra.mxu0 %v4503
    %5791 = vmatmul.bf16.gmra.mxu0 %v3309
    %v5792 = vpop.f32.mrf.mxu0
    %v5793 = vadd.f32 %v5704, %v5792
    %v5794 = vpop.f32.mrf.mxu0
    %v5795 = vadd.f32 %v5706, %v5794
    %5796 = vmatmul.bf16.gmra.mxu0 %v3317
    %v5797 = vpop.f32.mrf.mxu0
    %v5798 = vadd.f32 %v5709, %v5797
    %v5799 = vpop.f32.mrf.mxu0
    %v5800 = vadd.f32 %v5711, %v5799
    %5801 = vmatmul.bf16.gmra.mxu0 %v3325
    %v5802 = vpop.f32.mrf.mxu0
    %v5803 = vadd.f32 %v5714, %v5802
    %v5804 = vpop.f32.mrf.mxu0
    %v5805 = vadd.f32 %v5716, %v5804
    %5806 = vmatmul.bf16.gmra.mxu0 %v3333
    %v5807 = vpop.f32.mrf.mxu0
    %v5808 = vadd.f32 %v5719, %v5807
    %v5809 = vpop.f32.mrf.mxu0
    %v5810 = vadd.f32 %v5721, %v5809
    %5811 = vmatmul.bf16.gmra.mxu0 %v3341
    %v5812 = vpop.f32.mrf.mxu0
    %v5813 = vadd.f32 %v5724, %v5812
    %v5814 = vpop.f32.mrf.mxu0
    %v5815 = vadd.f32 %v5726, %v5814
    %5816 = vmatmul.bf16.gmra.mxu0 %v3349
    %v5817 = vpop.f32.mrf.mxu0
    %v5818 = vadd.f32 %v5729, %v5817
    %v5819 = vpop.f32.mrf.mxu0
    %v5820 = vadd.f32 %v5731, %v5819
    %5821 = vmatmul.bf16.gmra.mxu0 %v3357
    %v5822 = vpop.f32.mrf.mxu0
    %v5823 = vadd.f32 %v5734, %v5822
    %v5824 = vpop.f32.mrf.mxu0
    %v5825 = vadd.f32 %v5736, %v5824
    %5826 = vmatmul.bf16.gmra.mxu0 %v3365
    %v5827 = vpop.f32.mrf.mxu0
    %v5828 = vadd.f32 %v5739, %v5827
    %v5829 = vpop.f32.mrf.mxu0
    %v5830 = vadd.f32 %v5741, %v5829
    %5831 = vmatmul.bf16.gmra.mxu0 %v3373
    %v5832 = vpop.f32.mrf.mxu0
    %v5833 = vadd.f32 %v5744, %v5832
    %v5834 = vpop.f32.mrf.mxu0
    %v5835 = vadd.f32 %v5746, %v5834
    %5836 = vmatmul.bf16.gmra.mxu0 %v3381
    %v5837 = vpop.f32.mrf.mxu0
    %v5838 = vadd.f32 %v5749, %v5837
    %v5839 = vpop.f32.mrf.mxu0
    %v5840 = vadd.f32 %v5751, %v5839
    %5841 = vmatmul.bf16.gmra.mxu0 %v3389
    %v5842 = vpop.f32.mrf.mxu0
    %v5843 = vadd.f32 %v5754, %v5842
    %v5844 = vpop.f32.mrf.mxu0
    %v5845 = vadd.f32 %v5756, %v5844
    %5846 = vmatmul.bf16.gmra.mxu0 %v3397
    %v5847 = vpop.f32.mrf.mxu0
    %v5848 = vadd.f32 %v5759, %v5847
    %v5849 = vpop.f32.mrf.mxu0
    %v5850 = vadd.f32 %v5761, %v5849
    %5851 = vmatmul.bf16.gmra.mxu0 %v3405
    %v5852 = vpop.f32.mrf.mxu0
    %v5853 = vadd.f32 %v5764, %v5852
    %v5854 = vpop.f32.mrf.mxu0
    %v5855 = vadd.f32 %v5766, %v5854
    %5856 = vmatmul.bf16.gmra.mxu0 %v3413
    %v5857 = vpop.f32.mrf.mxu0
    %v5858 = vadd.f32 %v5769, %v5857
    %v5859 = vpop.f32.mrf.mxu0
    %v5860 = vadd.f32 %v5771, %v5859
    %5861 = vmatmul.bf16.gmra.mxu0 %v3421
    %v5862 = vpop.f32.mrf.mxu0
    %v5863 = vadd.f32 %v5774, %v5862
    %v5864 = vpop.f32.mrf.mxu0
    %v5865 = vadd.f32 %v5776, %v5864
    %5866 = vmatmul.bf16.gmra.mxu0 %v3429
    %v5867 = vpop.f32.mrf.mxu0
    %v5868 = vadd.f32 %v5779, %v5867
    %v5869 = vpop.f32.mrf.mxu0
    %v5870 = vadd.f32 %v5781, %v5869
    %5871 = vdwg.mxu0
    %5872 = vmatpush.bf16.msra.mxu0 %v4563
    %5873 = vmatpush.bf16.msra.mxu0 %v4559
    %5874 = vmatpush.bf16.msra.mxu0 %v4555
    %5875 = vmatpush.bf16.msra.mxu0 %v4551
    %5876 = vmatpush.bf16.msra.mxu0 %v4547
    %5877 = vmatpush.bf16.msra.mxu0 %v4543
    %5878 = vmatpush.bf16.msra.mxu0 %v4539
    %5879 = vmatpush.bf16.msra.mxu0 %v4535
    %5880 = vmatmul.bf16.gmra.mxu0 %v3310
    %v5881 = vpop.f32.mrf.mxu0
    %v5882 = vadd.f32 %v5793, %v5881
    %v5883 = vpop.f32.mrf.mxu0
    %v5884 = vadd.f32 %v5795, %v5883
    %5885 = vmatmul.bf16.gmra.mxu0 %v3318
    %v5886 = vpop.f32.mrf.mxu0
    %v5887 = vadd.f32 %v5798, %v5886
    %v5888 = vpop.f32.mrf.mxu0
    %v5889 = vadd.f32 %v5800, %v5888
    %5890 = vmatmul.bf16.gmra.mxu0 %v3326
    %v5891 = vpop.f32.mrf.mxu0
    %v5892 = vadd.f32 %v5803, %v5891
    %v5893 = vpop.f32.mrf.mxu0
    %v5894 = vadd.f32 %v5805, %v5893
    %5895 = vmatmul.bf16.gmra.mxu0 %v3334
    %v5896 = vpop.f32.mrf.mxu0
    %v5897 = vadd.f32 %v5808, %v5896
    %v5898 = vpop.f32.mrf.mxu0
    %v5899 = vadd.f32 %v5810, %v5898
    %5900 = vmatmul.bf16.gmra.mxu0 %v3342
    %v5901 = vpop.f32.mrf.mxu0
    %v5902 = vadd.f32 %v5813, %v5901
    %v5903 = vpop.f32.mrf.mxu0
    %v5904 = vadd.f32 %v5815, %v5903
    %5905 = vmatmul.bf16.gmra.mxu0 %v3350
    %v5906 = vpop.f32.mrf.mxu0
    %v5907 = vadd.f32 %v5818, %v5906
    %v5908 = vpop.f32.mrf.mxu0
    %v5909 = vadd.f32 %v5820, %v5908
    %5910 = vmatmul.bf16.gmra.mxu0 %v3358
    %v5911 = vpop.f32.mrf.mxu0
    %v5912 = vadd.f32 %v5823, %v5911
    %v5913 = vpop.f32.mrf.mxu0
    %v5914 = vadd.f32 %v5825, %v5913
    %5915 = vmatmul.bf16.gmra.mxu0 %v3366
    %v5916 = vpop.f32.mrf.mxu0
    %v5917 = vadd.f32 %v5828, %v5916
    %v5918 = vpop.f32.mrf.mxu0
    %v5919 = vadd.f32 %v5830, %v5918
    %5920 = vmatmul.bf16.gmra.mxu0 %v3374
    %v5921 = vpop.f32.mrf.mxu0
    %v5922 = vadd.f32 %v5833, %v5921
    %v5923 = vpop.f32.mrf.mxu0
    %v5924 = vadd.f32 %v5835, %v5923
    %5925 = vmatmul.bf16.gmra.mxu0 %v3382
    %v5926 = vpop.f32.mrf.mxu0
    %v5927 = vadd.f32 %v5838, %v5926
    %v5928 = vpop.f32.mrf.mxu0
    %v5929 = vadd.f32 %v5840, %v5928
    %5930 = vmatmul.bf16.gmra.mxu0 %v3390
    %v5931 = vpop.f32.mrf.mxu0
    %v5932 = vadd.f32 %v5843, %v5931
    %v5933 = vpop.f32.mrf.mxu0
    %v5934 = vadd.f32 %v5845, %v5933
    %5935 = vmatmul.bf16.gmra.mxu0 %v3398
    %v5936 = vpop.f32.mrf.mxu0
    %v5937 = vadd.f32 %v5848, %v5936
    %v5938 = vpop.f32.mrf.mxu0
    %v5939 = vadd.f32 %v5850, %v5938
    %5940 = vmatmul.bf16.gmra.mxu0 %v3406
    %v5941 = vpop.f32.mrf.mxu0
    %v5942 = vadd.f32 %v5853, %v5941
    %v5943 = vpop.f32.mrf.mxu0
    %v5944 = vadd.f32 %v5855, %v5943
    %5945 = vmatmul.bf16.gmra.mxu0 %v3414
    %v5946 = vpop.f32.mrf.mxu0
    %v5947 = vadd.f32 %v5858, %v5946
    %v5948 = vpop.f32.mrf.mxu0
    %v5949 = vadd.f32 %v5860, %v5948
    %5950 = vmatmul.bf16.gmra.mxu0 %v3422
    %v5951 = vpop.f32.mrf.mxu0
    %v5952 = vadd.f32 %v5863, %v5951
    %v5953 = vpop.f32.mrf.mxu0
    %v5954 = vadd.f32 %v5865, %v5953
    %5955 = vmatmul.bf16.gmra.mxu0 %v3430
    %v5956 = vpop.f32.mrf.mxu0
    %v5957 = vadd.f32 %v5868, %v5956
    %v5958 = vpop.f32.mrf.mxu0
    %v5959 = vadd.f32 %v5870, %v5958
    %5960 = vdwg.mxu0
    %5961 = vmatpush.bf16.msra.mxu0 %v4595
    %5962 = vmatpush.bf16.msra.mxu0 %v4591
    %5963 = vmatpush.bf16.msra.mxu0 %v4587
    %5964 = vmatpush.bf16.msra.mxu0 %v4583
    %5965 = vmatpush.bf16.msra.mxu0 %v4579
    %5966 = vmatpush.bf16.msra.mxu0 %v4575
    %5967 = vmatpush.bf16.msra.mxu0 %v4571
    %5968 = vmatpush.bf16.msra.mxu0 %v4567
    %5969 = vmatmul.bf16.gmra.mxu0 %v3311
    %v5970 = vpop.f32.mrf.mxu0
    %v5971 = vadd.f32 %v5882, %v5970
    %v5972 = vpop.f32.mrf.mxu0
    %v5973 = vadd.f32 %v5884, %v5972
    %5974 = vmatmul.bf16.gmra.mxu0 %v3319
    %v5975 = vpop.f32.mrf.mxu0
    %v5976 = vadd.f32 %v5887, %v5975
    %v5977 = vpop.f32.mrf.mxu0
    %v5978 = vadd.f32 %v5889, %v5977
    %5979 = vmatmul.bf16.gmra.mxu0 %v3327
    %v5980 = vpop.f32.mrf.mxu0
    %v5981 = vadd.f32 %v5892, %v5980
    %v5982 = vpop.f32.mrf.mxu0
    %v5983 = vadd.f32 %v5894, %v5982
    %5984 = vmatmul.bf16.gmra.mxu0 %v3335
    %v5985 = vpop.f32.mrf.mxu0
    %v5986 = vadd.f32 %v5897, %v5985
    %v5987 = vpop.f32.mrf.mxu0
    %v5988 = vadd.f32 %v5899, %v5987
    %5989 = vmatmul.bf16.gmra.mxu0 %v3343
    %v5990 = vpop.f32.mrf.mxu0
    %v5991 = vadd.f32 %v5902, %v5990
    %v5992 = vpop.f32.mrf.mxu0
    %v5993 = vadd.f32 %v5904, %v5992
    %5994 = vmatmul.bf16.gmra.mxu0 %v3351
    %v5995 = vpop.f32.mrf.mxu0
    %v5996 = vadd.f32 %v5907, %v5995
    %v5997 = vpop.f32.mrf.mxu0
    %v5998 = vadd.f32 %v5909, %v5997
    %5999 = vmatmul.bf16.gmra.mxu0 %v3359
    %v6000 = vpop.f32.mrf.mxu0
    %v6001 = vadd.f32 %v5912, %v6000
    %v6002 = vpop.f32.mrf.mxu0
    %v6003 = vadd.f32 %v5914, %v6002
    %6004 = vmatmul.bf16.gmra.mxu0 %v3367
    %v6005 = vpop.f32.mrf.mxu0
    %v6006 = vadd.f32 %v5917, %v6005
    %v6007 = vpop.f32.mrf.mxu0
    %v6008 = vadd.f32 %v5919, %v6007
    %6009 = vmatmul.bf16.gmra.mxu0 %v3375
    %v6010 = vpop.f32.mrf.mxu0
    %v6011 = vadd.f32 %v5922, %v6010
    %v6012 = vpop.f32.mrf.mxu0
    %v6013 = vadd.f32 %v5924, %v6012
    %6014 = vmatmul.bf16.gmra.mxu0 %v3383
    %v6015 = vpop.f32.mrf.mxu0
    %v6016 = vadd.f32 %v5927, %v6015
    %v6017 = vpop.f32.mrf.mxu0
    %v6018 = vadd.f32 %v5929, %v6017
    %6019 = vmatmul.bf16.gmra.mxu0 %v3391
    %v6020 = vpop.f32.mrf.mxu0
    %v6021 = vadd.f32 %v5932, %v6020
    %v6022 = vpop.f32.mrf.mxu0
    %v6023 = vadd.f32 %v5934, %v6022
    %6024 = vmatmul.bf16.gmra.mxu0 %v3399
    %v6025 = vpop.f32.mrf.mxu0
    %v6026 = vadd.f32 %v5937, %v6025
    %v6027 = vpop.f32.mrf.mxu0
    %v6028 = vadd.f32 %v5939, %v6027
    %6029 = vmatmul.bf16.gmra.mxu0 %v3407
    %v6030 = vpop.f32.mrf.mxu0
    %v6031 = vadd.f32 %v5942, %v6030
    %v6032 = vpop.f32.mrf.mxu0
    %v6033 = vadd.f32 %v5944, %v6032
    %6034 = vmatmul.bf16.gmra.mxu0 %v3415
    %v6035 = vpop.f32.mrf.mxu0
    %v6036 = vadd.f32 %v5947, %v6035
    %v6037 = vpop.f32.mrf.mxu0
    %v6038 = vadd.f32 %v5949, %v6037
    %6039 = vmatmul.bf16.gmra.mxu0 %v3423
    %v6040 = vpop.f32.mrf.mxu0
    %v6041 = vadd.f32 %v5952, %v6040
    %v6042 = vpop.f32.mrf.mxu0
    %v6043 = vadd.f32 %v5954, %v6042
    %6044 = vmatmul.bf16.gmra.mxu0 %v3431
    %v6045 = vpop.f32.mrf.mxu0
    %v6046 = vadd.f32 %v5957, %v6045
    %v6047 = vpop.f32.mrf.mxu0
    %v6048 = vadd.f32 %v5959, %v6047
    %6049 = vdwg.mxu0
    %6050 = vmatpush.bf16.msra.mxu0 %v4627
    %6051 = vmatpush.bf16.msra.mxu0 %v4623
    %6052 = vmatpush.bf16.msra.mxu0 %v4619
    %6053 = vmatpush.bf16.msra.mxu0 %v4615
    %6054 = vmatpush.bf16.msra.mxu0 %v4611
    %6055 = vmatpush.bf16.msra.mxu0 %v4607
    %6056 = vmatpush.bf16.msra.mxu0 %v4603
    %6057 = vmatpush.bf16.msra.mxu0 %v4599
    %6058 = vmatmul.bf16.gmra.mxu0 %v3312
    %v6059 = vpop.f32.mrf.mxu0
    %v6060 = vadd.f32 %v5971, %v6059
    %v6061 = vpop.f32.mrf.mxu0
    %v6062 = vadd.f32 %v5973, %v6061
    %6063 = vmatmul.bf16.gmra.mxu0 %v3320
    %v6064 = vpop.f32.mrf.mxu0
    %v6065 = vadd.f32 %v5976, %v6064
    %v6066 = vpop.f32.mrf.mxu0
    %v6067 = vadd.f32 %v5978, %v6066
    %6068 = vmatmul.bf16.gmra.mxu0 %v3328
    %v6069 = vpop.f32.mrf.mxu0
    %v6070 = vadd.f32 %v5981, %v6069
    %v6071 = vpop.f32.mrf.mxu0
    %v6072 = vadd.f32 %v5983, %v6071
    %6073 = vmatmul.bf16.gmra.mxu0 %v3336
    %v6074 = vpop.f32.mrf.mxu0
    %v6075 = vadd.f32 %v5986, %v6074
    %v6076 = vpop.f32.mrf.mxu0
    %v6077 = vadd.f32 %v5988, %v6076
    %6078 = vmatmul.bf16.gmra.mxu0 %v3344
    %v6079 = vpop.f32.mrf.mxu0
    %v6080 = vadd.f32 %v5991, %v6079
    %v6081 = vpop.f32.mrf.mxu0
    %v6082 = vadd.f32 %v5993, %v6081
    %6083 = vmatmul.bf16.gmra.mxu0 %v3352
    %v6084 = vpop.f32.mrf.mxu0
    %v6085 = vadd.f32 %v5996, %v6084
    %v6086 = vpop.f32.mrf.mxu0
    %v6087 = vadd.f32 %v5998, %v6086
    %6088 = vmatmul.bf16.gmra.mxu0 %v3360
    %v6089 = vpop.f32.mrf.mxu0
    %v6090 = vadd.f32 %v6001, %v6089
    %v6091 = vpop.f32.mrf.mxu0
    %v6092 = vadd.f32 %v6003, %v6091
    %6093 = vmatmul.bf16.gmra.mxu0 %v3368
    %v6094 = vpop.f32.mrf.mxu0
    %v6095 = vadd.f32 %v6006, %v6094
    %v6096 = vpop.f32.mrf.mxu0
    %v6097 = vadd.f32 %v6008, %v6096
    %6098 = vmatmul.bf16.gmra.mxu0 %v3376
    %v6099 = vpop.f32.mrf.mxu0
    %v6100 = vadd.f32 %v6011, %v6099
    %v6101 = vpop.f32.mrf.mxu0
    %v6102 = vadd.f32 %v6013, %v6101
    %6103 = vmatmul.bf16.gmra.mxu0 %v3384
    %v6104 = vpop.f32.mrf.mxu0
    %v6105 = vadd.f32 %v6016, %v6104
    %v6106 = vpop.f32.mrf.mxu0
    %v6107 = vadd.f32 %v6018, %v6106
    %6108 = vmatmul.bf16.gmra.mxu0 %v3392
    %v6109 = vpop.f32.mrf.mxu0
    %v6110 = vadd.f32 %v6021, %v6109
    %v6111 = vpop.f32.mrf.mxu0
    %v6112 = vadd.f32 %v6023, %v6111
    %6113 = vmatmul.bf16.gmra.mxu0 %v3400
    %v6114 = vpop.f32.mrf.mxu0
    %v6115 = vadd.f32 %v6026, %v6114
    %v6116 = vpop.f32.mrf.mxu0
    %v6117 = vadd.f32 %v6028, %v6116
    %6118 = vmatmul.bf16.gmra.mxu0 %v3408
    %v6119 = vpop.f32.mrf.mxu0
    %v6120 = vadd.f32 %v6031, %v6119
    %v6121 = vpop.f32.mrf.mxu0
    %v6122 = vadd.f32 %v6033, %v6121
    %6123 = vmatmul.bf16.gmra.mxu0 %v3416
    %v6124 = vpop.f32.mrf.mxu0
    %v6125 = vadd.f32 %v6036, %v6124
    %v6126 = vpop.f32.mrf.mxu0
    %v6127 = vadd.f32 %v6038, %v6126
    %6128 = vmatmul.bf16.gmra.mxu0 %v3424
    %v6129 = vpop.f32.mrf.mxu0
    %v6130 = vadd.f32 %v6041, %v6129
    %v6131 = vpop.f32.mrf.mxu0
    %v6132 = vadd.f32 %v6043, %v6131
    %6133 = vmatmul.bf16.gmra.mxu0 %v3432
    %v6134 = vpop.f32.mrf.mxu0
    %v6135 = vadd.f32 %v6046, %v6134
    %v6136 = vpop.f32.mrf.mxu0
    %v6137 = vadd.f32 %v6048, %v6136
    %6138 = vdwg.mxu0
    %6139 = vmatpush.bf16.msra.mxu0 %v4659
    %6140 = vmatpush.bf16.msra.mxu0 %v4655
    %6141 = vmatpush.bf16.msra.mxu0 %v4651
    %6142 = vmatpush.bf16.msra.mxu0 %v4647
    %6143 = vmatpush.bf16.msra.mxu0 %v4643
    %6144 = vmatpush.bf16.msra.mxu0 %v4639
    %6145 = vmatpush.bf16.msra.mxu0 %v4635
    %6146 = vmatpush.bf16.msra.mxu0 %v4631
    %6147 = vmatmul.bf16.gmra.mxu0 %v3313
    %v6148 = vpop.f32.mrf.mxu0
    %v6149 = vadd.f32 %v6060, %v6148
    %v6150 = vpop.f32.mrf.mxu0
    %v6151 = vadd.f32 %v6062, %v6150
    %6152 = vmatmul.bf16.gmra.mxu0 %v3321
    %v6153 = vpop.f32.mrf.mxu0
    %v6154 = vadd.f32 %v6065, %v6153
    %v6155 = vpop.f32.mrf.mxu0
    %v6156 = vadd.f32 %v6067, %v6155
    %6157 = vmatmul.bf16.gmra.mxu0 %v3329
    %v6158 = vpop.f32.mrf.mxu0
    %v6159 = vadd.f32 %v6070, %v6158
    %v6160 = vpop.f32.mrf.mxu0
    %v6161 = vadd.f32 %v6072, %v6160
    %6162 = vmatmul.bf16.gmra.mxu0 %v3337
    %v6163 = vpop.f32.mrf.mxu0
    %v6164 = vadd.f32 %v6075, %v6163
    %v6165 = vpop.f32.mrf.mxu0
    %v6166 = vadd.f32 %v6077, %v6165
    %6167 = vmatmul.bf16.gmra.mxu0 %v3345
    %v6168 = vpop.f32.mrf.mxu0
    %v6169 = vadd.f32 %v6080, %v6168
    %v6170 = vpop.f32.mrf.mxu0
    %v6171 = vadd.f32 %v6082, %v6170
    %6172 = vmatmul.bf16.gmra.mxu0 %v3353
    %v6173 = vpop.f32.mrf.mxu0
    %v6174 = vadd.f32 %v6085, %v6173
    %v6175 = vpop.f32.mrf.mxu0
    %v6176 = vadd.f32 %v6087, %v6175
    %6177 = vmatmul.bf16.gmra.mxu0 %v3361
    %v6178 = vpop.f32.mrf.mxu0
    %v6179 = vadd.f32 %v6090, %v6178
    %v6180 = vpop.f32.mrf.mxu0
    %v6181 = vadd.f32 %v6092, %v6180
    %6182 = vmatmul.bf16.gmra.mxu0 %v3369
    %v6183 = vpop.f32.mrf.mxu0
    %v6184 = vadd.f32 %v6095, %v6183
    %v6185 = vpop.f32.mrf.mxu0
    %v6186 = vadd.f32 %v6097, %v6185
    %6187 = vmatmul.bf16.gmra.mxu0 %v3377
    %v6188 = vpop.f32.mrf.mxu0
    %v6189 = vadd.f32 %v6100, %v6188
    %v6190 = vpop.f32.mrf.mxu0
    %v6191 = vadd.f32 %v6102, %v6190
    %6192 = vmatmul.bf16.gmra.mxu0 %v3385
    %v6193 = vpop.f32.mrf.mxu0
    %v6194 = vadd.f32 %v6105, %v6193
    %v6195 = vpop.f32.mrf.mxu0
    %v6196 = vadd.f32 %v6107, %v6195
    %6197 = vmatmul.bf16.gmra.mxu0 %v3393
    %v6198 = vpop.f32.mrf.mxu0
    %v6199 = vadd.f32 %v6110, %v6198
    %v6200 = vpop.f32.mrf.mxu0
    %v6201 = vadd.f32 %v6112, %v6200
    %6202 = vmatmul.bf16.gmra.mxu0 %v3401
    %v6203 = vpop.f32.mrf.mxu0
    %v6204 = vadd.f32 %v6115, %v6203
    %v6205 = vpop.f32.mrf.mxu0
    %v6206 = vadd.f32 %v6117, %v6205
    %6207 = vmatmul.bf16.gmra.mxu0 %v3409
    %v6208 = vpop.f32.mrf.mxu0
    %v6209 = vadd.f32 %v6120, %v6208
    %v6210 = vpop.f32.mrf.mxu0
    %v6211 = vadd.f32 %v6122, %v6210
    %6212 = vmatmul.bf16.gmra.mxu0 %v3417
    %v6213 = vpop.f32.mrf.mxu0
    %v6214 = vadd.f32 %v6125, %v6213
    %v6215 = vpop.f32.mrf.mxu0
    %v6216 = vadd.f32 %v6127, %v6215
    %6217 = vmatmul.bf16.gmra.mxu0 %v3425
    %v6218 = vpop.f32.mrf.mxu0
    %v6219 = vadd.f32 %v6130, %v6218
    %v6220 = vpop.f32.mrf.mxu0
    %v6221 = vadd.f32 %v6132, %v6220
    %6222 = vmatmul.bf16.gmra.mxu0 %v3433
    %v6223 = vpop.f32.mrf.mxu0
    %v6224 = vadd.f32 %v6135, %v6223
    %v6225 = vpop.f32.mrf.mxu0
    %v6226 = vadd.f32 %v6137, %v6225
    %6227 = vdwg.mxu0
    %6228 = vmatpush.bf16.msra.mxu0 %v4691
    %6229 = vmatpush.bf16.msra.mxu0 %v4687
    %6230 = vmatpush.bf16.msra.mxu0 %v4683
    %6231 = vmatpush.bf16.msra.mxu0 %v4679
    %6232 = vmatpush.bf16.msra.mxu0 %v4675
    %6233 = vmatpush.bf16.msra.mxu0 %v4671
    %6234 = vmatpush.bf16.msra.mxu0 %v4667
    %6235 = vmatpush.bf16.msra.mxu0 %v4663
    %6236 = vmatmul.bf16.gmra.mxu0 %v3314
    %v6237 = vpop.f32.mrf.mxu0
    %v6238 = vadd.f32 %v6149, %v6237
    %v6239 = vpop.f32.mrf.mxu0
    %v6240 = vadd.f32 %v6151, %v6239
    %6241 = vmatmul.bf16.gmra.mxu0 %v3322
    %v6242 = vpop.f32.mrf.mxu0
    %v6243 = vadd.f32 %v6154, %v6242
    %v6244 = vpop.f32.mrf.mxu0
    %v6245 = vadd.f32 %v6156, %v6244
    %6246 = vmatmul.bf16.gmra.mxu0 %v3330
    %v6247 = vpop.f32.mrf.mxu0
    %v6248 = vadd.f32 %v6159, %v6247
    %v6249 = vpop.f32.mrf.mxu0
    %v6250 = vadd.f32 %v6161, %v6249
    %6251 = vmatmul.bf16.gmra.mxu0 %v3338
    %v6252 = vpop.f32.mrf.mxu0
    %v6253 = vadd.f32 %v6164, %v6252
    %v6254 = vpop.f32.mrf.mxu0
    %v6255 = vadd.f32 %v6166, %v6254
    %6256 = vmatmul.bf16.gmra.mxu0 %v3346
    %v6257 = vpop.f32.mrf.mxu0
    %v6258 = vadd.f32 %v6169, %v6257
    %v6259 = vpop.f32.mrf.mxu0
    %v6260 = vadd.f32 %v6171, %v6259
    %6261 = vmatmul.bf16.gmra.mxu0 %v3354
    %v6262 = vpop.f32.mrf.mxu0
    %v6263 = vadd.f32 %v6174, %v6262
    %v6264 = vpop.f32.mrf.mxu0
    %v6265 = vadd.f32 %v6176, %v6264
    %6266 = vmatmul.bf16.gmra.mxu0 %v3362
    %v6267 = vpop.f32.mrf.mxu0
    %v6268 = vadd.f32 %v6179, %v6267
    %v6269 = vpop.f32.mrf.mxu0
    %v6270 = vadd.f32 %v6181, %v6269
    %6271 = vmatmul.bf16.gmra.mxu0 %v3370
    %v6272 = vpop.f32.mrf.mxu0
    %v6273 = vadd.f32 %v6184, %v6272
    %v6274 = vpop.f32.mrf.mxu0
    %v6275 = vadd.f32 %v6186, %v6274
    %6276 = vmatmul.bf16.gmra.mxu0 %v3378
    %v6277 = vpop.f32.mrf.mxu0
    %v6278 = vadd.f32 %v6189, %v6277
    %v6279 = vpop.f32.mrf.mxu0
    %v6280 = vadd.f32 %v6191, %v6279
    %6281 = vmatmul.bf16.gmra.mxu0 %v3386
    %v6282 = vpop.f32.mrf.mxu0
    %v6283 = vadd.f32 %v6194, %v6282
    %v6284 = vpop.f32.mrf.mxu0
    %v6285 = vadd.f32 %v6196, %v6284
    %6286 = vmatmul.bf16.gmra.mxu0 %v3394
    %v6287 = vpop.f32.mrf.mxu0
    %v6288 = vadd.f32 %v6199, %v6287
    %v6289 = vpop.f32.mrf.mxu0
    %v6290 = vadd.f32 %v6201, %v6289
    %6291 = vmatmul.bf16.gmra.mxu0 %v3402
    %v6292 = vpop.f32.mrf.mxu0
    %v6293 = vadd.f32 %v6204, %v6292
    %v6294 = vpop.f32.mrf.mxu0
    %v6295 = vadd.f32 %v6206, %v6294
    %6296 = vmatmul.bf16.gmra.mxu0 %v3410
    %v6297 = vpop.f32.mrf.mxu0
    %v6298 = vadd.f32 %v6209, %v6297
    %v6299 = vpop.f32.mrf.mxu0
    %v6300 = vadd.f32 %v6211, %v6299
    %6301 = vmatmul.bf16.gmra.mxu0 %v3418
    %v6302 = vpop.f32.mrf.mxu0
    %v6303 = vadd.f32 %v6214, %v6302
    %v6304 = vpop.f32.mrf.mxu0
    %v6305 = vadd.f32 %v6216, %v6304
    %6306 = vmatmul.bf16.gmra.mxu0 %v3426
    %v6307 = vpop.f32.mrf.mxu0
    %v6308 = vadd.f32 %v6219, %v6307
    %v6309 = vpop.f32.mrf.mxu0
    %v6310 = vadd.f32 %v6221, %v6309
    %6311 = vmatmul.bf16.gmra.mxu0 %v3434
    %v6312 = vpop.f32.mrf.mxu0
    %v6313 = vadd.f32 %v6224, %v6312
    %v6314 = vpop.f32.mrf.mxu0
    %v6315 = vadd.f32 %v6226, %v6314
    %6316 = vdwg.mxu0
    %6317 = vmatpush.bf16.msra.mxu0 %v4723
    %6318 = vmatpush.bf16.msra.mxu0 %v4719
    %6319 = vmatpush.bf16.msra.mxu0 %v4715
    %6320 = vmatpush.bf16.msra.mxu0 %v4711
    %6321 = vmatpush.bf16.msra.mxu0 %v4707
    %6322 = vmatpush.bf16.msra.mxu0 %v4703
    %6323 = vmatpush.bf16.msra.mxu0 %v4699
    %6324 = vmatpush.bf16.msra.mxu0 %v4695
    %6325 = vmatmul.bf16.gmra.mxu0 %v3315
    %v6326 = vpop.f32.mrf.mxu0
    %v6327 = vadd.f32 %v6238, %v6326
    %v6328 = vpop.f32.mrf.mxu0
    %v6329 = vadd.f32 %v6240, %v6328
    %6330 = vmatmul.bf16.gmra.mxu0 %v3323
    %v6331 = vpop.f32.mrf.mxu0
    %v6332 = vadd.f32 %v6243, %v6331
    %v6333 = vpop.f32.mrf.mxu0
    %v6334 = vadd.f32 %v6245, %v6333
    %6335 = vmatmul.bf16.gmra.mxu0 %v3331
    %v6336 = vpop.f32.mrf.mxu0
    %v6337 = vadd.f32 %v6248, %v6336
    %v6338 = vpop.f32.mrf.mxu0
    %v6339 = vadd.f32 %v6250, %v6338
    %6340 = vmatmul.bf16.gmra.mxu0 %v3339
    %v6341 = vpop.f32.mrf.mxu0
    %v6342 = vadd.f32 %v6253, %v6341
    %v6343 = vpop.f32.mrf.mxu0
    %v6344 = vadd.f32 %v6255, %v6343
    %6345 = vmatmul.bf16.gmra.mxu0 %v3347
    %v6346 = vpop.f32.mrf.mxu0
    %v6347 = vadd.f32 %v6258, %v6346
    %v6348 = vpop.f32.mrf.mxu0
    %v6349 = vadd.f32 %v6260, %v6348
    %6350 = vmatmul.bf16.gmra.mxu0 %v3355
    %v6351 = vpop.f32.mrf.mxu0
    %v6352 = vadd.f32 %v6263, %v6351
    %v6353 = vpop.f32.mrf.mxu0
    %v6354 = vadd.f32 %v6265, %v6353
    %6355 = vmatmul.bf16.gmra.mxu0 %v3363
    %v6356 = vpop.f32.mrf.mxu0
    %v6357 = vadd.f32 %v6268, %v6356
    %v6358 = vpop.f32.mrf.mxu0
    %v6359 = vadd.f32 %v6270, %v6358
    %6360 = vmatmul.bf16.gmra.mxu0 %v3371
    %v6361 = vpop.f32.mrf.mxu0
    %v6362 = vadd.f32 %v6273, %v6361
    %v6363 = vpop.f32.mrf.mxu0
    %v6364 = vadd.f32 %v6275, %v6363
    %6365 = vmatmul.bf16.gmra.mxu0 %v3379
    %v6366 = vpop.f32.mrf.mxu0
    %v6367 = vadd.f32 %v6278, %v6366
    %v6368 = vpop.f32.mrf.mxu0
    %v6369 = vadd.f32 %v6280, %v6368
    %6370 = vmatmul.bf16.gmra.mxu0 %v3387
    %v6371 = vpop.f32.mrf.mxu0
    %v6372 = vadd.f32 %v6283, %v6371
    %v6373 = vpop.f32.mrf.mxu0
    %v6374 = vadd.f32 %v6285, %v6373
    %6375 = vmatmul.bf16.gmra.mxu0 %v3395
    %v6376 = vpop.f32.mrf.mxu0
    %v6377 = vadd.f32 %v6288, %v6376
    %v6378 = vpop.f32.mrf.mxu0
    %v6379 = vadd.f32 %v6290, %v6378
    %6380 = vmatmul.bf16.gmra.mxu0 %v3403
    %v6381 = vpop.f32.mrf.mxu0
    %v6382 = vadd.f32 %v6293, %v6381
    %v6383 = vpop.f32.mrf.mxu0
    %v6384 = vadd.f32 %v6295, %v6383
    %6385 = vmatmul.bf16.gmra.mxu0 %v3411
    %v6386 = vpop.f32.mrf.mxu0
    %v6387 = vadd.f32 %v6298, %v6386
    %v6388 = vpop.f32.mrf.mxu0
    %v6389 = vadd.f32 %v6300, %v6388
    %6390 = vmatmul.bf16.gmra.mxu0 %v3419
    %v6391 = vpop.f32.mrf.mxu0
    %v6392 = vadd.f32 %v6303, %v6391
    %v6393 = vpop.f32.mrf.mxu0
    %v6394 = vadd.f32 %v6305, %v6393
    %6395 = vmatmul.bf16.gmra.mxu0 %v3427
    %v6396 = vpop.f32.mrf.mxu0
    %v6397 = vadd.f32 %v6308, %v6396
    %v6398 = vpop.f32.mrf.mxu0
    %v6399 = vadd.f32 %v6310, %v6398
    %6400 = vmatmul.bf16.gmra.mxu0 %v3435
    %v6401 = vpop.f32.mrf.mxu0
    %v6402 = vadd.f32 %v6313, %v6401
    %v6403 = vpop.f32.mrf.mxu0
    %v6404 = vadd.f32 %v6315, %v6403
    %6405 = vdwg.mxu0
    %6406 = vmatpush.bf16.msra.mxu0 %v4500
    %6407 = vmatpush.bf16.msra.mxu0 %v4496
    %6408 = vmatpush.bf16.msra.mxu0 %v4492
    %6409 = vmatpush.bf16.msra.mxu0 %v4488
    %6410 = vmatpush.bf16.msra.mxu0 %v4484
    %6411 = vmatpush.bf16.msra.mxu0 %v4480
    %6412 = vmatpush.bf16.msra.mxu0 %v4476
    %6413 = vmatpush.bf16.msra.mxu0 %v4472
    %6414 = vmatmul.bf16.gmra.mxu0 %v3308
    %v6415 = vpop.f32.mrf.mxu0
    %v6416 = vadd.f32 %v3696, %v6415
    %v6417 = vpop.f32.mrf.mxu0
    %v6418 = vadd.f32 %v3696, %v6417
    %6419 = vmatmul.bf16.gmra.mxu0 %v3316
    %v6420 = vpop.f32.mrf.mxu0
    %v6421 = vadd.f32 %v3696, %v6420
    %v6422 = vpop.f32.mrf.mxu0
    %v6423 = vadd.f32 %v3696, %v6422
    %6424 = vmatmul.bf16.gmra.mxu0 %v3324
    %v6425 = vpop.f32.mrf.mxu0
    %v6426 = vadd.f32 %v3696, %v6425
    %v6427 = vpop.f32.mrf.mxu0
    %v6428 = vadd.f32 %v3696, %v6427
    %6429 = vmatmul.bf16.gmra.mxu0 %v3332
    %v6430 = vpop.f32.mrf.mxu0
    %v6431 = vadd.f32 %v3696, %v6430
    %v6432 = vpop.f32.mrf.mxu0
    %v6433 = vadd.f32 %v3696, %v6432
    %6434 = vmatmul.bf16.gmra.mxu0 %v3340
    %v6435 = vpop.f32.mrf.mxu0
    %v6436 = vadd.f32 %v3696, %v6435
    %v6437 = vpop.f32.mrf.mxu0
    %v6438 = vadd.f32 %v3696, %v6437
    %6439 = vmatmul.bf16.gmra.mxu0 %v3348
    %v6440 = vpop.f32.mrf.mxu0
    %v6441 = vadd.f32 %v3696, %v6440
    %v6442 = vpop.f32.mrf.mxu0
    %v6443 = vadd.f32 %v3696, %v6442
    %6444 = vmatmul.bf16.gmra.mxu0 %v3356
    %v6445 = vpop.f32.mrf.mxu0
    %v6446 = vadd.f32 %v3696, %v6445
    %v6447 = vpop.f32.mrf.mxu0
    %v6448 = vadd.f32 %v3696, %v6447
    %6449 = vmatmul.bf16.gmra.mxu0 %v3364
    %v6450 = vpop.f32.mrf.mxu0
    %v6451 = vadd.f32 %v3696, %v6450
    %v6452 = vpop.f32.mrf.mxu0
    %v6453 = vadd.f32 %v3696, %v6452
    %6454 = vmatmul.bf16.gmra.mxu0 %v3372
    %v6455 = vpop.f32.mrf.mxu0
    %v6456 = vadd.f32 %v3696, %v6455
    %v6457 = vpop.f32.mrf.mxu0
    %v6458 = vadd.f32 %v3696, %v6457
    %6459 = vmatmul.bf16.gmra.mxu0 %v3380
    %v6460 = vpop.f32.mrf.mxu0
    %v6461 = vadd.f32 %v3696, %v6460
    %v6462 = vpop.f32.mrf.mxu0
    %v6463 = vadd.f32 %v3696, %v6462
    %6464 = vmatmul.bf16.gmra.mxu0 %v3388
    %v6465 = vpop.f32.mrf.mxu0
    %v6466 = vadd.f32 %v3696, %v6465
    %v6467 = vpop.f32.mrf.mxu0
    %v6468 = vadd.f32 %v3696, %v6467
    %6469 = vmatmul.bf16.gmra.mxu0 %v3396
    %v6470 = vpop.f32.mrf.mxu0
    %v6471 = vadd.f32 %v3696, %v6470
    %v6472 = vpop.f32.mrf.mxu0
    %v6473 = vadd.f32 %v3696, %v6472
    %6474 = vmatmul.bf16.gmra.mxu0 %v3404
    %v6475 = vpop.f32.mrf.mxu0
    %v6476 = vadd.f32 %v3696, %v6475
    %v6477 = vpop.f32.mrf.mxu0
    %v6478 = vadd.f32 %v3696, %v6477
    %6479 = vmatmul.bf16.gmra.mxu0 %v3412
    %v6480 = vpop.f32.mrf.mxu0
    %v6481 = vadd.f32 %v3696, %v6480
    %v6482 = vpop.f32.mrf.mxu0
    %v6483 = vadd.f32 %v3696, %v6482
    %6484 = vmatmul.bf16.gmra.mxu0 %v3420
    %v6485 = vpop.f32.mrf.mxu0
    %v6486 = vadd.f32 %v3696, %v6485
    %v6487 = vpop.f32.mrf.mxu0
    %v6488 = vadd.f32 %v3696, %v6487
    %6489 = vmatmul.bf16.gmra.mxu0 %v3428
    %v6490 = vpop.f32.mrf.mxu0
    %v6491 = vadd.f32 %v3696, %v6490
    %v6492 = vpop.f32.mrf.mxu0
    %v6493 = vadd.f32 %v3696, %v6492
    %6494 = vdwg.mxu0
    %6495 = vmatpush.bf16.msra.mxu0 %v4532
    %6496 = vmatpush.bf16.msra.mxu0 %v4528
    %6497 = vmatpush.bf16.msra.mxu0 %v4524
    %6498 = vmatpush.bf16.msra.mxu0 %v4520
    %6499 = vmatpush.bf16.msra.mxu0 %v4516
    %6500 = vmatpush.bf16.msra.mxu0 %v4512
    %6501 = vmatpush.bf16.msra.mxu0 %v4508
    %6502 = vmatpush.bf16.msra.mxu0 %v4504
    %6503 = vmatmul.bf16.gmra.mxu0 %v3309
    %v6504 = vpop.f32.mrf.mxu0
    %v6505 = vadd.f32 %v6416, %v6504
    %v6506 = vpop.f32.mrf.mxu0
    %v6507 = vadd.f32 %v6418, %v6506
    %6508 = vmatmul.bf16.gmra.mxu0 %v3317
    %v6509 = vpop.f32.mrf.mxu0
    %v6510 = vadd.f32 %v6421, %v6509
    %v6511 = vpop.f32.mrf.mxu0
    %v6512 = vadd.f32 %v6423, %v6511
    %6513 = vmatmul.bf16.gmra.mxu0 %v3325
    %v6514 = vpop.f32.mrf.mxu0
    %v6515 = vadd.f32 %v6426, %v6514
    %v6516 = vpop.f32.mrf.mxu0
    %v6517 = vadd.f32 %v6428, %v6516
    %6518 = vmatmul.bf16.gmra.mxu0 %v3333
    %v6519 = vpop.f32.mrf.mxu0
    %v6520 = vadd.f32 %v6431, %v6519
    %v6521 = vpop.f32.mrf.mxu0
    %v6522 = vadd.f32 %v6433, %v6521
    %6523 = vmatmul.bf16.gmra.mxu0 %v3341
    %v6524 = vpop.f32.mrf.mxu0
    %v6525 = vadd.f32 %v6436, %v6524
    %v6526 = vpop.f32.mrf.mxu0
    %v6527 = vadd.f32 %v6438, %v6526
    %6528 = vmatmul.bf16.gmra.mxu0 %v3349
    %v6529 = vpop.f32.mrf.mxu0
    %v6530 = vadd.f32 %v6441, %v6529
    %v6531 = vpop.f32.mrf.mxu0
    %v6532 = vadd.f32 %v6443, %v6531
    %6533 = vmatmul.bf16.gmra.mxu0 %v3357
    %v6534 = vpop.f32.mrf.mxu0
    %v6535 = vadd.f32 %v6446, %v6534
    %v6536 = vpop.f32.mrf.mxu0
    %v6537 = vadd.f32 %v6448, %v6536
    %6538 = vmatmul.bf16.gmra.mxu0 %v3365
    %v6539 = vpop.f32.mrf.mxu0
    %v6540 = vadd.f32 %v6451, %v6539
    %v6541 = vpop.f32.mrf.mxu0
    %v6542 = vadd.f32 %v6453, %v6541
    %6543 = vmatmul.bf16.gmra.mxu0 %v3373
    %v6544 = vpop.f32.mrf.mxu0
    %v6545 = vadd.f32 %v6456, %v6544
    %v6546 = vpop.f32.mrf.mxu0
    %v6547 = vadd.f32 %v6458, %v6546
    %6548 = vmatmul.bf16.gmra.mxu0 %v3381
    %v6549 = vpop.f32.mrf.mxu0
    %v6550 = vadd.f32 %v6461, %v6549
    %v6551 = vpop.f32.mrf.mxu0
    %v6552 = vadd.f32 %v6463, %v6551
    %6553 = vmatmul.bf16.gmra.mxu0 %v3389
    %v6554 = vpop.f32.mrf.mxu0
    %v6555 = vadd.f32 %v6466, %v6554
    %v6556 = vpop.f32.mrf.mxu0
    %v6557 = vadd.f32 %v6468, %v6556
    %6558 = vmatmul.bf16.gmra.mxu0 %v3397
    %v6559 = vpop.f32.mrf.mxu0
    %v6560 = vadd.f32 %v6471, %v6559
    %v6561 = vpop.f32.mrf.mxu0
    %v6562 = vadd.f32 %v6473, %v6561
    %6563 = vmatmul.bf16.gmra.mxu0 %v3405
    %v6564 = vpop.f32.mrf.mxu0
    %v6565 = vadd.f32 %v6476, %v6564
    %v6566 = vpop.f32.mrf.mxu0
    %v6567 = vadd.f32 %v6478, %v6566
    %6568 = vmatmul.bf16.gmra.mxu0 %v3413
    %v6569 = vpop.f32.mrf.mxu0
    %v6570 = vadd.f32 %v6481, %v6569
    %v6571 = vpop.f32.mrf.mxu0
    %v6572 = vadd.f32 %v6483, %v6571
    %6573 = vmatmul.bf16.gmra.mxu0 %v3421
    %v6574 = vpop.f32.mrf.mxu0
    %v6575 = vadd.f32 %v6486, %v6574
    %v6576 = vpop.f32.mrf.mxu0
    %v6577 = vadd.f32 %v6488, %v6576
    %6578 = vmatmul.bf16.gmra.mxu0 %v3429
    %v6579 = vpop.f32.mrf.mxu0
    %v6580 = vadd.f32 %v6491, %v6579
    %v6581 = vpop.f32.mrf.mxu0
    %v6582 = vadd.f32 %v6493, %v6581
    %6583 = vdwg.mxu0
    %6584 = vmatpush.bf16.msra.mxu0 %v4564
    %6585 = vmatpush.bf16.msra.mxu0 %v4560
    %6586 = vmatpush.bf16.msra.mxu0 %v4556
    %6587 = vmatpush.bf16.msra.mxu0 %v4552
    %6588 = vmatpush.bf16.msra.mxu0 %v4548
    %6589 = vmatpush.bf16.msra.mxu0 %v4544
    %6590 = vmatpush.bf16.msra.mxu0 %v4540
    %6591 = vmatpush.bf16.msra.mxu0 %v4536
    %6592 = vmatmul.bf16.gmra.mxu0 %v3310
    %v6593 = vpop.f32.mrf.mxu0
    %v6594 = vadd.f32 %v6505, %v6593
    %v6595 = vpop.f32.mrf.mxu0
    %v6596 = vadd.f32 %v6507, %v6595
    %6597 = vmatmul.bf16.gmra.mxu0 %v3318
    %v6598 = vpop.f32.mrf.mxu0
    %v6599 = vadd.f32 %v6510, %v6598
    %v6600 = vpop.f32.mrf.mxu0
    %v6601 = vadd.f32 %v6512, %v6600
    %6602 = vmatmul.bf16.gmra.mxu0 %v3326
    %v6603 = vpop.f32.mrf.mxu0
    %v6604 = vadd.f32 %v6515, %v6603
    %v6605 = vpop.f32.mrf.mxu0
    %v6606 = vadd.f32 %v6517, %v6605
    %6607 = vmatmul.bf16.gmra.mxu0 %v3334
    %v6608 = vpop.f32.mrf.mxu0
    %v6609 = vadd.f32 %v6520, %v6608
    %v6610 = vpop.f32.mrf.mxu0
    %v6611 = vadd.f32 %v6522, %v6610
    %6612 = vmatmul.bf16.gmra.mxu0 %v3342
    %v6613 = vpop.f32.mrf.mxu0
    %v6614 = vadd.f32 %v6525, %v6613
    %v6615 = vpop.f32.mrf.mxu0
    %v6616 = vadd.f32 %v6527, %v6615
    %6617 = vmatmul.bf16.gmra.mxu0 %v3350
    %v6618 = vpop.f32.mrf.mxu0
    %v6619 = vadd.f32 %v6530, %v6618
    %v6620 = vpop.f32.mrf.mxu0
    %v6621 = vadd.f32 %v6532, %v6620
    %6622 = vmatmul.bf16.gmra.mxu0 %v3358
    %v6623 = vpop.f32.mrf.mxu0
    %v6624 = vadd.f32 %v6535, %v6623
    %v6625 = vpop.f32.mrf.mxu0
    %v6626 = vadd.f32 %v6537, %v6625
    %6627 = vmatmul.bf16.gmra.mxu0 %v3366
    %v6628 = vpop.f32.mrf.mxu0
    %v6629 = vadd.f32 %v6540, %v6628
    %v6630 = vpop.f32.mrf.mxu0
    %v6631 = vadd.f32 %v6542, %v6630
    %6632 = vmatmul.bf16.gmra.mxu0 %v3374
    %v6633 = vpop.f32.mrf.mxu0
    %v6634 = vadd.f32 %v6545, %v6633
    %v6635 = vpop.f32.mrf.mxu0
    %v6636 = vadd.f32 %v6547, %v6635
    %6637 = vmatmul.bf16.gmra.mxu0 %v3382
    %v6638 = vpop.f32.mrf.mxu0
    %v6639 = vadd.f32 %v6550, %v6638
    %v6640 = vpop.f32.mrf.mxu0
    %v6641 = vadd.f32 %v6552, %v6640
    %6642 = vmatmul.bf16.gmra.mxu0 %v3390
    %v6643 = vpop.f32.mrf.mxu0
    %v6644 = vadd.f32 %v6555, %v6643
    %v6645 = vpop.f32.mrf.mxu0
    %v6646 = vadd.f32 %v6557, %v6645
    %6647 = vmatmul.bf16.gmra.mxu0 %v3398
    %v6648 = vpop.f32.mrf.mxu0
    %v6649 = vadd.f32 %v6560, %v6648
    %v6650 = vpop.f32.mrf.mxu0
    %v6651 = vadd.f32 %v6562, %v6650
    %6652 = vmatmul.bf16.gmra.mxu0 %v3406
    %v6653 = vpop.f32.mrf.mxu0
    %v6654 = vadd.f32 %v6565, %v6653
    %v6655 = vpop.f32.mrf.mxu0
    %v6656 = vadd.f32 %v6567, %v6655
    %6657 = vmatmul.bf16.gmra.mxu0 %v3414
    %v6658 = vpop.f32.mrf.mxu0
    %v6659 = vadd.f32 %v6570, %v6658
    %v6660 = vpop.f32.mrf.mxu0
    %v6661 = vadd.f32 %v6572, %v6660
    %6662 = vmatmul.bf16.gmra.mxu0 %v3422
    %v6663 = vpop.f32.mrf.mxu0
    %v6664 = vadd.f32 %v6575, %v6663
    %v6665 = vpop.f32.mrf.mxu0
    %v6666 = vadd.f32 %v6577, %v6665
    %6667 = vmatmul.bf16.gmra.mxu0 %v3430
    %v6668 = vpop.f32.mrf.mxu0
    %v6669 = vadd.f32 %v6580, %v6668
    %v6670 = vpop.f32.mrf.mxu0
    %v6671 = vadd.f32 %v6582, %v6670
    %6672 = vdwg.mxu0
    %6673 = vmatpush.bf16.msra.mxu0 %v4596
    %6674 = vmatpush.bf16.msra.mxu0 %v4592
    %6675 = vmatpush.bf16.msra.mxu0 %v4588
    %6676 = vmatpush.bf16.msra.mxu0 %v4584
    %6677 = vmatpush.bf16.msra.mxu0 %v4580
    %6678 = vmatpush.bf16.msra.mxu0 %v4576
    %6679 = vmatpush.bf16.msra.mxu0 %v4572
    %6680 = vmatpush.bf16.msra.mxu0 %v4568
    %6681 = vmatmul.bf16.gmra.mxu0 %v3311
    %v6682 = vpop.f32.mrf.mxu0
    %v6683 = vadd.f32 %v6594, %v6682
    %v6684 = vpop.f32.mrf.mxu0
    %v6685 = vadd.f32 %v6596, %v6684
    %6686 = vmatmul.bf16.gmra.mxu0 %v3319
    %v6687 = vpop.f32.mrf.mxu0
    %v6688 = vadd.f32 %v6599, %v6687
    %v6689 = vpop.f32.mrf.mxu0
    %v6690 = vadd.f32 %v6601, %v6689
    %6691 = vmatmul.bf16.gmra.mxu0 %v3327
    %v6692 = vpop.f32.mrf.mxu0
    %v6693 = vadd.f32 %v6604, %v6692
    %v6694 = vpop.f32.mrf.mxu0
    %v6695 = vadd.f32 %v6606, %v6694
    %6696 = vmatmul.bf16.gmra.mxu0 %v3335
    %v6697 = vpop.f32.mrf.mxu0
    %v6698 = vadd.f32 %v6609, %v6697
    %v6699 = vpop.f32.mrf.mxu0
    %v6700 = vadd.f32 %v6611, %v6699
    %6701 = vmatmul.bf16.gmra.mxu0 %v3343
    %v6702 = vpop.f32.mrf.mxu0
    %v6703 = vadd.f32 %v6614, %v6702
    %v6704 = vpop.f32.mrf.mxu0
    %v6705 = vadd.f32 %v6616, %v6704
    %6706 = vmatmul.bf16.gmra.mxu0 %v3351
    %v6707 = vpop.f32.mrf.mxu0
    %v6708 = vadd.f32 %v6619, %v6707
    %v6709 = vpop.f32.mrf.mxu0
    %v6710 = vadd.f32 %v6621, %v6709
    %6711 = vmatmul.bf16.gmra.mxu0 %v3359
    %v6712 = vpop.f32.mrf.mxu0
    %v6713 = vadd.f32 %v6624, %v6712
    %v6714 = vpop.f32.mrf.mxu0
    %v6715 = vadd.f32 %v6626, %v6714
    %6716 = vmatmul.bf16.gmra.mxu0 %v3367
    %v6717 = vpop.f32.mrf.mxu0
    %v6718 = vadd.f32 %v6629, %v6717
    %v6719 = vpop.f32.mrf.mxu0
    %v6720 = vadd.f32 %v6631, %v6719
    %6721 = vmatmul.bf16.gmra.mxu0 %v3375
    %v6722 = vpop.f32.mrf.mxu0
    %v6723 = vadd.f32 %v6634, %v6722
    %v6724 = vpop.f32.mrf.mxu0
    %v6725 = vadd.f32 %v6636, %v6724
    %6726 = vmatmul.bf16.gmra.mxu0 %v3383
    %v6727 = vpop.f32.mrf.mxu0
    %v6728 = vadd.f32 %v6639, %v6727
    %v6729 = vpop.f32.mrf.mxu0
    %v6730 = vadd.f32 %v6641, %v6729
    %6731 = vmatmul.bf16.gmra.mxu0 %v3391
    %v6732 = vpop.f32.mrf.mxu0
    %v6733 = vadd.f32 %v6644, %v6732
    %v6734 = vpop.f32.mrf.mxu0
    %v6735 = vadd.f32 %v6646, %v6734
    %6736 = vmatmul.bf16.gmra.mxu0 %v3399
    %v6737 = vpop.f32.mrf.mxu0
    %v6738 = vadd.f32 %v6649, %v6737
    %v6739 = vpop.f32.mrf.mxu0
    %v6740 = vadd.f32 %v6651, %v6739
    %6741 = vmatmul.bf16.gmra.mxu0 %v3407
    %v6742 = vpop.f32.mrf.mxu0
    %v6743 = vadd.f32 %v6654, %v6742
    %v6744 = vpop.f32.mrf.mxu0
    %v6745 = vadd.f32 %v6656, %v6744
    %6746 = vmatmul.bf16.gmra.mxu0 %v3415
    %v6747 = vpop.f32.mrf.mxu0
    %v6748 = vadd.f32 %v6659, %v6747
    %v6749 = vpop.f32.mrf.mxu0
    %v6750 = vadd.f32 %v6661, %v6749
    %6751 = vmatmul.bf16.gmra.mxu0 %v3423
    %v6752 = vpop.f32.mrf.mxu0
    %v6753 = vadd.f32 %v6664, %v6752
    %v6754 = vpop.f32.mrf.mxu0
    %v6755 = vadd.f32 %v6666, %v6754
    %6756 = vmatmul.bf16.gmra.mxu0 %v3431
    %v6757 = vpop.f32.mrf.mxu0
    %v6758 = vadd.f32 %v6669, %v6757
    %v6759 = vpop.f32.mrf.mxu0
    %v6760 = vadd.f32 %v6671, %v6759
    %6761 = vdwg.mxu0
    %6762 = vmatpush.bf16.msra.mxu0 %v4628
    %6763 = vmatpush.bf16.msra.mxu0 %v4624
    %6764 = vmatpush.bf16.msra.mxu0 %v4620
    %6765 = vmatpush.bf16.msra.mxu0 %v4616
    %6766 = vmatpush.bf16.msra.mxu0 %v4612
    %6767 = vmatpush.bf16.msra.mxu0 %v4608
    %6768 = vmatpush.bf16.msra.mxu0 %v4604
    %6769 = vmatpush.bf16.msra.mxu0 %v4600
    %6770 = vmatmul.bf16.gmra.mxu0 %v3312
    %v6771 = vpop.f32.mrf.mxu0
    %v6772 = vadd.f32 %v6683, %v6771
    %v6773 = vpop.f32.mrf.mxu0
    %v6774 = vadd.f32 %v6685, %v6773
    %6775 = vmatmul.bf16.gmra.mxu0 %v3320
    %v6776 = vpop.f32.mrf.mxu0
    %v6777 = vadd.f32 %v6688, %v6776
    %v6778 = vpop.f32.mrf.mxu0
    %v6779 = vadd.f32 %v6690, %v6778
    %6780 = vmatmul.bf16.gmra.mxu0 %v3328
    %v6781 = vpop.f32.mrf.mxu0
    %v6782 = vadd.f32 %v6693, %v6781
    %v6783 = vpop.f32.mrf.mxu0
    %v6784 = vadd.f32 %v6695, %v6783
    %6785 = vmatmul.bf16.gmra.mxu0 %v3336
    %v6786 = vpop.f32.mrf.mxu0
    %v6787 = vadd.f32 %v6698, %v6786
    %v6788 = vpop.f32.mrf.mxu0
    %v6789 = vadd.f32 %v6700, %v6788
    %6790 = vmatmul.bf16.gmra.mxu0 %v3344
    %v6791 = vpop.f32.mrf.mxu0
    %v6792 = vadd.f32 %v6703, %v6791
    %v6793 = vpop.f32.mrf.mxu0
    %v6794 = vadd.f32 %v6705, %v6793
    %6795 = vmatmul.bf16.gmra.mxu0 %v3352
    %v6796 = vpop.f32.mrf.mxu0
    %v6797 = vadd.f32 %v6708, %v6796
    %v6798 = vpop.f32.mrf.mxu0
    %v6799 = vadd.f32 %v6710, %v6798
    %6800 = vmatmul.bf16.gmra.mxu0 %v3360
    %v6801 = vpop.f32.mrf.mxu0
    %v6802 = vadd.f32 %v6713, %v6801
    %v6803 = vpop.f32.mrf.mxu0
    %v6804 = vadd.f32 %v6715, %v6803
    %6805 = vmatmul.bf16.gmra.mxu0 %v3368
    %v6806 = vpop.f32.mrf.mxu0
    %v6807 = vadd.f32 %v6718, %v6806
    %v6808 = vpop.f32.mrf.mxu0
    %v6809 = vadd.f32 %v6720, %v6808
    %6810 = vmatmul.bf16.gmra.mxu0 %v3376
    %v6811 = vpop.f32.mrf.mxu0
    %v6812 = vadd.f32 %v6723, %v6811
    %v6813 = vpop.f32.mrf.mxu0
    %v6814 = vadd.f32 %v6725, %v6813
    %6815 = vmatmul.bf16.gmra.mxu0 %v3384
    %v6816 = vpop.f32.mrf.mxu0
    %v6817 = vadd.f32 %v6728, %v6816
    %v6818 = vpop.f32.mrf.mxu0
    %v6819 = vadd.f32 %v6730, %v6818
    %6820 = vmatmul.bf16.gmra.mxu0 %v3392
    %v6821 = vpop.f32.mrf.mxu0
    %v6822 = vadd.f32 %v6733, %v6821
    %v6823 = vpop.f32.mrf.mxu0
    %v6824 = vadd.f32 %v6735, %v6823
    %6825 = vmatmul.bf16.gmra.mxu0 %v3400
    %v6826 = vpop.f32.mrf.mxu0
    %v6827 = vadd.f32 %v6738, %v6826
    %v6828 = vpop.f32.mrf.mxu0
    %v6829 = vadd.f32 %v6740, %v6828
    %6830 = vmatmul.bf16.gmra.mxu0 %v3408
    %v6831 = vpop.f32.mrf.mxu0
    %v6832 = vadd.f32 %v6743, %v6831
    %v6833 = vpop.f32.mrf.mxu0
    %v6834 = vadd.f32 %v6745, %v6833
    %6835 = vmatmul.bf16.gmra.mxu0 %v3416
    %v6836 = vpop.f32.mrf.mxu0
    %v6837 = vadd.f32 %v6748, %v6836
    %v6838 = vpop.f32.mrf.mxu0
    %v6839 = vadd.f32 %v6750, %v6838
    %6840 = vmatmul.bf16.gmra.mxu0 %v3424
    %v6841 = vpop.f32.mrf.mxu0
    %v6842 = vadd.f32 %v6753, %v6841
    %v6843 = vpop.f32.mrf.mxu0
    %v6844 = vadd.f32 %v6755, %v6843
    %6845 = vmatmul.bf16.gmra.mxu0 %v3432
    %v6846 = vpop.f32.mrf.mxu0
    %v6847 = vadd.f32 %v6758, %v6846
    %v6848 = vpop.f32.mrf.mxu0
    %v6849 = vadd.f32 %v6760, %v6848
    %6850 = vdwg.mxu0
    %6851 = vmatpush.bf16.msra.mxu0 %v4660
    %6852 = vmatpush.bf16.msra.mxu0 %v4656
    %6853 = vmatpush.bf16.msra.mxu0 %v4652
    %6854 = vmatpush.bf16.msra.mxu0 %v4648
    %6855 = vmatpush.bf16.msra.mxu0 %v4644
    %6856 = vmatpush.bf16.msra.mxu0 %v4640
    %6857 = vmatpush.bf16.msra.mxu0 %v4636
    %6858 = vmatpush.bf16.msra.mxu0 %v4632
    %6859 = vmatmul.bf16.gmra.mxu0 %v3313
    %v6860 = vpop.f32.mrf.mxu0
    %v6861 = vadd.f32 %v6772, %v6860
    %v6862 = vpop.f32.mrf.mxu0
    %v6863 = vadd.f32 %v6774, %v6862
    %6864 = vmatmul.bf16.gmra.mxu0 %v3321
    %v6865 = vpop.f32.mrf.mxu0
    %v6866 = vadd.f32 %v6777, %v6865
    %v6867 = vpop.f32.mrf.mxu0
    %v6868 = vadd.f32 %v6779, %v6867
    %6869 = vmatmul.bf16.gmra.mxu0 %v3329
    %v6870 = vpop.f32.mrf.mxu0
    %v6871 = vadd.f32 %v6782, %v6870
    %v6872 = vpop.f32.mrf.mxu0
    %v6873 = vadd.f32 %v6784, %v6872
    %6874 = vmatmul.bf16.gmra.mxu0 %v3337
    %v6875 = vpop.f32.mrf.mxu0
    %v6876 = vadd.f32 %v6787, %v6875
    %v6877 = vpop.f32.mrf.mxu0
    %v6878 = vadd.f32 %v6789, %v6877
    %6879 = vmatmul.bf16.gmra.mxu0 %v3345
    %v6880 = vpop.f32.mrf.mxu0
    %v6881 = vadd.f32 %v6792, %v6880
    %v6882 = vpop.f32.mrf.mxu0
    %v6883 = vadd.f32 %v6794, %v6882
    %6884 = vmatmul.bf16.gmra.mxu0 %v3353
    %v6885 = vpop.f32.mrf.mxu0
    %v6886 = vadd.f32 %v6797, %v6885
    %v6887 = vpop.f32.mrf.mxu0
    %v6888 = vadd.f32 %v6799, %v6887
    %6889 = vmatmul.bf16.gmra.mxu0 %v3361
    %v6890 = vpop.f32.mrf.mxu0
    %v6891 = vadd.f32 %v6802, %v6890
    %v6892 = vpop.f32.mrf.mxu0
    %v6893 = vadd.f32 %v6804, %v6892
    %6894 = vmatmul.bf16.gmra.mxu0 %v3369
    %v6895 = vpop.f32.mrf.mxu0
    %v6896 = vadd.f32 %v6807, %v6895
    %v6897 = vpop.f32.mrf.mxu0
    %v6898 = vadd.f32 %v6809, %v6897
    %6899 = vmatmul.bf16.gmra.mxu0 %v3377
    %v6900 = vpop.f32.mrf.mxu0
    %v6901 = vadd.f32 %v6812, %v6900
    %v6902 = vpop.f32.mrf.mxu0
    %v6903 = vadd.f32 %v6814, %v6902
    %6904 = vmatmul.bf16.gmra.mxu0 %v3385
    %v6905 = vpop.f32.mrf.mxu0
    %v6906 = vadd.f32 %v6817, %v6905
    %v6907 = vpop.f32.mrf.mxu0
    %v6908 = vadd.f32 %v6819, %v6907
    %6909 = vmatmul.bf16.gmra.mxu0 %v3393
    %v6910 = vpop.f32.mrf.mxu0
    %v6911 = vadd.f32 %v6822, %v6910
    %v6912 = vpop.f32.mrf.mxu0
    %v6913 = vadd.f32 %v6824, %v6912
    %6914 = vmatmul.bf16.gmra.mxu0 %v3401
    %v6915 = vpop.f32.mrf.mxu0
    %v6916 = vadd.f32 %v6827, %v6915
    %v6917 = vpop.f32.mrf.mxu0
    %v6918 = vadd.f32 %v6829, %v6917
    %6919 = vmatmul.bf16.gmra.mxu0 %v3409
    %v6920 = vpop.f32.mrf.mxu0
    %v6921 = vadd.f32 %v6832, %v6920
    %v6922 = vpop.f32.mrf.mxu0
    %v6923 = vadd.f32 %v6834, %v6922
    %6924 = vmatmul.bf16.gmra.mxu0 %v3417
    %v6925 = vpop.f32.mrf.mxu0
    %v6926 = vadd.f32 %v6837, %v6925
    %v6927 = vpop.f32.mrf.mxu0
    %v6928 = vadd.f32 %v6839, %v6927
    %6929 = vmatmul.bf16.gmra.mxu0 %v3425
    %v6930 = vpop.f32.mrf.mxu0
    %v6931 = vadd.f32 %v6842, %v6930
    %v6932 = vpop.f32.mrf.mxu0
    %v6933 = vadd.f32 %v6844, %v6932
    %6934 = vmatmul.bf16.gmra.mxu0 %v3433
    %v6935 = vpop.f32.mrf.mxu0
    %v6936 = vadd.f32 %v6847, %v6935
    %v6937 = vpop.f32.mrf.mxu0
    %v6938 = vadd.f32 %v6849, %v6937
    %6939 = vdwg.mxu0
    %6940 = vmatpush.bf16.msra.mxu0 %v4692
    %6941 = vmatpush.bf16.msra.mxu0 %v4688
    %6942 = vmatpush.bf16.msra.mxu0 %v4684
    %6943 = vmatpush.bf16.msra.mxu0 %v4680
    %6944 = vmatpush.bf16.msra.mxu0 %v4676
    %6945 = vmatpush.bf16.msra.mxu0 %v4672
    %6946 = vmatpush.bf16.msra.mxu0 %v4668
    %6947 = vmatpush.bf16.msra.mxu0 %v4664
    %6948 = vmatmul.bf16.gmra.mxu0 %v3314
    %v6949 = vpop.f32.mrf.mxu0
    %v6950 = vadd.f32 %v6861, %v6949
    %v6951 = vpop.f32.mrf.mxu0
    %v6952 = vadd.f32 %v6863, %v6951
    %6953 = vmatmul.bf16.gmra.mxu0 %v3322
    %v6954 = vpop.f32.mrf.mxu0
    %v6955 = vadd.f32 %v6866, %v6954
    %v6956 = vpop.f32.mrf.mxu0
    %v6957 = vadd.f32 %v6868, %v6956
    %6958 = vmatmul.bf16.gmra.mxu0 %v3330
    %v6959 = vpop.f32.mrf.mxu0
    %v6960 = vadd.f32 %v6871, %v6959
    %v6961 = vpop.f32.mrf.mxu0
    %v6962 = vadd.f32 %v6873, %v6961
    %6963 = vmatmul.bf16.gmra.mxu0 %v3338
    %v6964 = vpop.f32.mrf.mxu0
    %v6965 = vadd.f32 %v6876, %v6964
    %v6966 = vpop.f32.mrf.mxu0
    %v6967 = vadd.f32 %v6878, %v6966
    %6968 = vmatmul.bf16.gmra.mxu0 %v3346
    %v6969 = vpop.f32.mrf.mxu0
    %v6970 = vadd.f32 %v6881, %v6969
    %v6971 = vpop.f32.mrf.mxu0
    %v6972 = vadd.f32 %v6883, %v6971
    %6973 = vmatmul.bf16.gmra.mxu0 %v3354
    %v6974 = vpop.f32.mrf.mxu0
    %v6975 = vadd.f32 %v6886, %v6974
    %v6976 = vpop.f32.mrf.mxu0
    %v6977 = vadd.f32 %v6888, %v6976
    %6978 = vmatmul.bf16.gmra.mxu0 %v3362
    %v6979 = vpop.f32.mrf.mxu0
    %v6980 = vadd.f32 %v6891, %v6979
    %v6981 = vpop.f32.mrf.mxu0
    %v6982 = vadd.f32 %v6893, %v6981
    %6983 = vmatmul.bf16.gmra.mxu0 %v3370
    %v6984 = vpop.f32.mrf.mxu0
    %v6985 = vadd.f32 %v6896, %v6984
    %v6986 = vpop.f32.mrf.mxu0
    %v6987 = vadd.f32 %v6898, %v6986
    %6988 = vmatmul.bf16.gmra.mxu0 %v3378
    %v6989 = vpop.f32.mrf.mxu0
    %v6990 = vadd.f32 %v6901, %v6989
    %v6991 = vpop.f32.mrf.mxu0
    %v6992 = vadd.f32 %v6903, %v6991
    %6993 = vmatmul.bf16.gmra.mxu0 %v3386
    %v6994 = vpop.f32.mrf.mxu0
    %v6995 = vadd.f32 %v6906, %v6994
    %v6996 = vpop.f32.mrf.mxu0
    %v6997 = vadd.f32 %v6908, %v6996
    %6998 = vmatmul.bf16.gmra.mxu0 %v3394
    %v6999 = vpop.f32.mrf.mxu0
    %v7000 = vadd.f32 %v6911, %v6999
    %v7001 = vpop.f32.mrf.mxu0
    %v7002 = vadd.f32 %v6913, %v7001
    %7003 = vmatmul.bf16.gmra.mxu0 %v3402
    %v7004 = vpop.f32.mrf.mxu0
    %v7005 = vadd.f32 %v6916, %v7004
    %v7006 = vpop.f32.mrf.mxu0
    %v7007 = vadd.f32 %v6918, %v7006
    %7008 = vmatmul.bf16.gmra.mxu0 %v3410
    %v7009 = vpop.f32.mrf.mxu0
    %v7010 = vadd.f32 %v6921, %v7009
    %v7011 = vpop.f32.mrf.mxu0
    %v7012 = vadd.f32 %v6923, %v7011
    %7013 = vmatmul.bf16.gmra.mxu0 %v3418
    %v7014 = vpop.f32.mrf.mxu0
    %v7015 = vadd.f32 %v6926, %v7014
    %v7016 = vpop.f32.mrf.mxu0
    %v7017 = vadd.f32 %v6928, %v7016
    %7018 = vmatmul.bf16.gmra.mxu0 %v3426
    %v7019 = vpop.f32.mrf.mxu0
    %v7020 = vadd.f32 %v6931, %v7019
    %v7021 = vpop.f32.mrf.mxu0
    %v7022 = vadd.f32 %v6933, %v7021
    %7023 = vmatmul.bf16.gmra.mxu0 %v3434
    %v7024 = vpop.f32.mrf.mxu0
    %v7025 = vadd.f32 %v6936, %v7024
    %v7026 = vpop.f32.mrf.mxu0
    %v7027 = vadd.f32 %v6938, %v7026
    %7028 = vdwg.mxu0
    %7029 = vmatpush.bf16.msra.mxu0 %v4724
    %7030 = vmatpush.bf16.msra.mxu0 %v4720
    %7031 = vmatpush.bf16.msra.mxu0 %v4716
    %7032 = vmatpush.bf16.msra.mxu0 %v4712
    %7033 = vmatpush.bf16.msra.mxu0 %v4708
    %7034 = vmatpush.bf16.msra.mxu0 %v4704
    %7035 = vmatpush.bf16.msra.mxu0 %v4700
    %7036 = vmatpush.bf16.msra.mxu0 %v4696
    %7037 = vmatmul.bf16.gmra.mxu0 %v3315
    %v7038 = vpop.f32.mrf.mxu0
    %v7039 = vadd.f32 %v6950, %v7038
    %v7040 = vpop.f32.mrf.mxu0
    %v7041 = vadd.f32 %v6952, %v7040
    %7042 = vmatmul.bf16.gmra.mxu0 %v3323
    %v7043 = vpop.f32.mrf.mxu0
    %v7044 = vadd.f32 %v6955, %v7043
    %v7045 = vpop.f32.mrf.mxu0
    %v7046 = vadd.f32 %v6957, %v7045
    %7047 = vmatmul.bf16.gmra.mxu0 %v3331
    %v7048 = vpop.f32.mrf.mxu0
    %v7049 = vadd.f32 %v6960, %v7048
    %v7050 = vpop.f32.mrf.mxu0
    %v7051 = vadd.f32 %v6962, %v7050
    %7052 = vmatmul.bf16.gmra.mxu0 %v3339
    %v7053 = vpop.f32.mrf.mxu0
    %v7054 = vadd.f32 %v6965, %v7053
    %v7055 = vpop.f32.mrf.mxu0
    %v7056 = vadd.f32 %v6967, %v7055
    %7057 = vmatmul.bf16.gmra.mxu0 %v3347
    %v7058 = vpop.f32.mrf.mxu0
    %v7059 = vadd.f32 %v6970, %v7058
    %v7060 = vpop.f32.mrf.mxu0
    %v7061 = vadd.f32 %v6972, %v7060
    %7062 = vmatmul.bf16.gmra.mxu0 %v3355
    %v7063 = vpop.f32.mrf.mxu0
    %v7064 = vadd.f32 %v6975, %v7063
    %v7065 = vpop.f32.mrf.mxu0
    %v7066 = vadd.f32 %v6977, %v7065
    %7067 = vmatmul.bf16.gmra.mxu0 %v3363
    %v7068 = vpop.f32.mrf.mxu0
    %v7069 = vadd.f32 %v6980, %v7068
    %v7070 = vpop.f32.mrf.mxu0
    %v7071 = vadd.f32 %v6982, %v7070
    %7072 = vmatmul.bf16.gmra.mxu0 %v3371
    %v7073 = vpop.f32.mrf.mxu0
    %v7074 = vadd.f32 %v6985, %v7073
    %v7075 = vpop.f32.mrf.mxu0
    %v7076 = vadd.f32 %v6987, %v7075
    %7077 = vmatmul.bf16.gmra.mxu0 %v3379
    %v7078 = vpop.f32.mrf.mxu0
    %v7079 = vadd.f32 %v6990, %v7078
    %v7080 = vpop.f32.mrf.mxu0
    %v7081 = vadd.f32 %v6992, %v7080
    %7082 = vmatmul.bf16.gmra.mxu0 %v3387
    %v7083 = vpop.f32.mrf.mxu0
    %v7084 = vadd.f32 %v6995, %v7083
    %v7085 = vpop.f32.mrf.mxu0
    %v7086 = vadd.f32 %v6997, %v7085
    %7087 = vmatmul.bf16.gmra.mxu0 %v3395
    %v7088 = vpop.f32.mrf.mxu0
    %v7089 = vadd.f32 %v7000, %v7088
    %v7090 = vpop.f32.mrf.mxu0
    %v7091 = vadd.f32 %v7002, %v7090
    %7092 = vmatmul.bf16.gmra.mxu0 %v3403
    %v7093 = vpop.f32.mrf.mxu0
    %v7094 = vadd.f32 %v7005, %v7093
    %v7095 = vpop.f32.mrf.mxu0
    %v7096 = vadd.f32 %v7007, %v7095
    %7097 = vmatmul.bf16.gmra.mxu0 %v3411
    %v7098 = vpop.f32.mrf.mxu0
    %v7099 = vadd.f32 %v7010, %v7098
    %v7100 = vpop.f32.mrf.mxu0
    %v7101 = vadd.f32 %v7012, %v7100
    %7102 = vmatmul.bf16.gmra.mxu0 %v3419
    %v7103 = vpop.f32.mrf.mxu0
    %v7104 = vadd.f32 %v7015, %v7103
    %v7105 = vpop.f32.mrf.mxu0
    %v7106 = vadd.f32 %v7017, %v7105
    %7107 = vmatmul.bf16.gmra.mxu0 %v3427
    %v7108 = vpop.f32.mrf.mxu0
    %v7109 = vadd.f32 %v7020, %v7108
    %v7110 = vpop.f32.mrf.mxu0
    %v7111 = vadd.f32 %v7022, %v7110
    %7112 = vmatmul.bf16.gmra.mxu0 %v3435
    %v7113 = vpop.f32.mrf.mxu0
    %v7114 = vadd.f32 %v7025, %v7113
    %v7115 = vpop.f32.mrf.mxu0
    %v7116 = vadd.f32 %v7027, %v7115
    %7117 = vdwg.mxu0
    %7118 = vmatpush.bf16.msra.mxu0 %v4501
    %7119 = vmatpush.bf16.msra.mxu0 %v4497
    %7120 = vmatpush.bf16.msra.mxu0 %v4493
    %7121 = vmatpush.bf16.msra.mxu0 %v4489
    %7122 = vmatpush.bf16.msra.mxu0 %v4485
    %7123 = vmatpush.bf16.msra.mxu0 %v4481
    %7124 = vmatpush.bf16.msra.mxu0 %v4477
    %7125 = vmatpush.bf16.msra.mxu0 %v4473
    %7126 = vmatmul.bf16.gmra.mxu0 %v3308
    %v7127 = vpop.f32.mrf.mxu0
    %v7128 = vadd.f32 %v3697, %v7127
    %v7129 = vpop.f32.mrf.mxu0
    %v7130 = vadd.f32 %v3697, %v7129
    %7131 = vmatmul.bf16.gmra.mxu0 %v3316
    %v7132 = vpop.f32.mrf.mxu0
    %v7133 = vadd.f32 %v3697, %v7132
    %v7134 = vpop.f32.mrf.mxu0
    %v7135 = vadd.f32 %v3697, %v7134
    %7136 = vmatmul.bf16.gmra.mxu0 %v3324
    %v7137 = vpop.f32.mrf.mxu0
    %v7138 = vadd.f32 %v3697, %v7137
    %v7139 = vpop.f32.mrf.mxu0
    %v7140 = vadd.f32 %v3697, %v7139
    %7141 = vmatmul.bf16.gmra.mxu0 %v3332
    %v7142 = vpop.f32.mrf.mxu0
    %v7143 = vadd.f32 %v3697, %v7142
    %v7144 = vpop.f32.mrf.mxu0
    %v7145 = vadd.f32 %v3697, %v7144
    %7146 = vmatmul.bf16.gmra.mxu0 %v3340
    %v7147 = vpop.f32.mrf.mxu0
    %v7148 = vadd.f32 %v3697, %v7147
    %v7149 = vpop.f32.mrf.mxu0
    %v7150 = vadd.f32 %v3697, %v7149
    %7151 = vmatmul.bf16.gmra.mxu0 %v3348
    %v7152 = vpop.f32.mrf.mxu0
    %v7153 = vadd.f32 %v3697, %v7152
    %v7154 = vpop.f32.mrf.mxu0
    %v7155 = vadd.f32 %v3697, %v7154
    %7156 = vmatmul.bf16.gmra.mxu0 %v3356
    %v7157 = vpop.f32.mrf.mxu0
    %v7158 = vadd.f32 %v3697, %v7157
    %v7159 = vpop.f32.mrf.mxu0
    %v7160 = vadd.f32 %v3697, %v7159
    %7161 = vmatmul.bf16.gmra.mxu0 %v3364
    %v7162 = vpop.f32.mrf.mxu0
    %v7163 = vadd.f32 %v3697, %v7162
    %v7164 = vpop.f32.mrf.mxu0
    %v7165 = vadd.f32 %v3697, %v7164
    %7166 = vmatmul.bf16.gmra.mxu0 %v3372
    %v7167 = vpop.f32.mrf.mxu0
    %v7168 = vadd.f32 %v3697, %v7167
    %v7169 = vpop.f32.mrf.mxu0
    %v7170 = vadd.f32 %v3697, %v7169
    %7171 = vmatmul.bf16.gmra.mxu0 %v3380
    %v7172 = vpop.f32.mrf.mxu0
    %v7173 = vadd.f32 %v3697, %v7172
    %v7174 = vpop.f32.mrf.mxu0
    %v7175 = vadd.f32 %v3697, %v7174
    %7176 = vmatmul.bf16.gmra.mxu0 %v3388
    %v7177 = vpop.f32.mrf.mxu0
    %v7178 = vadd.f32 %v3697, %v7177
    %v7179 = vpop.f32.mrf.mxu0
    %v7180 = vadd.f32 %v3697, %v7179
    %7181 = vmatmul.bf16.gmra.mxu0 %v3396
    %v7182 = vpop.f32.mrf.mxu0
    %v7183 = vadd.f32 %v3697, %v7182
    %v7184 = vpop.f32.mrf.mxu0
    %v7185 = vadd.f32 %v3697, %v7184
    %7186 = vmatmul.bf16.gmra.mxu0 %v3404
    %v7187 = vpop.f32.mrf.mxu0
    %v7188 = vadd.f32 %v3697, %v7187
    %v7189 = vpop.f32.mrf.mxu0
    %v7190 = vadd.f32 %v3697, %v7189
    %7191 = vmatmul.bf16.gmra.mxu0 %v3412
    %v7192 = vpop.f32.mrf.mxu0
    %v7193 = vadd.f32 %v3697, %v7192
    %v7194 = vpop.f32.mrf.mxu0
    %v7195 = vadd.f32 %v3697, %v7194
    %7196 = vmatmul.bf16.gmra.mxu0 %v3420
    %v7197 = vpop.f32.mrf.mxu0
    %v7198 = vadd.f32 %v3697, %v7197
    %v7199 = vpop.f32.mrf.mxu0
    %v7200 = vadd.f32 %v3697, %v7199
    %7201 = vmatmul.bf16.gmra.mxu0 %v3428
    %v7202 = vpop.f32.mrf.mxu0
    %v7203 = vadd.f32 %v3697, %v7202
    %v7204 = vpop.f32.mrf.mxu0
    %v7205 = vadd.f32 %v3697, %v7204
    %7206 = vdwg.mxu0
    %7207 = vmatpush.bf16.msra.mxu0 %v4533
    %7208 = vmatpush.bf16.msra.mxu0 %v4529
    %7209 = vmatpush.bf16.msra.mxu0 %v4525
    %7210 = vmatpush.bf16.msra.mxu0 %v4521
    %7211 = vmatpush.bf16.msra.mxu0 %v4517
    %7212 = vmatpush.bf16.msra.mxu0 %v4513
    %7213 = vmatpush.bf16.msra.mxu0 %v4509
    %7214 = vmatpush.bf16.msra.mxu0 %v4505
    %7215 = vmatmul.bf16.gmra.mxu0 %v3309
    %v7216 = vpop.f32.mrf.mxu0
    %v7217 = vadd.f32 %v7128, %v7216
    %v7218 = vpop.f32.mrf.mxu0
    %v7219 = vadd.f32 %v7130, %v7218
    %7220 = vmatmul.bf16.gmra.mxu0 %v3317
    %v7221 = vpop.f32.mrf.mxu0
    %v7222 = vadd.f32 %v7133, %v7221
    %v7223 = vpop.f32.mrf.mxu0
    %v7224 = vadd.f32 %v7135, %v7223
    %7225 = vmatmul.bf16.gmra.mxu0 %v3325
    %v7226 = vpop.f32.mrf.mxu0
    %v7227 = vadd.f32 %v7138, %v7226
    %v7228 = vpop.f32.mrf.mxu0
    %v7229 = vadd.f32 %v7140, %v7228
    %7230 = vmatmul.bf16.gmra.mxu0 %v3333
    %v7231 = vpop.f32.mrf.mxu0
    %v7232 = vadd.f32 %v7143, %v7231
    %v7233 = vpop.f32.mrf.mxu0
    %v7234 = vadd.f32 %v7145, %v7233
    %7235 = vmatmul.bf16.gmra.mxu0 %v3341
    %v7236 = vpop.f32.mrf.mxu0
    %v7237 = vadd.f32 %v7148, %v7236
    %v7238 = vpop.f32.mrf.mxu0
    %v7239 = vadd.f32 %v7150, %v7238
    %7240 = vmatmul.bf16.gmra.mxu0 %v3349
    %v7241 = vpop.f32.mrf.mxu0
    %v7242 = vadd.f32 %v7153, %v7241
    %v7243 = vpop.f32.mrf.mxu0
    %v7244 = vadd.f32 %v7155, %v7243
    %7245 = vmatmul.bf16.gmra.mxu0 %v3357
    %v7246 = vpop.f32.mrf.mxu0
    %v7247 = vadd.f32 %v7158, %v7246
    %v7248 = vpop.f32.mrf.mxu0
    %v7249 = vadd.f32 %v7160, %v7248
    %7250 = vmatmul.bf16.gmra.mxu0 %v3365
    %v7251 = vpop.f32.mrf.mxu0
    %v7252 = vadd.f32 %v7163, %v7251
    %v7253 = vpop.f32.mrf.mxu0
    %v7254 = vadd.f32 %v7165, %v7253
    %7255 = vmatmul.bf16.gmra.mxu0 %v3373
    %v7256 = vpop.f32.mrf.mxu0
    %v7257 = vadd.f32 %v7168, %v7256
    %v7258 = vpop.f32.mrf.mxu0
    %v7259 = vadd.f32 %v7170, %v7258
    %7260 = vmatmul.bf16.gmra.mxu0 %v3381
    %v7261 = vpop.f32.mrf.mxu0
    %v7262 = vadd.f32 %v7173, %v7261
    %v7263 = vpop.f32.mrf.mxu0
    %v7264 = vadd.f32 %v7175, %v7263
    %7265 = vmatmul.bf16.gmra.mxu0 %v3389
    %v7266 = vpop.f32.mrf.mxu0
    %v7267 = vadd.f32 %v7178, %v7266
    %v7268 = vpop.f32.mrf.mxu0
    %v7269 = vadd.f32 %v7180, %v7268
    %7270 = vmatmul.bf16.gmra.mxu0 %v3397
    %v7271 = vpop.f32.mrf.mxu0
    %v7272 = vadd.f32 %v7183, %v7271
    %v7273 = vpop.f32.mrf.mxu0
    %v7274 = vadd.f32 %v7185, %v7273
    %7275 = vmatmul.bf16.gmra.mxu0 %v3405
    %v7276 = vpop.f32.mrf.mxu0
    %v7277 = vadd.f32 %v7188, %v7276
    %v7278 = vpop.f32.mrf.mxu0
    %v7279 = vadd.f32 %v7190, %v7278
    %7280 = vmatmul.bf16.gmra.mxu0 %v3413
    %v7281 = vpop.f32.mrf.mxu0
    %v7282 = vadd.f32 %v7193, %v7281
    %v7283 = vpop.f32.mrf.mxu0
    %v7284 = vadd.f32 %v7195, %v7283
    %7285 = vmatmul.bf16.gmra.mxu0 %v3421
    %v7286 = vpop.f32.mrf.mxu0
    %v7287 = vadd.f32 %v7198, %v7286
    %v7288 = vpop.f32.mrf.mxu0
    %v7289 = vadd.f32 %v7200, %v7288
    %7290 = vmatmul.bf16.gmra.mxu0 %v3429
    %v7291 = vpop.f32.mrf.mxu0
    %v7292 = vadd.f32 %v7203, %v7291
    %v7293 = vpop.f32.mrf.mxu0
    %v7294 = vadd.f32 %v7205, %v7293
    %7295 = vdwg.mxu0
    %7296 = vmatpush.bf16.msra.mxu0 %v4565
    %7297 = vmatpush.bf16.msra.mxu0 %v4561
    %7298 = vmatpush.bf16.msra.mxu0 %v4557
    %7299 = vmatpush.bf16.msra.mxu0 %v4553
    %7300 = vmatpush.bf16.msra.mxu0 %v4549
    %7301 = vmatpush.bf16.msra.mxu0 %v4545
    %7302 = vmatpush.bf16.msra.mxu0 %v4541
    %7303 = vmatpush.bf16.msra.mxu0 %v4537
    %7304 = vmatmul.bf16.gmra.mxu0 %v3310
    %v7305 = vpop.f32.mrf.mxu0
    %v7306 = vadd.f32 %v7217, %v7305
    %v7307 = vpop.f32.mrf.mxu0
    %v7308 = vadd.f32 %v7219, %v7307
    %7309 = vmatmul.bf16.gmra.mxu0 %v3318
    %v7310 = vpop.f32.mrf.mxu0
    %v7311 = vadd.f32 %v7222, %v7310
    %v7312 = vpop.f32.mrf.mxu0
    %v7313 = vadd.f32 %v7224, %v7312
    %7314 = vmatmul.bf16.gmra.mxu0 %v3326
    %v7315 = vpop.f32.mrf.mxu0
    %v7316 = vadd.f32 %v7227, %v7315
    %v7317 = vpop.f32.mrf.mxu0
    %v7318 = vadd.f32 %v7229, %v7317
    %7319 = vmatmul.bf16.gmra.mxu0 %v3334
    %v7320 = vpop.f32.mrf.mxu0
    %v7321 = vadd.f32 %v7232, %v7320
    %v7322 = vpop.f32.mrf.mxu0
    %v7323 = vadd.f32 %v7234, %v7322
    %7324 = vmatmul.bf16.gmra.mxu0 %v3342
    %v7325 = vpop.f32.mrf.mxu0
    %v7326 = vadd.f32 %v7237, %v7325
    %v7327 = vpop.f32.mrf.mxu0
    %v7328 = vadd.f32 %v7239, %v7327
    %7329 = vmatmul.bf16.gmra.mxu0 %v3350
    %v7330 = vpop.f32.mrf.mxu0
    %v7331 = vadd.f32 %v7242, %v7330
    %v7332 = vpop.f32.mrf.mxu0
    %v7333 = vadd.f32 %v7244, %v7332
    %7334 = vmatmul.bf16.gmra.mxu0 %v3358
    %v7335 = vpop.f32.mrf.mxu0
    %v7336 = vadd.f32 %v7247, %v7335
    %v7337 = vpop.f32.mrf.mxu0
    %v7338 = vadd.f32 %v7249, %v7337
    %7339 = vmatmul.bf16.gmra.mxu0 %v3366
    %v7340 = vpop.f32.mrf.mxu0
    %v7341 = vadd.f32 %v7252, %v7340
    %v7342 = vpop.f32.mrf.mxu0
    %v7343 = vadd.f32 %v7254, %v7342
    %7344 = vmatmul.bf16.gmra.mxu0 %v3374
    %v7345 = vpop.f32.mrf.mxu0
    %v7346 = vadd.f32 %v7257, %v7345
    %v7347 = vpop.f32.mrf.mxu0
    %v7348 = vadd.f32 %v7259, %v7347
    %7349 = vmatmul.bf16.gmra.mxu0 %v3382
    %v7350 = vpop.f32.mrf.mxu0
    %v7351 = vadd.f32 %v7262, %v7350
    %v7352 = vpop.f32.mrf.mxu0
    %v7353 = vadd.f32 %v7264, %v7352
    %7354 = vmatmul.bf16.gmra.mxu0 %v3390
    %v7355 = vpop.f32.mrf.mxu0
    %v7356 = vadd.f32 %v7267, %v7355
    %v7357 = vpop.f32.mrf.mxu0
    %v7358 = vadd.f32 %v7269, %v7357
    %7359 = vmatmul.bf16.gmra.mxu0 %v3398
    %v7360 = vpop.f32.mrf.mxu0
    %v7361 = vadd.f32 %v7272, %v7360
    %v7362 = vpop.f32.mrf.mxu0
    %v7363 = vadd.f32 %v7274, %v7362
    %7364 = vmatmul.bf16.gmra.mxu0 %v3406
    %v7365 = vpop.f32.mrf.mxu0
    %v7366 = vadd.f32 %v7277, %v7365
    %v7367 = vpop.f32.mrf.mxu0
    %v7368 = vadd.f32 %v7279, %v7367
    %7369 = vmatmul.bf16.gmra.mxu0 %v3414
    %v7370 = vpop.f32.mrf.mxu0
    %v7371 = vadd.f32 %v7282, %v7370
    %v7372 = vpop.f32.mrf.mxu0
    %v7373 = vadd.f32 %v7284, %v7372
    %7374 = vmatmul.bf16.gmra.mxu0 %v3422
    %v7375 = vpop.f32.mrf.mxu0
    %v7376 = vadd.f32 %v7287, %v7375
    %v7377 = vpop.f32.mrf.mxu0
    %v7378 = vadd.f32 %v7289, %v7377
    %7379 = vmatmul.bf16.gmra.mxu0 %v3430
    %v7380 = vpop.f32.mrf.mxu0
    %v7381 = vadd.f32 %v7292, %v7380
    %v7382 = vpop.f32.mrf.mxu0
    %v7383 = vadd.f32 %v7294, %v7382
    %7384 = vdwg.mxu0
    %7385 = vmatpush.bf16.msra.mxu0 %v4597
    %7386 = vmatpush.bf16.msra.mxu0 %v4593
    %7387 = vmatpush.bf16.msra.mxu0 %v4589
    %7388 = vmatpush.bf16.msra.mxu0 %v4585
    %7389 = vmatpush.bf16.msra.mxu0 %v4581
    %7390 = vmatpush.bf16.msra.mxu0 %v4577
    %7391 = vmatpush.bf16.msra.mxu0 %v4573
    %7392 = vmatpush.bf16.msra.mxu0 %v4569
    %7393 = vmatmul.bf16.gmra.mxu0 %v3311
    %v7394 = vpop.f32.mrf.mxu0
    %v7395 = vadd.f32 %v7306, %v7394
    %v7396 = vpop.f32.mrf.mxu0
    %v7397 = vadd.f32 %v7308, %v7396
    %7398 = vmatmul.bf16.gmra.mxu0 %v3319
    %v7399 = vpop.f32.mrf.mxu0
    %v7400 = vadd.f32 %v7311, %v7399
    %v7401 = vpop.f32.mrf.mxu0
    %v7402 = vadd.f32 %v7313, %v7401
    %7403 = vmatmul.bf16.gmra.mxu0 %v3327
    %v7404 = vpop.f32.mrf.mxu0
    %v7405 = vadd.f32 %v7316, %v7404
    %v7406 = vpop.f32.mrf.mxu0
    %v7407 = vadd.f32 %v7318, %v7406
    %7408 = vmatmul.bf16.gmra.mxu0 %v3335
    %v7409 = vpop.f32.mrf.mxu0
    %v7410 = vadd.f32 %v7321, %v7409
    %v7411 = vpop.f32.mrf.mxu0
    %v7412 = vadd.f32 %v7323, %v7411
    %7413 = vmatmul.bf16.gmra.mxu0 %v3343
    %v7414 = vpop.f32.mrf.mxu0
    %v7415 = vadd.f32 %v7326, %v7414
    %v7416 = vpop.f32.mrf.mxu0
    %v7417 = vadd.f32 %v7328, %v7416
    %7418 = vmatmul.bf16.gmra.mxu0 %v3351
    %v7419 = vpop.f32.mrf.mxu0
    %v7420 = vadd.f32 %v7331, %v7419
    %v7421 = vpop.f32.mrf.mxu0
    %v7422 = vadd.f32 %v7333, %v7421
    %7423 = vmatmul.bf16.gmra.mxu0 %v3359
    %v7424 = vpop.f32.mrf.mxu0
    %v7425 = vadd.f32 %v7336, %v7424
    %v7426 = vpop.f32.mrf.mxu0
    %v7427 = vadd.f32 %v7338, %v7426
    %7428 = vmatmul.bf16.gmra.mxu0 %v3367
    %v7429 = vpop.f32.mrf.mxu0
    %v7430 = vadd.f32 %v7341, %v7429
    %v7431 = vpop.f32.mrf.mxu0
    %v7432 = vadd.f32 %v7343, %v7431
    %7433 = vmatmul.bf16.gmra.mxu0 %v3375
    %v7434 = vpop.f32.mrf.mxu0
    %v7435 = vadd.f32 %v7346, %v7434
    %v7436 = vpop.f32.mrf.mxu0
    %v7437 = vadd.f32 %v7348, %v7436
    %7438 = vmatmul.bf16.gmra.mxu0 %v3383
    %v7439 = vpop.f32.mrf.mxu0
    %v7440 = vadd.f32 %v7351, %v7439
    %v7441 = vpop.f32.mrf.mxu0
    %v7442 = vadd.f32 %v7353, %v7441
    %7443 = vmatmul.bf16.gmra.mxu0 %v3391
    %v7444 = vpop.f32.mrf.mxu0
    %v7445 = vadd.f32 %v7356, %v7444
    %v7446 = vpop.f32.mrf.mxu0
    %v7447 = vadd.f32 %v7358, %v7446
    %7448 = vmatmul.bf16.gmra.mxu0 %v3399
    %v7449 = vpop.f32.mrf.mxu0
    %v7450 = vadd.f32 %v7361, %v7449
    %v7451 = vpop.f32.mrf.mxu0
    %v7452 = vadd.f32 %v7363, %v7451
    %7453 = vmatmul.bf16.gmra.mxu0 %v3407
    %v7454 = vpop.f32.mrf.mxu0
    %v7455 = vadd.f32 %v7366, %v7454
    %v7456 = vpop.f32.mrf.mxu0
    %v7457 = vadd.f32 %v7368, %v7456
    %7458 = vmatmul.bf16.gmra.mxu0 %v3415
    %v7459 = vpop.f32.mrf.mxu0
    %v7460 = vadd.f32 %v7371, %v7459
    %v7461 = vpop.f32.mrf.mxu0
    %v7462 = vadd.f32 %v7373, %v7461
    %7463 = vmatmul.bf16.gmra.mxu0 %v3423
    %v7464 = vpop.f32.mrf.mxu0
    %v7465 = vadd.f32 %v7376, %v7464
    %v7466 = vpop.f32.mrf.mxu0
    %v7467 = vadd.f32 %v7378, %v7466
    %7468 = vmatmul.bf16.gmra.mxu0 %v3431
    %v7469 = vpop.f32.mrf.mxu0
    %v7470 = vadd.f32 %v7381, %v7469
    %v7471 = vpop.f32.mrf.mxu0
    %v7472 = vadd.f32 %v7383, %v7471
    %7473 = vdwg.mxu0
    %7474 = vmatpush.bf16.msra.mxu0 %v4629
    %7475 = vmatpush.bf16.msra.mxu0 %v4625
    %7476 = vmatpush.bf16.msra.mxu0 %v4621
    %7477 = vmatpush.bf16.msra.mxu0 %v4617
    %7478 = vmatpush.bf16.msra.mxu0 %v4613
    %7479 = vmatpush.bf16.msra.mxu0 %v4609
    %7480 = vmatpush.bf16.msra.mxu0 %v4605
    %7481 = vmatpush.bf16.msra.mxu0 %v4601
    %7482 = vmatmul.bf16.gmra.mxu0 %v3312
    %v7483 = vpop.f32.mrf.mxu0
    %v7484 = vadd.f32 %v7395, %v7483
    %v7485 = vpop.f32.mrf.mxu0
    %v7486 = vadd.f32 %v7397, %v7485
    %7487 = vmatmul.bf16.gmra.mxu0 %v3320
    %v7488 = vpop.f32.mrf.mxu0
    %v7489 = vadd.f32 %v7400, %v7488
    %v7490 = vpop.f32.mrf.mxu0
    %v7491 = vadd.f32 %v7402, %v7490
    %7492 = vmatmul.bf16.gmra.mxu0 %v3328
    %v7493 = vpop.f32.mrf.mxu0
    %v7494 = vadd.f32 %v7405, %v7493
    %v7495 = vpop.f32.mrf.mxu0
    %v7496 = vadd.f32 %v7407, %v7495
    %7497 = vmatmul.bf16.gmra.mxu0 %v3336
    %v7498 = vpop.f32.mrf.mxu0
    %v7499 = vadd.f32 %v7410, %v7498
    %v7500 = vpop.f32.mrf.mxu0
    %v7501 = vadd.f32 %v7412, %v7500
    %7502 = vmatmul.bf16.gmra.mxu0 %v3344
    %v7503 = vpop.f32.mrf.mxu0
    %v7504 = vadd.f32 %v7415, %v7503
    %v7505 = vpop.f32.mrf.mxu0
    %v7506 = vadd.f32 %v7417, %v7505
    %7507 = vmatmul.bf16.gmra.mxu0 %v3352
    %v7508 = vpop.f32.mrf.mxu0
    %v7509 = vadd.f32 %v7420, %v7508
    %v7510 = vpop.f32.mrf.mxu0
    %v7511 = vadd.f32 %v7422, %v7510
    %7512 = vmatmul.bf16.gmra.mxu0 %v3360
    %v7513 = vpop.f32.mrf.mxu0
    %v7514 = vadd.f32 %v7425, %v7513
    %v7515 = vpop.f32.mrf.mxu0
    %v7516 = vadd.f32 %v7427, %v7515
    %7517 = vmatmul.bf16.gmra.mxu0 %v3368
    %v7518 = vpop.f32.mrf.mxu0
    %v7519 = vadd.f32 %v7430, %v7518
    %v7520 = vpop.f32.mrf.mxu0
    %v7521 = vadd.f32 %v7432, %v7520
    %7522 = vmatmul.bf16.gmra.mxu0 %v3376
    %v7523 = vpop.f32.mrf.mxu0
    %v7524 = vadd.f32 %v7435, %v7523
    %v7525 = vpop.f32.mrf.mxu0
    %v7526 = vadd.f32 %v7437, %v7525
    %7527 = vmatmul.bf16.gmra.mxu0 %v3384
    %v7528 = vpop.f32.mrf.mxu0
    %v7529 = vadd.f32 %v7440, %v7528
    %v7530 = vpop.f32.mrf.mxu0
    %v7531 = vadd.f32 %v7442, %v7530
    %7532 = vmatmul.bf16.gmra.mxu0 %v3392
    %v7533 = vpop.f32.mrf.mxu0
    %v7534 = vadd.f32 %v7445, %v7533
    %v7535 = vpop.f32.mrf.mxu0
    %v7536 = vadd.f32 %v7447, %v7535
    %7537 = vmatmul.bf16.gmra.mxu0 %v3400
    %v7538 = vpop.f32.mrf.mxu0
    %v7539 = vadd.f32 %v7450, %v7538
    %v7540 = vpop.f32.mrf.mxu0
    %v7541 = vadd.f32 %v7452, %v7540
    %7542 = vmatmul.bf16.gmra.mxu0 %v3408
    %v7543 = vpop.f32.mrf.mxu0
    %v7544 = vadd.f32 %v7455, %v7543
    %v7545 = vpop.f32.mrf.mxu0
    %v7546 = vadd.f32 %v7457, %v7545
    %7547 = vmatmul.bf16.gmra.mxu0 %v3416
    %v7548 = vpop.f32.mrf.mxu0
    %v7549 = vadd.f32 %v7460, %v7548
    %v7550 = vpop.f32.mrf.mxu0
    %v7551 = vadd.f32 %v7462, %v7550
    %7552 = vmatmul.bf16.gmra.mxu0 %v3424
    %v7553 = vpop.f32.mrf.mxu0
    %v7554 = vadd.f32 %v7465, %v7553
    %v7555 = vpop.f32.mrf.mxu0
    %v7556 = vadd.f32 %v7467, %v7555
    %7557 = vmatmul.bf16.gmra.mxu0 %v3432
    %v7558 = vpop.f32.mrf.mxu0
    %v7559 = vadd.f32 %v7470, %v7558
    %v7560 = vpop.f32.mrf.mxu0
    %v7561 = vadd.f32 %v7472, %v7560
    %7562 = vdwg.mxu0
    %7563 = vmatpush.bf16.msra.mxu0 %v4661
    %7564 = vmatpush.bf16.msra.mxu0 %v4657
    %7565 = vmatpush.bf16.msra.mxu0 %v4653
    %7566 = vmatpush.bf16.msra.mxu0 %v4649
    %7567 = vmatpush.bf16.msra.mxu0 %v4645
    %7568 = vmatpush.bf16.msra.mxu0 %v4641
    %7569 = vmatpush.bf16.msra.mxu0 %v4637
    %7570 = vmatpush.bf16.msra.mxu0 %v4633
    %7571 = vmatmul.bf16.gmra.mxu0 %v3313
    %v7572 = vpop.f32.mrf.mxu0
    %v7573 = vadd.f32 %v7484, %v7572
    %v7574 = vpop.f32.mrf.mxu0
    %v7575 = vadd.f32 %v7486, %v7574
    %7576 = vmatmul.bf16.gmra.mxu0 %v3321
    %v7577 = vpop.f32.mrf.mxu0
    %v7578 = vadd.f32 %v7489, %v7577
    %v7579 = vpop.f32.mrf.mxu0
    %v7580 = vadd.f32 %v7491, %v7579
    %7581 = vmatmul.bf16.gmra.mxu0 %v3329
    %v7582 = vpop.f32.mrf.mxu0
    %v7583 = vadd.f32 %v7494, %v7582
    %v7584 = vpop.f32.mrf.mxu0
    %v7585 = vadd.f32 %v7496, %v7584
    %7586 = vmatmul.bf16.gmra.mxu0 %v3337
    %v7587 = vpop.f32.mrf.mxu0
    %v7588 = vadd.f32 %v7499, %v7587
    %v7589 = vpop.f32.mrf.mxu0
    %v7590 = vadd.f32 %v7501, %v7589
    %7591 = vmatmul.bf16.gmra.mxu0 %v3345
    %v7592 = vpop.f32.mrf.mxu0
    %v7593 = vadd.f32 %v7504, %v7592
    %v7594 = vpop.f32.mrf.mxu0
    %v7595 = vadd.f32 %v7506, %v7594
    %7596 = vmatmul.bf16.gmra.mxu0 %v3353
    %v7597 = vpop.f32.mrf.mxu0
    %v7598 = vadd.f32 %v7509, %v7597
    %v7599 = vpop.f32.mrf.mxu0
    %v7600 = vadd.f32 %v7511, %v7599
    %7601 = vmatmul.bf16.gmra.mxu0 %v3361
    %v7602 = vpop.f32.mrf.mxu0
    %v7603 = vadd.f32 %v7514, %v7602
    %v7604 = vpop.f32.mrf.mxu0
    %v7605 = vadd.f32 %v7516, %v7604
    %7606 = vmatmul.bf16.gmra.mxu0 %v3369
    %v7607 = vpop.f32.mrf.mxu0
    %v7608 = vadd.f32 %v7519, %v7607
    %v7609 = vpop.f32.mrf.mxu0
    %v7610 = vadd.f32 %v7521, %v7609
    %7611 = vmatmul.bf16.gmra.mxu0 %v3377
    %v7612 = vpop.f32.mrf.mxu0
    %v7613 = vadd.f32 %v7524, %v7612
    %v7614 = vpop.f32.mrf.mxu0
    %v7615 = vadd.f32 %v7526, %v7614
    %7616 = vmatmul.bf16.gmra.mxu0 %v3385
    %v7617 = vpop.f32.mrf.mxu0
    %v7618 = vadd.f32 %v7529, %v7617
    %v7619 = vpop.f32.mrf.mxu0
    %v7620 = vadd.f32 %v7531, %v7619
    %7621 = vmatmul.bf16.gmra.mxu0 %v3393
    %v7622 = vpop.f32.mrf.mxu0
    %v7623 = vadd.f32 %v7534, %v7622
    %v7624 = vpop.f32.mrf.mxu0
    %v7625 = vadd.f32 %v7536, %v7624
    %7626 = vmatmul.bf16.gmra.mxu0 %v3401
    %v7627 = vpop.f32.mrf.mxu0
    %v7628 = vadd.f32 %v7539, %v7627
    %v7629 = vpop.f32.mrf.mxu0
    %v7630 = vadd.f32 %v7541, %v7629
    %7631 = vmatmul.bf16.gmra.mxu0 %v3409
    %v7632 = vpop.f32.mrf.mxu0
    %v7633 = vadd.f32 %v7544, %v7632
    %v7634 = vpop.f32.mrf.mxu0
    %v7635 = vadd.f32 %v7546, %v7634
    %7636 = vmatmul.bf16.gmra.mxu0 %v3417
    %v7637 = vpop.f32.mrf.mxu0
    %v7638 = vadd.f32 %v7549, %v7637
    %v7639 = vpop.f32.mrf.mxu0
    %v7640 = vadd.f32 %v7551, %v7639
    %7641 = vmatmul.bf16.gmra.mxu0 %v3425
    %v7642 = vpop.f32.mrf.mxu0
    %v7643 = vadd.f32 %v7554, %v7642
    %v7644 = vpop.f32.mrf.mxu0
    %v7645 = vadd.f32 %v7556, %v7644
    %7646 = vmatmul.bf16.gmra.mxu0 %v3433
    %v7647 = vpop.f32.mrf.mxu0
    %v7648 = vadd.f32 %v7559, %v7647
    %v7649 = vpop.f32.mrf.mxu0
    %v7650 = vadd.f32 %v7561, %v7649
    %7651 = vdwg.mxu0
    %7652 = vmatpush.bf16.msra.mxu0 %v4693
    %7653 = vmatpush.bf16.msra.mxu0 %v4689
    %7654 = vmatpush.bf16.msra.mxu0 %v4685
    %7655 = vmatpush.bf16.msra.mxu0 %v4681
    %7656 = vmatpush.bf16.msra.mxu0 %v4677
    %7657 = vmatpush.bf16.msra.mxu0 %v4673
    %7658 = vmatpush.bf16.msra.mxu0 %v4669
    %7659 = vmatpush.bf16.msra.mxu0 %v4665
    %7660 = vmatmul.bf16.gmra.mxu0 %v3314
    %v7661 = vpop.f32.mrf.mxu0
    %v7662 = vadd.f32 %v7573, %v7661
    %v7663 = vpop.f32.mrf.mxu0
    %v7664 = vadd.f32 %v7575, %v7663
    %7665 = vmatmul.bf16.gmra.mxu0 %v3322
    %v7666 = vpop.f32.mrf.mxu0
    %v7667 = vadd.f32 %v7578, %v7666
    %v7668 = vpop.f32.mrf.mxu0
    %v7669 = vadd.f32 %v7580, %v7668
    %7670 = vmatmul.bf16.gmra.mxu0 %v3330
    %v7671 = vpop.f32.mrf.mxu0
    %v7672 = vadd.f32 %v7583, %v7671
    %v7673 = vpop.f32.mrf.mxu0
    %v7674 = vadd.f32 %v7585, %v7673
    %7675 = vmatmul.bf16.gmra.mxu0 %v3338
    %v7676 = vpop.f32.mrf.mxu0
    %v7677 = vadd.f32 %v7588, %v7676
    %v7678 = vpop.f32.mrf.mxu0
    %v7679 = vadd.f32 %v7590, %v7678
    %7680 = vmatmul.bf16.gmra.mxu0 %v3346
    %v7681 = vpop.f32.mrf.mxu0
    %v7682 = vadd.f32 %v7593, %v7681
    %v7683 = vpop.f32.mrf.mxu0
    %v7684 = vadd.f32 %v7595, %v7683
    %7685 = vmatmul.bf16.gmra.mxu0 %v3354
    %v7686 = vpop.f32.mrf.mxu0
    %v7687 = vadd.f32 %v7598, %v7686
    %v7688 = vpop.f32.mrf.mxu0
    %v7689 = vadd.f32 %v7600, %v7688
    %7690 = vmatmul.bf16.gmra.mxu0 %v3362
    %v7691 = vpop.f32.mrf.mxu0
    %v7692 = vadd.f32 %v7603, %v7691
    %v7693 = vpop.f32.mrf.mxu0
    %v7694 = vadd.f32 %v7605, %v7693
    %7695 = vmatmul.bf16.gmra.mxu0 %v3370
    %v7696 = vpop.f32.mrf.mxu0
    %v7697 = vadd.f32 %v7608, %v7696
    %v7698 = vpop.f32.mrf.mxu0
    %v7699 = vadd.f32 %v7610, %v7698
    %7700 = vmatmul.bf16.gmra.mxu0 %v3378
    %v7701 = vpop.f32.mrf.mxu0
    %v7702 = vadd.f32 %v7613, %v7701
    %v7703 = vpop.f32.mrf.mxu0
    %v7704 = vadd.f32 %v7615, %v7703
    %7705 = vmatmul.bf16.gmra.mxu0 %v3386
    %v7706 = vpop.f32.mrf.mxu0
    %v7707 = vadd.f32 %v7618, %v7706
    %v7708 = vpop.f32.mrf.mxu0
    %v7709 = vadd.f32 %v7620, %v7708
    %7710 = vmatmul.bf16.gmra.mxu0 %v3394
    %v7711 = vpop.f32.mrf.mxu0
    %v7712 = vadd.f32 %v7623, %v7711
    %v7713 = vpop.f32.mrf.mxu0
    %v7714 = vadd.f32 %v7625, %v7713
    %7715 = vmatmul.bf16.gmra.mxu0 %v3402
    %v7716 = vpop.f32.mrf.mxu0
    %v7717 = vadd.f32 %v7628, %v7716
    %v7718 = vpop.f32.mrf.mxu0
    %v7719 = vadd.f32 %v7630, %v7718
    %7720 = vmatmul.bf16.gmra.mxu0 %v3410
    %v7721 = vpop.f32.mrf.mxu0
    %v7722 = vadd.f32 %v7633, %v7721
    %v7723 = vpop.f32.mrf.mxu0
    %v7724 = vadd.f32 %v7635, %v7723
    %7725 = vmatmul.bf16.gmra.mxu0 %v3418
    %v7726 = vpop.f32.mrf.mxu0
    %v7727 = vadd.f32 %v7638, %v7726
    %v7728 = vpop.f32.mrf.mxu0
    %v7729 = vadd.f32 %v7640, %v7728
    %7730 = vmatmul.bf16.gmra.mxu0 %v3426
    %v7731 = vpop.f32.mrf.mxu0
    %v7732 = vadd.f32 %v7643, %v7731
    %v7733 = vpop.f32.mrf.mxu0
    %v7734 = vadd.f32 %v7645, %v7733
    %7735 = vmatmul.bf16.gmra.mxu0 %v3434
    %v7736 = vpop.f32.mrf.mxu0
    %v7737 = vadd.f32 %v7648, %v7736
    %v7738 = vpop.f32.mrf.mxu0
    %v7739 = vadd.f32 %v7650, %v7738
    %7740 = vdwg.mxu0
    %7741 = vmatpush.bf16.msra.mxu0 %v4725
    %7742 = vmatpush.bf16.msra.mxu0 %v4721
    %7743 = vmatpush.bf16.msra.mxu0 %v4717
    %7744 = vmatpush.bf16.msra.mxu0 %v4713
    %7745 = vmatpush.bf16.msra.mxu0 %v4709
    %7746 = vmatpush.bf16.msra.mxu0 %v4705
    %7747 = vmatpush.bf16.msra.mxu0 %v4701
    %7748 = vmatpush.bf16.msra.mxu0 %v4697
    %7749 = vmatmul.bf16.gmra.mxu0 %v3315
    %v7750 = vpop.f32.mrf.mxu0
    %v7751 = vadd.f32 %v7662, %v7750
    %v7752 = vpop.f32.mrf.mxu0
    %v7753 = vadd.f32 %v7664, %v7752
    %7754 = vmatmul.bf16.gmra.mxu0 %v3323
    %v7755 = vpop.f32.mrf.mxu0
    %v7756 = vadd.f32 %v7667, %v7755
    %v7757 = vpop.f32.mrf.mxu0
    %v7758 = vadd.f32 %v7669, %v7757
    %7759 = vmatmul.bf16.gmra.mxu0 %v3331
    %v7760 = vpop.f32.mrf.mxu0
    %v7761 = vadd.f32 %v7672, %v7760
    %v7762 = vpop.f32.mrf.mxu0
    %v7763 = vadd.f32 %v7674, %v7762
    %7764 = vmatmul.bf16.gmra.mxu0 %v3339
    %v7765 = vpop.f32.mrf.mxu0
    %v7766 = vadd.f32 %v7677, %v7765
    %v7767 = vpop.f32.mrf.mxu0
    %v7768 = vadd.f32 %v7679, %v7767
    %7769 = vmatmul.bf16.gmra.mxu0 %v3347
    %v7770 = vpop.f32.mrf.mxu0
    %v7771 = vadd.f32 %v7682, %v7770
    %v7772 = vpop.f32.mrf.mxu0
    %v7773 = vadd.f32 %v7684, %v7772
    %7774 = vmatmul.bf16.gmra.mxu0 %v3355
    %v7775 = vpop.f32.mrf.mxu0
    %v7776 = vadd.f32 %v7687, %v7775
    %v7777 = vpop.f32.mrf.mxu0
    %v7778 = vadd.f32 %v7689, %v7777
    %7779 = vmatmul.bf16.gmra.mxu0 %v3363
    %v7780 = vpop.f32.mrf.mxu0
    %v7781 = vadd.f32 %v7692, %v7780
    %v7782 = vpop.f32.mrf.mxu0
    %v7783 = vadd.f32 %v7694, %v7782
    %7784 = vmatmul.bf16.gmra.mxu0 %v3371
    %v7785 = vpop.f32.mrf.mxu0
    %v7786 = vadd.f32 %v7697, %v7785
    %v7787 = vpop.f32.mrf.mxu0
    %v7788 = vadd.f32 %v7699, %v7787
    %7789 = vmatmul.bf16.gmra.mxu0 %v3379
    %v7790 = vpop.f32.mrf.mxu0
    %v7791 = vadd.f32 %v7702, %v7790
    %v7792 = vpop.f32.mrf.mxu0
    %v7793 = vadd.f32 %v7704, %v7792
    %7794 = vmatmul.bf16.gmra.mxu0 %v3387
    %v7795 = vpop.f32.mrf.mxu0
    %v7796 = vadd.f32 %v7707, %v7795
    %v7797 = vpop.f32.mrf.mxu0
    %v7798 = vadd.f32 %v7709, %v7797
    %7799 = vmatmul.bf16.gmra.mxu0 %v3395
    %v7800 = vpop.f32.mrf.mxu0
    %v7801 = vadd.f32 %v7712, %v7800
    %v7802 = vpop.f32.mrf.mxu0
    %v7803 = vadd.f32 %v7714, %v7802
    %7804 = vmatmul.bf16.gmra.mxu0 %v3403
    %v7805 = vpop.f32.mrf.mxu0
    %v7806 = vadd.f32 %v7717, %v7805
    %v7807 = vpop.f32.mrf.mxu0
    %v7808 = vadd.f32 %v7719, %v7807
    %7809 = vmatmul.bf16.gmra.mxu0 %v3411
    %v7810 = vpop.f32.mrf.mxu0
    %v7811 = vadd.f32 %v7722, %v7810
    %v7812 = vpop.f32.mrf.mxu0
    %v7813 = vadd.f32 %v7724, %v7812
    %7814 = vmatmul.bf16.gmra.mxu0 %v3419
    %v7815 = vpop.f32.mrf.mxu0
    %v7816 = vadd.f32 %v7727, %v7815
    %v7817 = vpop.f32.mrf.mxu0
    %v7818 = vadd.f32 %v7729, %v7817
    %7819 = vmatmul.bf16.gmra.mxu0 %v3427
    %v7820 = vpop.f32.mrf.mxu0
    %v7821 = vadd.f32 %v7732, %v7820
    %v7822 = vpop.f32.mrf.mxu0
    %v7823 = vadd.f32 %v7734, %v7822
    %7824 = vmatmul.bf16.gmra.mxu0 %v3435
    %v7825 = vpop.f32.mrf.mxu0
    %v7826 = vadd.f32 %v7737, %v7825
    %v7827 = vpop.f32.mrf.mxu0
    %v7828 = vadd.f32 %v7739, %v7827
    %7829 = vdwg.mxu0
    %vm7830 = vcmp.gt.f32.partialorder %v5615, 0.0
    %vm7831 = vcmp.gt.f32.partialorder %v6327, 0.0
    %vm7832 = vcmp.gt.f32.partialorder %v7039, 0.0
    %vm7833 = vcmp.gt.f32.partialorder %v7751, 0.0
    %vm7834 = vcmp.gt.f32.partialorder %v5617, 0.0
    %vm7835 = vcmp.gt.f32.partialorder %v6329, 0.0
    %vm7836 = vcmp.gt.f32.partialorder %v7041, 0.0
    %vm7837 = vcmp.gt.f32.partialorder %v7753, 0.0
    %vm7838 = vcmp.gt.f32.partialorder %v5620, 0.0
    %vm7839 = vcmp.gt.f32.partialorder %v6332, 0.0
    %vm7840 = vcmp.gt.f32.partialorder %v7044, 0.0
    %vm7841 = vcmp.gt.f32.partialorder %v7756, 0.0
    %vm7842 = vcmp.gt.f32.partialorder %v5622, 0.0
    %vm7843 = vcmp.gt.f32.partialorder %v6334, 0.0
    %vm7844 = vcmp.gt.f32.partialorder %v7046, 0.0
    %vm7845 = vcmp.gt.f32.partialorder %v7758, 0.0
    %vm7846 = vcmp.gt.f32.partialorder %v5625, 0.0
    %vm7847 = vcmp.gt.f32.partialorder %v6337, 0.0
    %vm7848 = vcmp.gt.f32.partialorder %v7049, 0.0
    %vm7849 = vcmp.gt.f32.partialorder %v7761, 0.0
    %vm7850 = vcmp.gt.f32.partialorder %v5627, 0.0
    %vm7851 = vcmp.gt.f32.partialorder %v6339, 0.0
    %vm7852 = vcmp.gt.f32.partialorder %v7051, 0.0
    %vm7853 = vcmp.gt.f32.partialorder %v7763, 0.0
    %vm7854 = vcmp.gt.f32.partialorder %v5630, 0.0
    %vm7855 = vcmp.gt.f32.partialorder %v6342, 0.0
    %vm7856 = vcmp.gt.f32.partialorder %v7054, 0.0
    %vm7857 = vcmp.gt.f32.partialorder %v7766, 0.0
    %vm7858 = vcmp.gt.f32.partialorder %v5632, 0.0
    %vm7859 = vcmp.gt.f32.partialorder %v6344, 0.0
    %vm7860 = vcmp.gt.f32.partialorder %v7056, 0.0
    %vm7861 = vcmp.gt.f32.partialorder %v7768, 0.0
    %vm7862 = vcmp.gt.f32.partialorder %v5635, 0.0
    %vm7863 = vcmp.gt.f32.partialorder %v6347, 0.0
    %vm7864 = vcmp.gt.f32.partialorder %v7059, 0.0
    %vm7865 = vcmp.gt.f32.partialorder %v7771, 0.0
    %vm7866 = vcmp.gt.f32.partialorder %v5637, 0.0
    %vm7867 = vcmp.gt.f32.partialorder %v6349, 0.0
    %vm7868 = vcmp.gt.f32.partialorder %v7061, 0.0
    %vm7869 = vcmp.gt.f32.partialorder %v7773, 0.0
    %vm7870 = vcmp.gt.f32.partialorder %v5640, 0.0
    %vm7871 = vcmp.gt.f32.partialorder %v6352, 0.0
    %vm7872 = vcmp.gt.f32.partialorder %v7064, 0.0
    %vm7873 = vcmp.gt.f32.partialorder %v7776, 0.0
    %vm7874 = vcmp.gt.f32.partialorder %v5642, 0.0
    %vm7875 = vcmp.gt.f32.partialorder %v6354, 0.0
    %vm7876 = vcmp.gt.f32.partialorder %v7066, 0.0
    %vm7877 = vcmp.gt.f32.partialorder %v7778, 0.0
    %vm7878 = vcmp.gt.f32.partialorder %v5645, 0.0
    %vm7879 = vcmp.gt.f32.partialorder %v6357, 0.0
    %vm7880 = vcmp.gt.f32.partialorder %v7069, 0.0
    %vm7881 = vcmp.gt.f32.partialorder %v7781, 0.0
    %vm7882 = vcmp.gt.f32.partialorder %v5647, 0.0
    %vm7883 = vcmp.gt.f32.partialorder %v6359, 0.0
    %vm7884 = vcmp.gt.f32.partialorder %v7071, 0.0
    %vm7885 = vcmp.gt.f32.partialorder %v7783, 0.0
    %vm7886 = vcmp.gt.f32.partialorder %v5650, 0.0
    %vm7887 = vcmp.gt.f32.partialorder %v6362, 0.0
    %vm7888 = vcmp.gt.f32.partialorder %v7074, 0.0
    %vm7889 = vcmp.gt.f32.partialorder %v7786, 0.0
    %vm7890 = vcmp.gt.f32.partialorder %v5652, 0.0
    %vm7891 = vcmp.gt.f32.partialorder %v6364, 0.0
    %vm7892 = vcmp.gt.f32.partialorder %v7076, 0.0
    %vm7893 = vcmp.gt.f32.partialorder %v7788, 0.0
    %vm7894 = vcmp.gt.f32.partialorder %v5655, 0.0
    %vm7895 = vcmp.gt.f32.partialorder %v6367, 0.0
    %vm7896 = vcmp.gt.f32.partialorder %v7079, 0.0
    %vm7897 = vcmp.gt.f32.partialorder %v7791, 0.0
    %vm7898 = vcmp.gt.f32.partialorder %v5657, 0.0
    %vm7899 = vcmp.gt.f32.partialorder %v6369, 0.0
    %vm7900 = vcmp.gt.f32.partialorder %v7081, 0.0
    %vm7901 = vcmp.gt.f32.partialorder %v7793, 0.0
    %vm7902 = vcmp.gt.f32.partialorder %v5660, 0.0
    %vm7903 = vcmp.gt.f32.partialorder %v6372, 0.0
    %vm7904 = vcmp.gt.f32.partialorder %v7084, 0.0
    %vm7905 = vcmp.gt.f32.partialorder %v7796, 0.0
    %vm7906 = vcmp.gt.f32.partialorder %v5662, 0.0
    %vm7907 = vcmp.gt.f32.partialorder %v6374, 0.0
    %vm7908 = vcmp.gt.f32.partialorder %v7086, 0.0
    %vm7909 = vcmp.gt.f32.partialorder %v7798, 0.0
    %vm7910 = vcmp.gt.f32.partialorder %v5665, 0.0
    %vm7911 = vcmp.gt.f32.partialorder %v6377, 0.0
    %vm7912 = vcmp.gt.f32.partialorder %v7089, 0.0
    %vm7913 = vcmp.gt.f32.partialorder %v7801, 0.0
    %vm7914 = vcmp.gt.f32.partialorder %v5667, 0.0
    %vm7915 = vcmp.gt.f32.partialorder %v6379, 0.0
    %vm7916 = vcmp.gt.f32.partialorder %v7091, 0.0
    %vm7917 = vcmp.gt.f32.partialorder %v7803, 0.0
    %vm7918 = vcmp.gt.f32.partialorder %v5670, 0.0
    %vm7919 = vcmp.gt.f32.partialorder %v6382, 0.0
    %vm7920 = vcmp.gt.f32.partialorder %v7094, 0.0
    %vm7921 = vcmp.gt.f32.partialorder %v7806, 0.0
    %vm7922 = vcmp.gt.f32.partialorder %v5672, 0.0
    %vm7923 = vcmp.gt.f32.partialorder %v6384, 0.0
    %vm7924 = vcmp.gt.f32.partialorder %v7096, 0.0
    %vm7925 = vcmp.gt.f32.partialorder %v7808, 0.0
    %vm7926 = vcmp.gt.f32.partialorder %v5675, 0.0
    %vm7927 = vcmp.gt.f32.partialorder %v6387, 0.0
    %vm7928 = vcmp.gt.f32.partialorder %v7099, 0.0
    %vm7929 = vcmp.gt.f32.partialorder %v7811, 0.0
    %vm7930 = vcmp.gt.f32.partialorder %v5677, 0.0
    %vm7931 = vcmp.gt.f32.partialorder %v6389, 0.0
    %vm7932 = vcmp.gt.f32.partialorder %v7101, 0.0
    %vm7933 = vcmp.gt.f32.partialorder %v7813, 0.0
    %vm7934 = vcmp.gt.f32.partialorder %v5680, 0.0
    %vm7935 = vcmp.gt.f32.partialorder %v6392, 0.0
    %vm7936 = vcmp.gt.f32.partialorder %v7104, 0.0
    %vm7937 = vcmp.gt.f32.partialorder %v7816, 0.0
    %vm7938 = vcmp.gt.f32.partialorder %v5682, 0.0
    %vm7939 = vcmp.gt.f32.partialorder %v6394, 0.0
    %vm7940 = vcmp.gt.f32.partialorder %v7106, 0.0
    %vm7941 = vcmp.gt.f32.partialorder %v7818, 0.0
    %vm7942 = vcmp.gt.f32.partialorder %v5685, 0.0
    %vm7943 = vcmp.gt.f32.partialorder %v6397, 0.0
    %vm7944 = vcmp.gt.f32.partialorder %v7109, 0.0
    %vm7945 = vcmp.gt.f32.partialorder %v7821, 0.0
    %vm7946 = vcmp.gt.f32.partialorder %v5687, 0.0
    %vm7947 = vcmp.gt.f32.partialorder %v6399, 0.0
    %vm7948 = vcmp.gt.f32.partialorder %v7111, 0.0
    %vm7949 = vcmp.gt.f32.partialorder %v7823, 0.0
    %vm7950 = vcmp.gt.f32.partialorder %v5690, 0.0
    %vm7951 = vcmp.gt.f32.partialorder %v6402, 0.0
    %vm7952 = vcmp.gt.f32.partialorder %v7114, 0.0
    %vm7953 = vcmp.gt.f32.partialorder %v7826, 0.0
    %vm7954 = vcmp.gt.f32.partialorder %v5692, 0.0
    %vm7955 = vcmp.gt.f32.partialorder %v6404, 0.0
    %vm7956 = vcmp.gt.f32.partialorder %v7116, 0.0
    %vm7957 = vcmp.gt.f32.partialorder %v7828, 0.0
    %v7958 = vmul.f32 %v5615, 0.2
    %v7959 = vmul.f32 %v6327, 0.2
    %v7960 = vmul.f32 %v7039, 0.2
    %v7961 = vmul.f32 %v7751, 0.2
    %v7962 = vmul.f32 %v5617, 0.2
    %v7963 = vmul.f32 %v6329, 0.2
    %v7964 = vmul.f32 %v7041, 0.2
    %v7965 = vmul.f32 %v7753, 0.2
    %v7966 = vmul.f32 %v5620, 0.2
    %v7967 = vmul.f32 %v6332, 0.2
    %v7968 = vmul.f32 %v7044, 0.2
    %v7969 = vmul.f32 %v7756, 0.2
    %v7970 = vmul.f32 %v5622, 0.2
    %v7971 = vmul.f32 %v6334, 0.2
    %v7972 = vmul.f32 %v7046, 0.2
    %v7973 = vmul.f32 %v7758, 0.2
    %v7974 = vmul.f32 %v5625, 0.2
    %v7975 = vmul.f32 %v6337, 0.2
    %v7976 = vmul.f32 %v7049, 0.2
    %v7977 = vmul.f32 %v7761, 0.2
    %v7978 = vmul.f32 %v5627, 0.2
    %v7979 = vmul.f32 %v6339, 0.2
    %v7980 = vmul.f32 %v7051, 0.2
    %v7981 = vmul.f32 %v7763, 0.2
    %v7982 = vmul.f32 %v5630, 0.2
    %v7983 = vmul.f32 %v6342, 0.2
    %v7984 = vmul.f32 %v7054, 0.2
    %v7985 = vmul.f32 %v7766, 0.2
    %v7986 = vmul.f32 %v5632, 0.2
    %v7987 = vmul.f32 %v6344, 0.2
    %v7988 = vmul.f32 %v7056, 0.2
    %v7989 = vmul.f32 %v7768, 0.2
    %v7990 = vmul.f32 %v5635, 0.2
    %v7991 = vmul.f32 %v6347, 0.2
    %v7992 = vmul.f32 %v7059, 0.2
    %v7993 = vmul.f32 %v7771, 0.2
    %v7994 = vmul.f32 %v5637, 0.2
    %v7995 = vmul.f32 %v6349, 0.2
    %v7996 = vmul.f32 %v7061, 0.2
    %v7997 = vmul.f32 %v7773, 0.2
    %v7998 = vmul.f32 %v5640, 0.2
    %v7999 = vmul.f32 %v6352, 0.2
    %v8000 = vmul.f32 %v7064, 0.2
    %v8001 = vmul.f32 %v7776, 0.2
    %v8002 = vmul.f32 %v5642, 0.2
    %v8003 = vmul.f32 %v6354, 0.2
    %v8004 = vmul.f32 %v7066, 0.2
    %v8005 = vmul.f32 %v7778, 0.2
    %v8006 = vmul.f32 %v5645, 0.2
    %v8007 = vmul.f32 %v6357, 0.2
    %v8008 = vmul.f32 %v7069, 0.2
    %v8009 = vmul.f32 %v7781, 0.2
    %v8010 = vmul.f32 %v5647, 0.2
    %v8011 = vmul.f32 %v6359, 0.2
    %v8012 = vmul.f32 %v7071, 0.2
    %v8013 = vmul.f32 %v7783, 0.2
    %v8014 = vmul.f32 %v5650, 0.2
    %v8015 = vmul.f32 %v6362, 0.2
    %v8016 = vmul.f32 %v7074, 0.2
    %v8017 = vmul.f32 %v7786, 0.2
    %v8018 = vmul.f32 %v5652, 0.2
    %v8019 = vmul.f32 %v6364, 0.2
    %v8020 = vmul.f32 %v7076, 0.2
    %v8021 = vmul.f32 %v7788, 0.2
    %v8022 = vmul.f32 %v5655, 0.2
    %v8023 = vmul.f32 %v6367, 0.2
    %v8024 = vmul.f32 %v7079, 0.2
    %v8025 = vmul.f32 %v7791, 0.2
    %v8026 = vmul.f32 %v5657, 0.2
    %v8027 = vmul.f32 %v6369, 0.2
    %v8028 = vmul.f32 %v7081, 0.2
    %v8029 = vmul.f32 %v7793, 0.2
    %v8030 = vmul.f32 %v5660, 0.2
    %v8031 = vmul.f32 %v6372, 0.2
    %v8032 = vmul.f32 %v7084, 0.2
    %v8033 = vmul.f32 %v7796, 0.2
    %v8034 = vmul.f32 %v5662, 0.2
    %v8035 = vmul.f32 %v6374, 0.2
    %v8036 = vmul.f32 %v7086, 0.2
    %v8037 = vmul.f32 %v7798, 0.2
    %v8038 = vmul.f32 %v5665, 0.2
    %v8039 = vmul.f32 %v6377, 0.2
    %v8040 = vmul.f32 %v7089, 0.2
    %v8041 = vmul.f32 %v7801, 0.2
    %v8042 = vmul.f32 %v5667, 0.2
    %v8043 = vmul.f32 %v6379, 0.2
    %v8044 = vmul.f32 %v7091, 0.2
    %v8045 = vmul.f32 %v7803, 0.2
    %v8046 = vmul.f32 %v5670, 0.2
    %v8047 = vmul.f32 %v6382, 0.2
    %v8048 = vmul.f32 %v7094, 0.2
    %v8049 = vmul.f32 %v7806, 0.2
    %v8050 = vmul.f32 %v5672, 0.2
    %v8051 = vmul.f32 %v6384, 0.2
    %v8052 = vmul.f32 %v7096, 0.2
    %v8053 = vmul.f32 %v7808, 0.2
    %v8054 = vmul.f32 %v5675, 0.2
    %v8055 = vmul.f32 %v6387, 0.2
    %v8056 = vmul.f32 %v7099, 0.2
    %v8057 = vmul.f32 %v7811, 0.2
    %v8058 = vmul.f32 %v5677, 0.2
    %v8059 = vmul.f32 %v6389, 0.2
    %v8060 = vmul.f32 %v7101, 0.2
    %v8061 = vmul.f32 %v7813, 0.2
    %v8062 = vmul.f32 %v5680, 0.2
    %v8063 = vmul.f32 %v6392, 0.2
    %v8064 = vmul.f32 %v7104, 0.2
    %v8065 = vmul.f32 %v7816, 0.2
    %v8066 = vmul.f32 %v5682, 0.2
    %v8067 = vmul.f32 %v6394, 0.2
    %v8068 = vmul.f32 %v7106, 0.2
    %v8069 = vmul.f32 %v7818, 0.2
    %v8070 = vmul.f32 %v5685, 0.2
    %v8071 = vmul.f32 %v6397, 0.2
    %v8072 = vmul.f32 %v7109, 0.2
    %v8073 = vmul.f32 %v7821, 0.2
    %v8074 = vmul.f32 %v5687, 0.2
    %v8075 = vmul.f32 %v6399, 0.2
    %v8076 = vmul.f32 %v7111, 0.2
    %v8077 = vmul.f32 %v7823, 0.2
    %v8078 = vmul.f32 %v5690, 0.2
    %v8079 = vmul.f32 %v6402, 0.2
    %v8080 = vmul.f32 %v7114, 0.2
    %v8081 = vmul.f32 %v7826, 0.2
    %v8082 = vmul.f32 %v5692, 0.2
    %v8083 = vmul.f32 %v6404, 0.2
    %v8084 = vmul.f32 %v7116, 0.2
    %v8085 = vmul.f32 %v7828, 0.2
    %v8086 = vsel %vm7830, %v5615, %v7958
    %v8087 = vsel %vm7831, %v6327, %v7959
    %v8088 = vsel %vm7832, %v7039, %v7960
    %v8089 = vsel %vm7833, %v7751, %v7961
    %v8090 = vsel %vm7834, %v5617, %v7962
    %v8091 = vsel %vm7835, %v6329, %v7963
    %v8092 = vsel %vm7836, %v7041, %v7964
    %v8093 = vsel %vm7837, %v7753, %v7965
    %v8094 = vsel %vm7838, %v5620, %v7966
    %v8095 = vsel %vm7839, %v6332, %v7967
    %v8096 = vsel %vm7840, %v7044, %v7968
    %v8097 = vsel %vm7841, %v7756, %v7969
    %v8098 = vsel %vm7842, %v5622, %v7970
    %v8099 = vsel %vm7843, %v6334, %v7971
    %v8100 = vsel %vm7844, %v7046, %v7972
    %v8101 = vsel %vm7845, %v7758, %v7973
    %v8102 = vsel %vm7846, %v5625, %v7974
    %v8103 = vsel %vm7847, %v6337, %v7975
    %v8104 = vsel %vm7848, %v7049, %v7976
    %v8105 = vsel %vm7849, %v7761, %v7977
    %v8106 = vsel %vm7850, %v5627, %v7978
    %v8107 = vsel %vm7851, %v6339, %v7979
    %v8108 = vsel %vm7852, %v7051, %v7980
    %v8109 = vsel %vm7853, %v7763, %v7981
    %v8110 = vsel %vm7854, %v5630, %v7982
    %v8111 = vsel %vm7855, %v6342, %v7983
    %v8112 = vsel %vm7856, %v7054, %v7984
    %v8113 = vsel %vm7857, %v7766, %v7985
    %v8114 = vsel %vm7858, %v5632, %v7986
    %v8115 = vsel %vm7859, %v6344, %v7987
    %v8116 = vsel %vm7860, %v7056, %v7988
    %v8117 = vsel %vm7861, %v7768, %v7989
    %v8118 = vsel %vm7862, %v5635, %v7990
    %v8119 = vsel %vm7863, %v6347, %v7991
    %v8120 = vsel %vm7864, %v7059, %v7992
    %v8121 = vsel %vm7865, %v7771, %v7993
    %v8122 = vsel %vm7866, %v5637, %v7994
    %v8123 = vsel %vm7867, %v6349, %v7995
    %v8124 = vsel %vm7868, %v7061, %v7996
    %v8125 = vsel %vm7869, %v7773, %v7997
    %v8126 = vsel %vm7870, %v5640, %v7998
    %v8127 = vsel %vm7871, %v6352, %v7999
    %v8128 = vsel %vm7872, %v7064, %v8000
    %v8129 = vsel %vm7873, %v7776, %v8001
    %v8130 = vsel %vm7874, %v5642, %v8002
    %v8131 = vsel %vm7875, %v6354, %v8003
    %v8132 = vsel %vm7876, %v7066, %v8004
    %v8133 = vsel %vm7877, %v7778, %v8005
    %v8134 = vsel %vm7878, %v5645, %v8006
    %v8135 = vsel %vm7879, %v6357, %v8007
    %v8136 = vsel %vm7880, %v7069, %v8008
    %v8137 = vsel %vm7881, %v7781, %v8009
    %v8138 = vsel %vm7882, %v5647, %v8010
    %v8139 = vsel %vm7883, %v6359, %v8011
    %v8140 = vsel %vm7884, %v7071, %v8012
    %v8141 = vsel %vm7885, %v7783, %v8013
    %v8142 = vsel %vm7886, %v5650, %v8014
    %v8143 = vsel %vm7887, %v6362, %v8015
    %v8144 = vsel %vm7888, %v7074, %v8016
    %v8145 = vsel %vm7889, %v7786, %v8017
    %v8146 = vsel %vm7890, %v5652, %v8018
    %v8147 = vsel %vm7891, %v6364, %v8019
    %v8148 = vsel %vm7892, %v7076, %v8020
    %v8149 = vsel %vm7893, %v7788, %v8021
    %v8150 = vsel %vm7894, %v5655, %v8022
    %v8151 = vsel %vm7895, %v6367, %v8023
    %v8152 = vsel %vm7896, %v7079, %v8024
    %v8153 = vsel %vm7897, %v7791, %v8025
    %v8154 = vsel %vm7898, %v5657, %v8026
    %v8155 = vsel %vm7899, %v6369, %v8027
    %v8156 = vsel %vm7900, %v7081, %v8028
    %v8157 = vsel %vm7901, %v7793, %v8029
    %v8158 = vsel %vm7902, %v5660, %v8030
    %v8159 = vsel %vm7903, %v6372, %v8031
    %v8160 = vsel %vm7904, %v7084, %v8032
    %v8161 = vsel %vm7905, %v7796, %v8033
    %v8162 = vsel %vm7906, %v5662, %v8034
    %v8163 = vsel %vm7907, %v6374, %v8035
    %v8164 = vsel %vm7908, %v7086, %v8036
    %v8165 = vsel %vm7909, %v7798, %v8037
    %v8166 = vsel %vm7910, %v5665, %v8038
    %v8167 = vsel %vm7911, %v6377, %v8039
    %v8168 = vsel %vm7912, %v7089, %v8040
    %v8169 = vsel %vm7913, %v7801, %v8041
    %v8170 = vsel %vm7914, %v5667, %v8042
    %v8171 = vsel %vm7915, %v6379, %v8043
    %v8172 = vsel %vm7916, %v7091, %v8044
    %v8173 = vsel %vm7917, %v7803, %v8045
    %v8174 = vsel %vm7918, %v5670, %v8046
    %v8175 = vsel %vm7919, %v6382, %v8047
    %v8176 = vsel %vm7920, %v7094, %v8048
    %v8177 = vsel %vm7921, %v7806, %v8049
    %v8178 = vsel %vm7922, %v5672, %v8050
    %v8179 = vsel %vm7923, %v6384, %v8051
    %v8180 = vsel %vm7924, %v7096, %v8052
    %v8181 = vsel %vm7925, %v7808, %v8053
    %v8182 = vsel %vm7926, %v5675, %v8054
    %v8183 = vsel %vm7927, %v6387, %v8055
    %v8184 = vsel %vm7928, %v7099, %v8056
    %v8185 = vsel %vm7929, %v7811, %v8057
    %v8186 = vsel %vm7930, %v5677, %v8058
    %v8187 = vsel %vm7931, %v6389, %v8059
    %v8188 = vsel %vm7932, %v7101, %v8060
    %v8189 = vsel %vm7933, %v7813, %v8061
    %v8190 = vsel %vm7934, %v5680, %v8062
    %v8191 = vsel %vm7935, %v6392, %v8063
    %v8192 = vsel %vm7936, %v7104, %v8064
    %v8193 = vsel %vm7937, %v7816, %v8065
    %v8194 = vsel %vm7938, %v5682, %v8066
    %v8195 = vsel %vm7939, %v6394, %v8067
    %v8196 = vsel %vm7940, %v7106, %v8068
    %v8197 = vsel %vm7941, %v7818, %v8069
    %v8198 = vsel %vm7942, %v5685, %v8070
    %v8199 = vsel %vm7943, %v6397, %v8071
    %v8200 = vsel %vm7944, %v7109, %v8072
    %v8201 = vsel %vm7945, %v7821, %v8073
    %v8202 = vsel %vm7946, %v5687, %v8074
    %v8203 = vsel %vm7947, %v6399, %v8075
    %v8204 = vsel %vm7948, %v7111, %v8076
    %v8205 = vsel %vm7949, %v7823, %v8077
    %v8206 = vsel %vm7950, %v5690, %v8078
    %v8207 = vsel %vm7951, %v6402, %v8079
    %v8208 = vsel %vm7952, %v7114, %v8080
    %v8209 = vsel %vm7953, %v7826, %v8081
    %v8210 = vsel %vm7954, %v5692, %v8082
    %v8211 = vsel %vm7955, %v6404, %v8083
    %v8212 = vsel %vm7956, %v7116, %v8084
    %v8213 = vsel %vm7957, %v7828, %v8085
    %v8214 = vpack.c.bf16 %v8090, %v8086
    %v8215 = vpack.c.bf16 %v8091, %v8087
    %v8216 = vpack.c.bf16 %v8092, %v8088
    %v8217 = vpack.c.bf16 %v8093, %v8089
    %v8218 = vpack.c.bf16 %v8098, %v8094
    %v8219 = vpack.c.bf16 %v8099, %v8095
    %v8220 = vpack.c.bf16 %v8100, %v8096
    %v8221 = vpack.c.bf16 %v8101, %v8097
    %v8222 = vpack.c.bf16 %v8106, %v8102
    %v8223 = vpack.c.bf16 %v8107, %v8103
    %v8224 = vpack.c.bf16 %v8108, %v8104
    %v8225 = vpack.c.bf16 %v8109, %v8105
    %v8226 = vpack.c.bf16 %v8114, %v8110
    %v8227 = vpack.c.bf16 %v8115, %v8111
    %v8228 = vpack.c.bf16 %v8116, %v8112
    %v8229 = vpack.c.bf16 %v8117, %v8113
    %v8230 = vpack.c.bf16 %v8122, %v8118
    %v8231 = vpack.c.bf16 %v8123, %v8119
    %v8232 = vpack.c.bf16 %v8124, %v8120
    %v8233 = vpack.c.bf16 %v8125, %v8121
    %v8234 = vpack.c.bf16 %v8130, %v8126
    %v8235 = vpack.c.bf16 %v8131, %v8127
    %v8236 = vpack.c.bf16 %v8132, %v8128
    %v8237 = vpack.c.bf16 %v8133, %v8129
    %v8238 = vpack.c.bf16 %v8138, %v8134
    %v8239 = vpack.c.bf16 %v8139, %v8135
    %v8240 = vpack.c.bf16 %v8140, %v8136
    %v8241 = vpack.c.bf16 %v8141, %v8137
    %v8242 = vpack.c.bf16 %v8146, %v8142
    %v8243 = vpack.c.bf16 %v8147, %v8143
    %v8244 = vpack.c.bf16 %v8148, %v8144
    %v8245 = vpack.c.bf16 %v8149, %v8145
    %v8246 = vpack.c.bf16 %v8154, %v8150
    %v8247 = vpack.c.bf16 %v8155, %v8151
    %v8248 = vpack.c.bf16 %v8156, %v8152
    %v8249 = vpack.c.bf16 %v8157, %v8153
    %v8250 = vpack.c.bf16 %v8162, %v8158
    %v8251 = vpack.c.bf16 %v8163, %v8159
    %v8252 = vpack.c.bf16 %v8164, %v8160
    %v8253 = vpack.c.bf16 %v8165, %v8161
    %v8254 = vpack.c.bf16 %v8170, %v8166
    %v8255 = vpack.c.bf16 %v8171, %v8167
    %v8256 = vpack.c.bf16 %v8172, %v8168
    %v8257 = vpack.c.bf16 %v8173, %v8169
    %v8258 = vpack.c.bf16 %v8178, %v8174
    %v8259 = vpack.c.bf16 %v8179, %v8175
    %v8260 = vpack.c.bf16 %v8180, %v8176
    %v8261 = vpack.c.bf16 %v8181, %v8177
    %v8262 = vpack.c.bf16 %v8186, %v8182
    %v8263 = vpack.c.bf16 %v8187, %v8183
    %v8264 = vpack.c.bf16 %v8188, %v8184
    %v8265 = vpack.c.bf16 %v8189, %v8185
    %v8266 = vpack.c.bf16 %v8194, %v8190
    %v8267 = vpack.c.bf16 %v8195, %v8191
    %v8268 = vpack.c.bf16 %v8196, %v8192
    %v8269 = vpack.c.bf16 %v8197, %v8193
    %v8270 = vpack.c.bf16 %v8202, %v8198
    %v8271 = vpack.c.bf16 %v8203, %v8199
    %v8272 = vpack.c.bf16 %v8204, %v8200
    %v8273 = vpack.c.bf16 %v8205, %v8201
    %v8274 = vpack.c.bf16 %v8210, %v8206
    %v8275 = vpack.c.bf16 %v8211, %v8207
    %v8276 = vpack.c.bf16 %v8212, %v8208
    %v8277 = vpack.c.bf16 %v8213, %v8209
    %v8278 = vld [vmem:[#allocation11] sm:$0xff]
    %v8279 = vld [vmem:[#allocation11 + $0x8] sm:$0xff]
    %v8280 = vld [vmem:[#allocation11 + $0x10] sm:$0xff]
    %v8281 = vld [vmem:[#allocation11 + $0x18] sm:$0xff]
    %v8282 = vld [vmem:[#allocation11 + $0x20] sm:$0xff]
    %v8283 = vld [vmem:[#allocation11 + $0x28] sm:$0xff]
    %v8284 = vld [vmem:[#allocation11 + $0x30] sm:$0xff]
    %v8285 = vld [vmem:[#allocation11 + $0x38] sm:$0xff]
    %v8286 = vld [vmem:[#allocation11 + $0x40] sm:$0xff]
    %v8287 = vld [vmem:[#allocation11 + $0x48] sm:$0xff]
    %v8288 = vld [vmem:[#allocation11 + $0x50] sm:$0xff]
    %v8289 = vld [vmem:[#allocation11 + $0x58] sm:$0xff]
    %v8290 = vld [vmem:[#allocation11 + $0x60] sm:$0xff]
    %v8291 = vld [vmem:[#allocation11 + $0x68] sm:$0xff]
    %v8292 = vld [vmem:[#allocation11 + $0x70] sm:$0xff]
    %v8293 = vld [vmem:[#allocation11 + $0x78] sm:$0xff]
    %v8294 = vld [vmem:[#allocation11 + $0x80] sm:$0xff]
    %v8295 = vld [vmem:[#allocation11 + $0x88] sm:$0xff]
    %v8296 = vld [vmem:[#allocation11 + $0x90] sm:$0xff]
    %v8297 = vld [vmem:[#allocation11 + $0x98] sm:$0xff]
    %v8298 = vld [vmem:[#allocation11 + $0xa0] sm:$0xff]
    %v8299 = vld [vmem:[#allocation11 + $0xa8] sm:$0xff]
    %v8300 = vld [vmem:[#allocation11 + $0xb0] sm:$0xff]
    %v8301 = vld [vmem:[#allocation11 + $0xb8] sm:$0xff]
    %v8302 = vld [vmem:[#allocation11 + $0xc0] sm:$0xff]
    %v8303 = vld [vmem:[#allocation11 + $0xc8] sm:$0xff]
    %v8304 = vld [vmem:[#allocation11 + $0xd0] sm:$0xff]
    %v8305 = vld [vmem:[#allocation11 + $0xd8] sm:$0xff]
    %v8306 = vld [vmem:[#allocation11 + $0xe0] sm:$0xff]
    %v8307 = vld [vmem:[#allocation11 + $0xe8] sm:$0xff]
    %v8308 = vld [vmem:[#allocation11 + $0xf0] sm:$0xff]
    %v8309 = vld [vmem:[#allocation11 + $0xf8] sm:$0xff]
    %v8310 = vld [vmem:[#allocation11 + $0x100] sm:$0xff]
    %v8311 = vld [vmem:[#allocation11 + $0x108] sm:$0xff]
    %v8312 = vld [vmem:[#allocation11 + $0x110] sm:$0xff]
    %v8313 = vld [vmem:[#allocation11 + $0x118] sm:$0xff]
    %v8314 = vld [vmem:[#allocation11 + $0x120] sm:$0xff]
    %v8315 = vld [vmem:[#allocation11 + $0x128] sm:$0xff]
    %v8316 = vld [vmem:[#allocation11 + $0x130] sm:$0xff]
    %v8317 = vld [vmem:[#allocation11 + $0x138] sm:$0xff]
    %v8318 = vld [vmem:[#allocation11 + $0x140] sm:$0xff]
    %v8319 = vld [vmem:[#allocation11 + $0x148] sm:$0xff]
    %v8320 = vld [vmem:[#allocation11 + $0x150] sm:$0xff]
    %v8321 = vld [vmem:[#allocation11 + $0x158] sm:$0xff]
    %v8322 = vld [vmem:[#allocation11 + $0x160] sm:$0xff]
    %v8323 = vld [vmem:[#allocation11 + $0x168] sm:$0xff]
    %v8324 = vld [vmem:[#allocation11 + $0x170] sm:$0xff]
    %v8325 = vld [vmem:[#allocation11 + $0x178] sm:$0xff]
    %v8326 = vld [vmem:[#allocation11 + $0x180] sm:$0xff]
    %v8327 = vld [vmem:[#allocation11 + $0x188] sm:$0xff]
    %v8328 = vld [vmem:[#allocation11 + $0x190] sm:$0xff]
    %v8329 = vld [vmem:[#allocation11 + $0x198] sm:$0xff]
    %v8330 = vld [vmem:[#allocation11 + $0x1a0] sm:$0xff]
    %v8331 = vld [vmem:[#allocation11 + $0x1a8] sm:$0xff]
    %v8332 = vld [vmem:[#allocation11 + $0x1b0] sm:$0xff]
    %v8333 = vld [vmem:[#allocation11 + $0x1b8] sm:$0xff]
    %v8334 = vld [vmem:[#allocation11 + $0x1c0] sm:$0xff]
    %v8335 = vld [vmem:[#allocation11 + $0x1c8] sm:$0xff]
    %v8336 = vld [vmem:[#allocation11 + $0x1d0] sm:$0xff]
    %v8337 = vld [vmem:[#allocation11 + $0x1d8] sm:$0xff]
    %v8338 = vld [vmem:[#allocation11 + $0x1e0] sm:$0xff]
    %v8339 = vld [vmem:[#allocation11 + $0x1e8] sm:$0xff]
    %v8340 = vld [vmem:[#allocation11 + $0x1f0] sm:$0xff]
    %v8341 = vld [vmem:[#allocation11 + $0x1f8] sm:$0xff]
    %v8342 = vld [vmem:[%s6] sm:$0x3]
    %v8344 = vperm.slane %v8342, 0
    %v8345 = vperm.slane %v8342, 1
    %v8412 = vunpack.c.l.b16 %v8278
    %v8413 = vunpack.c.h.b16 %v8278
    %v8414 = vunpack.c.l.b16 %v8279
    %v8415 = vunpack.c.h.b16 %v8279
    %v8416 = vunpack.c.l.b16 %v8280
    %v8417 = vunpack.c.h.b16 %v8280
    %v8418 = vunpack.c.l.b16 %v8281
    %v8419 = vunpack.c.h.b16 %v8281
    %v8420 = vunpack.c.l.b16 %v8282
    %v8421 = vunpack.c.h.b16 %v8282
    %v8422 = vunpack.c.l.b16 %v8283
    %v8423 = vunpack.c.h.b16 %v8283
    %v8424 = vunpack.c.l.b16 %v8284
    %v8425 = vunpack.c.h.b16 %v8284
    %v8426 = vunpack.c.l.b16 %v8285
    %v8427 = vunpack.c.h.b16 %v8285
    %v8428 = vunpack.c.l.b16 %v8286
    %v8429 = vunpack.c.h.b16 %v8286
    %v8430 = vunpack.c.l.b16 %v8287
    %v8431 = vunpack.c.h.b16 %v8287
    %v8432 = vunpack.c.l.b16 %v8288
    %v8433 = vunpack.c.h.b16 %v8288
    %v8434 = vunpack.c.l.b16 %v8289
    %v8435 = vunpack.c.h.b16 %v8289
    %v8436 = vunpack.c.l.b16 %v8290
    %v8437 = vunpack.c.h.b16 %v8290
    %v8438 = vunpack.c.l.b16 %v8291
    %v8439 = vunpack.c.h.b16 %v8291
    %v8440 = vunpack.c.l.b16 %v8292
    %v8441 = vunpack.c.h.b16 %v8292
    %v8442 = vunpack.c.l.b16 %v8293
    %v8443 = vunpack.c.h.b16 %v8293
    %v8444 = vunpack.c.l.b16 %v8294
    %v8445 = vunpack.c.h.b16 %v8294
    %v8446 = vunpack.c.l.b16 %v8295
    %v8447 = vunpack.c.h.b16 %v8295
    %v8448 = vunpack.c.l.b16 %v8296
    %v8449 = vunpack.c.h.b16 %v8296
    %v8450 = vunpack.c.l.b16 %v8297
    %v8451 = vunpack.c.h.b16 %v8297
    %v8452 = vunpack.c.l.b16 %v8298
    %v8453 = vunpack.c.h.b16 %v8298
    %v8454 = vunpack.c.l.b16 %v8299
    %v8455 = vunpack.c.h.b16 %v8299
    %v8456 = vunpack.c.l.b16 %v8300
    %v8457 = vunpack.c.h.b16 %v8300
    %v8458 = vunpack.c.l.b16 %v8301
    %v8459 = vunpack.c.h.b16 %v8301
    %v8460 = vunpack.c.l.b16 %v8302
    %v8461 = vunpack.c.h.b16 %v8302
    %v8462 = vunpack.c.l.b16 %v8303
    %v8463 = vunpack.c.h.b16 %v8303
    %v8464 = vunpack.c.l.b16 %v8304
    %v8465 = vunpack.c.h.b16 %v8304
    %v8466 = vunpack.c.l.b16 %v8305
    %v8467 = vunpack.c.h.b16 %v8305
    %v8468 = vunpack.c.l.b16 %v8306
    %v8469 = vunpack.c.h.b16 %v8306
    %v8470 = vunpack.c.l.b16 %v8307
    %v8471 = vunpack.c.h.b16 %v8307
    %v8472 = vunpack.c.l.b16 %v8308
    %v8473 = vunpack.c.h.b16 %v8308
    %v8474 = vunpack.c.l.b16 %v8309
    %v8475 = vunpack.c.h.b16 %v8309
    %v8476 = vunpack.c.l.b16 %v8310
    %v8477 = vunpack.c.h.b16 %v8310
    %v8478 = vunpack.c.l.b16 %v8311
    %v8479 = vunpack.c.h.b16 %v8311
    %v8480 = vunpack.c.l.b16 %v8312
    %v8481 = vunpack.c.h.b16 %v8312
    %v8482 = vunpack.c.l.b16 %v8313
    %v8483 = vunpack.c.h.b16 %v8313
    %v8484 = vunpack.c.l.b16 %v8314
    %v8485 = vunpack.c.h.b16 %v8314
    %v8486 = vunpack.c.l.b16 %v8315
    %v8487 = vunpack.c.h.b16 %v8315
    %v8488 = vunpack.c.l.b16 %v8316
    %v8489 = vunpack.c.h.b16 %v8316
    %v8490 = vunpack.c.l.b16 %v8317
    %v8491 = vunpack.c.h.b16 %v8317
    %v8492 = vunpack.c.l.b16 %v8318
    %v8493 = vunpack.c.h.b16 %v8318
    %v8494 = vunpack.c.l.b16 %v8319
    %v8495 = vunpack.c.h.b16 %v8319
    %v8496 = vunpack.c.l.b16 %v8320
    %v8497 = vunpack.c.h.b16 %v8320
    %v8498 = vunpack.c.l.b16 %v8321
    %v8499 = vunpack.c.h.b16 %v8321
    %v8500 = vunpack.c.l.b16 %v8322
    %v8501 = vunpack.c.h.b16 %v8322
    %v8502 = vunpack.c.l.b16 %v8323
    %v8503 = vunpack.c.h.b16 %v8323
    %v8504 = vunpack.c.l.b16 %v8324
    %v8505 = vunpack.c.h.b16 %v8324
    %v8506 = vunpack.c.l.b16 %v8325
    %v8507 = vunpack.c.h.b16 %v8325
    %v8508 = vunpack.c.l.b16 %v8326
    %v8509 = vunpack.c.h.b16 %v8326
    %v8510 = vunpack.c.l.b16 %v8327
    %v8511 = vunpack.c.h.b16 %v8327
    %v8512 = vunpack.c.l.b16 %v8328
    %v8513 = vunpack.c.h.b16 %v8328
    %v8514 = vunpack.c.l.b16 %v8329
    %v8515 = vunpack.c.h.b16 %v8329
    %v8516 = vunpack.c.l.b16 %v8330
    %v8517 = vunpack.c.h.b16 %v8330
    %v8518 = vunpack.c.l.b16 %v8331
    %v8519 = vunpack.c.h.b16 %v8331
    %v8520 = vunpack.c.l.b16 %v8332
    %v8521 = vunpack.c.h.b16 %v8332
    %v8522 = vunpack.c.l.b16 %v8333
    %v8523 = vunpack.c.h.b16 %v8333
    %v8524 = vunpack.c.l.b16 %v8334
    %v8525 = vunpack.c.h.b16 %v8334
    %v8526 = vunpack.c.l.b16 %v8335
    %v8527 = vunpack.c.h.b16 %v8335
    %v8528 = vunpack.c.l.b16 %v8336
    %v8529 = vunpack.c.h.b16 %v8336
    %v8530 = vunpack.c.l.b16 %v8337
    %v8531 = vunpack.c.h.b16 %v8337
    %v8532 = vunpack.c.l.b16 %v8338
    %v8533 = vunpack.c.h.b16 %v8338
    %v8534 = vunpack.c.l.b16 %v8339
    %v8535 = vunpack.c.h.b16 %v8339
    %v8536 = vunpack.c.l.b16 %v8340
    %v8537 = vunpack.c.h.b16 %v8340
    %v8538 = vunpack.c.l.b16 %v8341
    %v8539 = vunpack.c.h.b16 %v8341
    %v8540 = vpack.c.b16 %v8414, %v8412
    %v8541 = vpack.c.b16 %v8415, %v8413
    %v8542 = vpack.c.b16 %v8418, %v8416
    %v8543 = vpack.c.b16 %v8419, %v8417
    %v8544 = vpack.c.b16 %v8422, %v8420
    %v8545 = vpack.c.b16 %v8423, %v8421
    %v8546 = vpack.c.b16 %v8426, %v8424
    %v8547 = vpack.c.b16 %v8427, %v8425
    %v8548 = vpack.c.b16 %v8430, %v8428
    %v8549 = vpack.c.b16 %v8431, %v8429
    %v8550 = vpack.c.b16 %v8434, %v8432
    %v8551 = vpack.c.b16 %v8435, %v8433
    %v8552 = vpack.c.b16 %v8438, %v8436
    %v8553 = vpack.c.b16 %v8439, %v8437
    %v8554 = vpack.c.b16 %v8442, %v8440
    %v8555 = vpack.c.b16 %v8443, %v8441
    %v8556 = vpack.c.b16 %v8446, %v8444
    %v8557 = vpack.c.b16 %v8447, %v8445
    %v8558 = vpack.c.b16 %v8450, %v8448
    %v8559 = vpack.c.b16 %v8451, %v8449
    %v8560 = vpack.c.b16 %v8454, %v8452
    %v8561 = vpack.c.b16 %v8455, %v8453
    %v8562 = vpack.c.b16 %v8458, %v8456
    %v8563 = vpack.c.b16 %v8459, %v8457
    %v8564 = vpack.c.b16 %v8462, %v8460
    %v8565 = vpack.c.b16 %v8463, %v8461
    %v8566 = vpack.c.b16 %v8466, %v8464
    %v8567 = vpack.c.b16 %v8467, %v8465
    %v8568 = vpack.c.b16 %v8470, %v8468
    %v8569 = vpack.c.b16 %v8471, %v8469
    %v8570 = vpack.c.b16 %v8474, %v8472
    %v8571 = vpack.c.b16 %v8475, %v8473
    %v8572 = vpack.c.b16 %v8478, %v8476
    %v8573 = vpack.c.b16 %v8479, %v8477
    %v8574 = vpack.c.b16 %v8482, %v8480
    %v8575 = vpack.c.b16 %v8483, %v8481
    %v8576 = vpack.c.b16 %v8486, %v8484
    %v8577 = vpack.c.b16 %v8487, %v8485
    %v8578 = vpack.c.b16 %v8490, %v8488
    %v8579 = vpack.c.b16 %v8491, %v8489
    %v8580 = vpack.c.b16 %v8494, %v8492
    %v8581 = vpack.c.b16 %v8495, %v8493
    %v8582 = vpack.c.b16 %v8498, %v8496
    %v8583 = vpack.c.b16 %v8499, %v8497
    %v8584 = vpack.c.b16 %v8502, %v8500
    %v8585 = vpack.c.b16 %v8503, %v8501
    %v8586 = vpack.c.b16 %v8506, %v8504
    %v8587 = vpack.c.b16 %v8507, %v8505
    %v8588 = vpack.c.b16 %v8510, %v8508
    %v8589 = vpack.c.b16 %v8511, %v8509
    %v8590 = vpack.c.b16 %v8514, %v8512
    %v8591 = vpack.c.b16 %v8515, %v8513
    %v8592 = vpack.c.b16 %v8518, %v8516
    %v8593 = vpack.c.b16 %v8519, %v8517
    %v8594 = vpack.c.b16 %v8522, %v8520
    %v8595 = vpack.c.b16 %v8523, %v8521
    %v8596 = vpack.c.b16 %v8526, %v8524
    %v8597 = vpack.c.b16 %v8527, %v8525
    %v8598 = vpack.c.b16 %v8530, %v8528
    %v8599 = vpack.c.b16 %v8531, %v8529
    %v8600 = vpack.c.b16 %v8534, %v8532
    %v8601 = vpack.c.b16 %v8535, %v8533
    %v8602 = vpack.c.b16 %v8538, %v8536
    %v8603 = vpack.c.b16 %v8539, %v8537
    %8668 = vmatpush.bf16.msra.mxu0 %v8554
    %8669 = vmatpush.bf16.msra.mxu0 %v8552
    %8670 = vmatpush.bf16.msra.mxu0 %v8550
    %8671 = vmatpush.bf16.msra.mxu0 %v8548
    %8672 = vmatpush.bf16.msra.mxu0 %v8546
    %8673 = vmatpush.bf16.msra.mxu0 %v8544
    %8674 = vmatpush.bf16.msra.mxu0 %v8542
    %8675 = vmatpush.bf16.msra.mxu0 %v8540
    %8676 = vmatmul.bf16.gmra.mxu0 %v8214
    %v8677 = vpop.f32.mrf.mxu0
    %v8678 = vadd.f32 %v8344, %v8677
    %v8679 = vpop.f32.mrf.mxu0
    %v8680 = vadd.f32 %v8344, %v8679
    %8681 = vmatmul.bf16.gmra.mxu0 %v8218
    %v8682 = vpop.f32.mrf.mxu0
    %v8683 = vadd.f32 %v8344, %v8682
    %v8684 = vpop.f32.mrf.mxu0
    %v8685 = vadd.f32 %v8344, %v8684
    %8686 = vmatmul.bf16.gmra.mxu0 %v8222
    %v8687 = vpop.f32.mrf.mxu0
    %v8688 = vadd.f32 %v8344, %v8687
    %v8689 = vpop.f32.mrf.mxu0
    %v8690 = vadd.f32 %v8344, %v8689
    %8691 = vmatmul.bf16.gmra.mxu0 %v8226
    %v8692 = vpop.f32.mrf.mxu0
    %v8693 = vadd.f32 %v8344, %v8692
    %v8694 = vpop.f32.mrf.mxu0
    %v8695 = vadd.f32 %v8344, %v8694
    %8696 = vmatmul.bf16.gmra.mxu0 %v8230
    %v8697 = vpop.f32.mrf.mxu0
    %v8698 = vadd.f32 %v8344, %v8697
    %v8699 = vpop.f32.mrf.mxu0
    %v8700 = vadd.f32 %v8344, %v8699
    %8701 = vmatmul.bf16.gmra.mxu0 %v8234
    %v8702 = vpop.f32.mrf.mxu0
    %v8703 = vadd.f32 %v8344, %v8702
    %v8704 = vpop.f32.mrf.mxu0
    %v8705 = vadd.f32 %v8344, %v8704
    %8706 = vmatmul.bf16.gmra.mxu0 %v8238
    %v8707 = vpop.f32.mrf.mxu0
    %v8708 = vadd.f32 %v8344, %v8707
    %v8709 = vpop.f32.mrf.mxu0
    %v8710 = vadd.f32 %v8344, %v8709
    %8711 = vmatmul.bf16.gmra.mxu0 %v8242
    %v8712 = vpop.f32.mrf.mxu0
    %v8713 = vadd.f32 %v8344, %v8712
    %v8714 = vpop.f32.mrf.mxu0
    %v8715 = vadd.f32 %v8344, %v8714
    %8716 = vmatmul.bf16.gmra.mxu0 %v8246
    %v8717 = vpop.f32.mrf.mxu0
    %v8718 = vadd.f32 %v8344, %v8717
    %v8719 = vpop.f32.mrf.mxu0
    %v8720 = vadd.f32 %v8344, %v8719
    %8721 = vmatmul.bf16.gmra.mxu0 %v8250
    %v8722 = vpop.f32.mrf.mxu0
    %v8723 = vadd.f32 %v8344, %v8722
    %v8724 = vpop.f32.mrf.mxu0
    %v8725 = vadd.f32 %v8344, %v8724
    %8726 = vmatmul.bf16.gmra.mxu0 %v8254
    %v8727 = vpop.f32.mrf.mxu0
    %v8728 = vadd.f32 %v8344, %v8727
    %v8729 = vpop.f32.mrf.mxu0
    %v8730 = vadd.f32 %v8344, %v8729
    %8731 = vmatmul.bf16.gmra.mxu0 %v8258
    %v8732 = vpop.f32.mrf.mxu0
    %v8733 = vadd.f32 %v8344, %v8732
    %v8734 = vpop.f32.mrf.mxu0
    %v8735 = vadd.f32 %v8344, %v8734
    %8736 = vmatmul.bf16.gmra.mxu0 %v8262
    %v8737 = vpop.f32.mrf.mxu0
    %v8738 = vadd.f32 %v8344, %v8737
    %v8739 = vpop.f32.mrf.mxu0
    %v8740 = vadd.f32 %v8344, %v8739
    %8741 = vmatmul.bf16.gmra.mxu0 %v8266
    %v8742 = vpop.f32.mrf.mxu0
    %v8743 = vadd.f32 %v8344, %v8742
    %v8744 = vpop.f32.mrf.mxu0
    %v8745 = vadd.f32 %v8344, %v8744
    %8746 = vmatmul.bf16.gmra.mxu0 %v8270
    %v8747 = vpop.f32.mrf.mxu0
    %v8748 = vadd.f32 %v8344, %v8747
    %v8749 = vpop.f32.mrf.mxu0
    %v8750 = vadd.f32 %v8344, %v8749
    %8751 = vmatmul.bf16.gmra.mxu0 %v8274
    %v8752 = vpop.f32.mrf.mxu0
    %v8753 = vadd.f32 %v8344, %v8752
    %v8754 = vpop.f32.mrf.mxu0
    %v8755 = vadd.f32 %v8344, %v8754
    %8756 = vdwg.mxu0
    %8757 = vmatpush.bf16.msra.mxu0 %v8570
    %8758 = vmatpush.bf16.msra.mxu0 %v8568
    %8759 = vmatpush.bf16.msra.mxu0 %v8566
    %8760 = vmatpush.bf16.msra.mxu0 %v8564
    %8761 = vmatpush.bf16.msra.mxu0 %v8562
    %8762 = vmatpush.bf16.msra.mxu0 %v8560
    %8763 = vmatpush.bf16.msra.mxu0 %v8558
    %8764 = vmatpush.bf16.msra.mxu0 %v8556
    %8765 = vmatmul.bf16.gmra.mxu0 %v8215
    %v8766 = vpop.f32.mrf.mxu0
    %v8767 = vadd.f32 %v8678, %v8766
    %v8768 = vpop.f32.mrf.mxu0
    %v8769 = vadd.f32 %v8680, %v8768
    %8770 = vmatmul.bf16.gmra.mxu0 %v8219
    %v8771 = vpop.f32.mrf.mxu0
    %v8772 = vadd.f32 %v8683, %v8771
    %v8773 = vpop.f32.mrf.mxu0
    %v8774 = vadd.f32 %v8685, %v8773
    %8775 = vmatmul.bf16.gmra.mxu0 %v8223
    %v8776 = vpop.f32.mrf.mxu0
    %v8777 = vadd.f32 %v8688, %v8776
    %v8778 = vpop.f32.mrf.mxu0
    %v8779 = vadd.f32 %v8690, %v8778
    %8780 = vmatmul.bf16.gmra.mxu0 %v8227
    %v8781 = vpop.f32.mrf.mxu0
    %v8782 = vadd.f32 %v8693, %v8781
    %v8783 = vpop.f32.mrf.mxu0
    %v8784 = vadd.f32 %v8695, %v8783
    %8785 = vmatmul.bf16.gmra.mxu0 %v8231
    %v8786 = vpop.f32.mrf.mxu0
    %v8787 = vadd.f32 %v8698, %v8786
    %v8788 = vpop.f32.mrf.mxu0
    %v8789 = vadd.f32 %v8700, %v8788
    %8790 = vmatmul.bf16.gmra.mxu0 %v8235
    %v8791 = vpop.f32.mrf.mxu0
    %v8792 = vadd.f32 %v8703, %v8791
    %v8793 = vpop.f32.mrf.mxu0
    %v8794 = vadd.f32 %v8705, %v8793
    %8795 = vmatmul.bf16.gmra.mxu0 %v8239
    %v8796 = vpop.f32.mrf.mxu0
    %v8797 = vadd.f32 %v8708, %v8796
    %v8798 = vpop.f32.mrf.mxu0
    %v8799 = vadd.f32 %v8710, %v8798
    %8800 = vmatmul.bf16.gmra.mxu0 %v8243
    %v8801 = vpop.f32.mrf.mxu0
    %v8802 = vadd.f32 %v8713, %v8801
    %v8803 = vpop.f32.mrf.mxu0
    %v8804 = vadd.f32 %v8715, %v8803
    %8805 = vmatmul.bf16.gmra.mxu0 %v8247
    %v8806 = vpop.f32.mrf.mxu0
    %v8807 = vadd.f32 %v8718, %v8806
    %v8808 = vpop.f32.mrf.mxu0
    %v8809 = vadd.f32 %v8720, %v8808
    %8810 = vmatmul.bf16.gmra.mxu0 %v8251
    %v8811 = vpop.f32.mrf.mxu0
    %v8812 = vadd.f32 %v8723, %v8811
    %v8813 = vpop.f32.mrf.mxu0
    %v8814 = vadd.f32 %v8725, %v8813
    %8815 = vmatmul.bf16.gmra.mxu0 %v8255
    %v8816 = vpop.f32.mrf.mxu0
    %v8817 = vadd.f32 %v8728, %v8816
    %v8818 = vpop.f32.mrf.mxu0
    %v8819 = vadd.f32 %v8730, %v8818
    %8820 = vmatmul.bf16.gmra.mxu0 %v8259
    %v8821 = vpop.f32.mrf.mxu0
    %v8822 = vadd.f32 %v8733, %v8821
    %v8823 = vpop.f32.mrf.mxu0
    %v8824 = vadd.f32 %v8735, %v8823
    %8825 = vmatmul.bf16.gmra.mxu0 %v8263
    %v8826 = vpop.f32.mrf.mxu0
    %v8827 = vadd.f32 %v8738, %v8826
    %v8828 = vpop.f32.mrf.mxu0
    %v8829 = vadd.f32 %v8740, %v8828
    %8830 = vmatmul.bf16.gmra.mxu0 %v8267
    %v8831 = vpop.f32.mrf.mxu0
    %v8832 = vadd.f32 %v8743, %v8831
    %v8833 = vpop.f32.mrf.mxu0
    %v8834 = vadd.f32 %v8745, %v8833
    %8835 = vmatmul.bf16.gmra.mxu0 %v8271
    %v8836 = vpop.f32.mrf.mxu0
    %v8837 = vadd.f32 %v8748, %v8836
    %v8838 = vpop.f32.mrf.mxu0
    %v8839 = vadd.f32 %v8750, %v8838
    %8840 = vmatmul.bf16.gmra.mxu0 %v8275
    %v8841 = vpop.f32.mrf.mxu0
    %v8842 = vadd.f32 %v8753, %v8841
    %v8843 = vpop.f32.mrf.mxu0
    %v8844 = vadd.f32 %v8755, %v8843
    %8845 = vdwg.mxu0
    %8846 = vmatpush.bf16.msra.mxu0 %v8586
    %8847 = vmatpush.bf16.msra.mxu0 %v8584
    %8848 = vmatpush.bf16.msra.mxu0 %v8582
    %8849 = vmatpush.bf16.msra.mxu0 %v8580
    %8850 = vmatpush.bf16.msra.mxu0 %v8578
    %8851 = vmatpush.bf16.msra.mxu0 %v8576
    %8852 = vmatpush.bf16.msra.mxu0 %v8574
    %8853 = vmatpush.bf16.msra.mxu0 %v8572
    %8854 = vmatmul.bf16.gmra.mxu0 %v8216
    %v8855 = vpop.f32.mrf.mxu0
    %v8856 = vadd.f32 %v8767, %v8855
    %v8857 = vpop.f32.mrf.mxu0
    %v8858 = vadd.f32 %v8769, %v8857
    %8859 = vmatmul.bf16.gmra.mxu0 %v8220
    %v8860 = vpop.f32.mrf.mxu0
    %v8861 = vadd.f32 %v8772, %v8860
    %v8862 = vpop.f32.mrf.mxu0
    %v8863 = vadd.f32 %v8774, %v8862
    %8864 = vmatmul.bf16.gmra.mxu0 %v8224
    %v8865 = vpop.f32.mrf.mxu0
    %v8866 = vadd.f32 %v8777, %v8865
    %v8867 = vpop.f32.mrf.mxu0
    %v8868 = vadd.f32 %v8779, %v8867
    %8869 = vmatmul.bf16.gmra.mxu0 %v8228
    %v8870 = vpop.f32.mrf.mxu0
    %v8871 = vadd.f32 %v8782, %v8870
    %v8872 = vpop.f32.mrf.mxu0
    %v8873 = vadd.f32 %v8784, %v8872
    %8874 = vmatmul.bf16.gmra.mxu0 %v8232
    %v8875 = vpop.f32.mrf.mxu0
    %v8876 = vadd.f32 %v8787, %v8875
    %v8877 = vpop.f32.mrf.mxu0
    %v8878 = vadd.f32 %v8789, %v8877
    %8879 = vmatmul.bf16.gmra.mxu0 %v8236
    %v8880 = vpop.f32.mrf.mxu0
    %v8881 = vadd.f32 %v8792, %v8880
    %v8882 = vpop.f32.mrf.mxu0
    %v8883 = vadd.f32 %v8794, %v8882
    %8884 = vmatmul.bf16.gmra.mxu0 %v8240
    %v8885 = vpop.f32.mrf.mxu0
    %v8886 = vadd.f32 %v8797, %v8885
    %v8887 = vpop.f32.mrf.mxu0
    %v8888 = vadd.f32 %v8799, %v8887
    %8889 = vmatmul.bf16.gmra.mxu0 %v8244
    %v8890 = vpop.f32.mrf.mxu0
    %v8891 = vadd.f32 %v8802, %v8890
    %v8892 = vpop.f32.mrf.mxu0
    %v8893 = vadd.f32 %v8804, %v8892
    %8894 = vmatmul.bf16.gmra.mxu0 %v8248
    %v8895 = vpop.f32.mrf.mxu0
    %v8896 = vadd.f32 %v8807, %v8895
    %v8897 = vpop.f32.mrf.mxu0
    %v8898 = vadd.f32 %v8809, %v8897
    %8899 = vmatmul.bf16.gmra.mxu0 %v8252
    %v8900 = vpop.f32.mrf.mxu0
    %v8901 = vadd.f32 %v8812, %v8900
    %v8902 = vpop.f32.mrf.mxu0
    %v8903 = vadd.f32 %v8814, %v8902
    %8904 = vmatmul.bf16.gmra.mxu0 %v8256
    %v8905 = vpop.f32.mrf.mxu0
    %v8906 = vadd.f32 %v8817, %v8905
    %v8907 = vpop.f32.mrf.mxu0
    %v8908 = vadd.f32 %v8819, %v8907
    %8909 = vmatmul.bf16.gmra.mxu0 %v8260
    %v8910 = vpop.f32.mrf.mxu0
    %v8911 = vadd.f32 %v8822, %v8910
    %v8912 = vpop.f32.mrf.mxu0
    %v8913 = vadd.f32 %v8824, %v8912
    %8914 = vmatmul.bf16.gmra.mxu0 %v8264
    %v8915 = vpop.f32.mrf.mxu0
    %v8916 = vadd.f32 %v8827, %v8915
    %v8917 = vpop.f32.mrf.mxu0
    %v8918 = vadd.f32 %v8829, %v8917
    %8919 = vmatmul.bf16.gmra.mxu0 %v8268
    %v8920 = vpop.f32.mrf.mxu0
    %v8921 = vadd.f32 %v8832, %v8920
    %v8922 = vpop.f32.mrf.mxu0
    %v8923 = vadd.f32 %v8834, %v8922
    %8924 = vmatmul.bf16.gmra.mxu0 %v8272
    %v8925 = vpop.f32.mrf.mxu0
    %v8926 = vadd.f32 %v8837, %v8925
    %v8927 = vpop.f32.mrf.mxu0
    %v8928 = vadd.f32 %v8839, %v8927
    %8929 = vmatmul.bf16.gmra.mxu0 %v8276
    %v8930 = vpop.f32.mrf.mxu0
    %v8931 = vadd.f32 %v8842, %v8930
    %v8932 = vpop.f32.mrf.mxu0
    %v8933 = vadd.f32 %v8844, %v8932
    %8934 = vdwg.mxu0
    %8935 = vmatpush.bf16.msra.mxu0 %v8602
    %8936 = vmatpush.bf16.msra.mxu0 %v8600
    %8937 = vmatpush.bf16.msra.mxu0 %v8598
    %8938 = vmatpush.bf16.msra.mxu0 %v8596
    %8939 = vmatpush.bf16.msra.mxu0 %v8594
    %8940 = vmatpush.bf16.msra.mxu0 %v8592
    %8941 = vmatpush.bf16.msra.mxu0 %v8590
    %8942 = vmatpush.bf16.msra.mxu0 %v8588
    %8943 = vmatmul.bf16.gmra.mxu0 %v8217
    %v8944 = vpop.f32.mrf.mxu0
    %v8945 = vadd.f32 %v8856, %v8944
    %v8946 = vpop.f32.mrf.mxu0
    %v8947 = vadd.f32 %v8858, %v8946
    %8948 = vmatmul.bf16.gmra.mxu0 %v8221
    %v8949 = vpop.f32.mrf.mxu0
    %v8950 = vadd.f32 %v8861, %v8949
    %v8951 = vpop.f32.mrf.mxu0
    %v8952 = vadd.f32 %v8863, %v8951
    %8953 = vmatmul.bf16.gmra.mxu0 %v8225
    %v8954 = vpop.f32.mrf.mxu0
    %v8955 = vadd.f32 %v8866, %v8954
    %v8956 = vpop.f32.mrf.mxu0
    %v8957 = vadd.f32 %v8868, %v8956
    %8958 = vmatmul.bf16.gmra.mxu0 %v8229
    %v8959 = vpop.f32.mrf.mxu0
    %v8960 = vadd.f32 %v8871, %v8959
    %v8961 = vpop.f32.mrf.mxu0
    %v8962 = vadd.f32 %v8873, %v8961
    %8963 = vmatmul.bf16.gmra.mxu0 %v8233
    %v8964 = vpop.f32.mrf.mxu0
    %v8965 = vadd.f32 %v8876, %v8964
    %v8966 = vpop.f32.mrf.mxu0
    %v8967 = vadd.f32 %v8878, %v8966
    %8968 = vmatmul.bf16.gmra.mxu0 %v8237
    %v8969 = vpop.f32.mrf.mxu0
    %v8970 = vadd.f32 %v8881, %v8969
    %v8971 = vpop.f32.mrf.mxu0
    %v8972 = vadd.f32 %v8883, %v8971
    %8973 = vmatmul.bf16.gmra.mxu0 %v8241
    %v8974 = vpop.f32.mrf.mxu0
    %v8975 = vadd.f32 %v8886, %v8974
    %v8976 = vpop.f32.mrf.mxu0
    %v8977 = vadd.f32 %v8888, %v8976
    %8978 = vmatmul.bf16.gmra.mxu0 %v8245
    %v8979 = vpop.f32.mrf.mxu0
    %v8980 = vadd.f32 %v8891, %v8979
    %v8981 = vpop.f32.mrf.mxu0
    %v8982 = vadd.f32 %v8893, %v8981
    %8983 = vmatmul.bf16.gmra.mxu0 %v8249
    %v8984 = vpop.f32.mrf.mxu0
    %v8985 = vadd.f32 %v8896, %v8984
    %v8986 = vpop.f32.mrf.mxu0
    %v8987 = vadd.f32 %v8898, %v8986
    %8988 = vmatmul.bf16.gmra.mxu0 %v8253
    %v8989 = vpop.f32.mrf.mxu0
    %v8990 = vadd.f32 %v8901, %v8989
    %v8991 = vpop.f32.mrf.mxu0
    %v8992 = vadd.f32 %v8903, %v8991
    %8993 = vmatmul.bf16.gmra.mxu0 %v8257
    %v8994 = vpop.f32.mrf.mxu0
    %v8995 = vadd.f32 %v8906, %v8994
    %v8996 = vpop.f32.mrf.mxu0
    %v8997 = vadd.f32 %v8908, %v8996
    %8998 = vmatmul.bf16.gmra.mxu0 %v8261
    %v8999 = vpop.f32.mrf.mxu0
    %v9000 = vadd.f32 %v8911, %v8999
    %v9001 = vpop.f32.mrf.mxu0
    %v9002 = vadd.f32 %v8913, %v9001
    %9003 = vmatmul.bf16.gmra.mxu0 %v8265
    %v9004 = vpop.f32.mrf.mxu0
    %v9005 = vadd.f32 %v8916, %v9004
    %v9006 = vpop.f32.mrf.mxu0
    %v9007 = vadd.f32 %v8918, %v9006
    %9008 = vmatmul.bf16.gmra.mxu0 %v8269
    %v9009 = vpop.f32.mrf.mxu0
    %v9010 = vadd.f32 %v8921, %v9009
    %v9011 = vpop.f32.mrf.mxu0
    %v9012 = vadd.f32 %v8923, %v9011
    %9013 = vmatmul.bf16.gmra.mxu0 %v8273
    %v9014 = vpop.f32.mrf.mxu0
    %v9015 = vadd.f32 %v8926, %v9014
    %v9016 = vpop.f32.mrf.mxu0
    %v9017 = vadd.f32 %v8928, %v9016
    %9018 = vmatmul.bf16.gmra.mxu0 %v8277
    %v9019 = vpop.f32.mrf.mxu0
    %v9020 = vadd.f32 %v8931, %v9019
    %v9021 = vpop.f32.mrf.mxu0
    %v9022 = vadd.f32 %v8933, %v9021
    %9023 = vdwg.mxu0
    %9024 = vmatpush.bf16.msra.mxu0 %v8555
    %9025 = vmatpush.bf16.msra.mxu0 %v8553
    %9026 = vmatpush.bf16.msra.mxu0 %v8551
    %9027 = vmatpush.bf16.msra.mxu0 %v8549
    %9028 = vmatpush.bf16.msra.mxu0 %v8547
    %9029 = vmatpush.bf16.msra.mxu0 %v8545
    %9030 = vmatpush.bf16.msra.mxu0 %v8543
    %9031 = vmatpush.bf16.msra.mxu0 %v8541
    %9032 = vmatmul.bf16.gmra.mxu0 %v8214
    %v9033 = vpop.f32.mrf.mxu0
    %v9034 = vadd.f32 %v8345, %v9033
    %v9035 = vpop.f32.mrf.mxu0
    %v9036 = vadd.f32 %v8345, %v9035
    %9037 = vmatmul.bf16.gmra.mxu0 %v8218
    %v9038 = vpop.f32.mrf.mxu0
    %v9039 = vadd.f32 %v8345, %v9038
    %v9040 = vpop.f32.mrf.mxu0
    %v9041 = vadd.f32 %v8345, %v9040
    %9042 = vmatmul.bf16.gmra.mxu0 %v8222
    %v9043 = vpop.f32.mrf.mxu0
    %v9044 = vadd.f32 %v8345, %v9043
    %v9045 = vpop.f32.mrf.mxu0
    %v9046 = vadd.f32 %v8345, %v9045
    %9047 = vmatmul.bf16.gmra.mxu0 %v8226
    %v9048 = vpop.f32.mrf.mxu0
    %v9049 = vadd.f32 %v8345, %v9048
    %v9050 = vpop.f32.mrf.mxu0
    %v9051 = vadd.f32 %v8345, %v9050
    %9052 = vmatmul.bf16.gmra.mxu0 %v8230
    %v9053 = vpop.f32.mrf.mxu0
    %v9054 = vadd.f32 %v8345, %v9053
    %v9055 = vpop.f32.mrf.mxu0
    %v9056 = vadd.f32 %v8345, %v9055
    %9057 = vmatmul.bf16.gmra.mxu0 %v8234
    %v9058 = vpop.f32.mrf.mxu0
    %v9059 = vadd.f32 %v8345, %v9058
    %v9060 = vpop.f32.mrf.mxu0
    %v9061 = vadd.f32 %v8345, %v9060
    %9062 = vmatmul.bf16.gmra.mxu0 %v8238
    %v9063 = vpop.f32.mrf.mxu0
    %v9064 = vadd.f32 %v8345, %v9063
    %v9065 = vpop.f32.mrf.mxu0
    %v9066 = vadd.f32 %v8345, %v9065
    %9067 = vmatmul.bf16.gmra.mxu0 %v8242
    %v9068 = vpop.f32.mrf.mxu0
    %v9069 = vadd.f32 %v8345, %v9068
    %v9070 = vpop.f32.mrf.mxu0
    %v9071 = vadd.f32 %v8345, %v9070
    %9072 = vmatmul.bf16.gmra.mxu0 %v8246
    %v9073 = vpop.f32.mrf.mxu0
    %v9074 = vadd.f32 %v8345, %v9073
    %v9075 = vpop.f32.mrf.mxu0
    %v9076 = vadd.f32 %v8345, %v9075
    %9077 = vmatmul.bf16.gmra.mxu0 %v8250
    %v9078 = vpop.f32.mrf.mxu0
    %v9079 = vadd.f32 %v8345, %v9078
    %v9080 = vpop.f32.mrf.mxu0
    %v9081 = vadd.f32 %v8345, %v9080
    %9082 = vmatmul.bf16.gmra.mxu0 %v8254
    %v9083 = vpop.f32.mrf.mxu0
    %v9084 = vadd.f32 %v8345, %v9083
    %v9085 = vpop.f32.mrf.mxu0
    %v9086 = vadd.f32 %v8345, %v9085
    %9087 = vmatmul.bf16.gmra.mxu0 %v8258
    %v9088 = vpop.f32.mrf.mxu0
    %v9089 = vadd.f32 %v8345, %v9088
    %v9090 = vpop.f32.mrf.mxu0
    %v9091 = vadd.f32 %v8345, %v9090
    %9092 = vmatmul.bf16.gmra.mxu0 %v8262
    %v9093 = vpop.f32.mrf.mxu0
    %v9094 = vadd.f32 %v8345, %v9093
    %v9095 = vpop.f32.mrf.mxu0
    %v9096 = vadd.f32 %v8345, %v9095
    %9097 = vmatmul.bf16.gmra.mxu0 %v8266
    %v9098 = vpop.f32.mrf.mxu0
    %v9099 = vadd.f32 %v8345, %v9098
    %v9100 = vpop.f32.mrf.mxu0
    %v9101 = vadd.f32 %v8345, %v9100
    %9102 = vmatmul.bf16.gmra.mxu0 %v8270
    %v9103 = vpop.f32.mrf.mxu0
    %v9104 = vadd.f32 %v8345, %v9103
    %v9105 = vpop.f32.mrf.mxu0
    %v9106 = vadd.f32 %v8345, %v9105
    %9107 = vmatmul.bf16.gmra.mxu0 %v8274
    %v9108 = vpop.f32.mrf.mxu0
    %v9109 = vadd.f32 %v8345, %v9108
    %v9110 = vpop.f32.mrf.mxu0
    %v9111 = vadd.f32 %v8345, %v9110
    %9112 = vdwg.mxu0
    %9113 = vmatpush.bf16.msra.mxu0 %v8571
    %9114 = vmatpush.bf16.msra.mxu0 %v8569
    %9115 = vmatpush.bf16.msra.mxu0 %v8567
    %9116 = vmatpush.bf16.msra.mxu0 %v8565
    %9117 = vmatpush.bf16.msra.mxu0 %v8563
    %9118 = vmatpush.bf16.msra.mxu0 %v8561
    %9119 = vmatpush.bf16.msra.mxu0 %v8559
    %9120 = vmatpush.bf16.msra.mxu0 %v8557
    %9121 = vmatmul.bf16.gmra.mxu0 %v8215
    %v9122 = vpop.f32.mrf.mxu0
    %v9123 = vadd.f32 %v9034, %v9122
    %v9124 = vpop.f32.mrf.mxu0
    %v9125 = vadd.f32 %v9036, %v9124
    %9126 = vmatmul.bf16.gmra.mxu0 %v8219
    %v9127 = vpop.f32.mrf.mxu0
    %v9128 = vadd.f32 %v9039, %v9127
    %v9129 = vpop.f32.mrf.mxu0
    %v9130 = vadd.f32 %v9041, %v9129
    %9131 = vmatmul.bf16.gmra.mxu0 %v8223
    %v9132 = vpop.f32.mrf.mxu0
    %v9133 = vadd.f32 %v9044, %v9132
    %v9134 = vpop.f32.mrf.mxu0
    %v9135 = vadd.f32 %v9046, %v9134
    %9136 = vmatmul.bf16.gmra.mxu0 %v8227
    %v9137 = vpop.f32.mrf.mxu0
    %v9138 = vadd.f32 %v9049, %v9137
    %v9139 = vpop.f32.mrf.mxu0
    %v9140 = vadd.f32 %v9051, %v9139
    %9141 = vmatmul.bf16.gmra.mxu0 %v8231
    %v9142 = vpop.f32.mrf.mxu0
    %v9143 = vadd.f32 %v9054, %v9142
    %v9144 = vpop.f32.mrf.mxu0
    %v9145 = vadd.f32 %v9056, %v9144
    %9146 = vmatmul.bf16.gmra.mxu0 %v8235
    %v9147 = vpop.f32.mrf.mxu0
    %v9148 = vadd.f32 %v9059, %v9147
    %v9149 = vpop.f32.mrf.mxu0
    %v9150 = vadd.f32 %v9061, %v9149
    %9151 = vmatmul.bf16.gmra.mxu0 %v8239
    %v9152 = vpop.f32.mrf.mxu0
    %v9153 = vadd.f32 %v9064, %v9152
    %v9154 = vpop.f32.mrf.mxu0
    %v9155 = vadd.f32 %v9066, %v9154
    %9156 = vmatmul.bf16.gmra.mxu0 %v8243
    %v9157 = vpop.f32.mrf.mxu0
    %v9158 = vadd.f32 %v9069, %v9157
    %v9159 = vpop.f32.mrf.mxu0
    %v9160 = vadd.f32 %v9071, %v9159
    %9161 = vmatmul.bf16.gmra.mxu0 %v8247
    %v9162 = vpop.f32.mrf.mxu0
    %v9163 = vadd.f32 %v9074, %v9162
    %v9164 = vpop.f32.mrf.mxu0
    %v9165 = vadd.f32 %v9076, %v9164
    %9166 = vmatmul.bf16.gmra.mxu0 %v8251
    %v9167 = vpop.f32.mrf.mxu0
    %v9168 = vadd.f32 %v9079, %v9167
    %v9169 = vpop.f32.mrf.mxu0
    %v9170 = vadd.f32 %v9081, %v9169
    %9171 = vmatmul.bf16.gmra.mxu0 %v8255
    %v9172 = vpop.f32.mrf.mxu0
    %v9173 = vadd.f32 %v9084, %v9172
    %v9174 = vpop.f32.mrf.mxu0
    %v9175 = vadd.f32 %v9086, %v9174
    %9176 = vmatmul.bf16.gmra.mxu0 %v8259
    %v9177 = vpop.f32.mrf.mxu0
    %v9178 = vadd.f32 %v9089, %v9177
    %v9179 = vpop.f32.mrf.mxu0
    %v9180 = vadd.f32 %v9091, %v9179
    %9181 = vmatmul.bf16.gmra.mxu0 %v8263
    %v9182 = vpop.f32.mrf.mxu0
    %v9183 = vadd.f32 %v9094, %v9182
    %v9184 = vpop.f32.mrf.mxu0
    %v9185 = vadd.f32 %v9096, %v9184
    %9186 = vmatmul.bf16.gmra.mxu0 %v8267
    %v9187 = vpop.f32.mrf.mxu0
    %v9188 = vadd.f32 %v9099, %v9187
    %v9189 = vpop.f32.mrf.mxu0
    %v9190 = vadd.f32 %v9101, %v9189
    %9191 = vmatmul.bf16.gmra.mxu0 %v8271
    %v9192 = vpop.f32.mrf.mxu0
    %v9193 = vadd.f32 %v9104, %v9192
    %v9194 = vpop.f32.mrf.mxu0
    %v9195 = vadd.f32 %v9106, %v9194
    %9196 = vmatmul.bf16.gmra.mxu0 %v8275
    %v9197 = vpop.f32.mrf.mxu0
    %v9198 = vadd.f32 %v9109, %v9197
    %v9199 = vpop.f32.mrf.mxu0
    %v9200 = vadd.f32 %v9111, %v9199
    %9201 = vdwg.mxu0
    %9202 = vmatpush.bf16.msra.mxu0 %v8587
    %9203 = vmatpush.bf16.msra.mxu0 %v8585
    %9204 = vmatpush.bf16.msra.mxu0 %v8583
    %9205 = vmatpush.bf16.msra.mxu0 %v8581
    %9206 = vmatpush.bf16.msra.mxu0 %v8579
    %9207 = vmatpush.bf16.msra.mxu0 %v8577
    %9208 = vmatpush.bf16.msra.mxu0 %v8575
    %9209 = vmatpush.bf16.msra.mxu0 %v8573
    %9210 = vmatmul.bf16.gmra.mxu0 %v8216
    %v9211 = vpop.f32.mrf.mxu0
    %v9212 = vadd.f32 %v9123, %v9211
    %v9213 = vpop.f32.mrf.mxu0
    %v9214 = vadd.f32 %v9125, %v9213
    %9215 = vmatmul.bf16.gmra.mxu0 %v8220
    %v9216 = vpop.f32.mrf.mxu0
    %v9217 = vadd.f32 %v9128, %v9216
    %v9218 = vpop.f32.mrf.mxu0
    %v9219 = vadd.f32 %v9130, %v9218
    %9220 = vmatmul.bf16.gmra.mxu0 %v8224
    %v9221 = vpop.f32.mrf.mxu0
    %v9222 = vadd.f32 %v9133, %v9221
    %v9223 = vpop.f32.mrf.mxu0
    %v9224 = vadd.f32 %v9135, %v9223
    %9225 = vmatmul.bf16.gmra.mxu0 %v8228
    %v9226 = vpop.f32.mrf.mxu0
    %v9227 = vadd.f32 %v9138, %v9226
    %v9228 = vpop.f32.mrf.mxu0
    %v9229 = vadd.f32 %v9140, %v9228
    %9230 = vmatmul.bf16.gmra.mxu0 %v8232
    %v9231 = vpop.f32.mrf.mxu0
    %v9232 = vadd.f32 %v9143, %v9231
    %v9233 = vpop.f32.mrf.mxu0
    %v9234 = vadd.f32 %v9145, %v9233
    %9235 = vmatmul.bf16.gmra.mxu0 %v8236
    %v9236 = vpop.f32.mrf.mxu0
    %v9237 = vadd.f32 %v9148, %v9236
    %v9238 = vpop.f32.mrf.mxu0
    %v9239 = vadd.f32 %v9150, %v9238
    %9240 = vmatmul.bf16.gmra.mxu0 %v8240
    %v9241 = vpop.f32.mrf.mxu0
    %v9242 = vadd.f32 %v9153, %v9241
    %v9243 = vpop.f32.mrf.mxu0
    %v9244 = vadd.f32 %v9155, %v9243
    %9245 = vmatmul.bf16.gmra.mxu0 %v8244
    %v9246 = vpop.f32.mrf.mxu0
    %v9247 = vadd.f32 %v9158, %v9246
    %v9248 = vpop.f32.mrf.mxu0
    %v9249 = vadd.f32 %v9160, %v9248
    %9250 = vmatmul.bf16.gmra.mxu0 %v8248
    %v9251 = vpop.f32.mrf.mxu0
    %v9252 = vadd.f32 %v9163, %v9251
    %v9253 = vpop.f32.mrf.mxu0
    %v9254 = vadd.f32 %v9165, %v9253
    %9255 = vmatmul.bf16.gmra.mxu0 %v8252
    %v9256 = vpop.f32.mrf.mxu0
    %v9257 = vadd.f32 %v9168, %v9256
    %v9258 = vpop.f32.mrf.mxu0
    %v9259 = vadd.f32 %v9170, %v9258
    %9260 = vmatmul.bf16.gmra.mxu0 %v8256
    %v9261 = vpop.f32.mrf.mxu0
    %v9262 = vadd.f32 %v9173, %v9261
    %v9263 = vpop.f32.mrf.mxu0
    %v9264 = vadd.f32 %v9175, %v9263
    %9265 = vmatmul.bf16.gmra.mxu0 %v8260
    %v9266 = vpop.f32.mrf.mxu0
    %v9267 = vadd.f32 %v9178, %v9266
    %v9268 = vpop.f32.mrf.mxu0
    %v9269 = vadd.f32 %v9180, %v9268
    %9270 = vmatmul.bf16.gmra.mxu0 %v8264
    %v9271 = vpop.f32.mrf.mxu0
    %v9272 = vadd.f32 %v9183, %v9271
    %v9273 = vpop.f32.mrf.mxu0
    %v9274 = vadd.f32 %v9185, %v9273
    %9275 = vmatmul.bf16.gmra.mxu0 %v8268
    %v9276 = vpop.f32.mrf.mxu0
    %v9277 = vadd.f32 %v9188, %v9276
    %v9278 = vpop.f32.mrf.mxu0
    %v9279 = vadd.f32 %v9190, %v9278
    %9280 = vmatmul.bf16.gmra.mxu0 %v8272
    %v9281 = vpop.f32.mrf.mxu0
    %v9282 = vadd.f32 %v9193, %v9281
    %v9283 = vpop.f32.mrf.mxu0
    %v9284 = vadd.f32 %v9195, %v9283
    %9285 = vmatmul.bf16.gmra.mxu0 %v8276
    %v9286 = vpop.f32.mrf.mxu0
    %v9287 = vadd.f32 %v9198, %v9286
    %v9288 = vpop.f32.mrf.mxu0
    %v9289 = vadd.f32 %v9200, %v9288
    %9290 = vdwg.mxu0
    %9291 = vmatpush.bf16.msra.mxu0 %v8603
    %9292 = vmatpush.bf16.msra.mxu0 %v8601
    %9293 = vmatpush.bf16.msra.mxu0 %v8599
    %9294 = vmatpush.bf16.msra.mxu0 %v8597
    %9295 = vmatpush.bf16.msra.mxu0 %v8595
    %9296 = vmatpush.bf16.msra.mxu0 %v8593
    %9297 = vmatpush.bf16.msra.mxu0 %v8591
    %9298 = vmatpush.bf16.msra.mxu0 %v8589
    %9299 = vmatmul.bf16.gmra.mxu0 %v8217
    %v9300 = vpop.f32.mrf.mxu0
    %v9301 = vadd.f32 %v9212, %v9300
    %v9302 = vpop.f32.mrf.mxu0
    %v9303 = vadd.f32 %v9214, %v9302
    %9304 = vmatmul.bf16.gmra.mxu0 %v8221
    %v9305 = vpop.f32.mrf.mxu0
    %v9306 = vadd.f32 %v9217, %v9305
    %v9307 = vpop.f32.mrf.mxu0
    %v9308 = vadd.f32 %v9219, %v9307
    %9309 = vmatmul.bf16.gmra.mxu0 %v8225
    %v9310 = vpop.f32.mrf.mxu0
    %v9311 = vadd.f32 %v9222, %v9310
    %v9312 = vpop.f32.mrf.mxu0
    %v9313 = vadd.f32 %v9224, %v9312
    %9314 = vmatmul.bf16.gmra.mxu0 %v8229
    %v9315 = vpop.f32.mrf.mxu0
    %v9316 = vadd.f32 %v9227, %v9315
    %v9317 = vpop.f32.mrf.mxu0
    %v9318 = vadd.f32 %v9229, %v9317
    %9319 = vmatmul.bf16.gmra.mxu0 %v8233
    %v9320 = vpop.f32.mrf.mxu0
    %v9321 = vadd.f32 %v9232, %v9320
    %v9322 = vpop.f32.mrf.mxu0
    %v9323 = vadd.f32 %v9234, %v9322
    %9324 = vmatmul.bf16.gmra.mxu0 %v8237
    %v9325 = vpop.f32.mrf.mxu0
    %v9326 = vadd.f32 %v9237, %v9325
    %v9327 = vpop.f32.mrf.mxu0
    %v9328 = vadd.f32 %v9239, %v9327
    %9329 = vmatmul.bf16.gmra.mxu0 %v8241
    %v9330 = vpop.f32.mrf.mxu0
    %v9331 = vadd.f32 %v9242, %v9330
    %v9332 = vpop.f32.mrf.mxu0
    %v9333 = vadd.f32 %v9244, %v9332
    %9334 = vmatmul.bf16.gmra.mxu0 %v8245
    %v9335 = vpop.f32.mrf.mxu0
    %v9336 = vadd.f32 %v9247, %v9335
    %v9337 = vpop.f32.mrf.mxu0
    %v9338 = vadd.f32 %v9249, %v9337
    %9339 = vmatmul.bf16.gmra.mxu0 %v8249
    %v9340 = vpop.f32.mrf.mxu0
    %v9341 = vadd.f32 %v9252, %v9340
    %v9342 = vpop.f32.mrf.mxu0
    %v9343 = vadd.f32 %v9254, %v9342
    %9344 = vmatmul.bf16.gmra.mxu0 %v8253
    %v9345 = vpop.f32.mrf.mxu0
    %v9346 = vadd.f32 %v9257, %v9345
    %v9347 = vpop.f32.mrf.mxu0
    %v9348 = vadd.f32 %v9259, %v9347
    %9349 = vmatmul.bf16.gmra.mxu0 %v8257
    %v9350 = vpop.f32.mrf.mxu0
    %v9351 = vadd.f32 %v9262, %v9350
    %v9352 = vpop.f32.mrf.mxu0
    %v9353 = vadd.f32 %v9264, %v9352
    %9354 = vmatmul.bf16.gmra.mxu0 %v8261
    %v9355 = vpop.f32.mrf.mxu0
    %v9356 = vadd.f32 %v9267, %v9355
    %v9357 = vpop.f32.mrf.mxu0
    %v9358 = vadd.f32 %v9269, %v9357
    %9359 = vmatmul.bf16.gmra.mxu0 %v8265
    %v9360 = vpop.f32.mrf.mxu0
    %v9361 = vadd.f32 %v9272, %v9360
    %v9362 = vpop.f32.mrf.mxu0
    %v9363 = vadd.f32 %v9274, %v9362
    %9364 = vmatmul.bf16.gmra.mxu0 %v8269
    %v9365 = vpop.f32.mrf.mxu0
    %v9366 = vadd.f32 %v9277, %v9365
    %v9367 = vpop.f32.mrf.mxu0
    %v9368 = vadd.f32 %v9279, %v9367
    %9369 = vmatmul.bf16.gmra.mxu0 %v8273
    %v9370 = vpop.f32.mrf.mxu0
    %v9371 = vadd.f32 %v9282, %v9370
    %v9372 = vpop.f32.mrf.mxu0
    %v9373 = vadd.f32 %v9284, %v9372
    %9374 = vmatmul.bf16.gmra.mxu0 %v8277
    %v9375 = vpop.f32.mrf.mxu0
    %v9376 = vadd.f32 %v9287, %v9375
    %v9377 = vpop.f32.mrf.mxu0
    %v9378 = vadd.f32 %v9289, %v9377
    %9379 = vdwg.mxu0
    %vm9380 = vcmp.gt.f32.partialorder %v8945, 0.0
    %vm9381 = vcmp.gt.f32.partialorder %v9301, 0.0
    %vm9382 = vcmp.gt.f32.partialorder %v8947, 0.0
    %vm9383 = vcmp.gt.f32.partialorder %v9303, 0.0
    %vm9384 = vcmp.gt.f32.partialorder %v8950, 0.0
    %vm9385 = vcmp.gt.f32.partialorder %v9306, 0.0
    %vm9386 = vcmp.gt.f32.partialorder %v8952, 0.0
    %vm9387 = vcmp.gt.f32.partialorder %v9308, 0.0
    %vm9388 = vcmp.gt.f32.partialorder %v8955, 0.0
    %vm9389 = vcmp.gt.f32.partialorder %v9311, 0.0
    %vm9390 = vcmp.gt.f32.partialorder %v8957, 0.0
    %vm9391 = vcmp.gt.f32.partialorder %v9313, 0.0
    %vm9392 = vcmp.gt.f32.partialorder %v8960, 0.0
    %vm9393 = vcmp.gt.f32.partialorder %v9316, 0.0
    %vm9394 = vcmp.gt.f32.partialorder %v8962, 0.0
    %vm9395 = vcmp.gt.f32.partialorder %v9318, 0.0
    %vm9396 = vcmp.gt.f32.partialorder %v8965, 0.0
    %vm9397 = vcmp.gt.f32.partialorder %v9321, 0.0
    %vm9398 = vcmp.gt.f32.partialorder %v8967, 0.0
    %vm9399 = vcmp.gt.f32.partialorder %v9323, 0.0
    %vm9400 = vcmp.gt.f32.partialorder %v8970, 0.0
    %vm9401 = vcmp.gt.f32.partialorder %v9326, 0.0
    %vm9402 = vcmp.gt.f32.partialorder %v8972, 0.0
    %vm9403 = vcmp.gt.f32.partialorder %v9328, 0.0
    %vm9404 = vcmp.gt.f32.partialorder %v8975, 0.0
    %vm9405 = vcmp.gt.f32.partialorder %v9331, 0.0
    %vm9406 = vcmp.gt.f32.partialorder %v8977, 0.0
    %vm9407 = vcmp.gt.f32.partialorder %v9333, 0.0
    %vm9408 = vcmp.gt.f32.partialorder %v8980, 0.0
    %vm9409 = vcmp.gt.f32.partialorder %v9336, 0.0
    %vm9410 = vcmp.gt.f32.partialorder %v8982, 0.0
    %vm9411 = vcmp.gt.f32.partialorder %v9338, 0.0
    %vm9412 = vcmp.gt.f32.partialorder %v8985, 0.0
    %vm9413 = vcmp.gt.f32.partialorder %v9341, 0.0
    %vm9414 = vcmp.gt.f32.partialorder %v8987, 0.0
    %vm9415 = vcmp.gt.f32.partialorder %v9343, 0.0
    %vm9416 = vcmp.gt.f32.partialorder %v8990, 0.0
    %vm9417 = vcmp.gt.f32.partialorder %v9346, 0.0
    %vm9418 = vcmp.gt.f32.partialorder %v8992, 0.0
    %vm9419 = vcmp.gt.f32.partialorder %v9348, 0.0
    %vm9420 = vcmp.gt.f32.partialorder %v8995, 0.0
    %vm9421 = vcmp.gt.f32.partialorder %v9351, 0.0
    %vm9422 = vcmp.gt.f32.partialorder %v8997, 0.0
    %vm9423 = vcmp.gt.f32.partialorder %v9353, 0.0
    %vm9424 = vcmp.gt.f32.partialorder %v9000, 0.0
    %vm9425 = vcmp.gt.f32.partialorder %v9356, 0.0
    %vm9426 = vcmp.gt.f32.partialorder %v9002, 0.0
    %vm9427 = vcmp.gt.f32.partialorder %v9358, 0.0
    %vm9428 = vcmp.gt.f32.partialorder %v9005, 0.0
    %vm9429 = vcmp.gt.f32.partialorder %v9361, 0.0
    %vm9430 = vcmp.gt.f32.partialorder %v9007, 0.0
    %vm9431 = vcmp.gt.f32.partialorder %v9363, 0.0
    %vm9432 = vcmp.gt.f32.partialorder %v9010, 0.0
    %vm9433 = vcmp.gt.f32.partialorder %v9366, 0.0
    %vm9434 = vcmp.gt.f32.partialorder %v9012, 0.0
    %vm9435 = vcmp.gt.f32.partialorder %v9368, 0.0
    %vm9436 = vcmp.gt.f32.partialorder %v9015, 0.0
    %vm9437 = vcmp.gt.f32.partialorder %v9371, 0.0
    %vm9438 = vcmp.gt.f32.partialorder %v9017, 0.0
    %vm9439 = vcmp.gt.f32.partialorder %v9373, 0.0
    %vm9440 = vcmp.gt.f32.partialorder %v9020, 0.0
    %vm9441 = vcmp.gt.f32.partialorder %v9376, 0.0
    %vm9442 = vcmp.gt.f32.partialorder %v9022, 0.0
    %vm9443 = vcmp.gt.f32.partialorder %v9378, 0.0
    %v9444 = vmul.f32 %v8945, 0.2
    %v9445 = vmul.f32 %v9301, 0.2
    %v9446 = vmul.f32 %v8947, 0.2
    %v9447 = vmul.f32 %v9303, 0.2
    %v9448 = vmul.f32 %v8950, 0.2
    %v9449 = vmul.f32 %v9306, 0.2
    %v9450 = vmul.f32 %v8952, 0.2
    %v9451 = vmul.f32 %v9308, 0.2
    %v9452 = vmul.f32 %v8955, 0.2
    %v9453 = vmul.f32 %v9311, 0.2
    %v9454 = vmul.f32 %v8957, 0.2
    %v9455 = vmul.f32 %v9313, 0.2
    %v9456 = vmul.f32 %v8960, 0.2
    %v9457 = vmul.f32 %v9316, 0.2
    %v9458 = vmul.f32 %v8962, 0.2
    %v9459 = vmul.f32 %v9318, 0.2
    %v9460 = vmul.f32 %v8965, 0.2
    %v9461 = vmul.f32 %v9321, 0.2
    %v9462 = vmul.f32 %v8967, 0.2
    %v9463 = vmul.f32 %v9323, 0.2
    %v9464 = vmul.f32 %v8970, 0.2
    %v9465 = vmul.f32 %v9326, 0.2
    %v9466 = vmul.f32 %v8972, 0.2
    %v9467 = vmul.f32 %v9328, 0.2
    %v9468 = vmul.f32 %v8975, 0.2
    %v9469 = vmul.f32 %v9331, 0.2
    %v9470 = vmul.f32 %v8977, 0.2
    %v9471 = vmul.f32 %v9333, 0.2
    %v9472 = vmul.f32 %v8980, 0.2
    %v9473 = vmul.f32 %v9336, 0.2
    %v9474 = vmul.f32 %v8982, 0.2
    %v9475 = vmul.f32 %v9338, 0.2
    %v9476 = vmul.f32 %v8985, 0.2
    %v9477 = vmul.f32 %v9341, 0.2
    %v9478 = vmul.f32 %v8987, 0.2
    %v9479 = vmul.f32 %v9343, 0.2
    %v9480 = vmul.f32 %v8990, 0.2
    %v9481 = vmul.f32 %v9346, 0.2
    %v9482 = vmul.f32 %v8992, 0.2
    %v9483 = vmul.f32 %v9348, 0.2
    %v9484 = vmul.f32 %v8995, 0.2
    %v9485 = vmul.f32 %v9351, 0.2
    %v9486 = vmul.f32 %v8997, 0.2
    %v9487 = vmul.f32 %v9353, 0.2
    %v9488 = vmul.f32 %v9000, 0.2
    %v9489 = vmul.f32 %v9356, 0.2
    %v9490 = vmul.f32 %v9002, 0.2
    %v9491 = vmul.f32 %v9358, 0.2
    %v9492 = vmul.f32 %v9005, 0.2
    %v9493 = vmul.f32 %v9361, 0.2
    %v9494 = vmul.f32 %v9007, 0.2
    %v9495 = vmul.f32 %v9363, 0.2
    %v9496 = vmul.f32 %v9010, 0.2
    %v9497 = vmul.f32 %v9366, 0.2
    %v9498 = vmul.f32 %v9012, 0.2
    %v9499 = vmul.f32 %v9368, 0.2
    %v9500 = vmul.f32 %v9015, 0.2
    %v9501 = vmul.f32 %v9371, 0.2
    %v9502 = vmul.f32 %v9017, 0.2
    %v9503 = vmul.f32 %v9373, 0.2
    %v9504 = vmul.f32 %v9020, 0.2
    %v9505 = vmul.f32 %v9376, 0.2
    %v9506 = vmul.f32 %v9022, 0.2
    %v9507 = vmul.f32 %v9378, 0.2
    %v9508 = vsel %vm9380, %v8945, %v9444
    %v9509 = vsel %vm9381, %v9301, %v9445
    %v9510 = vsel %vm9382, %v8947, %v9446
    %v9511 = vsel %vm9383, %v9303, %v9447
    %v9512 = vsel %vm9384, %v8950, %v9448
    %v9513 = vsel %vm9385, %v9306, %v9449
    %v9514 = vsel %vm9386, %v8952, %v9450
    %v9515 = vsel %vm9387, %v9308, %v9451
    %v9516 = vsel %vm9388, %v8955, %v9452
    %v9517 = vsel %vm9389, %v9311, %v9453
    %v9518 = vsel %vm9390, %v8957, %v9454
    %v9519 = vsel %vm9391, %v9313, %v9455
    %v9520 = vsel %vm9392, %v8960, %v9456
    %v9521 = vsel %vm9393, %v9316, %v9457
    %v9522 = vsel %vm9394, %v8962, %v9458
    %v9523 = vsel %vm9395, %v9318, %v9459
    %v9524 = vsel %vm9396, %v8965, %v9460
    %v9525 = vsel %vm9397, %v9321, %v9461
    %v9526 = vsel %vm9398, %v8967, %v9462
    %v9527 = vsel %vm9399, %v9323, %v9463
    %v9528 = vsel %vm9400, %v8970, %v9464
    %v9529 = vsel %vm9401, %v9326, %v9465
    %v9530 = vsel %vm9402, %v8972, %v9466
    %v9531 = vsel %vm9403, %v9328, %v9467
    %v9532 = vsel %vm9404, %v8975, %v9468
    %v9533 = vsel %vm9405, %v9331, %v9469
    %v9534 = vsel %vm9406, %v8977, %v9470
    %v9535 = vsel %vm9407, %v9333, %v9471
    %v9536 = vsel %vm9408, %v8980, %v9472
    %v9537 = vsel %vm9409, %v9336, %v9473
    %v9538 = vsel %vm9410, %v8982, %v9474
    %v9539 = vsel %vm9411, %v9338, %v9475
    %v9540 = vsel %vm9412, %v8985, %v9476
    %v9541 = vsel %vm9413, %v9341, %v9477
    %v9542 = vsel %vm9414, %v8987, %v9478
    %v9543 = vsel %vm9415, %v9343, %v9479
    %v9544 = vsel %vm9416, %v8990, %v9480
    %v9545 = vsel %vm9417, %v9346, %v9481
    %v9546 = vsel %vm9418, %v8992, %v9482
    %v9547 = vsel %vm9419, %v9348, %v9483
    %v9548 = vsel %vm9420, %v8995, %v9484
    %v9549 = vsel %vm9421, %v9351, %v9485
    %v9550 = vsel %vm9422, %v8997, %v9486
    %v9551 = vsel %vm9423, %v9353, %v9487
    %v9552 = vsel %vm9424, %v9000, %v9488
    %v9553 = vsel %vm9425, %v9356, %v9489
    %v9554 = vsel %vm9426, %v9002, %v9490
    %v9555 = vsel %vm9427, %v9358, %v9491
    %v9556 = vsel %vm9428, %v9005, %v9492
    %v9557 = vsel %vm9429, %v9361, %v9493
    %v9558 = vsel %vm9430, %v9007, %v9494
    %v9559 = vsel %vm9431, %v9363, %v9495
    %v9560 = vsel %vm9432, %v9010, %v9496
    %v9561 = vsel %vm9433, %v9366, %v9497
    %v9562 = vsel %vm9434, %v9012, %v9498
    %v9563 = vsel %vm9435, %v9368, %v9499
    %v9564 = vsel %vm9436, %v9015, %v9500
    %v9565 = vsel %vm9437, %v9371, %v9501
    %v9566 = vsel %vm9438, %v9017, %v9502
    %v9567 = vsel %vm9439, %v9373, %v9503
    %v9568 = vsel %vm9440, %v9020, %v9504
    %v9569 = vsel %vm9441, %v9376, %v9505
    %v9570 = vsel %vm9442, %v9022, %v9506
    %v9571 = vsel %vm9443, %v9378, %v9507
    %v9572 = vpack.c.bf16 %v9510, %v9508
    %v9573 = vpack.c.bf16 %v9511, %v9509
    %v9574 = vpack.c.bf16 %v9514, %v9512
    %v9575 = vpack.c.bf16 %v9515, %v9513
    %v9576 = vpack.c.bf16 %v9518, %v9516
    %v9577 = vpack.c.bf16 %v9519, %v9517
    %v9578 = vpack.c.bf16 %v9522, %v9520
    %v9579 = vpack.c.bf16 %v9523, %v9521
    %v9580 = vpack.c.bf16 %v9526, %v9524
    %v9581 = vpack.c.bf16 %v9527, %v9525
    %v9582 = vpack.c.bf16 %v9530, %v9528
    %v9583 = vpack.c.bf16 %v9531, %v9529
    %v9584 = vpack.c.bf16 %v9534, %v9532
    %v9585 = vpack.c.bf16 %v9535, %v9533
    %v9586 = vpack.c.bf16 %v9538, %v9536
    %v9587 = vpack.c.bf16 %v9539, %v9537
    %v9588 = vpack.c.bf16 %v9542, %v9540
    %v9589 = vpack.c.bf16 %v9543, %v9541
    %v9590 = vpack.c.bf16 %v9546, %v9544
    %v9591 = vpack.c.bf16 %v9547, %v9545
    %v9592 = vpack.c.bf16 %v9550, %v9548
    %v9593 = vpack.c.bf16 %v9551, %v9549
    %v9594 = vpack.c.bf16 %v9554, %v9552
    %v9595 = vpack.c.bf16 %v9555, %v9553
    %v9596 = vpack.c.bf16 %v9558, %v9556
    %v9597 = vpack.c.bf16 %v9559, %v9557
    %v9598 = vpack.c.bf16 %v9562, %v9560
    %v9599 = vpack.c.bf16 %v9563, %v9561
    %v9600 = vpack.c.bf16 %v9566, %v9564
    %v9601 = vpack.c.bf16 %v9567, %v9565
    %v9602 = vpack.c.bf16 %v9570, %v9568
    %v9603 = vpack.c.bf16 %v9571, %v9569
    %v9604 = vld [vmem:[#allocation13] sm:$0xf]
    %v9605 = vld [vmem:[#allocation13 + $0x4] sm:$0xf]
    %v9606 = vld [vmem:[#allocation13 + $0x8] sm:$0xf]
    %v9607 = vld [vmem:[#allocation13 + $0xc] sm:$0xf]
    %v9608 = vld [vmem:[#allocation13 + $0x10] sm:$0xf]
    %v9609 = vld [vmem:[#allocation13 + $0x14] sm:$0xf]
    %v9610 = vld [vmem:[#allocation13 + $0x18] sm:$0xf]
    %v9611 = vld [vmem:[#allocation13 + $0x1c] sm:$0xf]
    %v9612 = vld [vmem:[#allocation13 + $0x20] sm:$0xf]
    %v9613 = vld [vmem:[#allocation13 + $0x24] sm:$0xf]
    %v9614 = vld [vmem:[#allocation13 + $0x28] sm:$0xf]
    %v9615 = vld [vmem:[#allocation13 + $0x2c] sm:$0xf]
    %v9616 = vld [vmem:[#allocation13 + $0x30] sm:$0xf]
    %v9617 = vld [vmem:[#allocation13 + $0x34] sm:$0xf]
    %v9618 = vld [vmem:[#allocation13 + $0x38] sm:$0xf]
    %v9619 = vld [vmem:[#allocation13 + $0x3c] sm:$0xf]
    %v9620 = vld [vmem:[#allocation13 + $0x40] sm:$0xf]
    %v9621 = vld [vmem:[#allocation13 + $0x44] sm:$0xf]
    %v9622 = vld [vmem:[#allocation13 + $0x48] sm:$0xf]
    %v9623 = vld [vmem:[#allocation13 + $0x4c] sm:$0xf]
    %v9624 = vld [vmem:[#allocation13 + $0x50] sm:$0xf]
    %v9625 = vld [vmem:[#allocation13 + $0x54] sm:$0xf]
    %v9626 = vld [vmem:[#allocation13 + $0x58] sm:$0xf]
    %v9627 = vld [vmem:[#allocation13 + $0x5c] sm:$0xf]
    %v9628 = vld [vmem:[#allocation13 + $0x60] sm:$0xf]
    %v9629 = vld [vmem:[#allocation13 + $0x64] sm:$0xf]
    %v9630 = vld [vmem:[#allocation13 + $0x68] sm:$0xf]
    %v9631 = vld [vmem:[#allocation13 + $0x6c] sm:$0xf]
    %v9632 = vld [vmem:[#allocation13 + $0x70] sm:$0xf]
    %v9633 = vld [vmem:[#allocation13 + $0x74] sm:$0xf]
    %v9634 = vld [vmem:[#allocation13 + $0x78] sm:$0xf]
    %v9635 = vld [vmem:[#allocation13 + $0x7c] sm:$0xf]
    %v9636 = vld [vmem:[%s8] sm:$0x1]
    %v9638 = vperm.slane %v9636, 0
    %v9672 = vunpack.c.l.b16 %v9604
    %v9673 = vunpack.c.l.b16 %v9605
    %v9674 = vunpack.c.l.b16 %v9606
    %v9675 = vunpack.c.l.b16 %v9607
    %v9676 = vunpack.c.l.b16 %v9608
    %v9677 = vunpack.c.l.b16 %v9609
    %v9678 = vunpack.c.l.b16 %v9610
    %v9679 = vunpack.c.l.b16 %v9611
    %v9680 = vunpack.c.l.b16 %v9612
    %v9681 = vunpack.c.l.b16 %v9613
    %v9682 = vunpack.c.l.b16 %v9614
    %v9683 = vunpack.c.l.b16 %v9615
    %v9684 = vunpack.c.l.b16 %v9616
    %v9685 = vunpack.c.l.b16 %v9617
    %v9686 = vunpack.c.l.b16 %v9618
    %v9687 = vunpack.c.l.b16 %v9619
    %v9688 = vunpack.c.l.b16 %v9620
    %v9689 = vunpack.c.l.b16 %v9621
    %v9690 = vunpack.c.l.b16 %v9622
    %v9691 = vunpack.c.l.b16 %v9623
    %v9692 = vunpack.c.l.b16 %v9624
    %v9693 = vunpack.c.l.b16 %v9625
    %v9694 = vunpack.c.l.b16 %v9626
    %v9695 = vunpack.c.l.b16 %v9627
    %v9696 = vunpack.c.l.b16 %v9628
    %v9697 = vunpack.c.l.b16 %v9629
    %v9698 = vunpack.c.l.b16 %v9630
    %v9699 = vunpack.c.l.b16 %v9631
    %v9700 = vunpack.c.l.b16 %v9632
    %v9701 = vunpack.c.l.b16 %v9633
    %v9702 = vunpack.c.l.b16 %v9634
    %v9703 = vunpack.c.l.b16 %v9635
    %v9704 = vpack.c.b16 %v9673, %v9672
    %v9705 = vpack.c.b16 %v9675, %v9674
    %v9706 = vpack.c.b16 %v9677, %v9676
    %v9707 = vpack.c.b16 %v9679, %v9678
    %v9708 = vpack.c.b16 %v9681, %v9680
    %v9709 = vpack.c.b16 %v9683, %v9682
    %v9710 = vpack.c.b16 %v9685, %v9684
    %v9711 = vpack.c.b16 %v9687, %v9686
    %v9712 = vpack.c.b16 %v9689, %v9688
    %v9713 = vpack.c.b16 %v9691, %v9690
    %v9714 = vpack.c.b16 %v9693, %v9692
    %v9715 = vpack.c.b16 %v9695, %v9694
    %v9716 = vpack.c.b16 %v9697, %v9696
    %v9717 = vpack.c.b16 %v9699, %v9698
    %v9718 = vpack.c.b16 %v9701, %v9700
    %v9719 = vpack.c.b16 %v9703, %v9702
    %9736 = vmatpush.bf16.msra.mxu0 %v9711
    %9737 = vmatpush.bf16.msra.mxu0 %v9710
    %9738 = vmatpush.bf16.msra.mxu0 %v9709
    %9739 = vmatpush.bf16.msra.mxu0 %v9708
    %9740 = vmatpush.bf16.msra.mxu0 %v9707
    %9741 = vmatpush.bf16.msra.mxu0 %v9706
    %9742 = vmatpush.bf16.msra.mxu0 %v9705
    %9743 = vmatpush.bf16.msra.mxu0 %v9704
    %9744 = vmatmul.bf16.gmra.mxu0 %v9572
    %v9745 = vpop.f32.mrf.mxu0
    %v9746 = vadd.f32 %v9638, %v9745
    %v9747 = vpop.f32.mrf.mxu0
    %v9748 = vadd.f32 %v9638, %v9747
    %9749 = vmatmul.bf16.gmra.mxu0 %v9574
    %v9750 = vpop.f32.mrf.mxu0
    %v9751 = vadd.f32 %v9638, %v9750
    %v9752 = vpop.f32.mrf.mxu0
    %v9753 = vadd.f32 %v9638, %v9752
    %9754 = vmatmul.bf16.gmra.mxu0 %v9576
    %v9755 = vpop.f32.mrf.mxu0
    %v9756 = vadd.f32 %v9638, %v9755
    %v9757 = vpop.f32.mrf.mxu0
    %v9758 = vadd.f32 %v9638, %v9757
    %9759 = vmatmul.bf16.gmra.mxu0 %v9578
    %v9760 = vpop.f32.mrf.mxu0
    %v9761 = vadd.f32 %v9638, %v9760
    %v9762 = vpop.f32.mrf.mxu0
    %v9763 = vadd.f32 %v9638, %v9762
    %9764 = vmatmul.bf16.gmra.mxu0 %v9580
    %v9765 = vpop.f32.mrf.mxu0
    %v9766 = vadd.f32 %v9638, %v9765
    %v9767 = vpop.f32.mrf.mxu0
    %v9768 = vadd.f32 %v9638, %v9767
    %9769 = vmatmul.bf16.gmra.mxu0 %v9582
    %v9770 = vpop.f32.mrf.mxu0
    %v9771 = vadd.f32 %v9638, %v9770
    %v9772 = vpop.f32.mrf.mxu0
    %v9773 = vadd.f32 %v9638, %v9772
    %9774 = vmatmul.bf16.gmra.mxu0 %v9584
    %v9775 = vpop.f32.mrf.mxu0
    %v9776 = vadd.f32 %v9638, %v9775
    %v9777 = vpop.f32.mrf.mxu0
    %v9778 = vadd.f32 %v9638, %v9777
    %9779 = vmatmul.bf16.gmra.mxu0 %v9586
    %v9780 = vpop.f32.mrf.mxu0
    %v9781 = vadd.f32 %v9638, %v9780
    %v9782 = vpop.f32.mrf.mxu0
    %v9783 = vadd.f32 %v9638, %v9782
    %9784 = vmatmul.bf16.gmra.mxu0 %v9588
    %v9785 = vpop.f32.mrf.mxu0
    %v9786 = vadd.f32 %v9638, %v9785
    %v9787 = vpop.f32.mrf.mxu0
    %v9788 = vadd.f32 %v9638, %v9787
    %9789 = vmatmul.bf16.gmra.mxu0 %v9590
    %v9790 = vpop.f32.mrf.mxu0
    %v9791 = vadd.f32 %v9638, %v9790
    %v9792 = vpop.f32.mrf.mxu0
    %v9793 = vadd.f32 %v9638, %v9792
    %9794 = vmatmul.bf16.gmra.mxu0 %v9592
    %v9795 = vpop.f32.mrf.mxu0
    %v9796 = vadd.f32 %v9638, %v9795
    %v9797 = vpop.f32.mrf.mxu0
    %v9798 = vadd.f32 %v9638, %v9797
    %9799 = vmatmul.bf16.gmra.mxu0 %v9594
    %v9800 = vpop.f32.mrf.mxu0
    %v9801 = vadd.f32 %v9638, %v9800
    %v9802 = vpop.f32.mrf.mxu0
    %v9803 = vadd.f32 %v9638, %v9802
    %9804 = vmatmul.bf16.gmra.mxu0 %v9596
    %v9805 = vpop.f32.mrf.mxu0
    %v9806 = vadd.f32 %v9638, %v9805
    %v9807 = vpop.f32.mrf.mxu0
    %v9808 = vadd.f32 %v9638, %v9807
    %9809 = vmatmul.bf16.gmra.mxu0 %v9598
    %v9810 = vpop.f32.mrf.mxu0
    %v9811 = vadd.f32 %v9638, %v9810
    %v9812 = vpop.f32.mrf.mxu0
    %v9813 = vadd.f32 %v9638, %v9812
    %9814 = vmatmul.bf16.gmra.mxu0 %v9600
    %v9815 = vpop.f32.mrf.mxu0
    %v9816 = vadd.f32 %v9638, %v9815
    %v9817 = vpop.f32.mrf.mxu0
    %v9818 = vadd.f32 %v9638, %v9817
    %9819 = vmatmul.bf16.gmra.mxu0 %v9602
    %v9820 = vpop.f32.mrf.mxu0
    %v9821 = vadd.f32 %v9638, %v9820
    %v9822 = vpop.f32.mrf.mxu0
    %v9823 = vadd.f32 %v9638, %v9822
    %9824 = vdwg.mxu0
    %9825 = vmatpush.bf16.msra.mxu0 %v9719
    %9826 = vmatpush.bf16.msra.mxu0 %v9718
    %9827 = vmatpush.bf16.msra.mxu0 %v9717
    %9828 = vmatpush.bf16.msra.mxu0 %v9716
    %9829 = vmatpush.bf16.msra.mxu0 %v9715
    %9830 = vmatpush.bf16.msra.mxu0 %v9714
    %9831 = vmatpush.bf16.msra.mxu0 %v9713
    %9832 = vmatpush.bf16.msra.mxu0 %v9712
    %9833 = vmatmul.bf16.gmra.mxu0 %v9573
    %v9834 = vpop.f32.mrf.mxu0
    %v9835 = vadd.f32 %v9746, %v9834
    %v9836 = vpop.f32.mrf.mxu0
    %v9837 = vadd.f32 %v9748, %v9836
    %9838 = vmatmul.bf16.gmra.mxu0 %v9575
    %v9839 = vpop.f32.mrf.mxu0
    %v9840 = vadd.f32 %v9751, %v9839
    %v9841 = vpop.f32.mrf.mxu0
    %v9842 = vadd.f32 %v9753, %v9841
    %9843 = vmatmul.bf16.gmra.mxu0 %v9577
    %v9844 = vpop.f32.mrf.mxu0
    %v9845 = vadd.f32 %v9756, %v9844
    %v9846 = vpop.f32.mrf.mxu0
    %v9847 = vadd.f32 %v9758, %v9846
    %9848 = vmatmul.bf16.gmra.mxu0 %v9579
    %v9849 = vpop.f32.mrf.mxu0
    %v9850 = vadd.f32 %v9761, %v9849
    %v9851 = vpop.f32.mrf.mxu0
    %v9852 = vadd.f32 %v9763, %v9851
    %9853 = vmatmul.bf16.gmra.mxu0 %v9581
    %v9854 = vpop.f32.mrf.mxu0
    %v9855 = vadd.f32 %v9766, %v9854
    %v9856 = vpop.f32.mrf.mxu0
    %v9857 = vadd.f32 %v9768, %v9856
    %9858 = vmatmul.bf16.gmra.mxu0 %v9583
    %v9859 = vpop.f32.mrf.mxu0
    %v9860 = vadd.f32 %v9771, %v9859
    %v9861 = vpop.f32.mrf.mxu0
    %v9862 = vadd.f32 %v9773, %v9861
    %9863 = vmatmul.bf16.gmra.mxu0 %v9585
    %v9864 = vpop.f32.mrf.mxu0
    %v9865 = vadd.f32 %v9776, %v9864
    %v9866 = vpop.f32.mrf.mxu0
    %v9867 = vadd.f32 %v9778, %v9866
    %9868 = vmatmul.bf16.gmra.mxu0 %v9587
    %v9869 = vpop.f32.mrf.mxu0
    %v9870 = vadd.f32 %v9781, %v9869
    %v9871 = vpop.f32.mrf.mxu0
    %v9872 = vadd.f32 %v9783, %v9871
    %9873 = vmatmul.bf16.gmra.mxu0 %v9589
    %v9874 = vpop.f32.mrf.mxu0
    %v9875 = vadd.f32 %v9786, %v9874
    %v9876 = vpop.f32.mrf.mxu0
    %v9877 = vadd.f32 %v9788, %v9876
    %9878 = vmatmul.bf16.gmra.mxu0 %v9591
    %v9879 = vpop.f32.mrf.mxu0
    %v9880 = vadd.f32 %v9791, %v9879
    %v9881 = vpop.f32.mrf.mxu0
    %v9882 = vadd.f32 %v9793, %v9881
    %9883 = vmatmul.bf16.gmra.mxu0 %v9593
    %v9884 = vpop.f32.mrf.mxu0
    %v9885 = vadd.f32 %v9796, %v9884
    %v9886 = vpop.f32.mrf.mxu0
    %v9887 = vadd.f32 %v9798, %v9886
    %9888 = vmatmul.bf16.gmra.mxu0 %v9595
    %v9889 = vpop.f32.mrf.mxu0
    %v9890 = vadd.f32 %v9801, %v9889
    %v9891 = vpop.f32.mrf.mxu0
    %v9892 = vadd.f32 %v9803, %v9891
    %9893 = vmatmul.bf16.gmra.mxu0 %v9597
    %v9894 = vpop.f32.mrf.mxu0
    %v9895 = vadd.f32 %v9806, %v9894
    %v9896 = vpop.f32.mrf.mxu0
    %v9897 = vadd.f32 %v9808, %v9896
    %9898 = vmatmul.bf16.gmra.mxu0 %v9599
    %v9899 = vpop.f32.mrf.mxu0
    %v9900 = vadd.f32 %v9811, %v9899
    %v9901 = vpop.f32.mrf.mxu0
    %v9902 = vadd.f32 %v9813, %v9901
    %9903 = vmatmul.bf16.gmra.mxu0 %v9601
    %v9904 = vpop.f32.mrf.mxu0
    %v9905 = vadd.f32 %v9816, %v9904
    %v9906 = vpop.f32.mrf.mxu0
    %v9907 = vadd.f32 %v9818, %v9906
    %9908 = vmatmul.bf16.gmra.mxu0 %v9603
    %v9909 = vpop.f32.mrf.mxu0
    %v9910 = vadd.f32 %v9821, %v9909
    %v9911 = vpop.f32.mrf.mxu0
    %v9912 = vadd.f32 %v9823, %v9911
    %9913 = vdwg.mxu0
    %v9914 = vxor.u32 %v9835, 2147483648
    %v9915 = vxor.u32 %v9837, 2147483648
    %v9916 = vxor.u32 %v9840, 2147483648
    %v9917 = vxor.u32 %v9842, 2147483648
    %v9918 = vxor.u32 %v9845, 2147483648
    %v9919 = vxor.u32 %v9847, 2147483648
    %v9920 = vxor.u32 %v9850, 2147483648
    %v9921 = vxor.u32 %v9852, 2147483648
    %v9922 = vxor.u32 %v9855, 2147483648
    %v9923 = vxor.u32 %v9857, 2147483648
    %v9924 = vxor.u32 %v9860, 2147483648
    %v9925 = vxor.u32 %v9862, 2147483648
    %v9926 = vxor.u32 %v9865, 2147483648
    %v9927 = vxor.u32 %v9867, 2147483648
    %v9928 = vxor.u32 %v9870, 2147483648
    %v9929 = vxor.u32 %v9872, 2147483648
    %v9930 = vxor.u32 %v9875, 2147483648
    %v9931 = vxor.u32 %v9877, 2147483648
    %v9932 = vxor.u32 %v9880, 2147483648
    %v9933 = vxor.u32 %v9882, 2147483648
    %v9934 = vxor.u32 %v9885, 2147483648
    %v9935 = vxor.u32 %v9887, 2147483648
    %v9936 = vxor.u32 %v9890, 2147483648
    %v9937 = vxor.u32 %v9892, 2147483648
    %v9938 = vxor.u32 %v9895, 2147483648
    %v9939 = vxor.u32 %v9897, 2147483648
    %v9940 = vxor.u32 %v9900, 2147483648
    %v9941 = vxor.u32 %v9902, 2147483648
    %v9942 = vxor.u32 %v9905, 2147483648
    %v9943 = vxor.u32 %v9907, 2147483648
    %v9944 = vxor.u32 %v9910, 2147483648
    %v9945 = vxor.u32 %v9912, 2147483648
    %v9946 = vmul.f32 %v9914, 1.442695
    %v9947 = vpow.pop %v9946
    %v9948 = vmul.f32 %v9915, 1.442695
    %v9949 = vpow.pop %v9948
    %v9950 = vmul.f32 %v9916, 1.442695
    %v9951 = vpow.pop %v9950
    %v9952 = vmul.f32 %v9917, 1.442695
    %v9953 = vpow.pop %v9952
    %v9954 = vmul.f32 %v9918, 1.442695
    %v9955 = vpow.pop %v9954
    %v9956 = vmul.f32 %v9919, 1.442695
    %v9957 = vpow.pop %v9956
    %v9958 = vmul.f32 %v9920, 1.442695
    %v9959 = vpow.pop %v9958
    %v9960 = vmul.f32 %v9921, 1.442695
    %v9961 = vpow.pop %v9960
    %v9962 = vmul.f32 %v9922, 1.442695
    %v9963 = vpow.pop %v9962
    %v9964 = vmul.f32 %v9923, 1.442695
    %v9965 = vpow.pop %v9964
    %v9966 = vmul.f32 %v9924, 1.442695
    %v9967 = vpow.pop %v9966
    %v9968 = vmul.f32 %v9925, 1.442695
    %v9969 = vpow.pop %v9968
    %v9970 = vmul.f32 %v9926, 1.442695
    %v9971 = vpow.pop %v9970
    %v9972 = vmul.f32 %v9927, 1.442695
    %v9973 = vpow.pop %v9972
    %v9974 = vmul.f32 %v9928, 1.442695
    %v9975 = vpow.pop %v9974
    %v9976 = vmul.f32 %v9929, 1.442695
    %v9977 = vpow.pop %v9976
    %v9978 = vmul.f32 %v9930, 1.442695
    %v9979 = vpow.pop %v9978
    %v9980 = vmul.f32 %v9931, 1.442695
    %v9981 = vpow.pop %v9980
    %v9982 = vmul.f32 %v9932, 1.442695
    %v9983 = vpow.pop %v9982
    %v9984 = vmul.f32 %v9933, 1.442695
    %v9985 = vpow.pop %v9984
    %v9986 = vmul.f32 %v9934, 1.442695
    %v9987 = vpow.pop %v9986
    %v9988 = vmul.f32 %v9935, 1.442695
    %v9989 = vpow.pop %v9988
    %v9990 = vmul.f32 %v9936, 1.442695
    %v9991 = vpow.pop %v9990
    %v9992 = vmul.f32 %v9937, 1.442695
    %v9993 = vpow.pop %v9992
    %v9994 = vmul.f32 %v9938, 1.442695
    %v9995 = vpow.pop %v9994
    %v9996 = vmul.f32 %v9939, 1.442695
    %v9997 = vpow.pop %v9996
    %v9998 = vmul.f32 %v9940, 1.442695
    %v9999 = vpow.pop %v9998
    %v10000 = vmul.f32 %v9941, 1.442695
    %v10001 = vpow.pop %v10000
    %v10002 = vmul.f32 %v9942, 1.442695
    %v10003 = vpow.pop %v10002
    %v10004 = vmul.f32 %v9943, 1.442695
    %v10005 = vpow.pop %v10004
    %v10006 = vmul.f32 %v9944, 1.442695
    %v10007 = vpow.pop %v10006
    %v10008 = vmul.f32 %v9945, 1.442695
    %v10009 = vpow.pop %v10008
    %v10010 = vadd.f32 %v9947, 1.0
    %v10011 = vadd.f32 %v9949, 1.0
    %v10012 = vadd.f32 %v9951, 1.0
    %v10013 = vadd.f32 %v9953, 1.0
    %v10014 = vadd.f32 %v9955, 1.0
    %v10015 = vadd.f32 %v9957, 1.0
    %v10016 = vadd.f32 %v9959, 1.0
    %v10017 = vadd.f32 %v9961, 1.0
    %v10018 = vadd.f32 %v9963, 1.0
    %v10019 = vadd.f32 %v9965, 1.0
    %v10020 = vadd.f32 %v9967, 1.0
    %v10021 = vadd.f32 %v9969, 1.0
    %v10022 = vadd.f32 %v9971, 1.0
    %v10023 = vadd.f32 %v9973, 1.0
    %v10024 = vadd.f32 %v9975, 1.0
    %v10025 = vadd.f32 %v9977, 1.0
    %v10026 = vadd.f32 %v9979, 1.0
    %v10027 = vadd.f32 %v9981, 1.0
    %v10028 = vadd.f32 %v9983, 1.0
    %v10029 = vadd.f32 %v9985, 1.0
    %v10030 = vadd.f32 %v9987, 1.0
    %v10031 = vadd.f32 %v9989, 1.0
    %v10032 = vadd.f32 %v9991, 1.0
    %v10033 = vadd.f32 %v9993, 1.0
    %v10034 = vadd.f32 %v9995, 1.0
    %v10035 = vadd.f32 %v9997, 1.0
    %v10036 = vadd.f32 %v9999, 1.0
    %v10037 = vadd.f32 %v10001, 1.0
    %v10038 = vadd.f32 %v10003, 1.0
    %v10039 = vadd.f32 %v10005, 1.0
    %v10040 = vadd.f32 %v10007, 1.0
    %v10041 = vadd.f32 %v10009, 1.0
    %v10042 = vrcp.pop %v10010
    %v10043 = vmul.f32 %v10010, %v10042
    %v10044 = vsub.f32 1.0, %v10043
    %v10045 = vmul.f32 %v10042, %v10044
    %v10046 = vadd.f32 %v10042, %v10045
    %vm10047 = vweird.f32 %v10010
    %vm10048 = vweird.f32 %v10042
    %vm10049 = vmor %vm10047, %vm10048
    %v10050 = vsel %vm10049, %v10042, %v10046
    %v10051 = vand.u32 2147483647, %v10010
    %vm10052 = vcmp.eq.f32.partialorder %v10051, 8.507059e+37
    %v10053 = vand.u32 %v10010, 2147483648
    %v10054 = vor.u32 1.1754944e-38, %v10053
    %v10055 = vsel %vm10052, %v10054, %v10050
    %v10056 = vmul.f32 1.0, %v10055
    %v10057 = vrcp.pop %v10011
    %v10058 = vmul.f32 %v10011, %v10057
    %v10059 = vsub.f32 1.0, %v10058
    %v10060 = vmul.f32 %v10057, %v10059
    %v10061 = vadd.f32 %v10057, %v10060
    %vm10062 = vweird.f32 %v10011
    %vm10063 = vweird.f32 %v10057
    %vm10064 = vmor %vm10062, %vm10063
    %v10065 = vsel %vm10064, %v10057, %v10061
    %v10066 = vand.u32 2147483647, %v10011
    %vm10067 = vcmp.eq.f32.partialorder %v10066, 8.507059e+37
    %v10068 = vand.u32 %v10011, 2147483648
    %v10069 = vor.u32 1.1754944e-38, %v10068
    %v10070 = vsel %vm10067, %v10069, %v10065
    %v10071 = vmul.f32 1.0, %v10070
    %v10072 = vrcp.pop %v10012
    %v10073 = vmul.f32 %v10012, %v10072
    %v10074 = vsub.f32 1.0, %v10073
    %v10075 = vmul.f32 %v10072, %v10074
    %v10076 = vadd.f32 %v10072, %v10075
    %vm10077 = vweird.f32 %v10012
    %vm10078 = vweird.f32 %v10072
    %vm10079 = vmor %vm10077, %vm10078
    %v10080 = vsel %vm10079, %v10072, %v10076
    %v10081 = vand.u32 2147483647, %v10012
    %vm10082 = vcmp.eq.f32.partialorder %v10081, 8.507059e+37
    %v10083 = vand.u32 %v10012, 2147483648
    %v10084 = vor.u32 1.1754944e-38, %v10083
    %v10085 = vsel %vm10082, %v10084, %v10080
    %v10086 = vmul.f32 1.0, %v10085
    %v10087 = vrcp.pop %v10013
    %v10088 = vmul.f32 %v10013, %v10087
    %v10089 = vsub.f32 1.0, %v10088
    %v10090 = vmul.f32 %v10087, %v10089
    %v10091 = vadd.f32 %v10087, %v10090
    %vm10092 = vweird.f32 %v10013
    %vm10093 = vweird.f32 %v10087
    %vm10094 = vmor %vm10092, %vm10093
    %v10095 = vsel %vm10094, %v10087, %v10091
    %v10096 = vand.u32 2147483647, %v10013
    %vm10097 = vcmp.eq.f32.partialorder %v10096, 8.507059e+37
    %v10098 = vand.u32 %v10013, 2147483648
    %v10099 = vor.u32 1.1754944e-38, %v10098
    %v10100 = vsel %vm10097, %v10099, %v10095
    %v10101 = vmul.f32 1.0, %v10100
    %v10102 = vrcp.pop %v10014
    %v10103 = vmul.f32 %v10014, %v10102
    %v10104 = vsub.f32 1.0, %v10103
    %v10105 = vmul.f32 %v10102, %v10104
    %v10106 = vadd.f32 %v10102, %v10105
    %vm10107 = vweird.f32 %v10014
    %vm10108 = vweird.f32 %v10102
    %vm10109 = vmor %vm10107, %vm10108
    %v10110 = vsel %vm10109, %v10102, %v10106
    %v10111 = vand.u32 2147483647, %v10014
    %vm10112 = vcmp.eq.f32.partialorder %v10111, 8.507059e+37
    %v10113 = vand.u32 %v10014, 2147483648
    %v10114 = vor.u32 1.1754944e-38, %v10113
    %v10115 = vsel %vm10112, %v10114, %v10110
    %v10116 = vmul.f32 1.0, %v10115
    %v10117 = vrcp.pop %v10015
    %v10118 = vmul.f32 %v10015, %v10117
    %v10119 = vsub.f32 1.0, %v10118
    %v10120 = vmul.f32 %v10117, %v10119
    %v10121 = vadd.f32 %v10117, %v10120
    %vm10122 = vweird.f32 %v10015
    %vm10123 = vweird.f32 %v10117
    %vm10124 = vmor %vm10122, %vm10123
    %v10125 = vsel %vm10124, %v10117, %v10121
    %v10126 = vand.u32 2147483647, %v10015
    %vm10127 = vcmp.eq.f32.partialorder %v10126, 8.507059e+37
    %v10128 = vand.u32 %v10015, 2147483648
    %v10129 = vor.u32 1.1754944e-38, %v10128
    %v10130 = vsel %vm10127, %v10129, %v10125
    %v10131 = vmul.f32 1.0, %v10130
    %v10132 = vrcp.pop %v10016
    %v10133 = vmul.f32 %v10016, %v10132
    %v10134 = vsub.f32 1.0, %v10133
    %v10135 = vmul.f32 %v10132, %v10134
    %v10136 = vadd.f32 %v10132, %v10135
    %vm10137 = vweird.f32 %v10016
    %vm10138 = vweird.f32 %v10132
    %vm10139 = vmor %vm10137, %vm10138
    %v10140 = vsel %vm10139, %v10132, %v10136
    %v10141 = vand.u32 2147483647, %v10016
    %vm10142 = vcmp.eq.f32.partialorder %v10141, 8.507059e+37
    %v10143 = vand.u32 %v10016, 2147483648
    %v10144 = vor.u32 1.1754944e-38, %v10143
    %v10145 = vsel %vm10142, %v10144, %v10140
    %v10146 = vmul.f32 1.0, %v10145
    %v10147 = vrcp.pop %v10017
    %v10148 = vmul.f32 %v10017, %v10147
    %v10149 = vsub.f32 1.0, %v10148
    %v10150 = vmul.f32 %v10147, %v10149
    %v10151 = vadd.f32 %v10147, %v10150
    %vm10152 = vweird.f32 %v10017
    %vm10153 = vweird.f32 %v10147
    %vm10154 = vmor %vm10152, %vm10153
    %v10155 = vsel %vm10154, %v10147, %v10151
    %v10156 = vand.u32 2147483647, %v10017
    %vm10157 = vcmp.eq.f32.partialorder %v10156, 8.507059e+37
    %v10158 = vand.u32 %v10017, 2147483648
    %v10159 = vor.u32 1.1754944e-38, %v10158
    %v10160 = vsel %vm10157, %v10159, %v10155
    %v10161 = vmul.f32 1.0, %v10160
    %v10162 = vrcp.pop %v10018
    %v10163 = vmul.f32 %v10018, %v10162
    %v10164 = vsub.f32 1.0, %v10163
    %v10165 = vmul.f32 %v10162, %v10164
    %v10166 = vadd.f32 %v10162, %v10165
    %vm10167 = vweird.f32 %v10018
    %vm10168 = vweird.f32 %v10162
    %vm10169 = vmor %vm10167, %vm10168
    %v10170 = vsel %vm10169, %v10162, %v10166
    %v10171 = vand.u32 2147483647, %v10018
    %vm10172 = vcmp.eq.f32.partialorder %v10171, 8.507059e+37
    %v10173 = vand.u32 %v10018, 2147483648
    %v10174 = vor.u32 1.1754944e-38, %v10173
    %v10175 = vsel %vm10172, %v10174, %v10170
    %v10176 = vmul.f32 1.0, %v10175
    %v10177 = vrcp.pop %v10019
    %v10178 = vmul.f32 %v10019, %v10177
    %v10179 = vsub.f32 1.0, %v10178
    %v10180 = vmul.f32 %v10177, %v10179
    %v10181 = vadd.f32 %v10177, %v10180
    %vm10182 = vweird.f32 %v10019
    %vm10183 = vweird.f32 %v10177
    %vm10184 = vmor %vm10182, %vm10183
    %v10185 = vsel %vm10184, %v10177, %v10181
    %v10186 = vand.u32 2147483647, %v10019
    %vm10187 = vcmp.eq.f32.partialorder %v10186, 8.507059e+37
    %v10188 = vand.u32 %v10019, 2147483648
    %v10189 = vor.u32 1.1754944e-38, %v10188
    %v10190 = vsel %vm10187, %v10189, %v10185
    %v10191 = vmul.f32 1.0, %v10190
    %v10192 = vrcp.pop %v10020
    %v10193 = vmul.f32 %v10020, %v10192
    %v10194 = vsub.f32 1.0, %v10193
    %v10195 = vmul.f32 %v10192, %v10194
    %v10196 = vadd.f32 %v10192, %v10195
    %vm10197 = vweird.f32 %v10020
    %vm10198 = vweird.f32 %v10192
    %vm10199 = vmor %vm10197, %vm10198
    %v10200 = vsel %vm10199, %v10192, %v10196
    %v10201 = vand.u32 2147483647, %v10020
    %vm10202 = vcmp.eq.f32.partialorder %v10201, 8.507059e+37
    %v10203 = vand.u32 %v10020, 2147483648
    %v10204 = vor.u32 1.1754944e-38, %v10203
    %v10205 = vsel %vm10202, %v10204, %v10200
    %v10206 = vmul.f32 1.0, %v10205
    %v10207 = vrcp.pop %v10021
    %v10208 = vmul.f32 %v10021, %v10207
    %v10209 = vsub.f32 1.0, %v10208
    %v10210 = vmul.f32 %v10207, %v10209
    %v10211 = vadd.f32 %v10207, %v10210
    %vm10212 = vweird.f32 %v10021
    %vm10213 = vweird.f32 %v10207
    %vm10214 = vmor %vm10212, %vm10213
    %v10215 = vsel %vm10214, %v10207, %v10211
    %v10216 = vand.u32 2147483647, %v10021
    %vm10217 = vcmp.eq.f32.partialorder %v10216, 8.507059e+37
    %v10218 = vand.u32 %v10021, 2147483648
    %v10219 = vor.u32 1.1754944e-38, %v10218
    %v10220 = vsel %vm10217, %v10219, %v10215
    %v10221 = vmul.f32 1.0, %v10220
    %v10222 = vrcp.pop %v10022
    %v10223 = vmul.f32 %v10022, %v10222
    %v10224 = vsub.f32 1.0, %v10223
    %v10225 = vmul.f32 %v10222, %v10224
    %v10226 = vadd.f32 %v10222, %v10225
    %vm10227 = vweird.f32 %v10022
    %vm10228 = vweird.f32 %v10222
    %vm10229 = vmor %vm10227, %vm10228
    %v10230 = vsel %vm10229, %v10222, %v10226
    %v10231 = vand.u32 2147483647, %v10022
    %vm10232 = vcmp.eq.f32.partialorder %v10231, 8.507059e+37
    %v10233 = vand.u32 %v10022, 2147483648
    %v10234 = vor.u32 1.1754944e-38, %v10233
    %v10235 = vsel %vm10232, %v10234, %v10230
    %v10236 = vmul.f32 1.0, %v10235
    %v10237 = vrcp.pop %v10023
    %v10238 = vmul.f32 %v10023, %v10237
    %v10239 = vsub.f32 1.0, %v10238
    %v10240 = vmul.f32 %v10237, %v10239
    %v10241 = vadd.f32 %v10237, %v10240
    %vm10242 = vweird.f32 %v10023
    %vm10243 = vweird.f32 %v10237
    %vm10244 = vmor %vm10242, %vm10243
    %v10245 = vsel %vm10244, %v10237, %v10241
    %v10246 = vand.u32 2147483647, %v10023
    %vm10247 = vcmp.eq.f32.partialorder %v10246, 8.507059e+37
    %v10248 = vand.u32 %v10023, 2147483648
    %v10249 = vor.u32 1.1754944e-38, %v10248
    %v10250 = vsel %vm10247, %v10249, %v10245
    %v10251 = vmul.f32 1.0, %v10250
    %v10252 = vrcp.pop %v10024
    %v10253 = vmul.f32 %v10024, %v10252
    %v10254 = vsub.f32 1.0, %v10253
    %v10255 = vmul.f32 %v10252, %v10254
    %v10256 = vadd.f32 %v10252, %v10255
    %vm10257 = vweird.f32 %v10024
    %vm10258 = vweird.f32 %v10252
    %vm10259 = vmor %vm10257, %vm10258
    %v10260 = vsel %vm10259, %v10252, %v10256
    %v10261 = vand.u32 2147483647, %v10024
    %vm10262 = vcmp.eq.f32.partialorder %v10261, 8.507059e+37
    %v10263 = vand.u32 %v10024, 2147483648
    %v10264 = vor.u32 1.1754944e-38, %v10263
    %v10265 = vsel %vm10262, %v10264, %v10260
    %v10266 = vmul.f32 1.0, %v10265
    %v10267 = vrcp.pop %v10025
    %v10268 = vmul.f32 %v10025, %v10267
    %v10269 = vsub.f32 1.0, %v10268
    %v10270 = vmul.f32 %v10267, %v10269
    %v10271 = vadd.f32 %v10267, %v10270
    %vm10272 = vweird.f32 %v10025
    %vm10273 = vweird.f32 %v10267
    %vm10274 = vmor %vm10272, %vm10273
    %v10275 = vsel %vm10274, %v10267, %v10271
    %v10276 = vand.u32 2147483647, %v10025
    %vm10277 = vcmp.eq.f32.partialorder %v10276, 8.507059e+37
    %v10278 = vand.u32 %v10025, 2147483648
    %v10279 = vor.u32 1.1754944e-38, %v10278
    %v10280 = vsel %vm10277, %v10279, %v10275
    %v10281 = vmul.f32 1.0, %v10280
    %v10282 = vrcp.pop %v10026
    %v10283 = vmul.f32 %v10026, %v10282
    %v10284 = vsub.f32 1.0, %v10283
    %v10285 = vmul.f32 %v10282, %v10284
    %v10286 = vadd.f32 %v10282, %v10285
    %vm10287 = vweird.f32 %v10026
    %vm10288 = vweird.f32 %v10282
    %vm10289 = vmor %vm10287, %vm10288
    %v10290 = vsel %vm10289, %v10282, %v10286
    %v10291 = vand.u32 2147483647, %v10026
    %vm10292 = vcmp.eq.f32.partialorder %v10291, 8.507059e+37
    %v10293 = vand.u32 %v10026, 2147483648
    %v10294 = vor.u32 1.1754944e-38, %v10293
    %v10295 = vsel %vm10292, %v10294, %v10290
    %v10296 = vmul.f32 1.0, %v10295
    %v10297 = vrcp.pop %v10027
    %v10298 = vmul.f32 %v10027, %v10297
    %v10299 = vsub.f32 1.0, %v10298
    %v10300 = vmul.f32 %v10297, %v10299
    %v10301 = vadd.f32 %v10297, %v10300
    %vm10302 = vweird.f32 %v10027
    %vm10303 = vweird.f32 %v10297
    %vm10304 = vmor %vm10302, %vm10303
    %v10305 = vsel %vm10304, %v10297, %v10301
    %v10306 = vand.u32 2147483647, %v10027
    %vm10307 = vcmp.eq.f32.partialorder %v10306, 8.507059e+37
    %v10308 = vand.u32 %v10027, 2147483648
    %v10309 = vor.u32 1.1754944e-38, %v10308
    %v10310 = vsel %vm10307, %v10309, %v10305
    %v10311 = vmul.f32 1.0, %v10310
    %v10312 = vrcp.pop %v10028
    %v10313 = vmul.f32 %v10028, %v10312
    %v10314 = vsub.f32 1.0, %v10313
    %v10315 = vmul.f32 %v10312, %v10314
    %v10316 = vadd.f32 %v10312, %v10315
    %vm10317 = vweird.f32 %v10028
    %vm10318 = vweird.f32 %v10312
    %vm10319 = vmor %vm10317, %vm10318
    %v10320 = vsel %vm10319, %v10312, %v10316
    %v10321 = vand.u32 2147483647, %v10028
    %vm10322 = vcmp.eq.f32.partialorder %v10321, 8.507059e+37
    %v10323 = vand.u32 %v10028, 2147483648
    %v10324 = vor.u32 1.1754944e-38, %v10323
    %v10325 = vsel %vm10322, %v10324, %v10320
    %v10326 = vmul.f32 1.0, %v10325
    %v10327 = vrcp.pop %v10029
    %v10328 = vmul.f32 %v10029, %v10327
    %v10329 = vsub.f32 1.0, %v10328
    %v10330 = vmul.f32 %v10327, %v10329
    %v10331 = vadd.f32 %v10327, %v10330
    %vm10332 = vweird.f32 %v10029
    %vm10333 = vweird.f32 %v10327
    %vm10334 = vmor %vm10332, %vm10333
    %v10335 = vsel %vm10334, %v10327, %v10331
    %v10336 = vand.u32 2147483647, %v10029
    %vm10337 = vcmp.eq.f32.partialorder %v10336, 8.507059e+37
    %v10338 = vand.u32 %v10029, 2147483648
    %v10339 = vor.u32 1.1754944e-38, %v10338
    %v10340 = vsel %vm10337, %v10339, %v10335
    %v10341 = vmul.f32 1.0, %v10340
    %v10342 = vrcp.pop %v10030
    %v10343 = vmul.f32 %v10030, %v10342
    %v10344 = vsub.f32 1.0, %v10343
    %v10345 = vmul.f32 %v10342, %v10344
    %v10346 = vadd.f32 %v10342, %v10345
    %vm10347 = vweird.f32 %v10030
    %vm10348 = vweird.f32 %v10342
    %vm10349 = vmor %vm10347, %vm10348
    %v10350 = vsel %vm10349, %v10342, %v10346
    %v10351 = vand.u32 2147483647, %v10030
    %vm10352 = vcmp.eq.f32.partialorder %v10351, 8.507059e+37
    %v10353 = vand.u32 %v10030, 2147483648
    %v10354 = vor.u32 1.1754944e-38, %v10353
    %v10355 = vsel %vm10352, %v10354, %v10350
    %v10356 = vmul.f32 1.0, %v10355
    %v10357 = vrcp.pop %v10031
    %v10358 = vmul.f32 %v10031, %v10357
    %v10359 = vsub.f32 1.0, %v10358
    %v10360 = vmul.f32 %v10357, %v10359
    %v10361 = vadd.f32 %v10357, %v10360
    %vm10362 = vweird.f32 %v10031
    %vm10363 = vweird.f32 %v10357
    %vm10364 = vmor %vm10362, %vm10363
    %v10365 = vsel %vm10364, %v10357, %v10361
    %v10366 = vand.u32 2147483647, %v10031
    %vm10367 = vcmp.eq.f32.partialorder %v10366, 8.507059e+37
    %v10368 = vand.u32 %v10031, 2147483648
    %v10369 = vor.u32 1.1754944e-38, %v10368
    %v10370 = vsel %vm10367, %v10369, %v10365
    %v10371 = vmul.f32 1.0, %v10370
    %v10372 = vrcp.pop %v10032
    %v10373 = vmul.f32 %v10032, %v10372
    %v10374 = vsub.f32 1.0, %v10373
    %v10375 = vmul.f32 %v10372, %v10374
    %v10376 = vadd.f32 %v10372, %v10375
    %vm10377 = vweird.f32 %v10032
    %vm10378 = vweird.f32 %v10372
    %vm10379 = vmor %vm10377, %vm10378
    %v10380 = vsel %vm10379, %v10372, %v10376
    %v10381 = vand.u32 2147483647, %v10032
    %vm10382 = vcmp.eq.f32.partialorder %v10381, 8.507059e+37
    %v10383 = vand.u32 %v10032, 2147483648
    %v10384 = vor.u32 1.1754944e-38, %v10383
    %v10385 = vsel %vm10382, %v10384, %v10380
    %v10386 = vmul.f32 1.0, %v10385
    %v10387 = vrcp.pop %v10033
    %v10388 = vmul.f32 %v10033, %v10387
    %v10389 = vsub.f32 1.0, %v10388
    %v10390 = vmul.f32 %v10387, %v10389
    %v10391 = vadd.f32 %v10387, %v10390
    %vm10392 = vweird.f32 %v10033
    %vm10393 = vweird.f32 %v10387
    %vm10394 = vmor %vm10392, %vm10393
    %v10395 = vsel %vm10394, %v10387, %v10391
    %v10396 = vand.u32 2147483647, %v10033
    %vm10397 = vcmp.eq.f32.partialorder %v10396, 8.507059e+37
    %v10398 = vand.u32 %v10033, 2147483648
    %v10399 = vor.u32 1.1754944e-38, %v10398
    %v10400 = vsel %vm10397, %v10399, %v10395
    %v10401 = vmul.f32 1.0, %v10400
    %v10402 = vrcp.pop %v10034
    %v10403 = vmul.f32 %v10034, %v10402
    %v10404 = vsub.f32 1.0, %v10403
    %v10405 = vmul.f32 %v10402, %v10404
    %v10406 = vadd.f32 %v10402, %v10405
    %vm10407 = vweird.f32 %v10034
    %vm10408 = vweird.f32 %v10402
    %vm10409 = vmor %vm10407, %vm10408
    %v10410 = vsel %vm10409, %v10402, %v10406
    %v10411 = vand.u32 2147483647, %v10034
    %vm10412 = vcmp.eq.f32.partialorder %v10411, 8.507059e+37
    %v10413 = vand.u32 %v10034, 2147483648
    %v10414 = vor.u32 1.1754944e-38, %v10413
    %v10415 = vsel %vm10412, %v10414, %v10410
    %v10416 = vmul.f32 1.0, %v10415
    %v10417 = vrcp.pop %v10035
    %v10418 = vmul.f32 %v10035, %v10417
    %v10419 = vsub.f32 1.0, %v10418
    %v10420 = vmul.f32 %v10417, %v10419
    %v10421 = vadd.f32 %v10417, %v10420
    %vm10422 = vweird.f32 %v10035
    %vm10423 = vweird.f32 %v10417
    %vm10424 = vmor %vm10422, %vm10423
    %v10425 = vsel %vm10424, %v10417, %v10421
    %v10426 = vand.u32 2147483647, %v10035
    %vm10427 = vcmp.eq.f32.partialorder %v10426, 8.507059e+37
    %v10428 = vand.u32 %v10035, 2147483648
    %v10429 = vor.u32 1.1754944e-38, %v10428
    %v10430 = vsel %vm10427, %v10429, %v10425
    %v10431 = vmul.f32 1.0, %v10430
    %v10432 = vrcp.pop %v10036
    %v10433 = vmul.f32 %v10036, %v10432
    %v10434 = vsub.f32 1.0, %v10433
    %v10435 = vmul.f32 %v10432, %v10434
    %v10436 = vadd.f32 %v10432, %v10435
    %vm10437 = vweird.f32 %v10036
    %vm10438 = vweird.f32 %v10432
    %vm10439 = vmor %vm10437, %vm10438
    %v10440 = vsel %vm10439, %v10432, %v10436
    %v10441 = vand.u32 2147483647, %v10036
    %vm10442 = vcmp.eq.f32.partialorder %v10441, 8.507059e+37
    %v10443 = vand.u32 %v10036, 2147483648
    %v10444 = vor.u32 1.1754944e-38, %v10443
    %v10445 = vsel %vm10442, %v10444, %v10440
    %v10446 = vmul.f32 1.0, %v10445
    %v10447 = vrcp.pop %v10037
    %v10448 = vmul.f32 %v10037, %v10447
    %v10449 = vsub.f32 1.0, %v10448
    %v10450 = vmul.f32 %v10447, %v10449
    %v10451 = vadd.f32 %v10447, %v10450
    %vm10452 = vweird.f32 %v10037
    %vm10453 = vweird.f32 %v10447
    %vm10454 = vmor %vm10452, %vm10453
    %v10455 = vsel %vm10454, %v10447, %v10451
    %v10456 = vand.u32 2147483647, %v10037
    %vm10457 = vcmp.eq.f32.partialorder %v10456, 8.507059e+37
    %v10458 = vand.u32 %v10037, 2147483648
    %v10459 = vor.u32 1.1754944e-38, %v10458
    %v10460 = vsel %vm10457, %v10459, %v10455
    %v10461 = vmul.f32 1.0, %v10460
    %v10462 = vrcp.pop %v10038
    %v10463 = vmul.f32 %v10038, %v10462
    %v10464 = vsub.f32 1.0, %v10463
    %v10465 = vmul.f32 %v10462, %v10464
    %v10466 = vadd.f32 %v10462, %v10465
    %vm10467 = vweird.f32 %v10038
    %vm10468 = vweird.f32 %v10462
    %vm10469 = vmor %vm10467, %vm10468
    %v10470 = vsel %vm10469, %v10462, %v10466
    %v10471 = vand.u32 2147483647, %v10038
    %vm10472 = vcmp.eq.f32.partialorder %v10471, 8.507059e+37
    %v10473 = vand.u32 %v10038, 2147483648
    %v10474 = vor.u32 1.1754944e-38, %v10473
    %v10475 = vsel %vm10472, %v10474, %v10470
    %v10476 = vmul.f32 1.0, %v10475
    %v10477 = vrcp.pop %v10039
    %v10478 = vmul.f32 %v10039, %v10477
    %v10479 = vsub.f32 1.0, %v10478
    %v10480 = vmul.f32 %v10477, %v10479
    %v10481 = vadd.f32 %v10477, %v10480
    %vm10482 = vweird.f32 %v10039
    %vm10483 = vweird.f32 %v10477
    %vm10484 = vmor %vm10482, %vm10483
    %v10485 = vsel %vm10484, %v10477, %v10481
    %v10486 = vand.u32 2147483647, %v10039
    %vm10487 = vcmp.eq.f32.partialorder %v10486, 8.507059e+37
    %v10488 = vand.u32 %v10039, 2147483648
    %v10489 = vor.u32 1.1754944e-38, %v10488
    %v10490 = vsel %vm10487, %v10489, %v10485
    %v10491 = vmul.f32 1.0, %v10490
    %v10492 = vrcp.pop %v10040
    %v10493 = vmul.f32 %v10040, %v10492
    %v10494 = vsub.f32 1.0, %v10493
    %v10495 = vmul.f32 %v10492, %v10494
    %v10496 = vadd.f32 %v10492, %v10495
    %vm10497 = vweird.f32 %v10040
    %vm10498 = vweird.f32 %v10492
    %vm10499 = vmor %vm10497, %vm10498
    %v10500 = vsel %vm10499, %v10492, %v10496
    %v10501 = vand.u32 2147483647, %v10040
    %vm10502 = vcmp.eq.f32.partialorder %v10501, 8.507059e+37
    %v10503 = vand.u32 %v10040, 2147483648
    %v10504 = vor.u32 1.1754944e-38, %v10503
    %v10505 = vsel %vm10502, %v10504, %v10500
    %v10506 = vmul.f32 1.0, %v10505
    %v10507 = vrcp.pop %v10041
    %v10508 = vmul.f32 %v10041, %v10507
    %v10509 = vsub.f32 1.0, %v10508
    %v10510 = vmul.f32 %v10507, %v10509
    %v10511 = vadd.f32 %v10507, %v10510
    %vm10512 = vweird.f32 %v10041
    %vm10513 = vweird.f32 %v10507
    %vm10514 = vmor %vm10512, %vm10513
    %v10515 = vsel %vm10514, %v10507, %v10511
    %v10516 = vand.u32 2147483647, %v10041
    %vm10517 = vcmp.eq.f32.partialorder %v10516, 8.507059e+37
    %v10518 = vand.u32 %v10041, 2147483648
    %v10519 = vor.u32 1.1754944e-38, %v10518
    %v10520 = vsel %vm10517, %v10519, %v10515
    %v10521 = vmul.f32 1.0, %v10520
    %10522 = vst [vmem:[#allocation14] sm:$0xff] %v10056
    %10523 = vst [vmem:[#allocation14 + $0x8] sm:$0xff] %v10071
    %10524 = vst [vmem:[#allocation14 + $0x10] sm:$0xff] %v10086
    %10525 = vst [vmem:[#allocation14 + $0x18] sm:$0xff] %v10101
    %10526 = vst [vmem:[#allocation14 + $0x20] sm:$0xff] %v10116
    %10527 = vst [vmem:[#allocation14 + $0x28] sm:$0xff] %v10131
    %10528 = vst [vmem:[#allocation14 + $0x30] sm:$0xff] %v10146
    %10529 = vst [vmem:[#allocation14 + $0x38] sm:$0xff] %v10161
    %10530 = vst [vmem:[#allocation14 + $0x40] sm:$0xff] %v10176
    %10531 = vst [vmem:[#allocation14 + $0x48] sm:$0xff] %v10191
    %10532 = vst [vmem:[#allocation14 + $0x50] sm:$0xff] %v10206
    %10533 = vst [vmem:[#allocation14 + $0x58] sm:$0xff] %v10221
    %10534 = vst [vmem:[#allocation14 + $0x60] sm:$0xff] %v10236
    %10535 = vst [vmem:[#allocation14 + $0x68] sm:$0xff] %v10251
    %10536 = vst [vmem:[#allocation14 + $0x70] sm:$0xff] %v10266
    %10537 = vst [vmem:[#allocation14 + $0x78] sm:$0xff] %v10281
    %10538 = vst [vmem:[#allocation14 + $0x80] sm:$0xff] %v10296
    %10539 = vst [vmem:[#allocation14 + $0x88] sm:$0xff] %v10311
    %10540 = vst [vmem:[#allocation14 + $0x90] sm:$0xff] %v10326
    %10541 = vst [vmem:[#allocation14 + $0x98] sm:$0xff] %v10341
    %10542 = vst [vmem:[#allocation14 + $0xa0] sm:$0xff] %v10356
    %10543 = vst [vmem:[#allocation14 + $0xa8] sm:$0xff] %v10371
    %10544 = vst [vmem:[#allocation14 + $0xb0] sm:$0xff] %v10386
    %10545 = vst [vmem:[#allocation14 + $0xb8] sm:$0xff] %v10401
    %10546 = vst [vmem:[#allocation14 + $0xc0] sm:$0xff] %v10416
    %10547 = vst [vmem:[#allocation14 + $0xc8] sm:$0xff] %v10431
    %10548 = vst [vmem:[#allocation14 + $0xd0] sm:$0xff] %v10446
    %10549 = vst [vmem:[#allocation14 + $0xd8] sm:$0xff] %v10461
    %10550 = vst [vmem:[#allocation14 + $0xe0] sm:$0xff] %v10476
    %10551 = vst [vmem:[#allocation14 + $0xe8] sm:$0xff] %v10491
    %10552 = vst [vmem:[#allocation14 + $0xf0] sm:$0xff] %v10506
    %10553 = vst [vmem:[#allocation14 + $0xf8] sm:$0xff] %v10521
    // Predicated region
    $region66: #{tpu_custom_call.1} parent=1 // pred_check
      _
    $region67: #{tpu_custom_call.1} parent=1 // pred_check_branch
      %10555 = sbr.rel (0) target = $region69
    $region68: #{tpu_custom_call.1} parent=1 // pred_region
      %10557 = vsyncadd [#allocation4], 0
      %s10558 = sshll.u32 [#allocation14], 4
      %s10559 = int_to_ptr.vmem [resolvable:$true] %s10558
      %s10560 = sshll.u32 %s9, 4
      %s10561 = int_to_ptr.hbm [resolvable:$true] %s10560
      %10566 = dma.vmem_to_hbm [thread:$0]  %s10559, 4096, %s10561, [#allocation4], 128, 128, 8
    $region69: #{tpu_custom_call.1} parent=1 // pred_fallthru
      _
    // Predicated region
    $region70: #{tpu_custom_call.1} parent=1 // pred_check
      _
    $region71: #{tpu_custom_call.1} parent=1 // pred_check_branch
      %10568 = sbr.rel (0) target = $region73
    $region72: #{tpu_custom_call.1} parent=1 // pred_region
      %10570 = dma.done [#allocation4], 4096
    $region73: #{tpu_custom_call.1} parent=1 // pred_fallthru
      _
    %10571 = vsyncpa [#allocation3], 1
    %10572 = vsyncpa [#allocation6], 1
    %10573 = vsyncpa [#allocation9], 1
    %10574 = vsyncpa [#allocation12], 1
    %10575 = vsyncpa [#allocation4], 1

</llo_original>
